<compile_context>
chip_gen: v7x
topology: tpu7x:2x2x1
jax: 0.10.0
libtpu: 0.0.40
codegen_flags: <defaults>
</compile_context>

<pallas_src>
import functools

import numpy as np
import jax
import jax.numpy as jnp
from jax.experimental import pallas as pl
from jax.experimental.pallas import tpu as pltpu


# ----------------------------------------------------------------------------
# Small host-side helpers
# ----------------------------------------------------------------------------
def _round_up(x, m):
    return (x + m - 1) // m * m


def _pool_out(n, k, s):
    return (n - k) // s + 1


def _sel_matrix_np(n_out, n_in, s):
    """(n_out, n_in) 0/1 matrix selecting every s-th element."""
    m = np.zeros((n_out, n_in), np.float64)
    m[np.arange(n_out), np.arange(n_out) * s] = 1.0
    return m


def _interp_matrix_np(out_size, in_size):
    """(out, in) bilinear weights, PyTorch F.interpolate align_corners=False."""
    dst = np.arange(out_size, dtype=np.float64)
    src = np.maximum((dst + 0.5) * (in_size / out_size) - 0.5, 0.0)
    i0 = np.clip(np.floor(src).astype(np.int64), 0, in_size - 1)
    i1 = np.minimum(i0 + 1, in_size - 1)
    w1 = src - i0
    w0 = 1.0 - w1
    m = np.zeros((out_size, in_size), np.float64)
    np.add.at(m, (np.arange(out_size), i0), w0)
    np.add.at(m, (np.arange(out_size), i1), w1)
    return m


def _combined_mats(h, w, k, s, target, tw_pad):
    """Transposed combined (stride-select [+ bilinear]) weight matrices.

    awT: (Wv, tw_pad)  — contraction over the W sliding-window axis (lanes);
                         columns >= target-width carry zeros (dropped on host).
    ahT: (Hv_pad, Th)  — contraction over the H sliding-window axis; rows
                         >= Hv carry zeros and line up with the in-kernel
                         zero padding of `mh`, so padded positions never leak.
    """
    wv, hv = w - k + 1, h - k + 1
    wo, ho = _pool_out(w, k, s), _pool_out(h, k, s)
    a_w = _sel_matrix_np(wo, wv, s)                 # (wo, wv)
    a_h = _sel_matrix_np(ho, hv, s)                 # (ho, hv)
    if target is not None:
        th_t, tw_t = target
        a_w = _interp_matrix_np(tw_t, wo) @ a_w     # (tw_t, wv)
        a_h = _interp_matrix_np(th_t, ho) @ a_h     # (th_t, hv)
    hv_pad = _round_up(hv, 8)
    awT = np.zeros((wv, tw_pad), np.float32)
    awT[:, : a_w.shape[0]] = a_w.T
    ahT = np.zeros((hv_pad, a_h.shape[0]), np.float32)
    ahT[:hv, :] = a_h.T
    return jnp.asarray(awT), jnp.asarray(ahT)


def _pick_tb(b, row_bytes):
    """Batch-tile size: ~8 grid steps (>= 4 per v7x TensorCore), VMEM-capped
    so double-buffered blocks stay well under the scoped-VMEM default on
    v5e(16MiB)/v6e(32MiB)/v7x(32MiB of 64MiB physical)."""
    tb_steps = max(1, -(-b // 8))                    # target ~8 grid steps
    tb_vmem = max(1, (4 << 20) // max(row_bytes, 1))  # ~4 MiB of input block
    return int(min(b, tb_steps, tb_vmem))


# ----------------------------------------------------------------------------
# In-kernel compute
# ----------------------------------------------------------------------------
def _pool_resize_block(x, k, awT, ahT):
    """MaxPool2d(kernel=k; stride + optional bilinear resize fused into the
    weight matrices) for one (TB, H, W) block.  Returns (TB, Tw_pad, Th) f32."""
    tb, h, w = x.shape
    wv, hv = w - k + 1, h - k + 1
    hv_pad, th = ahT.shape
    tw_pad = awT.shape[1]

    # stride-1 sliding-window max along W (lane axis) — VPU only
    m = x[:, :, 0:wv]
    for d in range(1, k):
        m = jnp.maximum(m, x[:, :, d:d + wv])
    # stride-1 sliding-window max along H (sublane axis) — VPU only
    mh = m[:, 0:hv, :]
    for d in range(1, k):
        mh = jnp.maximum(mh, m[:, d:d + hv, :])
    # In-VMEM zero pad of the H-window axis so the reshape below is
    # layout-preserving (hv_pad % 8 == 0); the matching ahT rows are zero.
    if hv_pad > hv:
        mh = jnp.concatenate(
            [mh, jnp.zeros((tb, hv_pad - hv, wv), jnp.float32)], axis=1)

    # stride-s downsample (+ optional bilinear resize) along W: one 2-D matmul
    y = jnp.dot(mh.reshape(tb * hv_pad, wv), awT,
                preferred_element_type=jnp.float32,
                precision=jax.lax.Precision.HIGHEST)      # (tb*hv_pad, tw_pad)
    y = jnp.swapaxes(y.reshape(tb, hv_pad, tw_pad), 1, 2)  # (tb, tw_pad, hv_pad)

    # stride-s downsample (+ optional bilinear resize) along H: one 2-D matmul
    z = jnp.dot(y.reshape(tb * tw_pad, hv_pad), ahT,
                preferred_element_type=jnp.float32,
                precision=jax.lax.Precision.HIGHEST)      # (tb*tw_pad, th)
    return z.reshape(tb, tw_pad, th)


def _fused_pairs_kernel(ks, nlev, *refs):
    """All pyramid pairs in one kernel: refs = x_0..x_{L-1},
    (aw1,ah1,aw2,ah2) per pair, then one output ref per pair."""
    npair = nlev - 1
    x_refs = refs[:nlev]
    w_refs = refs[nlev:nlev + 4 * npair]
    o_refs = refs[nlev + 4 * npair:]
    # Read each level from VMEM once; interior levels feed two pairs.
    xs = [r[...].astype(jnp.float32) for r in x_refs]
    for i in range(npair):
        k1, k2 = ks[i]
        aw1, ah1, aw2, ah2 = w_refs[4 * i:4 * i + 4]
        p1 = _pool_resize_block(xs[i], k1, aw1[...], ah1[...])
        p2 = _pool_resize_block(xs[i + 1], k2, aw2[...], ah2[...])
        p = jnp.maximum(p1, p2)                      # (TB, Tw_pad, Th)
        # Full padded-lane store (no masked ':tw' slice); host drops padding.
        o_refs[i][...] = jnp.swapaxes(p, 1, 2).astype(o_refs[i].dtype)


def _single_kernel(k, x_ref, aw_ref, ah_ref, o_ref):
    p = _pool_resize_block(x_ref[...].astype(jnp.float32), k,
                           aw_ref[...], ah_ref[...])
    o_ref[...] = jnp.swapaxes(p, 1, 2).astype(o_ref.dtype)


# ----------------------------------------------------------------------------
# Wrappers
# ----------------------------------------------------------------------------
def _c_pairs_fused(x_pyramid, k1=3, s1=2, k2=4, s2=3, tb=None):
    nlev = len(x_pyramid)
    npair = nlev - 1
    n, c = x_pyramid[0].shape[:2]
    assert all(x.shape[:2] == (n, c) for x in x_pyramid)
    b = n * c
    dtype = x_pyramid[0].dtype
    shapes = [tuple(x.shape[2:]) for x in x_pyramid]
    xs_flat = [x.reshape(b, h, w) for x, (h, w) in zip(x_pyramid, shapes)]

    pair_cfg, weights = [], []
    for i in range(npair):
        h1, w1 = shapes[i]
        h2, w2 = shapes[i + 1]
        h1o, w1o = _pool_out(h1, k1, s1), _pool_out(w1, k1, s1)
        h2o, w2o = _pool_out(h2, k2, s2), _pool_out(w2, k2, s2)
        ups2 = w1o > w2o                 # torch: if x_1.shape[-1] > x_2.shape[-1]
        th, tw = (h1o, w1o) if ups2 else (h2o, w2o)
        tw_pad = _round_up(tw, 8)
        aw1, ah1 = _combined_mats(h1, w1, k1, s1,
                                  None if ups2 else (th, tw), tw_pad)
        aw2, ah2 = _combined_mats(h2, w2, k2, s2,
                                  (th, tw) if ups2 else None, tw_pad)
        pair_cfg.append((th, tw, tw_pad))
        weights += [aw1, ah1, aw2, ah2]

    if tb is None:
        tb = _pick_tb(b, 4 * sum(h * w for h, w in shapes))
    grid = (pl.cdiv(b, tb),)             # ragged last block handled by Pallas

    in_specs = [pl.BlockSpec((tb, h, w), lambda i: (i, 0, 0))
                for (h, w) in shapes]
    # Constant block index -> weights stay resident in VMEM across grid steps.
    in_specs += [pl.BlockSpec(wm.shape, lambda i: (0, 0)) for wm in weights]
    out_specs = [pl.BlockSpec((tb, th, tw_pad), lambda i: (i, 0, 0))
                 for (th, _, tw_pad) in pair_cfg]
    out_shape = [jax.ShapeDtypeStruct((b, th, tw_pad), dtype)
                 for (th, _, tw_pad) in pair_cfg]

    kernel = functools.partial(_fused_pairs_kernel, ((k1, k2),) * npair, nlev)
    outs = pl.pallas_call(
        kernel,
        out_shape=out_shape,
        grid=grid,
        in_specs=in_specs,
        out_specs=out_specs,
        compiler_params=pltpu.CompilerParams(
            dimension_semantics=("parallel",)),
    )(*xs_flat, *weights)
    if not isinstance(outs, (list, tuple)):
        outs = [outs]
    # Drop the padded lane columns on the host; fuses with the final reshape.
    return [o[:, :, :tw].reshape(n, c, th, tw)
            for o, (th, tw, _) in zip(outs, pair_cfg)]


def _c_single(x, k=3, s=2, tb=None):
    n, c, h, w = x.shape
    b = n * c
    ho, wo = _pool_out(h, k, s), _pool_out(w, k, s)
    wo_pad = _round_up(wo, 8)
    awT, ahT = _combined_mats(h, w, k, s, None, wo_pad)
    xf = x.reshape(b, h, w)
    if tb is None:
        tb = _pick_tb(b, 4 * h * w)
    grid = (pl.cdiv(b, tb),)

    out = pl.pallas_call(
        functools.partial(_single_kernel, k),
        out_shape=jax.ShapeDtypeStruct((b, ho, wo_pad), x.dtype),
        grid=grid,
        in_specs=[pl.BlockSpec((tb, h, w), lambda i: (i, 0, 0)),
                  pl.BlockSpec(awT.shape, lambda i: (0, 0)),
                  pl.BlockSpec(ahT.shape, lambda i: (0, 0))],
        out_specs=pl.BlockSpec((tb, ho, wo_pad), lambda i: (i, 0, 0)),
        compiler_params=pltpu.CompilerParams(
            dimension_semantics=("parallel",)),
    )(xf, awT, ahT)
    return out[:, :, :wo].reshape(n, c, ho, wo)


def c_forward(x_pyramid, global_scale_pool=False, tb=None):
    """Forward pass of module C (default pool funcs, global_scale_pool=False)."""
    if global_scale_pool:
        # TODO(synk): global_scale_pool=True branch not implemented (default is False).
        raise NotImplementedError("global_scale_pool=True not implemented")
    if len(x_pyramid) == 1:
        return [_c_single(x_pyramid[0], 3, 2, tb=tb)]
    return _c_pairs_fused(x_pyramid, tb=tb)


# ----------------------------------------------------------------------------
# Pure-JAX reference (mirrors PyTorch semantics) for validation
# ----------------------------------------------------------------------------
def _ref_maxpool(x, k, s):
    return jax.lax.reduce_window(x, -jnp.inf, jax.lax.max,
                                 (1, 1, k, k), (1, 1, s, s), "VALID")


def _ref_interp_bilinear(x, out_h, out_w):
    n, c, in_h, in_w = x.shape

    def coords(out_size, in_size):
        dst = jnp.arange(out_size, dtype=jnp.float32)
        src = jnp.maximum((dst + 0.5) * (in_size / out_size) - 0.5, 0.0)
        i0 = jnp.clip(jnp.floor(src).astype(jnp.int32), 0, in_size - 1)
        i1 = jnp.minimum(i0 + 1, in_size - 1)
        frac = src - i0.astype(jnp.float32)
        return i0, i1, frac

    h0, h1, fh = coords(out_h, in_h)
    w0, w1, fw = coords(out_w, in_w)
    top = x[:, :, h0, :]
    bot = x[:, :, h1, :]
    rows = top * (1.0 - fh)[None, None, :, None] + bot * fh[None, None, :, None]
    left = rows[:, :, :, w0]
    right = rows[:, :, :, w1]
    return left * (1.0 - fw)[None, None, None, :] + right * fw[None, None, None, :]


def _ref_pair(x1, x2, k1=3, s1=2, k2=4, s2=3):
    p1 = _ref_maxpool(x1, k1, s1)
    p2 = _ref_maxpool(x2, k2, s2)
    if p1.shape[-1] > p2.shape[-1]:
        p2 = _ref_interp_bilinear(p2, p1.shape[-2], p1.shape[-1])
    else:
        p1 = _ref_interp_bilinear(p1, p2.shape[-2], p2.shape[-1])
    return jnp.maximum(p1, p2)


# ----------------------------------------------------------------------------
if __name__ == "__main__":
    key = jax.random.PRNGKey(0)
    # NCHW pyramid; N*C = 16 -> 8 grid steps in the fused pallas_call
    shapes = [(2, 8, 30, 30), (2, 8, 22, 22), (2, 8, 16, 16)]
    keys = jax.random.split(key, len(shapes))
    x_pyramid = [jax.random.normal(k, s, dtype=jnp.float32)
                 for k, s in zip(keys, shapes)]

    # main path: pyramid of 3 levels -> 2 outputs from ONE pallas_call
    outs = jax.block_until_ready(c_forward(x_pyramid))

    # len==1 path: single pooled output
    out_single = jax.block_until_ready(c_forward([x_pyramid[0]]))[0]

    # validate against pure-JAX reference of the PyTorch semantics
    for i in range(len(x_pyramid) - 1):
        ref = _ref_pair(x_pyramid[i], x_pyramid[i + 1])
        np.testing.assert_allclose(np.asarray(outs[i]), np.asarray(ref),
                                   rtol=2e-4, atol=2e-4)
    np.testing.assert_allclose(np.asarray(out_single),
                               np.asarray(_ref_maxpool(x_pyramid[0], 3, 2)),
                               rtol=2e-4, atol=2e-4)

    print("KERNEL_OK")
</pallas_src>

<mosaic_0001>
module attributes {stable_mosaic.version = 11 : i64} {
  func.func @_fused_pairs_kernel(%arg0: i32, %arg1: memref<2x30x30xf32, #tpu.memory_space<vmem>>, %arg2: memref<2x22x22xf32, #tpu.memory_space<vmem>>, %arg3: memref<2x16x16xf32, #tpu.memory_space<vmem>>, %arg4: memref<28x16xf32, #tpu.memory_space<vmem>>, %arg5: memref<32x14xf32, #tpu.memory_space<vmem>>, %arg6: memref<19x16xf32, #tpu.memory_space<vmem>>, %arg7: memref<24x14xf32, #tpu.memory_space<vmem>>, %arg8: memref<20x16xf32, #tpu.memory_space<vmem>>, %arg9: memref<24x10xf32, #tpu.memory_space<vmem>>, %arg10: memref<13x16xf32, #tpu.memory_space<vmem>>, %arg11: memref<16x10xf32, #tpu.memory_space<vmem>>, %arg12: memref<2x14x16xf32, #tpu.memory_space<vmem>>, %arg13: memref<2x10x16xf32, #tpu.memory_space<vmem>>) attributes {dimension_semantics = [#tpu.dimension_semantics<parallel>], iteration_bounds = array<i64: 8>, scalar_prefetch = 0 : i64, scratch_operands = 0 : i64, tpu.core_type = #tpu.core_type<tc>, window_params = [{transform_indices = @transform_0, window_bounds = array<i64: 2, 30, 30>}, {transform_indices = @transform_1, window_bounds = array<i64: 2, 22, 22>}, {transform_indices = @transform_2, window_bounds = array<i64: 2, 16, 16>}, {pipeline_mode = #tpu.pipeline_mode<synchronous>, transform_indices = @transform_3, window_bounds = array<i64: 28, 16>}, {pipeline_mode = #tpu.pipeline_mode<synchronous>, transform_indices = @transform_4, window_bounds = array<i64: 32, 14>}, {pipeline_mode = #tpu.pipeline_mode<synchronous>, transform_indices = @transform_5, window_bounds = array<i64: 19, 16>}, {pipeline_mode = #tpu.pipeline_mode<synchronous>, transform_indices = @transform_6, window_bounds = array<i64: 24, 14>}, {pipeline_mode = #tpu.pipeline_mode<synchronous>, transform_indices = @transform_7, window_bounds = array<i64: 20, 16>}, {pipeline_mode = #tpu.pipeline_mode<synchronous>, transform_indices = @transform_8, window_bounds = array<i64: 24, 10>}, {pipeline_mode = #tpu.pipeline_mode<synchronous>, transform_indices = @transform_9, window_bounds = array<i64: 13, 16>}, {pipeline_mode = #tpu.pipeline_mode<synchronous>, transform_indices = @transform_10, window_bounds = array<i64: 16, 10>}, {transform_indices = @transform_11, window_bounds = array<i64: 2, 14, 16>}, {transform_indices = @transform_12, window_bounds = array<i64: 2, 10, 16>}]} {
    %c0 = arith.constant 0 : index
    %c0_0 = arith.constant 0 : index
    %c0_1 = arith.constant 0 : index
    %0 = vector.load %arg1[%c0, %c0_0, %c0_1] : memref<2x30x30xf32, #tpu.memory_space<vmem>>, vector<2x30x30xf32>
    %c0_2 = arith.constant 0 : index
    %c0_3 = arith.constant 0 : index
    %c0_4 = arith.constant 0 : index
    %1 = vector.load %arg2[%c0_2, %c0_3, %c0_4] : memref<2x22x22xf32, #tpu.memory_space<vmem>>, vector<2x22x22xf32>
    %c0_5 = arith.constant 0 : index
    %c0_6 = arith.constant 0 : index
    %c0_7 = arith.constant 0 : index
    %2 = vector.load %arg3[%c0_5, %c0_6, %c0_7] : memref<2x16x16xf32, #tpu.memory_space<vmem>>, vector<2x16x16xf32>
    %c0_8 = arith.constant 0 : index
    %c0_9 = arith.constant 0 : index
    %3 = vector.load %arg4[%c0_8, %c0_9] : memref<28x16xf32, #tpu.memory_space<vmem>>, vector<28x16xf32>
    %c0_10 = arith.constant 0 : index
    %c0_11 = arith.constant 0 : index
    %4 = vector.load %arg5[%c0_10, %c0_11] : memref<32x14xf32, #tpu.memory_space<vmem>>, vector<32x14xf32>
    %5 = vector.extract_strided_slice %0 {offsets = [0, 0, 0], sizes = [2, 30, 28], strides = [1, 1, 1]} : vector<2x30x30xf32> to vector<2x30x28xf32>
    %6 = vector.extract_strided_slice %0 {offsets = [0, 0, 1], sizes = [2, 30, 28], strides = [1, 1, 1]} : vector<2x30x30xf32> to vector<2x30x28xf32>
    %7 = arith.maximumf %5, %6 : vector<2x30x28xf32>
    %8 = vector.extract_strided_slice %0 {offsets = [0, 0, 2], sizes = [2, 30, 28], strides = [1, 1, 1]} : vector<2x30x30xf32> to vector<2x30x28xf32>
    %9 = arith.maximumf %7, %8 : vector<2x30x28xf32>
    %10 = vector.extract_strided_slice %9 {offsets = [0, 0, 0], sizes = [2, 28, 28], strides = [1, 1, 1]} : vector<2x30x28xf32> to vector<2x28x28xf32>
    %11 = vector.extract_strided_slice %9 {offsets = [0, 1, 0], sizes = [2, 28, 28], strides = [1, 1, 1]} : vector<2x30x28xf32> to vector<2x28x28xf32>
    %12 = arith.maximumf %10, %11 : vector<2x28x28xf32>
    %13 = vector.extract_strided_slice %9 {offsets = [0, 2, 0], sizes = [2, 28, 28], strides = [1, 1, 1]} : vector<2x30x28xf32> to vector<2x28x28xf32>
    %14 = arith.maximumf %12, %13 : vector<2x28x28xf32>
    %cst = arith.constant 0.000000e+00 : f32
    %15 = vector.broadcast %cst : f32 to vector<2x4x28xf32>
    %16 = tpu.concatenate %14, %15 in 1 : vector<2x28x28xf32>, vector<2x4x28xf32> -> vector<2x32x28xf32>
    %17 = vector.shape_cast %16 : vector<2x32x28xf32> to vector<64x28xf32>
    %cst_12 = arith.constant dense<0.000000e+00> : vector<64x16xf32>
    %18 = tpu.matmul %17, %3, %cst_12 {dimension_numbers = #tpu.dot_dimension_numbers<[1], [0], [0], [1], [0, 0, 1, 1], [], []>, precision = #tpu.contract_precision<fp32>} : vector<64x28xf32>, vector<28x16xf32>, vector<64x16xf32> -> vector<64x16xf32>
    %19 = vector.shape_cast %18 : vector<64x16xf32> to vector<2x32x16xf32>
    %20 = tpu.transpose %19, [0, 2, 1] : vector<2x32x16xf32> -> vector<2x16x32xf32>
    %21 = vector.shape_cast %20 : vector<2x16x32xf32> to vector<32x32xf32>
    %cst_13 = arith.constant dense<0.000000e+00> : vector<32x14xf32>
    %22 = tpu.matmul %21, %4, %cst_13 {dimension_numbers = #tpu.dot_dimension_numbers<[1], [0], [0], [1], [0, 0, 1, 1], [], []>, precision = #tpu.contract_precision<fp32>} : vector<32x32xf32>, vector<32x14xf32>, vector<32x14xf32> -> vector<32x14xf32>
    %23 = vector.shape_cast %22 : vector<32x14xf32> to vector<2x16x14xf32>
    %c0_14 = arith.constant 0 : index
    %c0_15 = arith.constant 0 : index
    %24 = vector.load %arg6[%c0_14, %c0_15] : memref<19x16xf32, #tpu.memory_space<vmem>>, vector<19x16xf32>
    %c0_16 = arith.constant 0 : index
    %c0_17 = arith.constant 0 : index
    %25 = vector.load %arg7[%c0_16, %c0_17] : memref<24x14xf32, #tpu.memory_space<vmem>>, vector<24x14xf32>
    %26 = vector.extract_strided_slice %1 {offsets = [0, 0, 0], sizes = [2, 22, 19], strides = [1, 1, 1]} : vector<2x22x22xf32> to vector<2x22x19xf32>
    %27 = vector.extract_strided_slice %1 {offsets = [0, 0, 1], sizes = [2, 22, 19], strides = [1, 1, 1]} : vector<2x22x22xf32> to vector<2x22x19xf32>
    %28 = arith.maximumf %26, %27 : vector<2x22x19xf32>
    %29 = vector.extract_strided_slice %1 {offsets = [0, 0, 2], sizes = [2, 22, 19], strides = [1, 1, 1]} : vector<2x22x22xf32> to vector<2x22x19xf32>
    %30 = arith.maximumf %28, %29 : vector<2x22x19xf32>
    %31 = vector.extract_strided_slice %1 {offsets = [0, 0, 3], sizes = [2, 22, 19], strides = [1, 1, 1]} : vector<2x22x22xf32> to vector<2x22x19xf32>
    %32 = arith.maximumf %30, %31 : vector<2x22x19xf32>
    %33 = vector.extract_strided_slice %32 {offsets = [0, 0, 0], sizes = [2, 19, 19], strides = [1, 1, 1]} : vector<2x22x19xf32> to vector<2x19x19xf32>
    %34 = vector.extract_strided_slice %32 {offsets = [0, 1, 0], sizes = [2, 19, 19], strides = [1, 1, 1]} : vector<2x22x19xf32> to vector<2x19x19xf32>
    %35 = arith.maximumf %33, %34 : vector<2x19x19xf32>
    %36 = vector.extract_strided_slice %32 {offsets = [0, 2, 0], sizes = [2, 19, 19], strides = [1, 1, 1]} : vector<2x22x19xf32> to vector<2x19x19xf32>
    %37 = arith.maximumf %35, %36 : vector<2x19x19xf32>
    %38 = vector.extract_strided_slice %32 {offsets = [0, 3, 0], sizes = [2, 19, 19], strides = [1, 1, 1]} : vector<2x22x19xf32> to vector<2x19x19xf32>
    %39 = arith.maximumf %37, %38 : vector<2x19x19xf32>
    %cst_18 = arith.constant 0.000000e+00 : f32
    %40 = vector.broadcast %cst_18 : f32 to vector<2x5x19xf32>
    %41 = tpu.concatenate %39, %40 in 1 : vector<2x19x19xf32>, vector<2x5x19xf32> -> vector<2x24x19xf32>
    %42 = vector.shape_cast %41 : vector<2x24x19xf32> to vector<48x19xf32>
    %cst_19 = arith.constant dense<0.000000e+00> : vector<48x16xf32>
    %43 = tpu.matmul %42, %24, %cst_19 {dimension_numbers = #tpu.dot_dimension_numbers<[1], [0], [0], [1], [0, 0, 1, 1], [], []>, precision = #tpu.contract_precision<fp32>} : vector<48x19xf32>, vector<19x16xf32>, vector<48x16xf32> -> vector<48x16xf32>
    %44 = vector.shape_cast %43 : vector<48x16xf32> to vector<2x24x16xf32>
    %45 = tpu.transpose %44, [0, 2, 1] : vector<2x24x16xf32> -> vector<2x16x24xf32>
    %46 = vector.shape_cast %45 : vector<2x16x24xf32> to vector<32x24xf32>
    %cst_20 = arith.constant dense<0.000000e+00> : vector<32x14xf32>
    %47 = tpu.matmul %46, %25, %cst_20 {dimension_numbers = #tpu.dot_dimension_numbers<[1], [0], [0], [1], [0, 0, 1, 1], [], []>, precision = #tpu.contract_precision<fp32>} : vector<32x24xf32>, vector<24x14xf32>, vector<32x14xf32> -> vector<32x14xf32>
    %48 = vector.shape_cast %47 : vector<32x14xf32> to vector<2x16x14xf32>
    %49 = arith.maximumf %23, %48 : vector<2x16x14xf32>
    %50 = tpu.transpose %49, [0, 2, 1] : vector<2x16x14xf32> -> vector<2x14x16xf32>
    %c0_21 = arith.constant 0 : index
    %c0_22 = arith.constant 0 : index
    %c0_23 = arith.constant 0 : index
    %51 = vector.load %arg12[%c0_21, %c0_22, %c0_23] : memref<2x14x16xf32, #tpu.memory_space<vmem>>, vector<2x14x16xf32>
    tpu.vector_store %arg12[%c0_21, %c0_22, %c0_23], %50 {strides = array<i32>} : memref<2x14x16xf32, #tpu.memory_space<vmem>>, vector<2x14x16xf32>,
    %c0_24 = arith.constant 0 : index
    %c0_25 = arith.constant 0 : index
    %52 = vector.load %arg8[%c0_24, %c0_25] : memref<20x16xf32, #tpu.memory_space<vmem>>, vector<20x16xf32>
    %c0_26 = arith.constant 0 : index
    %c0_27 = arith.constant 0 : index
    %53 = vector.load %arg9[%c0_26, %c0_27] : memref<24x10xf32, #tpu.memory_space<vmem>>, vector<24x10xf32>
    %54 = vector.extract_strided_slice %1 {offsets = [0, 0, 0], sizes = [2, 22, 20], strides = [1, 1, 1]} : vector<2x22x22xf32> to vector<2x22x20xf32>
    %55 = vector.extract_strided_slice %1 {offsets = [0, 0, 1], sizes = [2, 22, 20], strides = [1, 1, 1]} : vector<2x22x22xf32> to vector<2x22x20xf32>
    %56 = arith.maximumf %54, %55 : vector<2x22x20xf32>
    %57 = vector.extract_strided_slice %1 {offsets = [0, 0, 2], sizes = [2, 22, 20], strides = [1, 1, 1]} : vector<2x22x22xf32> to vector<2x22x20xf32>
    %58 = arith.maximumf %56, %57 : vector<2x22x20xf32>
    %59 = vector.extract_strided_slice %58 {offsets = [0, 0, 0], sizes = [2, 20, 20], strides = [1, 1, 1]} : vector<2x22x20xf32> to vector<2x20x20xf32>
    %60 = vector.extract_strided_slice %58 {offsets = [0, 1, 0], sizes = [2, 20, 20], strides = [1, 1, 1]} : vector<2x22x20xf32> to vector<2x20x20xf32>
    %61 = arith.maximumf %59, %60 : vector<2x20x20xf32>
    %62 = vector.extract_strided_slice %58 {offsets = [0, 2, 0], sizes = [2, 20, 20], strides = [1, 1, 1]} : vector<2x22x20xf32> to vector<2x20x20xf32>
    %63 = arith.maximumf %61, %62 : vector<2x20x20xf32>
    %cst_28 = arith.constant 0.000000e+00 : f32
    %64 = vector.broadcast %cst_28 : f32 to vector<2x4x20xf32>
    %65 = tpu.concatenate %63, %64 in 1 : vector<2x20x20xf32>, vector<2x4x20xf32> -> vector<2x24x20xf32>
    %66 = vector.shape_cast %65 : vector<2x24x20xf32> to vector<48x20xf32>
    %cst_29 = arith.constant dense<0.000000e+00> : vector<48x16xf32>
    %67 = tpu.matmul %66, %52, %cst_29 {dimension_numbers = #tpu.dot_dimension_numbers<[1], [0], [0], [1], [0, 0, 1, 1], [], []>, precision = #tpu.contract_precision<fp32>} : vector<48x20xf32>, vector<20x16xf32>, vector<48x16xf32> -> vector<48x16xf32>
    %68 = vector.shape_cast %67 : vector<48x16xf32> to vector<2x24x16xf32>
    %69 = tpu.transpose %68, [0, 2, 1] : vector<2x24x16xf32> -> vector<2x16x24xf32>
    %70 = vector.shape_cast %69 : vector<2x16x24xf32> to vector<32x24xf32>
    %cst_30 = arith.constant dense<0.000000e+00> : vector<32x10xf32>
    %71 = tpu.matmul %70, %53, %cst_30 {dimension_numbers = #tpu.dot_dimension_numbers<[1], [0], [0], [1], [0, 0, 1, 1], [], []>, precision = #tpu.contract_precision<fp32>} : vector<32x24xf32>, vector<24x10xf32>, vector<32x10xf32> -> vector<32x10xf32>
    %72 = vector.shape_cast %71 : vector<32x10xf32> to vector<2x16x10xf32>
    %c0_31 = arith.constant 0 : index
    %c0_32 = arith.constant 0 : index
    %73 = vector.load %arg10[%c0_31, %c0_32] : memref<13x16xf32, #tpu.memory_space<vmem>>, vector<13x16xf32>
    %c0_33 = arith.constant 0 : index
    %c0_34 = arith.constant 0 : index
    %74 = vector.load %arg11[%c0_33, %c0_34] : memref<16x10xf32, #tpu.memory_space<vmem>>, vector<16x10xf32>
    %75 = vector.extract_strided_slice %2 {offsets = [0, 0, 0], sizes = [2, 16, 13], strides = [1, 1, 1]} : vector<2x16x16xf32> to vector<2x16x13xf32>
    %76 = vector.extract_strided_slice %2 {offsets = [0, 0, 1], sizes = [2, 16, 13], strides = [1, 1, 1]} : vector<2x16x16xf32> to vector<2x16x13xf32>
    %77 = arith.maximumf %75, %76 : vector<2x16x13xf32>
    %78 = vector.extract_strided_slice %2 {offsets = [0, 0, 2], sizes = [2, 16, 13], strides = [1, 1, 1]} : vector<2x16x16xf32> to vector<2x16x13xf32>
    %79 = arith.maximumf %77, %78 : vector<2x16x13xf32>
    %80 = vector.extract_strided_slice %2 {offsets = [0, 0, 3], sizes = [2, 16, 13], strides = [1, 1, 1]} : vector<2x16x16xf32> to vector<2x16x13xf32>
    %81 = arith.maximumf %79, %80 : vector<2x16x13xf32>
    %82 = vector.extract_strided_slice %81 {offsets = [0, 0, 0], sizes = [2, 13, 13], strides = [1, 1, 1]} : vector<2x16x13xf32> to vector<2x13x13xf32>
    %83 = vector.extract_strided_slice %81 {offsets = [0, 1, 0], sizes = [2, 13, 13], strides = [1, 1, 1]} : vector<2x16x13xf32> to vector<2x13x13xf32>
    %84 = arith.maximumf %82, %83 : vector<2x13x13xf32>
    %85 = vector.extract_strided_slice %81 {offsets = [0, 2, 0], sizes = [2, 13, 13], strides = [1, 1, 1]} : vector<2x16x13xf32> to vector<2x13x13xf32>
    %86 = arith.maximumf %84, %85 : vector<2x13x13xf32>
    %87 = vector.extract_strided_slice %81 {offsets = [0, 3, 0], sizes = [2, 13, 13], strides = [1, 1, 1]} : vector<2x16x13xf32> to vector<2x13x13xf32>
    %88 = arith.maximumf %86, %87 : vector<2x13x13xf32>
    %cst_35 = arith.constant 0.000000e+00 : f32
    %89 = vector.broadcast %cst_35 : f32 to vector<2x3x13xf32>
    %90 = tpu.concatenate %88, %89 in 1 : vector<2x13x13xf32>, vector<2x3x13xf32> -> vector<2x16x13xf32>
    %91 = vector.shape_cast %90 : vector<2x16x13xf32> to vector<32x13xf32>
    %cst_36 = arith.constant dense<0.000000e+00> : vector<32x16xf32>
    %92 = tpu.matmul %91, %73, %cst_36 {dimension_numbers = #tpu.dot_dimension_numbers<[1], [0], [0], [1], [0, 0, 1, 1], [], []>, precision = #tpu.contract_precision<fp32>} : vector<32x13xf32>, vector<13x16xf32>, vector<32x16xf32> -> vector<32x16xf32>
    %93 = vector.shape_cast %92 : vector<32x16xf32> to vector<2x16x16xf32>
    %94 = tpu.transpose %93, [0, 2, 1] : vector<2x16x16xf32> -> vector<2x16x16xf32>
    %95 = vector.shape_cast %94 : vector<2x16x16xf32> to vector<32x16xf32>
    %cst_37 = arith.constant dense<0.000000e+00> : vector<32x10xf32>
    %96 = tpu.matmul %95, %74, %cst_37 {dimension_numbers = #tpu.dot_dimension_numbers<[1], [0], [0], [1], [0, 0, 1, 1], [], []>, precision = #tpu.contract_precision<fp32>} : vector<32x16xf32>, vector<16x10xf32>, vector<32x10xf32> -> vector<32x10xf32>
    %97 = vector.shape_cast %96 : vector<32x10xf32> to vector<2x16x10xf32>
    %98 = arith.maximumf %72, %97 : vector<2x16x10xf32>
    %99 = tpu.transpose %98, [0, 2, 1] : vector<2x16x10xf32> -> vector<2x10x16xf32>
    %c0_38 = arith.constant 0 : index
    %c0_39 = arith.constant 0 : index
    %c0_40 = arith.constant 0 : index
    %100 = vector.load %arg13[%c0_38, %c0_39, %c0_40] : memref<2x10x16xf32, #tpu.memory_space<vmem>>, vector<2x10x16xf32>
    tpu.vector_store %arg13[%c0_38, %c0_39, %c0_40], %99 {strides = array<i32>} : memref<2x10x16xf32, #tpu.memory_space<vmem>>, vector<2x10x16xf32>,
    return
  }
  func.func @transform_0(%arg0: i32) -> (i32, i32, i32) {
    %c0_i32 = arith.constant 0 : i32
    %c0_i32_0 = arith.constant 0 : i32
    %c0_i32_1 = arith.constant 0 : i32
    return %arg0, %c0_i32, %c0_i32_0 : i32, i32, i32
  }
  func.func @transform_1(%arg0: i32) -> (i32, i32, i32) {
    %c0_i32 = arith.constant 0 : i32
    %c0_i32_0 = arith.constant 0 : i32
    %c0_i32_1 = arith.constant 0 : i32
    return %arg0, %c0_i32, %c0_i32_0 : i32, i32, i32
  }
  func.func @transform_2(%arg0: i32) -> (i32, i32, i32) {
    %c0_i32 = arith.constant 0 : i32
    %c0_i32_0 = arith.constant 0 : i32
    %c0_i32_1 = arith.constant 0 : i32
    return %arg0, %c0_i32, %c0_i32_0 : i32, i32, i32
  }
  func.func @transform_3(%arg0: i32) -> (i32, i32) {
    %c0_i32 = arith.constant 0 : i32
    %c0_i32_0 = arith.constant 0 : i32
    %c0_i32_1 = arith.constant 0 : i32
    return %c0_i32, %c0_i32_0 : i32, i32
  }
  func.func @transform_4(%arg0: i32) -> (i32, i32) {
    %c0_i32 = arith.constant 0 : i32
    %c0_i32_0 = arith.constant 0 : i32
    %c0_i32_1 = arith.constant 0 : i32
    return %c0_i32, %c0_i32_0 : i32, i32
  }
  func.func @transform_5(%arg0: i32) -> (i32, i32) {
    %c0_i32 = arith.constant 0 : i32
    %c0_i32_0 = arith.constant 0 : i32
    %c0_i32_1 = arith.constant 0 : i32
    return %c0_i32, %c0_i32_0 : i32, i32
  }
  func.func @transform_6(%arg0: i32) -> (i32, i32) {
    %c0_i32 = arith.constant 0 : i32
    %c0_i32_0 = arith.constant 0 : i32
    %c0_i32_1 = arith.constant 0 : i32
    return %c0_i32, %c0_i32_0 : i32, i32
  }
  func.func @transform_7(%arg0: i32) -> (i32, i32) {
    %c0_i32 = arith.constant 0 : i32
    %c0_i32_0 = arith.constant 0 : i32
    %c0_i32_1 = arith.constant 0 : i32
    return %c0_i32, %c0_i32_0 : i32, i32
  }
  func.func @transform_8(%arg0: i32) -> (i32, i32) {
    %c0_i32 = arith.constant 0 : i32
    %c0_i32_0 = arith.constant 0 : i32
    %c0_i32_1 = arith.constant 0 : i32
    return %c0_i32, %c0_i32_0 : i32, i32
  }
  func.func @transform_9(%arg0: i32) -> (i32, i32) {
    %c0_i32 = arith.constant 0 : i32
    %c0_i32_0 = arith.constant 0 : i32
    %c0_i32_1 = arith.constant 0 : i32
    return %c0_i32, %c0_i32_0 : i32, i32
  }
  func.func @transform_10(%arg0: i32) -> (i32, i32) {
    %c0_i32 = arith.constant 0 : i32
    %c0_i32_0 = arith.constant 0 : i32
    %c0_i32_1 = arith.constant 0 : i32
    return %c0_i32, %c0_i32_0 : i32, i32
  }
  func.func @transform_11(%arg0: i32) -> (i32, i32, i32) {
    %c0_i32 = arith.constant 0 : i32
    %c0_i32_0 = arith.constant 0 : i32
    %c0_i32_1 = arith.constant 0 : i32
    return %arg0, %c0_i32, %c0_i32_0 : i32, i32, i32
  }
  func.func @transform_12(%arg0: i32) -> (i32, i32, i32) {
    %c0_i32 = arith.constant 0 : i32
    %c0_i32_0 = arith.constant 0 : i32
    %c0_i32_1 = arith.constant 0 : i32
    return %arg0, %c0_i32, %c0_i32_0 : i32, i32, i32
  }
}

</mosaic_0001>

<llo_original>
// kernel: tpu_custom_call.1
$region0: #{tpu_custom_call.1}
  #allocation0 [shape = 'u32[]', space=smem, size = 0x4, offset = 0x4, fixed_abs, tag = 'smem constant byte address 0x4 - core index']
  #allocation1 [shape = 'u32[144,128]{1,0:T(1,128)}', space=vmem, size = 0x12000, scoped, tag = 'internal scratch']
  %s0 = inlined_call_operand.vmem [shape: f32[16,30,30], index: 0, kind: input, shape index: {}]
  %s1 = inlined_call_operand.vmem [shape: f32[16,22,22], index: 1, kind: input, shape index: {}]
  %s2 = inlined_call_operand.vmem [shape: f32[16,16,16], index: 2, kind: input, shape index: {}]
  %s3 = inlined_call_operand.vmem [shape: f32[28,16], index: 3, kind: input, shape index: {}]
  %s4 = inlined_call_operand.vmem [shape: f32[32,14], index: 4, kind: input, shape index: {}]
  %s5 = inlined_call_operand.vmem [shape: f32[19,16], index: 5, kind: input, shape index: {}]
  %s6 = inlined_call_operand.vmem [shape: f32[24,14], index: 6, kind: input, shape index: {}]
  %s7 = inlined_call_operand.vmem [shape: f32[20,16], index: 7, kind: input, shape index: {}]
  %s8 = inlined_call_operand.vmem [shape: f32[24,10], index: 8, kind: input, shape index: {}]
  %s9 = inlined_call_operand.vmem [shape: f32[13,16], index: 9, kind: input, shape index: {}]
  %s10 = inlined_call_operand.vmem [shape: f32[16,10], index: 10, kind: input, shape index: {}]
  %s11 = inlined_call_operand.vmem [shape: f32[16,14,16], index: 11, kind: output, shape index: {0}]
  %s12 = inlined_call_operand.vmem [shape: f32[16,10,16], index: 12, kind: output, shape index: {1}]
  %13 = xla_tuple %s11, %s12
  %s14 = sld [smem:[#allocation0]]
  $region85: #{tpu_custom_call.1} parent=0
    _
  %s16 = ssub.s32 1, %s14
  %s17 = scalar_select 0, %s16, %s14
  loop: start=0, step=1, limit=10
  $region2: #{tpu_custom_call.1} parent=0 // loop_pre_header
    _
  $region3: #{tpu_custom_call.1} parent=0 // loop_header
    %s19 = sphi 0, %s23
    %p20 = scmp.ge.s32.totalorder %s19, 10
    %s29 = sphi 0, %s31
    %s32 = sphi 0, %s29
    %s33 = sphi 0, %s32
    %s49 = sphi 0, %s33
    %s55 = sphi 0, %s57
    %s58 = sphi 0, %s55
    %s59 = sphi 0, %s58
    %s75 = sphi 0, %s59
    %s81 = sphi 0, %s83
    %s84 = sphi 0, %s81
    %s85 = sphi 0, %s84
    %s101 = sphi 0, %s85
    %s105 = sphi 0, %s105
    %s107 = sphi 0, %s105
    %s108 = sphi 0, %s107
    %s122 = sphi 0, %s108
    %s126 = sphi 0, %s126
    %s128 = sphi 0, %s126
    %s129 = sphi 0, %s128
    %s143 = sphi 0, %s129
    %s147 = sphi 0, %s147
    %s149 = sphi 0, %s147
    %s150 = sphi 0, %s149
    %s164 = sphi 0, %s150
    %s168 = sphi 0, %s168
    %s170 = sphi 0, %s168
    %s171 = sphi 0, %s170
    %s185 = sphi 0, %s171
    %s189 = sphi 0, %s189
    %s191 = sphi 0, %s189
    %s192 = sphi 0, %s191
    %s206 = sphi 0, %s192
    %s210 = sphi 0, %s210
    %s212 = sphi 0, %s210
    %s213 = sphi 0, %s212
    %s227 = sphi 0, %s213
    %s231 = sphi 0, %s231
    %s233 = sphi 0, %s231
    %s234 = sphi 0, %s233
    %s248 = sphi 0, %s234
    %s252 = sphi 0, %s252
    %s254 = sphi 0, %s252
    %s255 = sphi 0, %s254
    %s269 = sphi 0, %s255
    %s275 = sphi 0, %s277
    %s278 = sphi 0, %s275
    %s279 = sphi 0, %s278
    %s295 = sphi 0, %s279
    %s301 = sphi 0, %s303
    %s304 = sphi 0, %s301
    %s305 = sphi 0, %s304
    %s321 = sphi 0, %s305
  $region4: #{tpu_custom_call.1} parent=0 // loop_header_branch
    %22 = sbr.rel (%p20) target = $region8
  $region5: #{tpu_custom_call.1} parent=0 // loop_body
    %s24 = ssub.s32 %s19, 1
    %s25 = ssub.s32 %s19, 2
    %s26 = sadd.s32 %s19, 1
    %s27 = ssub.s32 %s19, %s26
    %p28 = scmp.eq.s32.totalorder %s27, 0
    %s30 = sadd.s32 %s29, 1
    %s31 = scalar_select %p28, %s29, %s30
    %p34 = pneg %p28
    %p35 = scmp.eq.s32.totalorder %s19, 7
    %p36 = por %p34, %p35
    %p37 = scmp.ne.s32.totalorder %s29, %s32
    %p38 = scmp.eq.s32.totalorder %s19, 0
    %p39 = por %p37, %p38
    %p40 = scmp.ne.s32.totalorder %s29, %s32
    %p41 = scmp.eq.s32.totalorder %s24, 7
    %p42 = por %p40, %p41
    %p43 = scmp.ne.s32.totalorder %s32, %s33
    %p44 = scmp.eq.s32.totalorder %s24, 0
    %p45 = por %p43, %p44
    %p46 = scmp.ne.s32.totalorder %s32, %s33
    %p47 = scmp.eq.s32.totalorder %s25, 7
    %p48 = por %p46, %p47
    %p50 = scmp.ne.s32.totalorder %s33, %s49
    %p51 = scmp.eq.s32.totalorder %s25, 0
    %p52 = por %p50, %p51
    %s53 = ssub.s32 %s19, %s26
    %p54 = scmp.eq.s32.totalorder %s53, 0
    %s56 = sadd.s32 %s55, 1
    %s57 = scalar_select %p54, %s55, %s56
    %p60 = pneg %p54
    %p61 = scmp.eq.s32.totalorder %s19, 7
    %p62 = por %p60, %p61
    %p63 = scmp.ne.s32.totalorder %s55, %s58
    %p64 = scmp.eq.s32.totalorder %s19, 0
    %p65 = por %p63, %p64
    %p66 = scmp.ne.s32.totalorder %s55, %s58
    %p67 = scmp.eq.s32.totalorder %s24, 7
    %p68 = por %p66, %p67
    %p69 = scmp.ne.s32.totalorder %s58, %s59
    %p70 = scmp.eq.s32.totalorder %s24, 0
    %p71 = por %p69, %p70
    %p72 = scmp.ne.s32.totalorder %s58, %s59
    %p73 = scmp.eq.s32.totalorder %s25, 7
    %p74 = por %p72, %p73
    %p76 = scmp.ne.s32.totalorder %s59, %s75
    %p77 = scmp.eq.s32.totalorder %s25, 0
    %p78 = por %p76, %p77
    %s79 = ssub.s32 %s19, %s26
    %p80 = scmp.eq.s32.totalorder %s79, 0
    %s82 = sadd.s32 %s81, 1
    %s83 = scalar_select %p80, %s81, %s82
    %p86 = pneg %p80
    %p87 = scmp.eq.s32.totalorder %s19, 7
    %p88 = por %p86, %p87
    %p89 = scmp.ne.s32.totalorder %s81, %s84
    %p90 = scmp.eq.s32.totalorder %s19, 0
    %p91 = por %p89, %p90
    %p92 = scmp.ne.s32.totalorder %s81, %s84
    %p93 = scmp.eq.s32.totalorder %s24, 7
    %p94 = por %p92, %p93
    %p95 = scmp.ne.s32.totalorder %s84, %s85
    %p96 = scmp.eq.s32.totalorder %s24, 0
    %p97 = por %p95, %p96
    %p98 = scmp.ne.s32.totalorder %s84, %s85
    %p99 = scmp.eq.s32.totalorder %s25, 7
    %p100 = por %p98, %p99
    %p102 = scmp.ne.s32.totalorder %s85, %s101
    %p103 = scmp.eq.s32.totalorder %s25, 0
    %p104 = por %p102, %p103
    %s106 = sadd.s32 %s105, 1
    %p109 = scmp.eq.s32.totalorder %s19, 7
    %p110 = scmp.ne.s32.totalorder %s105, %s107
    %p111 = scmp.eq.s32.totalorder %s19, 0
    %p112 = por %p110, %p111
    %p113 = scmp.ne.s32.totalorder %s105, %s107
    %p114 = scmp.eq.s32.totalorder %s24, 7
    %p115 = por %p113, %p114
    %p116 = scmp.ne.s32.totalorder %s107, %s108
    %p117 = scmp.eq.s32.totalorder %s24, 0
    %p118 = por %p116, %p117
    %p119 = scmp.ne.s32.totalorder %s107, %s108
    %p120 = scmp.eq.s32.totalorder %s25, 7
    %p121 = por %p119, %p120
    %p123 = scmp.ne.s32.totalorder %s108, %s122
    %p124 = scmp.eq.s32.totalorder %s25, 0
    %p125 = por %p123, %p124
    %s127 = sadd.s32 %s126, 1
    %p130 = scmp.eq.s32.totalorder %s19, 7
    %p131 = scmp.ne.s32.totalorder %s126, %s128
    %p132 = scmp.eq.s32.totalorder %s19, 0
    %p133 = por %p131, %p132
    %p134 = scmp.ne.s32.totalorder %s126, %s128
    %p135 = scmp.eq.s32.totalorder %s24, 7
    %p136 = por %p134, %p135
    %p137 = scmp.ne.s32.totalorder %s128, %s129
    %p138 = scmp.eq.s32.totalorder %s24, 0
    %p139 = por %p137, %p138
    %p140 = scmp.ne.s32.totalorder %s128, %s129
    %p141 = scmp.eq.s32.totalorder %s25, 7
    %p142 = por %p140, %p141
    %p144 = scmp.ne.s32.totalorder %s129, %s143
    %p145 = scmp.eq.s32.totalorder %s25, 0
    %p146 = por %p144, %p145
    %s148 = sadd.s32 %s147, 1
    %p151 = scmp.eq.s32.totalorder %s19, 7
    %p152 = scmp.ne.s32.totalorder %s147, %s149
    %p153 = scmp.eq.s32.totalorder %s19, 0
    %p154 = por %p152, %p153
    %p155 = scmp.ne.s32.totalorder %s147, %s149
    %p156 = scmp.eq.s32.totalorder %s24, 7
    %p157 = por %p155, %p156
    %p158 = scmp.ne.s32.totalorder %s149, %s150
    %p159 = scmp.eq.s32.totalorder %s24, 0
    %p160 = por %p158, %p159
    %p161 = scmp.ne.s32.totalorder %s149, %s150
    %p162 = scmp.eq.s32.totalorder %s25, 7
    %p163 = por %p161, %p162
    %p165 = scmp.ne.s32.totalorder %s150, %s164
    %p166 = scmp.eq.s32.totalorder %s25, 0
    %p167 = por %p165, %p166
    %s169 = sadd.s32 %s168, 1
    %p172 = scmp.eq.s32.totalorder %s19, 7
    %p173 = scmp.ne.s32.totalorder %s168, %s170
    %p174 = scmp.eq.s32.totalorder %s19, 0
    %p175 = por %p173, %p174
    %p176 = scmp.ne.s32.totalorder %s168, %s170
    %p177 = scmp.eq.s32.totalorder %s24, 7
    %p178 = por %p176, %p177
    %p179 = scmp.ne.s32.totalorder %s170, %s171
    %p180 = scmp.eq.s32.totalorder %s24, 0
    %p181 = por %p179, %p180
    %p182 = scmp.ne.s32.totalorder %s170, %s171
    %p183 = scmp.eq.s32.totalorder %s25, 7
    %p184 = por %p182, %p183
    %p186 = scmp.ne.s32.totalorder %s171, %s185
    %p187 = scmp.eq.s32.totalorder %s25, 0
    %p188 = por %p186, %p187
    %s190 = sadd.s32 %s189, 1
    %p193 = scmp.eq.s32.totalorder %s19, 7
    %p194 = scmp.ne.s32.totalorder %s189, %s191
    %p195 = scmp.eq.s32.totalorder %s19, 0
    %p196 = por %p194, %p195
    %p197 = scmp.ne.s32.totalorder %s189, %s191
    %p198 = scmp.eq.s32.totalorder %s24, 7
    %p199 = por %p197, %p198
    %p200 = scmp.ne.s32.totalorder %s191, %s192
    %p201 = scmp.eq.s32.totalorder %s24, 0
    %p202 = por %p200, %p201
    %p203 = scmp.ne.s32.totalorder %s191, %s192
    %p204 = scmp.eq.s32.totalorder %s25, 7
    %p205 = por %p203, %p204
    %p207 = scmp.ne.s32.totalorder %s192, %s206
    %p208 = scmp.eq.s32.totalorder %s25, 0
    %p209 = por %p207, %p208
    %s211 = sadd.s32 %s210, 1
    %p214 = scmp.eq.s32.totalorder %s19, 7
    %p215 = scmp.ne.s32.totalorder %s210, %s212
    %p216 = scmp.eq.s32.totalorder %s19, 0
    %p217 = por %p215, %p216
    %p218 = scmp.ne.s32.totalorder %s210, %s212
    %p219 = scmp.eq.s32.totalorder %s24, 7
    %p220 = por %p218, %p219
    %p221 = scmp.ne.s32.totalorder %s212, %s213
    %p222 = scmp.eq.s32.totalorder %s24, 0
    %p223 = por %p221, %p222
    %p224 = scmp.ne.s32.totalorder %s212, %s213
    %p225 = scmp.eq.s32.totalorder %s25, 7
    %p226 = por %p224, %p225
    %p228 = scmp.ne.s32.totalorder %s213, %s227
    %p229 = scmp.eq.s32.totalorder %s25, 0
    %p230 = por %p228, %p229
    %s232 = sadd.s32 %s231, 1
    %p235 = scmp.eq.s32.totalorder %s19, 7
    %p236 = scmp.ne.s32.totalorder %s231, %s233
    %p237 = scmp.eq.s32.totalorder %s19, 0
    %p238 = por %p236, %p237
    %p239 = scmp.ne.s32.totalorder %s231, %s233
    %p240 = scmp.eq.s32.totalorder %s24, 7
    %p241 = por %p239, %p240
    %p242 = scmp.ne.s32.totalorder %s233, %s234
    %p243 = scmp.eq.s32.totalorder %s24, 0
    %p244 = por %p242, %p243
    %p245 = scmp.ne.s32.totalorder %s233, %s234
    %p246 = scmp.eq.s32.totalorder %s25, 7
    %p247 = por %p245, %p246
    %p249 = scmp.ne.s32.totalorder %s234, %s248
    %p250 = scmp.eq.s32.totalorder %s25, 0
    %p251 = por %p249, %p250
    %s253 = sadd.s32 %s252, 1
    %p256 = scmp.eq.s32.totalorder %s19, 7
    %p257 = scmp.ne.s32.totalorder %s252, %s254
    %p258 = scmp.eq.s32.totalorder %s19, 0
    %p259 = por %p257, %p258
    %p260 = scmp.ne.s32.totalorder %s252, %s254
    %p261 = scmp.eq.s32.totalorder %s24, 7
    %p262 = por %p260, %p261
    %p263 = scmp.ne.s32.totalorder %s254, %s255
    %p264 = scmp.eq.s32.totalorder %s24, 0
    %p265 = por %p263, %p264
    %p266 = scmp.ne.s32.totalorder %s254, %s255
    %p267 = scmp.eq.s32.totalorder %s25, 7
    %p268 = por %p266, %p267
    %p270 = scmp.ne.s32.totalorder %s255, %s269
    %p271 = scmp.eq.s32.totalorder %s25, 0
    %p272 = por %p270, %p271
    %s273 = ssub.s32 %s19, %s26
    %p274 = scmp.eq.s32.totalorder %s273, 0
    %s276 = sadd.s32 %s275, 1
    %s277 = scalar_select %p274, %s275, %s276
    %p280 = pneg %p274
    %p281 = scmp.eq.s32.totalorder %s19, 7
    %p282 = por %p280, %p281
    %p283 = scmp.ne.s32.totalorder %s275, %s278
    %p284 = scmp.eq.s32.totalorder %s19, 0
    %p285 = por %p283, %p284
    %p286 = scmp.ne.s32.totalorder %s275, %s278
    %p287 = scmp.eq.s32.totalorder %s24, 7
    %p288 = por %p286, %p287
    %p289 = scmp.ne.s32.totalorder %s278, %s279
    %p290 = scmp.eq.s32.totalorder %s24, 0
    %p291 = por %p289, %p290
    %p292 = scmp.ne.s32.totalorder %s278, %s279
    %p293 = scmp.eq.s32.totalorder %s25, 7
    %p294 = por %p292, %p293
    %p296 = scmp.ne.s32.totalorder %s279, %s295
    %p297 = scmp.eq.s32.totalorder %s25, 0
    %p298 = por %p296, %p297
    %s299 = ssub.s32 %s19, %s26
    %p300 = scmp.eq.s32.totalorder %s299, 0
    %s302 = sadd.s32 %s301, 1
    %s303 = scalar_select %p300, %s301, %s302
    %p306 = pneg %p300
    %p307 = scmp.eq.s32.totalorder %s19, 7
    %p308 = por %p306, %p307
    %p309 = scmp.ne.s32.totalorder %s301, %s304
    %p310 = scmp.eq.s32.totalorder %s19, 0
    %p311 = por %p309, %p310
    %p312 = scmp.ne.s32.totalorder %s301, %s304
    %p313 = scmp.eq.s32.totalorder %s24, 7
    %p314 = por %p312, %p313
    %p315 = scmp.ne.s32.totalorder %s304, %s305
    %p316 = scmp.eq.s32.totalorder %s24, 0
    %p317 = por %p315, %p316
    %p318 = scmp.ne.s32.totalorder %s304, %s305
    %p319 = scmp.eq.s32.totalorder %s25, 7
    %p320 = por %p318, %p319
    %p322 = scmp.ne.s32.totalorder %s305, %s321
    %p323 = scmp.eq.s32.totalorder %s25, 0
    %p324 = por %p322, %p323
    %p325 = scmp.le.s32.totalorder 1, %s19
    %p326 = scmp.lt.s32.totalorder %s19, 9
    %p327 = pnand %p325, %p326
    %p328 = pneg %p327
    // Predicated region
    $region9: #{tpu_custom_call.1} parent=5 // pred_check
      _
    $region10: #{tpu_custom_call.1} parent=5 // pred_check_branch
      %330 = sbr.rel (%p327) target = $region12
    $region11: #{tpu_custom_call.1} parent=5 // pred_region
      %s331 = ssub.s32 %s19, 1
      // Predicated region
      $region13: #{tpu_custom_call.1} parent=11 // pred_check
        %p332 = pneg %p118
      $region14: #{tpu_custom_call.1} parent=11 // pred_check_branch
        %334 = sbr.rel (%p332) target = $region16
      $region15: #{tpu_custom_call.1} parent=11 // pred_region
        _
      $region16: #{tpu_custom_call.1} parent=11 // pred_fallthru
        _
      // Predicated region
      $region17: #{tpu_custom_call.1} parent=11 // pred_check
        %p335 = pneg %p139
      $region18: #{tpu_custom_call.1} parent=11 // pred_check_branch
        %337 = sbr.rel (%p335) target = $region20
      $region19: #{tpu_custom_call.1} parent=11 // pred_region
        _
      $region20: #{tpu_custom_call.1} parent=11 // pred_fallthru
        _
      // Predicated region
      $region21: #{tpu_custom_call.1} parent=11 // pred_check
        %p338 = pneg %p160
      $region22: #{tpu_custom_call.1} parent=11 // pred_check_branch
        %340 = sbr.rel (%p338) target = $region24
      $region23: #{tpu_custom_call.1} parent=11 // pred_region
        _
      $region24: #{tpu_custom_call.1} parent=11 // pred_fallthru
        _
      // Predicated region
      $region25: #{tpu_custom_call.1} parent=11 // pred_check
        %p341 = pneg %p181
      $region26: #{tpu_custom_call.1} parent=11 // pred_check_branch
        %343 = sbr.rel (%p341) target = $region28
      $region27: #{tpu_custom_call.1} parent=11 // pred_region
        _
      $region28: #{tpu_custom_call.1} parent=11 // pred_fallthru
        _
      // Predicated region
      $region29: #{tpu_custom_call.1} parent=11 // pred_check
        %p344 = pneg %p202
      $region30: #{tpu_custom_call.1} parent=11 // pred_check_branch
        %346 = sbr.rel (%p344) target = $region32
      $region31: #{tpu_custom_call.1} parent=11 // pred_region
        _
      $region32: #{tpu_custom_call.1} parent=11 // pred_fallthru
        _
      // Predicated region
      $region33: #{tpu_custom_call.1} parent=11 // pred_check
        %p347 = pneg %p223
      $region34: #{tpu_custom_call.1} parent=11 // pred_check_branch
        %349 = sbr.rel (%p347) target = $region36
      $region35: #{tpu_custom_call.1} parent=11 // pred_region
        _
      $region36: #{tpu_custom_call.1} parent=11 // pred_fallthru
        _
      // Predicated region
      $region37: #{tpu_custom_call.1} parent=11 // pred_check
        %p350 = pneg %p244
      $region38: #{tpu_custom_call.1} parent=11 // pred_check_branch
        %352 = sbr.rel (%p350) target = $region40
      $region39: #{tpu_custom_call.1} parent=11 // pred_region
        _
      $region40: #{tpu_custom_call.1} parent=11 // pred_fallthru
        _
      // Predicated region
      $region41: #{tpu_custom_call.1} parent=11 // pred_check
        %p353 = pneg %p265
      $region42: #{tpu_custom_call.1} parent=11 // pred_check_branch
        %355 = sbr.rel (%p353) target = $region44
      $region43: #{tpu_custom_call.1} parent=11 // pred_region
        _
      $region44: #{tpu_custom_call.1} parent=11 // pred_fallthru
        _
    $region12: #{tpu_custom_call.1} parent=5 // pred_fallthru
      _
    %p356 = scmp.lt.s32.totalorder %s19, 8
    // Predicated region
    $region45: #{tpu_custom_call.1} parent=5 // pred_check
      %p357 = pneg %p356
    $region46: #{tpu_custom_call.1} parent=5 // pred_check_branch
      %359 = sbr.rel (%p357) target = $region48
    $region47: #{tpu_custom_call.1} parent=5 // pred_region
      // Predicated region
      $region49: #{tpu_custom_call.1} parent=47 // pred_check
        %p360 = pneg %p39
      $region50: #{tpu_custom_call.1} parent=47 // pred_check_branch
        %362 = sbr.rel (%p360) target = $region52
      $region51: #{tpu_custom_call.1} parent=47 // pred_region
        %s363 = smul.u32 2, %s19
        %p364 = scmp.lt.s32.totalorder %s363, 15
        %s365 = scalar_select %p364, %s363, 15
        %s366 = smul.addr %s365, 4
        %s367 = smul.addr %s366, 8
        %s368 = scalar_lea.vmem %s0, %s367
        %s369 = smul.u32 2, %s19
      $region52: #{tpu_custom_call.1} parent=47 // pred_fallthru
        _
      // Predicated region
      $region53: #{tpu_custom_call.1} parent=47 // pred_check
        %p370 = pneg %p65
      $region54: #{tpu_custom_call.1} parent=47 // pred_check_branch
        %372 = sbr.rel (%p370) target = $region56
      $region55: #{tpu_custom_call.1} parent=47 // pred_region
        %s373 = smul.u32 2, %s19
        %p374 = scmp.lt.s32.totalorder %s373, 15
        %s375 = scalar_select %p374, %s373, 15
        %s376 = smul.addr %s375, 3
        %s377 = smul.addr %s376, 8
        %s378 = scalar_lea.vmem %s1, %s377
        %s379 = smul.u32 2, %s19
      $region56: #{tpu_custom_call.1} parent=47 // pred_fallthru
        _
      // Predicated region
      $region57: #{tpu_custom_call.1} parent=47 // pred_check
        %p380 = pneg %p91
      $region58: #{tpu_custom_call.1} parent=47 // pred_check_branch
        %382 = sbr.rel (%p380) target = $region60
      $region59: #{tpu_custom_call.1} parent=47 // pred_region
        %s383 = smul.u32 2, %s19
        %p384 = scmp.lt.s32.totalorder %s383, 15
        %s385 = scalar_select %p384, %s383, 15
        %s386 = smul.addr %s385, 2
        %s387 = smul.addr %s386, 8
        %s388 = scalar_lea.vmem %s2, %s387
        %s389 = smul.u32 2, %s19
      $region60: #{tpu_custom_call.1} parent=47 // pred_fallthru
        _
    $region48: #{tpu_custom_call.1} parent=5 // pred_fallthru
      _
    %p390 = scmp.le.s32.totalorder 1, %s19
    %p391 = scmp.lt.s32.totalorder %s19, 9
    %p392 = pnand %p390, %p391
    %p393 = pneg %p392
    // Predicated region
    $region61: #{tpu_custom_call.1} parent=5 // pred_check
      _
    $region62: #{tpu_custom_call.1} parent=5 // pred_check_branch
      %395 = sbr.rel (%p392) target = $region64
    $region63: #{tpu_custom_call.1} parent=5 // pred_region
      %s396 = ssub.s32 %s19, 1
      %s397 = smul.u32 2, %s24
      %p398 = scmp.lt.s32.totalorder %s397, 15
      %s399 = scalar_select %p398, %s397, 15
      %s400 = smul.addr %s399, 4
      %s401 = smul.addr %s400, 8
      %s402 = scalar_lea.vmem %s0, %s401
      %p403 = pneg %p45
      %p404 = pneg %p42
      %s405 = smul.u32 2, %s24
      %p406 = scmp.lt.s32.totalorder %s405, 15
      %s407 = scalar_select %p406, %s405, 15
      %s408 = smul.addr %s407, 3
      %s409 = smul.addr %s408, 8
      %s410 = scalar_lea.vmem %s1, %s409
      %p411 = pneg %p71
      %p412 = pneg %p68
      %s413 = smul.u32 2, %s24
      %p414 = scmp.lt.s32.totalorder %s413, 15
      %s415 = scalar_select %p414, %s413, 15
      %s416 = smul.addr %s415, 2
      %s417 = smul.addr %s416, 8
      %s418 = scalar_lea.vmem %s2, %s417
      %p419 = pneg %p97
      %p420 = pneg %p94
      %p421 = pneg %p118
      %p422 = pneg %p115
      %p423 = pneg %p139
      %p424 = pneg %p136
      %p425 = pneg %p160
      %p426 = pneg %p157
      %p427 = pneg %p181
      %p428 = pneg %p178
      %p429 = pneg %p202
      %p430 = pneg %p199
      %p431 = pneg %p223
      %p432 = pneg %p220
      %p433 = pneg %p244
      %p434 = pneg %p241
      %p435 = pneg %p265
      %p436 = pneg %p262
      %p437 = pneg %p291
      %p438 = pneg %p288
      %s439 = smul.u32 2, %s24
      %p440 = scmp.lt.s32.totalorder %s439, 15
      %s441 = scalar_select %p440, %s439, 15
      %s442 = smul.addr %s441, 2
      %s443 = smul.addr %s442, 8
      %s444 = scalar_lea.vmem %s11, %s443
      %p445 = pneg %p317
      %p446 = pneg %p314
      %s447 = smul.u32 2, %s24
      %p448 = scmp.lt.s32.totalorder %s447, 15
      %s449 = scalar_select %p448, %s447, 15
      %s450 = smul.addr %s449, 2
      %s451 = smul.addr %s450, 8
      %s452 = scalar_lea.vmem %s12, %s451
      %s453 = smul.u32 2, %s24
      %p454 = scmp.lt.s32.totalorder %s453, 15
      %s455 = scalar_select %p454, %s453, 15
      %s456 = smul.addr %s455, 4
      %s457 = smul.addr %s456, 8
      %s458 = scalar_lea.vmem %s0, %s457
      %s459 = smul.u32 2, %s24
      %s460 = smul.u32 2, %s24
      %p461 = scmp.lt.s32.totalorder %s460, 15
      %s462 = scalar_select %p461, %s460, 15
      %s463 = smul.addr %s462, 3
      %s464 = smul.addr %s463, 8
      %s465 = scalar_lea.vmem %s1, %s464
      %s466 = smul.u32 2, %s24
      %s467 = smul.u32 2, %s24
      %p468 = scmp.lt.s32.totalorder %s467, 15
      %s469 = scalar_select %p468, %s467, 15
      %s470 = smul.addr %s469, 2
      %s471 = smul.addr %s470, 8
      %s472 = scalar_lea.vmem %s2, %s471
      %s473 = smul.u32 2, %s24
      %s474 = smul.u32 2, %s24
      %p475 = scmp.lt.s32.totalorder %s474, 15
      %s476 = scalar_select %p475, %s474, 15
      %s477 = smul.addr %s476, 2
      %s478 = smul.addr %s477, 8
      %s479 = scalar_lea.vmem %s11, %s478
      %s480 = smul.u32 2, %s24
      %s481 = smul.u32 2, %s24
      %p482 = scmp.lt.s32.totalorder %s481, 15
      %s483 = scalar_select %p482, %s481, 15
      %s484 = smul.addr %s483, 2
      %s485 = smul.addr %s484, 8
      %s486 = scalar_lea.vmem %s12, %s485
      %s487 = smul.u32 2, %s24
      %v488 = vld [vmem:[%s458] sm:$0xff]
      %v489 = vld [vmem:[%s458 + $0x8] sm:$0xff]
      %v490 = vld [vmem:[%s458 + $0x10] sm:$0xff]
      %v491 = vld [vmem:[%s458 + $0x18] sm:$0x3f]
      %v492 = vld [vmem:[%s458 + $0x20] sm:$0xff]
      %v493 = vld [vmem:[%s458 + $0x28] sm:$0xff]
      %v494 = vld [vmem:[%s458 + $0x30] sm:$0xff]
      %v495 = vld [vmem:[%s458 + $0x38] sm:$0x3f]
      %v496 = vld [vmem:[%s465] sm:$0xff]
      %v497 = vld [vmem:[%s465 + $0x8] sm:$0xff]
      %v498 = vld [vmem:[%s465 + $0x10] sm:$0x3f]
      %v499 = vld [vmem:[%s465 + $0x18] sm:$0xff]
      %v500 = vld [vmem:[%s465 + $0x20] sm:$0xff]
      %v501 = vld [vmem:[%s465 + $0x28] sm:$0x3f]
      %v502 = vld [vmem:[%s472] sm:$0xff]
      %v503 = vld [vmem:[%s472 + $0x8] sm:$0xff]
      %v504 = vld [vmem:[%s472 + $0x10] sm:$0xff]
      %v505 = vld [vmem:[%s472 + $0x18] sm:$0xff]
      %v506 = vld [vmem:[%s3] sm:$0xff]
      %v507 = vld [vmem:[%s3 + $0x8] sm:$0xff]
      %v508 = vld [vmem:[%s3 + $0x10] sm:$0xff]
      %v509 = vld [vmem:[%s3 + $0x18] sm:$0xf]
      %v510 = vld [vmem:[%s4] sm:$0xff]
      %v511 = vld [vmem:[%s4 + $0x8] sm:$0xff]
      %v512 = vld [vmem:[%s4 + $0x10] sm:$0xff]
      %v513 = vld [vmem:[%s4 + $0x18] sm:$0xff]
      %522 = vrot.lane.b32.xlu0 %v488, 127
      %v523 = vpop.permute.xlu0 %522
      %524 = vrot.lane.b32.xlu0 %v489, 127
      %v525 = vpop.permute.xlu0 %524
      %526 = vrot.lane.b32.xlu0 %v490, 127
      %v527 = vpop.permute.xlu0 %526
      %528 = vrot.lane.b32.xlu0 %v491, 127
      %v529 = vpop.permute.xlu0 %528
      %530 = vrot.lane.b32.xlu0 %v492, 127
      %v531 = vpop.permute.xlu0 %530
      %532 = vrot.lane.b32.xlu0 %v493, 127
      %v533 = vpop.permute.xlu0 %532
      %534 = vrot.lane.b32.xlu0 %v494, 127
      %v535 = vpop.permute.xlu0 %534
      %536 = vrot.lane.b32.xlu0 %v495, 127
      %v537 = vpop.permute.xlu0 %536
      %v546 = vmax.f32 %v488, %v523
      %v547 = vmax.f32 %v489, %v525
      %v548 = vmax.f32 %v490, %v527
      %v549 = vmax.f32 %v491, %v529
      %v550 = vmax.f32 %v492, %v531
      %v551 = vmax.f32 %v493, %v533
      %v552 = vmax.f32 %v494, %v535
      %v553 = vmax.f32 %v495, %v537
      %554 = vrot.lane.b32.xlu0 %v488, 126
      %v555 = vpop.permute.xlu0 %554
      %556 = vrot.lane.b32.xlu0 %v489, 126
      %v557 = vpop.permute.xlu0 %556
      %558 = vrot.lane.b32.xlu0 %v490, 126
      %v559 = vpop.permute.xlu0 %558
      %560 = vrot.lane.b32.xlu0 %v491, 126
      %v561 = vpop.permute.xlu0 %560
      %562 = vrot.lane.b32.xlu0 %v492, 126
      %v563 = vpop.permute.xlu0 %562
      %564 = vrot.lane.b32.xlu0 %v493, 126
      %v565 = vpop.permute.xlu0 %564
      %566 = vrot.lane.b32.xlu0 %v494, 126
      %v567 = vpop.permute.xlu0 %566
      %568 = vrot.lane.b32.xlu0 %v495, 126
      %v569 = vpop.permute.xlu0 %568
      %v578 = vmax.f32 %v546, %v555
      %v579 = vmax.f32 %v547, %v557
      %v580 = vmax.f32 %v548, %v559
      %v581 = vmax.f32 %v549, %v561
      %v582 = vmax.f32 %v550, %v563
      %v583 = vmax.f32 %v551, %v565
      %v584 = vmax.f32 %v552, %v567
      %v585 = vmax.f32 %v553, %v569
      %vm594 = vcmask 1046528
      %v595 = vrot.slane %v578, 1
      %v596 = vrot.slane %v579, 1
      %v597 = vsel %vm594, %v595, %v596
      %v598 = vrot.slane %v580, 1
      %v599 = vsel %vm594, %v596, %v598
      %v600 = vrot.slane %v581, 1
      %v601 = vsel %vm594, %v598, %v600
      %v602 = vrot.slane %v582, 1
      %v603 = vrot.slane %v583, 1
      %v604 = vsel %vm594, %v602, %v603
      %v605 = vrot.slane %v584, 1
      %v606 = vsel %vm594, %v603, %v605
      %v607 = vrot.slane %v585, 1
      %v608 = vsel %vm594, %v605, %v607
      %v617 = vmax.f32 %v578, %v597
      %v618 = vmax.f32 %v579, %v599
      %v619 = vmax.f32 %v580, %v601
      %v620 = vmax.f32 %v581, %v600
      %v621 = vmax.f32 %v582, %v604
      %v622 = vmax.f32 %v583, %v606
      %v623 = vmax.f32 %v584, %v608
      %v624 = vmax.f32 %v585, %v607
      %vm625 = vcmask 1045504
      %v626 = vrot.slane %v578, 2
      %v627 = vrot.slane %v579, 2
      %v628 = vsel %vm625, %v626, %v627
      %v629 = vrot.slane %v580, 2
      %v630 = vsel %vm625, %v627, %v629
      %v631 = vrot.slane %v581, 2
      %v632 = vsel %vm625, %v629, %v631
      %v633 = vrot.slane %v582, 2
      %v634 = vrot.slane %v583, 2
      %v635 = vsel %vm625, %v633, %v634
      %v636 = vrot.slane %v584, 2
      %v637 = vsel %vm625, %v634, %v636
      %v638 = vrot.slane %v585, 2
      %v639 = vsel %vm625, %v636, %v638
      %v648 = vmax.f32 %v617, %v628
      %v649 = vmax.f32 %v618, %v630
      %v650 = vmax.f32 %v619, %v632
      %v651 = vmax.f32 %v620, %v631
      %v652 = vmax.f32 %v621, %v635
      %v653 = vmax.f32 %v622, %v637
      %v654 = vmax.f32 %v623, %v639
      %v655 = vmax.f32 %v624, %v638
      %vm656 = vcmask 1043456
      %v657 = vsel %vm656, %v651, 0.0
      %v658 = vsel %vm656, %v655, 0.0
      %vm659 = vcmask 228352
      %v661 = vsel %vm659, %v648, 0
      %v664 = vsel %vm659, %v649, 0
      %v667 = vsel %vm659, %v650, 0
      %v670 = vsel %vm659, %v657, 0
      %v673 = vsel %vm659, %v652, 0
      %v676 = vsel %vm659, %v653, 0
      %v679 = vsel %vm659, %v654, 0
      %v682 = vsel %vm659, %v658, 0
      %v685 = vsel %vm656, %v509, 0
      %687 = vmatprep.subr.mxu0 0.0
      %v688 = vand.u32 %v506, 4294901760
      %689 = vmatpush1.msra.mxu0 %v688
      %690 = vmatprep.subr.mxu0 0.0
      %v691 = vand.u32 %v507, 4294901760
      %692 = vmatpush1.msra.mxu0 %v691
      %693 = vmatprep.subr.mxu0 0.0
      %v694 = vand.u32 %v508, 4294901760
      %695 = vmatpush1.msra.mxu0 %v694
      %696 = vmatprep.subr.mxu0 0.0
      %v697 = vand.u32 %v685, 4294901760
      %698 = vmatpush1.msra.mxu0 %v697
      %699 = vmatprep.subr.mxu0 0.0
      %700 = vmatpush1.msra.mxu0 0.0
      %701 = vmatprep.subr.mxu0 0.0
      %702 = vmatpush1.msra.mxu0 0.0
      %703 = vmatprep.subr.mxu0 0.0
      %704 = vmatpush1.msra.mxu0 0.0
      %705 = vmatprep.subr.mxu0 0.0
      %706 = vmatpush1.msra.mxu0 0.0
      %707 = vmatprep.subr.mxu0 0.0
      %708 = vmatpush1.msra.mxu0 0.0
      %709 = vmatprep.subr.mxu0 0.0
      %710 = vmatpush1.msra.mxu0 0.0
      %711 = vmatprep.subr.mxu0 0.0
      %712 = vmatpush1.msra.mxu0 0.0
      %713 = vmatprep.subr.mxu0 0.0
      %714 = vmatpush1.msra.mxu0 0.0
      %715 = vmatprep.subr.mxu0 0.0
      %716 = vmatpush1.msra.mxu0 0.0
      %717 = vmatprep.subr.mxu0 0.0
      %718 = vmatpush1.msra.mxu0 0.0
      %719 = vmatprep.subr.mxu0 0.0
      %720 = vmatpush1.msra.mxu0 0.0
      %721 = vmatprep.subr.mxu0 0.0
      %722 = vmatpush1.msra.mxu0 0.0
      %723 = vmatprep.subr.mxu0 0.0
      %724 = vmatpush1.msra.mxu0 0.0
      %725 = vmatprep.subr.mxu0 0.0
      %726 = vmatpush1.msra.mxu0 0.0
      %727 = vmatprep.subr.mxu0 0.0
      %728 = vmatpush1.msra.mxu0 0.0
      %729 = vmatprep.subr.mxu0 0.0
      %730 = vmatpush1.msra.mxu0 0.0
      %731 = vmatprep.subr.mxu0 0.0
      %732 = vmatpush1.msra.mxu0 0.0
      %733 = vmatprep.subr.mxu0 0.0
      %734 = vmatpush1.msra.mxu0 0.0
      %735 = vmatprep.subr.mxu0 0.0
      %736 = vmatpush1.msra.mxu0 0.0
      %737 = vmatprep.subr.mxu0 0.0
      %738 = vmatpush1.msra.mxu0 0.0
      %739 = vmatprep.subr.mxu0 0.0
      %740 = vmatpush1.msra.mxu0 0.0
      %741 = vmatprep.subr.mxu0 0.0
      %742 = vmatpush1.msra.mxu0 0.0
      %743 = vmatprep.subr.mxu0 0.0
      %744 = vmatpush1.msra.mxu0 0.0
      %745 = vmatprep.subr.mxu0 0.0
      %746 = vmatpush1.msra.mxu0 0.0
      %747 = vmatprep.subr.mxu0 0.0
      %748 = vmatpush1.msra.mxu0 0.0
      %749 = vmatprep.subr.mxu0 0.0
      %750 = vmatpush1.msra.mxu0 0.0
      %751 = vmatprep.subr.mxu0 0.0
      %752 = vmatpush1.msra.mxu0 0.0
      %753 = vmatprep.subr.mxu0 0.0
      %754 = vmatpush1.msra.mxu0 0.0
      %755 = vmatprep.mubr.f32.mxu0 0.0
      %v756 = vand.u32 %v661, 4294901760
      %v757 = vsub.f32 %v661, %v756
      %v758 = vand.u32 %v757, 4294901760
      %v759 = vsub.f32 %v757, %v758
      %v760 = vand.u32 %v759, 4294901760
      %761 = vmatmul.mubr.f32.gmra.mrb[0].mxu0 %v760
      %v762 = vpop.f32.mrb[0].mxu0
      %v763 = vadd.f32 0.0, %v762
      %v764 = vpop.f32.mrb[0].mxu0
      %765 = vmatprep.mubr.f32.mxu0 0.0
      %v766 = vand.u32 %v664, 4294901760
      %v767 = vsub.f32 %v664, %v766
      %v768 = vand.u32 %v767, 4294901760
      %v769 = vsub.f32 %v767, %v768
      %v770 = vand.u32 %v769, 4294901760
      %771 = vmatmul.mubr.f32.gmra.mrb[0].mxu0 %v770
      %v772 = vpop.f32.mrb[0].mxu0
      %v773 = vadd.f32 0.0, %v772
      %v774 = vpop.f32.mrb[0].mxu0
      %775 = vmatprep.mubr.f32.mxu0 0.0
      %v776 = vand.u32 %v667, 4294901760
      %v777 = vsub.f32 %v667, %v776
      %v778 = vand.u32 %v777, 4294901760
      %v779 = vsub.f32 %v777, %v778
      %v780 = vand.u32 %v779, 4294901760
      %781 = vmatmul.mubr.f32.gmra.mrb[0].mxu0 %v780
      %v782 = vpop.f32.mrb[0].mxu0
      %v783 = vadd.f32 0.0, %v782
      %v784 = vpop.f32.mrb[0].mxu0
      %785 = vmatprep.mubr.f32.mxu0 0.0
      %v786 = vand.u32 %v670, 4294901760
      %v787 = vsub.f32 %v670, %v786
      %v788 = vand.u32 %v787, 4294901760
      %v789 = vsub.f32 %v787, %v788
      %v790 = vand.u32 %v789, 4294901760
      %791 = vmatmul.mubr.f32.gmra.mrb[0].mxu0 %v790
      %v792 = vpop.f32.mrb[0].mxu0
      %v793 = vadd.f32 0.0, %v792
      %v794 = vpop.f32.mrb[0].mxu0
      %795 = vmatprep.mubr.f32.mxu0 0.0
      %v796 = vand.u32 %v673, 4294901760
      %v797 = vsub.f32 %v673, %v796
      %v798 = vand.u32 %v797, 4294901760
      %v799 = vsub.f32 %v797, %v798
      %v800 = vand.u32 %v799, 4294901760
      %801 = vmatmul.mubr.f32.gmra.mrb[0].mxu0 %v800
      %v802 = vpop.f32.mrb[0].mxu0
      %v803 = vadd.f32 0.0, %v802
      %v804 = vpop.f32.mrb[0].mxu0
      %805 = vmatprep.mubr.f32.mxu0 0.0
      %v806 = vand.u32 %v676, 4294901760
      %v807 = vsub.f32 %v676, %v806
      %v808 = vand.u32 %v807, 4294901760
      %v809 = vsub.f32 %v807, %v808
      %v810 = vand.u32 %v809, 4294901760
      %811 = vmatmul.mubr.f32.gmra.mrb[0].mxu0 %v810
      %v812 = vpop.f32.mrb[0].mxu0
      %v813 = vadd.f32 0.0, %v812
      %v814 = vpop.f32.mrb[0].mxu0
      %815 = vmatprep.mubr.f32.mxu0 0.0
      %v816 = vand.u32 %v679, 4294901760
      %v817 = vsub.f32 %v679, %v816
      %v818 = vand.u32 %v817, 4294901760
      %v819 = vsub.f32 %v817, %v818
      %v820 = vand.u32 %v819, 4294901760
      %821 = vmatmul.mubr.f32.gmra.mrb[0].mxu0 %v820
      %v822 = vpop.f32.mrb[0].mxu0
      %v823 = vadd.f32 0.0, %v822
      %v824 = vpop.f32.mrb[0].mxu0
      %825 = vmatprep.mubr.f32.mxu0 0.0
      %v826 = vand.u32 %v682, 4294901760
      %v827 = vsub.f32 %v682, %v826
      %v828 = vand.u32 %v827, 4294901760
      %v829 = vsub.f32 %v827, %v828
      %v830 = vand.u32 %v829, 4294901760
      %831 = vmatmul.mubr.f32.gmra.mrb[0].mxu0 %v830
      %v832 = vpop.f32.mrb[0].mxu0
      %v833 = vadd.f32 0.0, %v832
      %v834 = vpop.f32.mrb[0].mxu0
      %835 = vdwg.mxu0
      %836 = vmatprep.subr.mxu0 0.0
      %v837 = vand.u32 %v506, 4294901760
      %v838 = vsub.f32 %v506, %v837
      %v839 = vand.u32 %v838, 4294901760
      %v840 = vsub.f32 %v838, %v839
      %v841 = vand.u32 %v840, 4294901760
      %842 = vmatpush1.msra.mxu0 %v841
      %843 = vmatprep.subr.mxu0 0.0
      %v844 = vand.u32 %v507, 4294901760
      %v845 = vsub.f32 %v507, %v844
      %v846 = vand.u32 %v845, 4294901760
      %v847 = vsub.f32 %v845, %v846
      %v848 = vand.u32 %v847, 4294901760
      %849 = vmatpush1.msra.mxu0 %v848
      %850 = vmatprep.subr.mxu0 0.0
      %v851 = vand.u32 %v508, 4294901760
      %v852 = vsub.f32 %v508, %v851
      %v853 = vand.u32 %v852, 4294901760
      %v854 = vsub.f32 %v852, %v853
      %v855 = vand.u32 %v854, 4294901760
      %856 = vmatpush1.msra.mxu0 %v855
      %857 = vmatprep.subr.mxu0 0.0
      %v858 = vand.u32 %v685, 4294901760
      %v859 = vsub.f32 %v685, %v858
      %v860 = vand.u32 %v859, 4294901760
      %v861 = vsub.f32 %v859, %v860
      %v862 = vand.u32 %v861, 4294901760
      %863 = vmatpush1.msra.mxu0 %v862
      %864 = vmatprep.subr.mxu0 0.0
      %865 = vmatpush1.msra.mxu0 0.0
      %866 = vmatprep.subr.mxu0 0.0
      %867 = vmatpush1.msra.mxu0 0.0
      %868 = vmatprep.subr.mxu0 0.0
      %869 = vmatpush1.msra.mxu0 0.0
      %870 = vmatprep.subr.mxu0 0.0
      %871 = vmatpush1.msra.mxu0 0.0
      %872 = vmatprep.subr.mxu0 0.0
      %873 = vmatpush1.msra.mxu0 0.0
      %874 = vmatprep.subr.mxu0 0.0
      %875 = vmatpush1.msra.mxu0 0.0
      %876 = vmatprep.subr.mxu0 0.0
      %877 = vmatpush1.msra.mxu0 0.0
      %878 = vmatprep.subr.mxu0 0.0
      %879 = vmatpush1.msra.mxu0 0.0
      %880 = vmatprep.subr.mxu0 0.0
      %881 = vmatpush1.msra.mxu0 0.0
      %882 = vmatprep.subr.mxu0 0.0
      %883 = vmatpush1.msra.mxu0 0.0
      %884 = vmatprep.subr.mxu0 0.0
      %885 = vmatpush1.msra.mxu0 0.0
      %886 = vmatprep.subr.mxu0 0.0
      %887 = vmatpush1.msra.mxu0 0.0
      %888 = vmatprep.subr.mxu0 0.0
      %889 = vmatpush1.msra.mxu0 0.0
      %890 = vmatprep.subr.mxu0 0.0
      %891 = vmatpush1.msra.mxu0 0.0
      %892 = vmatprep.subr.mxu0 0.0
      %893 = vmatpush1.msra.mxu0 0.0
      %894 = vmatprep.subr.mxu0 0.0
      %895 = vmatpush1.msra.mxu0 0.0
      %896 = vmatprep.subr.mxu0 0.0
      %897 = vmatpush1.msra.mxu0 0.0
      %898 = vmatprep.subr.mxu0 0.0
      %899 = vmatpush1.msra.mxu0 0.0
      %900 = vmatprep.subr.mxu0 0.0
      %901 = vmatpush1.msra.mxu0 0.0
      %902 = vmatprep.subr.mxu0 0.0
      %903 = vmatpush1.msra.mxu0 0.0
      %904 = vmatprep.subr.mxu0 0.0
      %905 = vmatpush1.msra.mxu0 0.0
      %906 = vmatprep.subr.mxu0 0.0
      %907 = vmatpush1.msra.mxu0 0.0
      %908 = vmatprep.subr.mxu0 0.0
      %909 = vmatpush1.msra.mxu0 0.0
      %910 = vmatprep.subr.mxu0 0.0
      %911 = vmatpush1.msra.mxu0 0.0
      %912 = vmatprep.subr.mxu0 0.0
      %913 = vmatpush1.msra.mxu0 0.0
      %914 = vmatprep.subr.mxu0 0.0
      %915 = vmatpush1.msra.mxu0 0.0
      %916 = vmatprep.subr.mxu0 0.0
      %917 = vmatpush1.msra.mxu0 0.0
      %918 = vmatprep.subr.mxu0 0.0
      %919 = vmatpush1.msra.mxu0 0.0
      %920 = vmatprep.mubr.f32.mxu0 0.0
      %v921 = vand.u32 %v661, 4294901760
      %922 = vmatmul.mubr.f32.gmra.mrb[0].mxu0 %v921
      %v923 = vpop.f32.mrb[0].mxu0
      %v924 = vadd.f32 %v763, %v923
      %v925 = vpop.f32.mrb[0].mxu0
      %926 = vmatprep.mubr.f32.mxu0 0.0
      %v927 = vand.u32 %v664, 4294901760
      %928 = vmatmul.mubr.f32.gmra.mrb[0].mxu0 %v927
      %v929 = vpop.f32.mrb[0].mxu0
      %v930 = vadd.f32 %v773, %v929
      %v931 = vpop.f32.mrb[0].mxu0
      %932 = vmatprep.mubr.f32.mxu0 0.0
      %v933 = vand.u32 %v667, 4294901760
      %934 = vmatmul.mubr.f32.gmra.mrb[0].mxu0 %v933
      %v935 = vpop.f32.mrb[0].mxu0
      %v936 = vadd.f32 %v783, %v935
      %v937 = vpop.f32.mrb[0].mxu0
      %938 = vmatprep.mubr.f32.mxu0 0.0
      %v939 = vand.u32 %v670, 4294901760
      %940 = vmatmul.mubr.f32.gmra.mrb[0].mxu0 %v939
      %v941 = vpop.f32.mrb[0].mxu0
      %v942 = vadd.f32 %v793, %v941
      %v943 = vpop.f32.mrb[0].mxu0
      %944 = vmatprep.mubr.f32.mxu0 0.0
      %v945 = vand.u32 %v673, 4294901760
      %946 = vmatmul.mubr.f32.gmra.mrb[0].mxu0 %v945
      %v947 = vpop.f32.mrb[0].mxu0
      %v948 = vadd.f32 %v803, %v947
      %v949 = vpop.f32.mrb[0].mxu0
      %950 = vmatprep.mubr.f32.mxu0 0.0
      %v951 = vand.u32 %v676, 4294901760
      %952 = vmatmul.mubr.f32.gmra.mrb[0].mxu0 %v951
      %v953 = vpop.f32.mrb[0].mxu0
      %v954 = vadd.f32 %v813, %v953
      %v955 = vpop.f32.mrb[0].mxu0
      %956 = vmatprep.mubr.f32.mxu0 0.0
      %v957 = vand.u32 %v679, 4294901760
      %958 = vmatmul.mubr.f32.gmra.mrb[0].mxu0 %v957
      %v959 = vpop.f32.mrb[0].mxu0
      %v960 = vadd.f32 %v823, %v959
      %v961 = vpop.f32.mrb[0].mxu0
      %962 = vmatprep.mubr.f32.mxu0 0.0
      %v963 = vand.u32 %v682, 4294901760
      %964 = vmatmul.mubr.f32.gmra.mrb[0].mxu0 %v963
      %v965 = vpop.f32.mrb[0].mxu0
      %v966 = vadd.f32 %v833, %v965
      %v967 = vpop.f32.mrb[0].mxu0
      %968 = vdwg.mxu0
      %969 = vmatprep.subr.mxu0 0.0
      %v970 = vand.u32 %v506, 4294901760
      %v971 = vsub.f32 %v506, %v970
      %972 = vmatpush1.msra.mxu0 %v971
      %973 = vmatprep.subr.mxu0 0.0
      %v974 = vand.u32 %v507, 4294901760
      %v975 = vsub.f32 %v507, %v974
      %976 = vmatpush1.msra.mxu0 %v975
      %977 = vmatprep.subr.mxu0 0.0
      %v978 = vand.u32 %v508, 4294901760
      %v979 = vsub.f32 %v508, %v978
      %980 = vmatpush1.msra.mxu0 %v979
      %981 = vmatprep.subr.mxu0 0.0
      %v982 = vand.u32 %v685, 4294901760
      %v983 = vsub.f32 %v685, %v982
      %984 = vmatpush1.msra.mxu0 %v983
      %985 = vmatprep.subr.mxu0 0.0
      %986 = vmatpush1.msra.mxu0 0.0
      %987 = vmatprep.subr.mxu0 0.0
      %988 = vmatpush1.msra.mxu0 0.0
      %989 = vmatprep.subr.mxu0 0.0
      %990 = vmatpush1.msra.mxu0 0.0
      %991 = vmatprep.subr.mxu0 0.0
      %992 = vmatpush1.msra.mxu0 0.0
      %993 = vmatprep.subr.mxu0 0.0
      %994 = vmatpush1.msra.mxu0 0.0
      %995 = vmatprep.subr.mxu0 0.0
      %996 = vmatpush1.msra.mxu0 0.0
      %997 = vmatprep.subr.mxu0 0.0
      %998 = vmatpush1.msra.mxu0 0.0
      %999 = vmatprep.subr.mxu0 0.0
      %1000 = vmatpush1.msra.mxu0 0.0
      %1001 = vmatprep.subr.mxu0 0.0
      %1002 = vmatpush1.msra.mxu0 0.0
      %1003 = vmatprep.subr.mxu0 0.0
      %1004 = vmatpush1.msra.mxu0 0.0
      %1005 = vmatprep.subr.mxu0 0.0
      %1006 = vmatpush1.msra.mxu0 0.0
      %1007 = vmatprep.subr.mxu0 0.0
      %1008 = vmatpush1.msra.mxu0 0.0
      %1009 = vmatprep.subr.mxu0 0.0
      %1010 = vmatpush1.msra.mxu0 0.0
      %1011 = vmatprep.subr.mxu0 0.0
      %1012 = vmatpush1.msra.mxu0 0.0
      %1013 = vmatprep.subr.mxu0 0.0
      %1014 = vmatpush1.msra.mxu0 0.0
      %1015 = vmatprep.subr.mxu0 0.0
      %1016 = vmatpush1.msra.mxu0 0.0
      %1017 = vmatprep.subr.mxu0 0.0
      %1018 = vmatpush1.msra.mxu0 0.0
      %1019 = vmatprep.subr.mxu0 0.0
      %1020 = vmatpush1.msra.mxu0 0.0
      %1021 = vmatprep.subr.mxu0 0.0
      %1022 = vmatpush1.msra.mxu0 0.0
      %1023 = vmatprep.subr.mxu0 0.0
      %1024 = vmatpush1.msra.mxu0 0.0
      %1025 = vmatprep.subr.mxu0 0.0
      %1026 = vmatpush1.msra.mxu0 0.0
      %1027 = vmatprep.subr.mxu0 0.0
      %1028 = vmatpush1.msra.mxu0 0.0
      %1029 = vmatprep.subr.mxu0 0.0
      %1030 = vmatpush1.msra.mxu0 0.0
      %1031 = vmatprep.subr.mxu0 0.0
      %1032 = vmatpush1.msra.mxu0 0.0
      %1033 = vmatprep.subr.mxu0 0.0
      %1034 = vmatpush1.msra.mxu0 0.0
      %1035 = vmatprep.subr.mxu0 0.0
      %1036 = vmatpush1.msra.mxu0 0.0
      %1037 = vmatprep.subr.mxu0 0.0
      %1038 = vmatpush1.msra.mxu0 0.0
      %1039 = vmatprep.subr.mxu0 0.0
      %1040 = vmatpush1.msra.mxu0 0.0
      %1041 = vmatprep.mubr.f32.mxu0 0.0
      %v1042 = vand.u32 %v661, 4294901760
      %v1043 = vsub.f32 %v661, %v1042
      %1044 = vmatmul.mubr.f32.gmra.mrb[0].mxu0 %v1043
      %v1045 = vpop.f32.mrb[0].mxu0
      %v1046 = vadd.f32 %v924, %v1045
      %v1047 = vpop.f32.mrb[0].mxu0
      %1048 = vmatprep.mubr.f32.mxu0 0.0
      %v1049 = vand.u32 %v664, 4294901760
      %v1050 = vsub.f32 %v664, %v1049
      %1051 = vmatmul.mubr.f32.gmra.mrb[0].mxu0 %v1050
      %v1052 = vpop.f32.mrb[0].mxu0
      %v1053 = vadd.f32 %v930, %v1052
      %v1054 = vpop.f32.mrb[0].mxu0
      %1055 = vmatprep.mubr.f32.mxu0 0.0
      %v1056 = vand.u32 %v667, 4294901760
      %v1057 = vsub.f32 %v667, %v1056
      %1058 = vmatmul.mubr.f32.gmra.mrb[0].mxu0 %v1057
      %v1059 = vpop.f32.mrb[0].mxu0
      %v1060 = vadd.f32 %v936, %v1059
      %v1061 = vpop.f32.mrb[0].mxu0
      %1062 = vmatprep.mubr.f32.mxu0 0.0
      %v1063 = vand.u32 %v670, 4294901760
      %v1064 = vsub.f32 %v670, %v1063
      %1065 = vmatmul.mubr.f32.gmra.mrb[0].mxu0 %v1064
      %v1066 = vpop.f32.mrb[0].mxu0
      %v1067 = vadd.f32 %v942, %v1066
      %v1068 = vpop.f32.mrb[0].mxu0
      %1069 = vmatprep.mubr.f32.mxu0 0.0
      %v1070 = vand.u32 %v673, 4294901760
      %v1071 = vsub.f32 %v673, %v1070
      %1072 = vmatmul.mubr.f32.gmra.mrb[0].mxu0 %v1071
      %v1073 = vpop.f32.mrb[0].mxu0
      %v1074 = vadd.f32 %v948, %v1073
      %v1075 = vpop.f32.mrb[0].mxu0
      %1076 = vmatprep.mubr.f32.mxu0 0.0
      %v1077 = vand.u32 %v676, 4294901760
      %v1078 = vsub.f32 %v676, %v1077
      %1079 = vmatmul.mubr.f32.gmra.mrb[0].mxu0 %v1078
      %v1080 = vpop.f32.mrb[0].mxu0
      %v1081 = vadd.f32 %v954, %v1080
      %v1082 = vpop.f32.mrb[0].mxu0
      %1083 = vmatprep.mubr.f32.mxu0 0.0
      %v1084 = vand.u32 %v679, 4294901760
      %v1085 = vsub.f32 %v679, %v1084
      %1086 = vmatmul.mubr.f32.gmra.mrb[0].mxu0 %v1085
      %v1087 = vpop.f32.mrb[0].mxu0
      %v1088 = vadd.f32 %v960, %v1087
      %v1089 = vpop.f32.mrb[0].mxu0
      %1090 = vmatprep.mubr.f32.mxu0 0.0
      %v1091 = vand.u32 %v682, 4294901760
      %v1092 = vsub.f32 %v682, %v1091
      %1093 = vmatmul.mubr.f32.gmra.mrb[0].mxu0 %v1092
      %v1094 = vpop.f32.mrb[0].mxu0
      %v1095 = vadd.f32 %v966, %v1094
      %v1096 = vpop.f32.mrb[0].mxu0
      %1097 = vdwg.mxu0
      %1098 = vmatprep.subr.mxu0 0.0
      %v1099 = vand.u32 %v506, 4294901760
      %1100 = vmatpush1.msra.mxu0 %v1099
      %1101 = vmatprep.subr.mxu0 0.0
      %v1102 = vand.u32 %v507, 4294901760
      %1103 = vmatpush1.msra.mxu0 %v1102
      %1104 = vmatprep.subr.mxu0 0.0
      %v1105 = vand.u32 %v508, 4294901760
      %1106 = vmatpush1.msra.mxu0 %v1105
      %1107 = vmatprep.subr.mxu0 0.0
      %v1108 = vand.u32 %v685, 4294901760
      %1109 = vmatpush1.msra.mxu0 %v1108
      %1110 = vmatprep.subr.mxu0 0.0
      %1111 = vmatpush1.msra.mxu0 0.0
      %1112 = vmatprep.subr.mxu0 0.0
      %1113 = vmatpush1.msra.mxu0 0.0
      %1114 = vmatprep.subr.mxu0 0.0
      %1115 = vmatpush1.msra.mxu0 0.0
      %1116 = vmatprep.subr.mxu0 0.0
      %1117 = vmatpush1.msra.mxu0 0.0
      %1118 = vmatprep.subr.mxu0 0.0
      %1119 = vmatpush1.msra.mxu0 0.0
      %1120 = vmatprep.subr.mxu0 0.0
      %1121 = vmatpush1.msra.mxu0 0.0
      %1122 = vmatprep.subr.mxu0 0.0
      %1123 = vmatpush1.msra.mxu0 0.0
      %1124 = vmatprep.subr.mxu0 0.0
      %1125 = vmatpush1.msra.mxu0 0.0
      %1126 = vmatprep.subr.mxu0 0.0
      %1127 = vmatpush1.msra.mxu0 0.0
      %1128 = vmatprep.subr.mxu0 0.0
      %1129 = vmatpush1.msra.mxu0 0.0
      %1130 = vmatprep.subr.mxu0 0.0
      %1131 = vmatpush1.msra.mxu0 0.0
      %1132 = vmatprep.subr.mxu0 0.0
      %1133 = vmatpush1.msra.mxu0 0.0
      %1134 = vmatprep.subr.mxu0 0.0
      %1135 = vmatpush1.msra.mxu0 0.0
      %1136 = vmatprep.subr.mxu0 0.0
      %1137 = vmatpush1.msra.mxu0 0.0
      %1138 = vmatprep.subr.mxu0 0.0
      %1139 = vmatpush1.msra.mxu0 0.0
      %1140 = vmatprep.subr.mxu0 0.0
      %1141 = vmatpush1.msra.mxu0 0.0
      %1142 = vmatprep.subr.mxu0 0.0
      %1143 = vmatpush1.msra.mxu0 0.0
      %1144 = vmatprep.subr.mxu0 0.0
      %1145 = vmatpush1.msra.mxu0 0.0
      %1146 = vmatprep.subr.mxu0 0.0
      %1147 = vmatpush1.msra.mxu0 0.0
      %1148 = vmatprep.subr.mxu0 0.0
      %1149 = vmatpush1.msra.mxu0 0.0
      %1150 = vmatprep.subr.mxu0 0.0
      %1151 = vmatpush1.msra.mxu0 0.0
      %1152 = vmatprep.subr.mxu0 0.0
      %1153 = vmatpush1.msra.mxu0 0.0
      %1154 = vmatprep.subr.mxu0 0.0
      %1155 = vmatpush1.msra.mxu0 0.0
      %1156 = vmatprep.subr.mxu0 0.0
      %1157 = vmatpush1.msra.mxu0 0.0
      %1158 = vmatprep.subr.mxu0 0.0
      %1159 = vmatpush1.msra.mxu0 0.0
      %1160 = vmatprep.subr.mxu0 0.0
      %1161 = vmatpush1.msra.mxu0 0.0
      %1162 = vmatprep.subr.mxu0 0.0
      %1163 = vmatpush1.msra.mxu0 0.0
      %1164 = vmatprep.subr.mxu0 0.0
      %1165 = vmatpush1.msra.mxu0 0.0
      %1166 = vmatprep.mubr.f32.mxu0 0.0
      %v1167 = vand.u32 %v661, 4294901760
      %v1168 = vsub.f32 %v661, %v1167
      %v1169 = vand.u32 %v1168, 4294901760
      %1170 = vmatmul.mubr.f32.gmra.mrb[0].mxu0 %v1169
      %v1171 = vpop.f32.mrb[0].mxu0
      %v1172 = vadd.f32 %v1046, %v1171
      %v1173 = vpop.f32.mrb[0].mxu0
      %1174 = vmatprep.mubr.f32.mxu0 0.0
      %v1175 = vand.u32 %v664, 4294901760
      %v1176 = vsub.f32 %v664, %v1175
      %v1177 = vand.u32 %v1176, 4294901760
      %1178 = vmatmul.mubr.f32.gmra.mrb[0].mxu0 %v1177
      %v1179 = vpop.f32.mrb[0].mxu0
      %v1180 = vadd.f32 %v1053, %v1179
      %v1181 = vpop.f32.mrb[0].mxu0
      %1182 = vmatprep.mubr.f32.mxu0 0.0
      %v1183 = vand.u32 %v667, 4294901760
      %v1184 = vsub.f32 %v667, %v1183
      %v1185 = vand.u32 %v1184, 4294901760
      %1186 = vmatmul.mubr.f32.gmra.mrb[0].mxu0 %v1185
      %v1187 = vpop.f32.mrb[0].mxu0
      %v1188 = vadd.f32 %v1060, %v1187
      %v1189 = vpop.f32.mrb[0].mxu0
      %1190 = vmatprep.mubr.f32.mxu0 0.0
      %v1191 = vand.u32 %v670, 4294901760
      %v1192 = vsub.f32 %v670, %v1191
      %v1193 = vand.u32 %v1192, 4294901760
      %1194 = vmatmul.mubr.f32.gmra.mrb[0].mxu0 %v1193
      %v1195 = vpop.f32.mrb[0].mxu0
      %v1196 = vadd.f32 %v1067, %v1195
      %v1197 = vpop.f32.mrb[0].mxu0
      %1198 = vmatprep.mubr.f32.mxu0 0.0
      %v1199 = vand.u32 %v673, 4294901760
      %v1200 = vsub.f32 %v673, %v1199
      %v1201 = vand.u32 %v1200, 4294901760
      %1202 = vmatmul.mubr.f32.gmra.mrb[0].mxu0 %v1201
      %v1203 = vpop.f32.mrb[0].mxu0
      %v1204 = vadd.f32 %v1074, %v1203
      %v1205 = vpop.f32.mrb[0].mxu0
      %1206 = vmatprep.mubr.f32.mxu0 0.0
      %v1207 = vand.u32 %v676, 4294901760
      %v1208 = vsub.f32 %v676, %v1207
      %v1209 = vand.u32 %v1208, 4294901760
      %1210 = vmatmul.mubr.f32.gmra.mrb[0].mxu0 %v1209
      %v1211 = vpop.f32.mrb[0].mxu0
      %v1212 = vadd.f32 %v1081, %v1211
      %v1213 = vpop.f32.mrb[0].mxu0
      %1214 = vmatprep.mubr.f32.mxu0 0.0
      %v1215 = vand.u32 %v679, 4294901760
      %v1216 = vsub.f32 %v679, %v1215
      %v1217 = vand.u32 %v1216, 4294901760
      %1218 = vmatmul.mubr.f32.gmra.mrb[0].mxu0 %v1217
      %v1219 = vpop.f32.mrb[0].mxu0
      %v1220 = vadd.f32 %v1088, %v1219
      %v1221 = vpop.f32.mrb[0].mxu0
      %1222 = vmatprep.mubr.f32.mxu0 0.0
      %v1223 = vand.u32 %v682, 4294901760
      %v1224 = vsub.f32 %v682, %v1223
      %v1225 = vand.u32 %v1224, 4294901760
      %1226 = vmatmul.mubr.f32.gmra.mrb[0].mxu0 %v1225
      %v1227 = vpop.f32.mrb[0].mxu0
      %v1228 = vadd.f32 %v1095, %v1227
      %v1229 = vpop.f32.mrb[0].mxu0
      %1230 = vdwg.mxu0
      %1231 = vmatprep.subr.mxu0 0.0
      %v1232 = vand.u32 %v506, 4294901760
      %v1233 = vsub.f32 %v506, %v1232
      %v1234 = vand.u32 %v1233, 4294901760
      %1235 = vmatpush1.msra.mxu0 %v1234
      %1236 = vmatprep.subr.mxu0 0.0
      %v1237 = vand.u32 %v507, 4294901760
      %v1238 = vsub.f32 %v507, %v1237
      %v1239 = vand.u32 %v1238, 4294901760
      %1240 = vmatpush1.msra.mxu0 %v1239
      %1241 = vmatprep.subr.mxu0 0.0
      %v1242 = vand.u32 %v508, 4294901760
      %v1243 = vsub.f32 %v508, %v1242
      %v1244 = vand.u32 %v1243, 4294901760
      %1245 = vmatpush1.msra.mxu0 %v1244
      %1246 = vmatprep.subr.mxu0 0.0
      %v1247 = vand.u32 %v685, 4294901760
      %v1248 = vsub.f32 %v685, %v1247
      %v1249 = vand.u32 %v1248, 4294901760
      %1250 = vmatpush1.msra.mxu0 %v1249
      %1251 = vmatprep.subr.mxu0 0.0
      %1252 = vmatpush1.msra.mxu0 0.0
      %1253 = vmatprep.subr.mxu0 0.0
      %1254 = vmatpush1.msra.mxu0 0.0
      %1255 = vmatprep.subr.mxu0 0.0
      %1256 = vmatpush1.msra.mxu0 0.0
      %1257 = vmatprep.subr.mxu0 0.0
      %1258 = vmatpush1.msra.mxu0 0.0
      %1259 = vmatprep.subr.mxu0 0.0
      %1260 = vmatpush1.msra.mxu0 0.0
      %1261 = vmatprep.subr.mxu0 0.0
      %1262 = vmatpush1.msra.mxu0 0.0
      %1263 = vmatprep.subr.mxu0 0.0
      %1264 = vmatpush1.msra.mxu0 0.0
      %1265 = vmatprep.subr.mxu0 0.0
      %1266 = vmatpush1.msra.mxu0 0.0
      %1267 = vmatprep.subr.mxu0 0.0
      %1268 = vmatpush1.msra.mxu0 0.0
      %1269 = vmatprep.subr.mxu0 0.0
      %1270 = vmatpush1.msra.mxu0 0.0
      %1271 = vmatprep.subr.mxu0 0.0
      %1272 = vmatpush1.msra.mxu0 0.0
      %1273 = vmatprep.subr.mxu0 0.0
      %1274 = vmatpush1.msra.mxu0 0.0
      %1275 = vmatprep.subr.mxu0 0.0
      %1276 = vmatpush1.msra.mxu0 0.0
      %1277 = vmatprep.subr.mxu0 0.0
      %1278 = vmatpush1.msra.mxu0 0.0
      %1279 = vmatprep.subr.mxu0 0.0
      %1280 = vmatpush1.msra.mxu0 0.0
      %1281 = vmatprep.subr.mxu0 0.0
      %1282 = vmatpush1.msra.mxu0 0.0
      %1283 = vmatprep.subr.mxu0 0.0
      %1284 = vmatpush1.msra.mxu0 0.0
      %1285 = vmatprep.subr.mxu0 0.0
      %1286 = vmatpush1.msra.mxu0 0.0
      %1287 = vmatprep.subr.mxu0 0.0
      %1288 = vmatpush1.msra.mxu0 0.0
      %1289 = vmatprep.subr.mxu0 0.0
      %1290 = vmatpush1.msra.mxu0 0.0
      %1291 = vmatprep.subr.mxu0 0.0
      %1292 = vmatpush1.msra.mxu0 0.0
      %1293 = vmatprep.subr.mxu0 0.0
      %1294 = vmatpush1.msra.mxu0 0.0
      %1295 = vmatprep.subr.mxu0 0.0
      %1296 = vmatpush1.msra.mxu0 0.0
      %1297 = vmatprep.subr.mxu0 0.0
      %1298 = vmatpush1.msra.mxu0 0.0
      %1299 = vmatprep.subr.mxu0 0.0
      %1300 = vmatpush1.msra.mxu0 0.0
      %1301 = vmatprep.subr.mxu0 0.0
      %1302 = vmatpush1.msra.mxu0 0.0
      %1303 = vmatprep.subr.mxu0 0.0
      %1304 = vmatpush1.msra.mxu0 0.0
      %1305 = vmatprep.subr.mxu0 0.0
      %1306 = vmatpush1.msra.mxu0 0.0
      %1307 = vmatprep.mubr.f32.mxu0 0.0
      %v1308 = vand.u32 %v661, 4294901760
      %1309 = vmatmul.mubr.f32.gmra.mrb[0].mxu0 %v1308
      %v1310 = vpop.f32.mrb[0].mxu0
      %v1311 = vadd.f32 %v1172, %v1310
      %v1312 = vpop.f32.mrb[0].mxu0
      %1313 = vmatprep.mubr.f32.mxu0 0.0
      %v1314 = vand.u32 %v664, 4294901760
      %1315 = vmatmul.mubr.f32.gmra.mrb[0].mxu0 %v1314
      %v1316 = vpop.f32.mrb[0].mxu0
      %v1317 = vadd.f32 %v1180, %v1316
      %v1318 = vpop.f32.mrb[0].mxu0
      %1319 = vmatprep.mubr.f32.mxu0 0.0
      %v1320 = vand.u32 %v667, 4294901760
      %1321 = vmatmul.mubr.f32.gmra.mrb[0].mxu0 %v1320
      %v1322 = vpop.f32.mrb[0].mxu0
      %v1323 = vadd.f32 %v1188, %v1322
      %v1324 = vpop.f32.mrb[0].mxu0
      %1325 = vmatprep.mubr.f32.mxu0 0.0
      %v1326 = vand.u32 %v670, 4294901760
      %1327 = vmatmul.mubr.f32.gmra.mrb[0].mxu0 %v1326
      %v1328 = vpop.f32.mrb[0].mxu0
      %v1329 = vadd.f32 %v1196, %v1328
      %v1330 = vpop.f32.mrb[0].mxu0
      %1331 = vmatprep.mubr.f32.mxu0 0.0
      %v1332 = vand.u32 %v673, 4294901760
      %1333 = vmatmul.mubr.f32.gmra.mrb[0].mxu0 %v1332
      %v1334 = vpop.f32.mrb[0].mxu0
      %v1335 = vadd.f32 %v1204, %v1334
      %v1336 = vpop.f32.mrb[0].mxu0
      %1337 = vmatprep.mubr.f32.mxu0 0.0
      %v1338 = vand.u32 %v676, 4294901760
      %1339 = vmatmul.mubr.f32.gmra.mrb[0].mxu0 %v1338
      %v1340 = vpop.f32.mrb[0].mxu0
      %v1341 = vadd.f32 %v1212, %v1340
      %v1342 = vpop.f32.mrb[0].mxu0
      %1343 = vmatprep.mubr.f32.mxu0 0.0
      %v1344 = vand.u32 %v679, 4294901760
      %1345 = vmatmul.mubr.f32.gmra.mrb[0].mxu0 %v1344
      %v1346 = vpop.f32.mrb[0].mxu0
      %v1347 = vadd.f32 %v1220, %v1346
      %v1348 = vpop.f32.mrb[0].mxu0
      %1349 = vmatprep.mubr.f32.mxu0 0.0
      %v1350 = vand.u32 %v682, 4294901760
      %1351 = vmatmul.mubr.f32.gmra.mrb[0].mxu0 %v1350
      %v1352 = vpop.f32.mrb[0].mxu0
      %v1353 = vadd.f32 %v1228, %v1352
      %v1354 = vpop.f32.mrb[0].mxu0
      %1355 = vdwg.mxu0
      %1356 = vmatprep.subr.mxu0 0.0
      %v1357 = vand.u32 %v506, 4294901760
      %1358 = vmatpush1.msra.mxu0 %v1357
      %1359 = vmatprep.subr.mxu0 0.0
      %v1360 = vand.u32 %v507, 4294901760
      %1361 = vmatpush1.msra.mxu0 %v1360
      %1362 = vmatprep.subr.mxu0 0.0
      %v1363 = vand.u32 %v508, 4294901760
      %1364 = vmatpush1.msra.mxu0 %v1363
      %1365 = vmatprep.subr.mxu0 0.0
      %v1366 = vand.u32 %v685, 4294901760
      %1367 = vmatpush1.msra.mxu0 %v1366
      %1368 = vmatprep.subr.mxu0 0.0
      %1369 = vmatpush1.msra.mxu0 0.0
      %1370 = vmatprep.subr.mxu0 0.0
      %1371 = vmatpush1.msra.mxu0 0.0
      %1372 = vmatprep.subr.mxu0 0.0
      %1373 = vmatpush1.msra.mxu0 0.0
      %1374 = vmatprep.subr.mxu0 0.0
      %1375 = vmatpush1.msra.mxu0 0.0
      %1376 = vmatprep.subr.mxu0 0.0
      %1377 = vmatpush1.msra.mxu0 0.0
      %1378 = vmatprep.subr.mxu0 0.0
      %1379 = vmatpush1.msra.mxu0 0.0
      %1380 = vmatprep.subr.mxu0 0.0
      %1381 = vmatpush1.msra.mxu0 0.0
      %1382 = vmatprep.subr.mxu0 0.0
      %1383 = vmatpush1.msra.mxu0 0.0
      %1384 = vmatprep.subr.mxu0 0.0
      %1385 = vmatpush1.msra.mxu0 0.0
      %1386 = vmatprep.subr.mxu0 0.0
      %1387 = vmatpush1.msra.mxu0 0.0
      %1388 = vmatprep.subr.mxu0 0.0
      %1389 = vmatpush1.msra.mxu0 0.0
      %1390 = vmatprep.subr.mxu0 0.0
      %1391 = vmatpush1.msra.mxu0 0.0
      %1392 = vmatprep.subr.mxu0 0.0
      %1393 = vmatpush1.msra.mxu0 0.0
      %1394 = vmatprep.subr.mxu0 0.0
      %1395 = vmatpush1.msra.mxu0 0.0
      %1396 = vmatprep.subr.mxu0 0.0
      %1397 = vmatpush1.msra.mxu0 0.0
      %1398 = vmatprep.subr.mxu0 0.0
      %1399 = vmatpush1.msra.mxu0 0.0
      %1400 = vmatprep.subr.mxu0 0.0
      %1401 = vmatpush1.msra.mxu0 0.0
      %1402 = vmatprep.subr.mxu0 0.0
      %1403 = vmatpush1.msra.mxu0 0.0
      %1404 = vmatprep.subr.mxu0 0.0
      %1405 = vmatpush1.msra.mxu0 0.0
      %1406 = vmatprep.subr.mxu0 0.0
      %1407 = vmatpush1.msra.mxu0 0.0
      %1408 = vmatprep.subr.mxu0 0.0
      %1409 = vmatpush1.msra.mxu0 0.0
      %1410 = vmatprep.subr.mxu0 0.0
      %1411 = vmatpush1.msra.mxu0 0.0
      %1412 = vmatprep.subr.mxu0 0.0
      %1413 = vmatpush1.msra.mxu0 0.0
      %1414 = vmatprep.subr.mxu0 0.0
      %1415 = vmatpush1.msra.mxu0 0.0
      %1416 = vmatprep.subr.mxu0 0.0
      %1417 = vmatpush1.msra.mxu0 0.0
      %1418 = vmatprep.subr.mxu0 0.0
      %1419 = vmatpush1.msra.mxu0 0.0
      %1420 = vmatprep.subr.mxu0 0.0
      %1421 = vmatpush1.msra.mxu0 0.0
      %1422 = vmatprep.subr.mxu0 0.0
      %1423 = vmatpush1.msra.mxu0 0.0
      %1424 = vmatprep.mubr.f32.mxu0 0.0
      %v1425 = vand.u32 %v661, 4294901760
      %1426 = vmatmul.mubr.f32.gmra.mrb[0].mxu0 %v1425
      %v1427 = vpop.f32.mrb[0].mxu0
      %v1428 = vadd.f32 %v1311, %v1427
      %v1429 = vpop.f32.mrb[0].mxu0
      %1430 = vmatprep.mubr.f32.mxu0 0.0
      %v1431 = vand.u32 %v664, 4294901760
      %1432 = vmatmul.mubr.f32.gmra.mrb[0].mxu0 %v1431
      %v1433 = vpop.f32.mrb[0].mxu0
      %v1434 = vadd.f32 %v1317, %v1433
      %v1435 = vpop.f32.mrb[0].mxu0
      %1436 = vmatprep.mubr.f32.mxu0 0.0
      %v1437 = vand.u32 %v667, 4294901760
      %1438 = vmatmul.mubr.f32.gmra.mrb[0].mxu0 %v1437
      %v1439 = vpop.f32.mrb[0].mxu0
      %v1440 = vadd.f32 %v1323, %v1439
      %v1441 = vpop.f32.mrb[0].mxu0
      %1442 = vmatprep.mubr.f32.mxu0 0.0
      %v1443 = vand.u32 %v670, 4294901760
      %1444 = vmatmul.mubr.f32.gmra.mrb[0].mxu0 %v1443
      %v1445 = vpop.f32.mrb[0].mxu0
      %v1446 = vadd.f32 %v1329, %v1445
      %v1447 = vpop.f32.mrb[0].mxu0
      %1448 = vmatprep.mubr.f32.mxu0 0.0
      %v1449 = vand.u32 %v673, 4294901760
      %1450 = vmatmul.mubr.f32.gmra.mrb[0].mxu0 %v1449
      %v1451 = vpop.f32.mrb[0].mxu0
      %v1452 = vadd.f32 %v1335, %v1451
      %v1453 = vpop.f32.mrb[0].mxu0
      %1454 = vmatprep.mubr.f32.mxu0 0.0
      %v1455 = vand.u32 %v676, 4294901760
      %1456 = vmatmul.mubr.f32.gmra.mrb[0].mxu0 %v1455
      %v1457 = vpop.f32.mrb[0].mxu0
      %v1458 = vadd.f32 %v1341, %v1457
      %v1459 = vpop.f32.mrb[0].mxu0
      %1460 = vmatprep.mubr.f32.mxu0 0.0
      %v1461 = vand.u32 %v679, 4294901760
      %1462 = vmatmul.mubr.f32.gmra.mrb[0].mxu0 %v1461
      %v1463 = vpop.f32.mrb[0].mxu0
      %v1464 = vadd.f32 %v1347, %v1463
      %v1465 = vpop.f32.mrb[0].mxu0
      %1466 = vmatprep.mubr.f32.mxu0 0.0
      %v1467 = vand.u32 %v682, 4294901760
      %1468 = vmatmul.mubr.f32.gmra.mrb[0].mxu0 %v1467
      %v1469 = vpop.f32.mrb[0].mxu0
      %v1470 = vadd.f32 %v1353, %v1469
      %v1471 = vpop.f32.mrb[0].mxu0
      %1472 = vdwg.mxu0
      %1473 = vxpose.xlu0.b32.start [1/16] %v1428, 128
      %1474 = vxpose.xlu0.b32.cont [2/16] %v1434, 128
      %1475 = vxpose.xlu0.b32.cont [3/16] %v1440, 128
      %1476 = vxpose.xlu0.b32.cont [4/16] %v1446, 128
      %1477 = vxpose.xlu0.b32.cont [5/16] 0.0, 128
      %1478 = vxpose.xlu0.b32.cont [6/16] 0.0, 128
      %1479 = vxpose.xlu0.b32.cont [7/16] 0.0, 128
      %1480 = vxpose.xlu0.b32.cont [8/16] 0.0, 128
      %1481 = vxpose.xlu0.b32.cont [9/16] 0.0, 128
      %1482 = vxpose.xlu0.b32.cont [10/16] 0.0, 128
      %1483 = vxpose.xlu0.b32.cont [11/16] 0.0, 128
      %1484 = vxpose.xlu0.b32.cont [12/16] 0.0, 128
      %1485 = vxpose.xlu0.b32.cont [13/16] 0.0, 128
      %1486 = vxpose.xlu0.b32.cont [14/16] 0.0, 128
      %1487 = vxpose.xlu0.b32.cont [15/16] 0.0, 128
      %1488 = vxpose.xlu0.b32.end [16/16] 0.0, 128
      %v1489 = vpop.trf.xlu0
      %v1490 = vpop.trf.xlu0
      %v1491 = vpop.trf.xlu0
      %v1492 = vpop.trf.xlu0
      %v1493 = vpop.trf.xlu0
      %v1494 = vpop.trf.xlu0
      %v1495 = vpop.trf.xlu0
      %v1496 = vpop.trf.xlu0
      %v1497 = vpop.trf.xlu0
      %v1498 = vpop.trf.xlu0
      %v1499 = vpop.trf.xlu0
      %v1500 = vpop.trf.xlu0
      %v1501 = vpop.trf.xlu0
      %v1502 = vpop.trf.xlu0
      %v1503 = vpop.trf.xlu0
      %v1504 = vpop.trf.xlu0
      %1505 = vxpose.xlu0.b32.start [1/16] %v1452, 128
      %1506 = vxpose.xlu0.b32.cont [2/16] %v1458, 128
      %1507 = vxpose.xlu0.b32.cont [3/16] %v1464, 128
      %1508 = vxpose.xlu0.b32.cont [4/16] %v1470, 128
      %1509 = vxpose.xlu0.b32.cont [5/16] 0.0, 128
      %1510 = vxpose.xlu0.b32.cont [6/16] 0.0, 128
      %1511 = vxpose.xlu0.b32.cont [7/16] 0.0, 128
      %1512 = vxpose.xlu0.b32.cont [8/16] 0.0, 128
      %1513 = vxpose.xlu0.b32.cont [9/16] 0.0, 128
      %1514 = vxpose.xlu0.b32.cont [10/16] 0.0, 128
      %1515 = vxpose.xlu0.b32.cont [11/16] 0.0, 128
      %1516 = vxpose.xlu0.b32.cont [12/16] 0.0, 128
      %1517 = vxpose.xlu0.b32.cont [13/16] 0.0, 128
      %1518 = vxpose.xlu0.b32.cont [14/16] 0.0, 128
      %1519 = vxpose.xlu0.b32.cont [15/16] 0.0, 128
      %1520 = vxpose.xlu0.b32.end [16/16] 0.0, 128
      %v1521 = vpop.trf.xlu0
      %v1522 = vpop.trf.xlu0
      %v1523 = vpop.trf.xlu0
      %v1524 = vpop.trf.xlu0
      %v1525 = vpop.trf.xlu0
      %v1526 = vpop.trf.xlu0
      %v1527 = vpop.trf.xlu0
      %v1528 = vpop.trf.xlu0
      %v1529 = vpop.trf.xlu0
      %v1530 = vpop.trf.xlu0
      %v1531 = vpop.trf.xlu0
      %v1532 = vpop.trf.xlu0
      %v1533 = vpop.trf.xlu0
      %v1534 = vpop.trf.xlu0
      %v1535 = vpop.trf.xlu0
      %v1536 = vpop.trf.xlu0
      %vm1537 = vcmask 261120
      %v1539 = vsel %vm1537, %v1489, 0
      %v1542 = vsel %vm1537, %v1490, 0
      %v1545 = vsel %vm1537, %v1521, 0
      %v1548 = vsel %vm1537, %v1522, 0
      %1550 = vmatprep.subr.mxu0 0.0
      %v1551 = vand.u32 %v510, 4294901760
      %1552 = vmatpush1.msra.mxu0 %v1551
      %1553 = vmatprep.subr.mxu0 0.0
      %v1554 = vand.u32 %v511, 4294901760
      %1555 = vmatpush1.msra.mxu0 %v1554
      %1556 = vmatprep.subr.mxu0 0.0
      %v1557 = vand.u32 %v512, 4294901760
      %1558 = vmatpush1.msra.mxu0 %v1557
      %1559 = vmatprep.subr.mxu0 0.0
      %v1560 = vand.u32 %v513, 4294901760
      %1561 = vmatpush1.msra.mxu0 %v1560
      %1562 = vmatprep.subr.mxu0 0.0
      %1563 = vmatpush1.msra.mxu0 0.0
      %1564 = vmatprep.subr.mxu0 0.0
      %1565 = vmatpush1.msra.mxu0 0.0
      %1566 = vmatprep.subr.mxu0 0.0
      %1567 = vmatpush1.msra.mxu0 0.0
      %1568 = vmatprep.subr.mxu0 0.0
      %1569 = vmatpush1.msra.mxu0 0.0
      %1570 = vmatprep.subr.mxu0 0.0
      %1571 = vmatpush1.msra.mxu0 0.0
      %1572 = vmatprep.subr.mxu0 0.0
      %1573 = vmatpush1.msra.mxu0 0.0
      %1574 = vmatprep.subr.mxu0 0.0
      %1575 = vmatpush1.msra.mxu0 0.0
      %1576 = vmatprep.subr.mxu0 0.0
      %1577 = vmatpush1.msra.mxu0 0.0
      %1578 = vmatprep.subr.mxu0 0.0
      %1579 = vmatpush1.msra.mxu0 0.0
      %1580 = vmatprep.subr.mxu0 0.0
      %1581 = vmatpush1.msra.mxu0 0.0
      %1582 = vmatprep.subr.mxu0 0.0
      %1583 = vmatpush1.msra.mxu0 0.0
      %1584 = vmatprep.subr.mxu0 0.0
      %1585 = vmatpush1.msra.mxu0 0.0
      %1586 = vmatprep.subr.mxu0 0.0
      %1587 = vmatpush1.msra.mxu0 0.0
      %1588 = vmatprep.subr.mxu0 0.0
      %1589 = vmatpush1.msra.mxu0 0.0
      %1590 = vmatprep.subr.mxu0 0.0
      %1591 = vmatpush1.msra.mxu0 0.0
      %1592 = vmatprep.subr.mxu0 0.0
      %1593 = vmatpush1.msra.mxu0 0.0
      %1594 = vmatprep.subr.mxu0 0.0
      %1595 = vmatpush1.msra.mxu0 0.0
      %1596 = vmatprep.subr.mxu0 0.0
      %1597 = vmatpush1.msra.mxu0 0.0
      %1598 = vmatprep.subr.mxu0 0.0
      %1599 = vmatpush1.msra.mxu0 0.0
      %1600 = vmatprep.subr.mxu0 0.0
      %1601 = vmatpush1.msra.mxu0 0.0
      %1602 = vmatprep.subr.mxu0 0.0
      %1603 = vmatpush1.msra.mxu0 0.0
      %1604 = vmatprep.subr.mxu0 0.0
      %1605 = vmatpush1.msra.mxu0 0.0
      %1606 = vmatprep.subr.mxu0 0.0
      %1607 = vmatpush1.msra.mxu0 0.0
      %1608 = vmatprep.subr.mxu0 0.0
      %1609 = vmatpush1.msra.mxu0 0.0
      %1610 = vmatprep.subr.mxu0 0.0
      %1611 = vmatpush1.msra.mxu0 0.0
      %1612 = vmatprep.subr.mxu0 0.0
      %1613 = vmatpush1.msra.mxu0 0.0
      %1614 = vmatprep.subr.mxu0 0.0
      %1615 = vmatpush1.msra.mxu0 0.0
      %1616 = vmatprep.subr.mxu0 0.0
      %1617 = vmatpush1.msra.mxu0 0.0
      %1618 = vmatprep.mubr.f32.mxu0 0.0
      %v1619 = vand.u32 %v1539, 4294901760
      %v1620 = vsub.f32 %v1539, %v1619
      %v1621 = vand.u32 %v1620, 4294901760
      %v1622 = vsub.f32 %v1620, %v1621
      %v1623 = vand.u32 %v1622, 4294901760
      %1624 = vmatmul.mubr.f32.gmra.mrb[0].mxu0 %v1623
      %v1625 = vpop.f32.mrb[0].mxu0
      %v1626 = vadd.f32 0.0, %v1625
      %v1627 = vpop.f32.mrb[0].mxu0
      %1628 = vmatprep.mubr.f32.mxu0 0.0
      %v1629 = vand.u32 %v1542, 4294901760
      %v1630 = vsub.f32 %v1542, %v1629
      %v1631 = vand.u32 %v1630, 4294901760
      %v1632 = vsub.f32 %v1630, %v1631
      %v1633 = vand.u32 %v1632, 4294901760
      %1634 = vmatmul.mubr.f32.gmra.mrb[0].mxu0 %v1633
      %v1635 = vpop.f32.mrb[0].mxu0
      %v1636 = vadd.f32 0.0, %v1635
      %v1637 = vpop.f32.mrb[0].mxu0
      %1638 = vmatprep.mubr.f32.mxu0 0.0
      %v1639 = vand.u32 %v1545, 4294901760
      %v1640 = vsub.f32 %v1545, %v1639
      %v1641 = vand.u32 %v1640, 4294901760
      %v1642 = vsub.f32 %v1640, %v1641
      %v1643 = vand.u32 %v1642, 4294901760
      %1644 = vmatmul.mubr.f32.gmra.mrb[0].mxu0 %v1643
      %v1645 = vpop.f32.mrb[0].mxu0
      %v1646 = vadd.f32 0.0, %v1645
      %v1647 = vpop.f32.mrb[0].mxu0
      %1648 = vmatprep.mubr.f32.mxu0 0.0
      %v1649 = vand.u32 %v1548, 4294901760
      %v1650 = vsub.f32 %v1548, %v1649
      %v1651 = vand.u32 %v1650, 4294901760
      %v1652 = vsub.f32 %v1650, %v1651
      %v1653 = vand.u32 %v1652, 4294901760
      %1654 = vmatmul.mubr.f32.gmra.mrb[0].mxu0 %v1653
      %v1655 = vpop.f32.mrb[0].mxu0
      %v1656 = vadd.f32 0.0, %v1655
      %v1657 = vpop.f32.mrb[0].mxu0
      %1658 = vdwg.mxu0
      %1659 = vmatprep.subr.mxu0 0.0
      %v1660 = vand.u32 %v510, 4294901760
      %v1661 = vsub.f32 %v510, %v1660
      %v1662 = vand.u32 %v1661, 4294901760
      %v1663 = vsub.f32 %v1661, %v1662
      %v1664 = vand.u32 %v1663, 4294901760
      %1665 = vmatpush1.msra.mxu0 %v1664
      %1666 = vmatprep.subr.mxu0 0.0
      %v1667 = vand.u32 %v511, 4294901760
      %v1668 = vsub.f32 %v511, %v1667
      %v1669 = vand.u32 %v1668, 4294901760
      %v1670 = vsub.f32 %v1668, %v1669
      %v1671 = vand.u32 %v1670, 4294901760
      %1672 = vmatpush1.msra.mxu0 %v1671
      %1673 = vmatprep.subr.mxu0 0.0
      %v1674 = vand.u32 %v512, 4294901760
      %v1675 = vsub.f32 %v512, %v1674
      %v1676 = vand.u32 %v1675, 4294901760
      %v1677 = vsub.f32 %v1675, %v1676
      %v1678 = vand.u32 %v1677, 4294901760
      %1679 = vmatpush1.msra.mxu0 %v1678
      %1680 = vmatprep.subr.mxu0 0.0
      %v1681 = vand.u32 %v513, 4294901760
      %v1682 = vsub.f32 %v513, %v1681
      %v1683 = vand.u32 %v1682, 4294901760
      %v1684 = vsub.f32 %v1682, %v1683
      %v1685 = vand.u32 %v1684, 4294901760
      %1686 = vmatpush1.msra.mxu0 %v1685
      %1687 = vmatprep.subr.mxu0 0.0
      %1688 = vmatpush1.msra.mxu0 0.0
      %1689 = vmatprep.subr.mxu0 0.0
      %1690 = vmatpush1.msra.mxu0 0.0
      %1691 = vmatprep.subr.mxu0 0.0
      %1692 = vmatpush1.msra.mxu0 0.0
      %1693 = vmatprep.subr.mxu0 0.0
      %1694 = vmatpush1.msra.mxu0 0.0
      %1695 = vmatprep.subr.mxu0 0.0
      %1696 = vmatpush1.msra.mxu0 0.0
      %1697 = vmatprep.subr.mxu0 0.0
      %1698 = vmatpush1.msra.mxu0 0.0
      %1699 = vmatprep.subr.mxu0 0.0
      %1700 = vmatpush1.msra.mxu0 0.0
      %1701 = vmatprep.subr.mxu0 0.0
      %1702 = vmatpush1.msra.mxu0 0.0
      %1703 = vmatprep.subr.mxu0 0.0
      %1704 = vmatpush1.msra.mxu0 0.0
      %1705 = vmatprep.subr.mxu0 0.0
      %1706 = vmatpush1.msra.mxu0 0.0
      %1707 = vmatprep.subr.mxu0 0.0
      %1708 = vmatpush1.msra.mxu0 0.0
      %1709 = vmatprep.subr.mxu0 0.0
      %1710 = vmatpush1.msra.mxu0 0.0
      %1711 = vmatprep.subr.mxu0 0.0
      %1712 = vmatpush1.msra.mxu0 0.0
      %1713 = vmatprep.subr.mxu0 0.0
      %1714 = vmatpush1.msra.mxu0 0.0
      %1715 = vmatprep.subr.mxu0 0.0
      %1716 = vmatpush1.msra.mxu0 0.0
      %1717 = vmatprep.subr.mxu0 0.0
      %1718 = vmatpush1.msra.mxu0 0.0
      %1719 = vmatprep.subr.mxu0 0.0
      %1720 = vmatpush1.msra.mxu0 0.0
      %1721 = vmatprep.subr.mxu0 0.0
      %1722 = vmatpush1.msra.mxu0 0.0
      %1723 = vmatprep.subr.mxu0 0.0
      %1724 = vmatpush1.msra.mxu0 0.0
      %1725 = vmatprep.subr.mxu0 0.0
      %1726 = vmatpush1.msra.mxu0 0.0
      %1727 = vmatprep.subr.mxu0 0.0
      %1728 = vmatpush1.msra.mxu0 0.0
      %1729 = vmatprep.subr.mxu0 0.0
      %1730 = vmatpush1.msra.mxu0 0.0
      %1731 = vmatprep.subr.mxu0 0.0
      %1732 = vmatpush1.msra.mxu0 0.0
      %1733 = vmatprep.subr.mxu0 0.0
      %1734 = vmatpush1.msra.mxu0 0.0
      %1735 = vmatprep.subr.mxu0 0.0
      %1736 = vmatpush1.msra.mxu0 0.0
      %1737 = vmatprep.subr.mxu0 0.0
      %1738 = vmatpush1.msra.mxu0 0.0
      %1739 = vmatprep.subr.mxu0 0.0
      %1740 = vmatpush1.msra.mxu0 0.0
      %1741 = vmatprep.subr.mxu0 0.0
      %1742 = vmatpush1.msra.mxu0 0.0
      %1743 = vmatprep.mubr.f32.mxu0 0.0
      %v1744 = vand.u32 %v1539, 4294901760
      %1745 = vmatmul.mubr.f32.gmra.mrb[0].mxu0 %v1744
      %v1746 = vpop.f32.mrb[0].mxu0
      %v1747 = vadd.f32 %v1626, %v1746
      %v1748 = vpop.f32.mrb[0].mxu0
      %1749 = vmatprep.mubr.f32.mxu0 0.0
      %v1750 = vand.u32 %v1542, 4294901760
      %1751 = vmatmul.mubr.f32.gmra.mrb[0].mxu0 %v1750
      %v1752 = vpop.f32.mrb[0].mxu0
      %v1753 = vadd.f32 %v1636, %v1752
      %v1754 = vpop.f32.mrb[0].mxu0
      %1755 = vmatprep.mubr.f32.mxu0 0.0
      %v1756 = vand.u32 %v1545, 4294901760
      %1757 = vmatmul.mubr.f32.gmra.mrb[0].mxu0 %v1756
      %v1758 = vpop.f32.mrb[0].mxu0
      %v1759 = vadd.f32 %v1646, %v1758
      %v1760 = vpop.f32.mrb[0].mxu0
      %1761 = vmatprep.mubr.f32.mxu0 0.0
      %v1762 = vand.u32 %v1548, 4294901760
      %1763 = vmatmul.mubr.f32.gmra.mrb[0].mxu0 %v1762
      %v1764 = vpop.f32.mrb[0].mxu0
      %v1765 = vadd.f32 %v1656, %v1764
      %v1766 = vpop.f32.mrb[0].mxu0
      %1767 = vdwg.mxu0
      %1768 = vmatprep.subr.mxu0 0.0
      %v1769 = vand.u32 %v510, 4294901760
      %v1770 = vsub.f32 %v510, %v1769
      %1771 = vmatpush1.msra.mxu0 %v1770
      %1772 = vmatprep.subr.mxu0 0.0
      %v1773 = vand.u32 %v511, 4294901760
      %v1774 = vsub.f32 %v511, %v1773
      %1775 = vmatpush1.msra.mxu0 %v1774
      %1776 = vmatprep.subr.mxu0 0.0
      %v1777 = vand.u32 %v512, 4294901760
      %v1778 = vsub.f32 %v512, %v1777
      %1779 = vmatpush1.msra.mxu0 %v1778
      %1780 = vmatprep.subr.mxu0 0.0
      %v1781 = vand.u32 %v513, 4294901760
      %v1782 = vsub.f32 %v513, %v1781
      %1783 = vmatpush1.msra.mxu0 %v1782
      %1784 = vmatprep.subr.mxu0 0.0
      %1785 = vmatpush1.msra.mxu0 0.0
      %1786 = vmatprep.subr.mxu0 0.0
      %1787 = vmatpush1.msra.mxu0 0.0
      %1788 = vmatprep.subr.mxu0 0.0
      %1789 = vmatpush1.msra.mxu0 0.0
      %1790 = vmatprep.subr.mxu0 0.0
      %1791 = vmatpush1.msra.mxu0 0.0
      %1792 = vmatprep.subr.mxu0 0.0
      %1793 = vmatpush1.msra.mxu0 0.0
      %1794 = vmatprep.subr.mxu0 0.0
      %1795 = vmatpush1.msra.mxu0 0.0
      %1796 = vmatprep.subr.mxu0 0.0
      %1797 = vmatpush1.msra.mxu0 0.0
      %1798 = vmatprep.subr.mxu0 0.0
      %1799 = vmatpush1.msra.mxu0 0.0
      %1800 = vmatprep.subr.mxu0 0.0
      %1801 = vmatpush1.msra.mxu0 0.0
      %1802 = vmatprep.subr.mxu0 0.0
      %1803 = vmatpush1.msra.mxu0 0.0
      %1804 = vmatprep.subr.mxu0 0.0
      %1805 = vmatpush1.msra.mxu0 0.0
      %1806 = vmatprep.subr.mxu0 0.0
      %1807 = vmatpush1.msra.mxu0 0.0
      %1808 = vmatprep.subr.mxu0 0.0
      %1809 = vmatpush1.msra.mxu0 0.0
      %1810 = vmatprep.subr.mxu0 0.0
      %1811 = vmatpush1.msra.mxu0 0.0
      %1812 = vmatprep.subr.mxu0 0.0
      %1813 = vmatpush1.msra.mxu0 0.0
      %1814 = vmatprep.subr.mxu0 0.0
      %1815 = vmatpush1.msra.mxu0 0.0
      %1816 = vmatprep.subr.mxu0 0.0
      %1817 = vmatpush1.msra.mxu0 0.0
      %1818 = vmatprep.subr.mxu0 0.0
      %1819 = vmatpush1.msra.mxu0 0.0
      %1820 = vmatprep.subr.mxu0 0.0
      %1821 = vmatpush1.msra.mxu0 0.0
      %1822 = vmatprep.subr.mxu0 0.0
      %1823 = vmatpush1.msra.mxu0 0.0
      %1824 = vmatprep.subr.mxu0 0.0
      %1825 = vmatpush1.msra.mxu0 0.0
      %1826 = vmatprep.subr.mxu0 0.0
      %1827 = vmatpush1.msra.mxu0 0.0
      %1828 = vmatprep.subr.mxu0 0.0
      %1829 = vmatpush1.msra.mxu0 0.0
      %1830 = vmatprep.subr.mxu0 0.0
      %1831 = vmatpush1.msra.mxu0 0.0
      %1832 = vmatprep.subr.mxu0 0.0
      %1833 = vmatpush1.msra.mxu0 0.0
      %1834 = vmatprep.subr.mxu0 0.0
      %1835 = vmatpush1.msra.mxu0 0.0
      %1836 = vmatprep.subr.mxu0 0.0
      %1837 = vmatpush1.msra.mxu0 0.0
      %1838 = vmatprep.subr.mxu0 0.0
      %1839 = vmatpush1.msra.mxu0 0.0
      %1840 = vmatprep.mubr.f32.mxu0 0.0
      %v1841 = vand.u32 %v1539, 4294901760
      %v1842 = vsub.f32 %v1539, %v1841
      %1843 = vmatmul.mubr.f32.gmra.mrb[0].mxu0 %v1842
      %v1844 = vpop.f32.mrb[0].mxu0
      %v1845 = vadd.f32 %v1747, %v1844
      %v1846 = vpop.f32.mrb[0].mxu0
      %1847 = vmatprep.mubr.f32.mxu0 0.0
      %v1848 = vand.u32 %v1542, 4294901760
      %v1849 = vsub.f32 %v1542, %v1848
      %1850 = vmatmul.mubr.f32.gmra.mrb[0].mxu0 %v1849
      %v1851 = vpop.f32.mrb[0].mxu0
      %v1852 = vadd.f32 %v1753, %v1851
      %v1853 = vpop.f32.mrb[0].mxu0
      %1854 = vmatprep.mubr.f32.mxu0 0.0
      %v1855 = vand.u32 %v1545, 4294901760
      %v1856 = vsub.f32 %v1545, %v1855
      %1857 = vmatmul.mubr.f32.gmra.mrb[0].mxu0 %v1856
      %v1858 = vpop.f32.mrb[0].mxu0
      %v1859 = vadd.f32 %v1759, %v1858
      %v1860 = vpop.f32.mrb[0].mxu0
      %1861 = vmatprep.mubr.f32.mxu0 0.0
      %v1862 = vand.u32 %v1548, 4294901760
      %v1863 = vsub.f32 %v1548, %v1862
      %1864 = vmatmul.mubr.f32.gmra.mrb[0].mxu0 %v1863
      %v1865 = vpop.f32.mrb[0].mxu0
      %v1866 = vadd.f32 %v1765, %v1865
      %v1867 = vpop.f32.mrb[0].mxu0
      %1868 = vdwg.mxu0
      %1869 = vmatprep.subr.mxu0 0.0
      %v1870 = vand.u32 %v510, 4294901760
      %1871 = vmatpush1.msra.mxu0 %v1870
      %1872 = vmatprep.subr.mxu0 0.0
      %v1873 = vand.u32 %v511, 4294901760
      %1874 = vmatpush1.msra.mxu0 %v1873
      %1875 = vmatprep.subr.mxu0 0.0
      %v1876 = vand.u32 %v512, 4294901760
      %1877 = vmatpush1.msra.mxu0 %v1876
      %1878 = vmatprep.subr.mxu0 0.0
      %v1879 = vand.u32 %v513, 4294901760
      %1880 = vmatpush1.msra.mxu0 %v1879
      %1881 = vmatprep.subr.mxu0 0.0
      %1882 = vmatpush1.msra.mxu0 0.0
      %1883 = vmatprep.subr.mxu0 0.0
      %1884 = vmatpush1.msra.mxu0 0.0
      %1885 = vmatprep.subr.mxu0 0.0
      %1886 = vmatpush1.msra.mxu0 0.0
      %1887 = vmatprep.subr.mxu0 0.0
      %1888 = vmatpush1.msra.mxu0 0.0
      %1889 = vmatprep.subr.mxu0 0.0
      %1890 = vmatpush1.msra.mxu0 0.0
      %1891 = vmatprep.subr.mxu0 0.0
      %1892 = vmatpush1.msra.mxu0 0.0
      %1893 = vmatprep.subr.mxu0 0.0
      %1894 = vmatpush1.msra.mxu0 0.0
      %1895 = vmatprep.subr.mxu0 0.0
      %1896 = vmatpush1.msra.mxu0 0.0
      %1897 = vmatprep.subr.mxu0 0.0
      %1898 = vmatpush1.msra.mxu0 0.0
      %1899 = vmatprep.subr.mxu0 0.0
      %1900 = vmatpush1.msra.mxu0 0.0
      %1901 = vmatprep.subr.mxu0 0.0
      %1902 = vmatpush1.msra.mxu0 0.0
      %1903 = vmatprep.subr.mxu0 0.0
      %1904 = vmatpush1.msra.mxu0 0.0
      %1905 = vmatprep.subr.mxu0 0.0
      %1906 = vmatpush1.msra.mxu0 0.0
      %1907 = vmatprep.subr.mxu0 0.0
      %1908 = vmatpush1.msra.mxu0 0.0
      %1909 = vmatprep.subr.mxu0 0.0
      %1910 = vmatpush1.msra.mxu0 0.0
      %1911 = vmatprep.subr.mxu0 0.0
      %1912 = vmatpush1.msra.mxu0 0.0
      %1913 = vmatprep.subr.mxu0 0.0
      %1914 = vmatpush1.msra.mxu0 0.0
      %1915 = vmatprep.subr.mxu0 0.0
      %1916 = vmatpush1.msra.mxu0 0.0
      %1917 = vmatprep.subr.mxu0 0.0
      %1918 = vmatpush1.msra.mxu0 0.0
      %1919 = vmatprep.subr.mxu0 0.0
      %1920 = vmatpush1.msra.mxu0 0.0
      %1921 = vmatprep.subr.mxu0 0.0
      %1922 = vmatpush1.msra.mxu0 0.0
      %1923 = vmatprep.subr.mxu0 0.0
      %1924 = vmatpush1.msra.mxu0 0.0
      %1925 = vmatprep.subr.mxu0 0.0
      %1926 = vmatpush1.msra.mxu0 0.0
      %1927 = vmatprep.subr.mxu0 0.0
      %1928 = vmatpush1.msra.mxu0 0.0
      %1929 = vmatprep.subr.mxu0 0.0
      %1930 = vmatpush1.msra.mxu0 0.0
      %1931 = vmatprep.subr.mxu0 0.0
      %1932 = vmatpush1.msra.mxu0 0.0
      %1933 = vmatprep.subr.mxu0 0.0
      %1934 = vmatpush1.msra.mxu0 0.0
      %1935 = vmatprep.subr.mxu0 0.0
      %1936 = vmatpush1.msra.mxu0 0.0
      %1937 = vmatprep.mubr.f32.mxu0 0.0
      %v1938 = vand.u32 %v1539, 4294901760
      %v1939 = vsub.f32 %v1539, %v1938
      %v1940 = vand.u32 %v1939, 4294901760
      %1941 = vmatmul.mubr.f32.gmra.mrb[0].mxu0 %v1940
      %v1942 = vpop.f32.mrb[0].mxu0
      %v1943 = vadd.f32 %v1845, %v1942
      %v1944 = vpop.f32.mrb[0].mxu0
      %1945 = vmatprep.mubr.f32.mxu0 0.0
      %v1946 = vand.u32 %v1542, 4294901760
      %v1947 = vsub.f32 %v1542, %v1946
      %v1948 = vand.u32 %v1947, 4294901760
      %1949 = vmatmul.mubr.f32.gmra.mrb[0].mxu0 %v1948
      %v1950 = vpop.f32.mrb[0].mxu0
      %v1951 = vadd.f32 %v1852, %v1950
      %v1952 = vpop.f32.mrb[0].mxu0
      %1953 = vmatprep.mubr.f32.mxu0 0.0
      %v1954 = vand.u32 %v1545, 4294901760
      %v1955 = vsub.f32 %v1545, %v1954
      %v1956 = vand.u32 %v1955, 4294901760
      %1957 = vmatmul.mubr.f32.gmra.mrb[0].mxu0 %v1956
      %v1958 = vpop.f32.mrb[0].mxu0
      %v1959 = vadd.f32 %v1859, %v1958
      %v1960 = vpop.f32.mrb[0].mxu0
      %1961 = vmatprep.mubr.f32.mxu0 0.0
      %v1962 = vand.u32 %v1548, 4294901760
      %v1963 = vsub.f32 %v1548, %v1962
      %v1964 = vand.u32 %v1963, 4294901760
      %1965 = vmatmul.mubr.f32.gmra.mrb[0].mxu0 %v1964
      %v1966 = vpop.f32.mrb[0].mxu0
      %v1967 = vadd.f32 %v1866, %v1966
      %v1968 = vpop.f32.mrb[0].mxu0
      %1969 = vdwg.mxu0
      %1970 = vmatprep.subr.mxu0 0.0
      %v1971 = vand.u32 %v510, 4294901760
      %v1972 = vsub.f32 %v510, %v1971
      %v1973 = vand.u32 %v1972, 4294901760
      %1974 = vmatpush1.msra.mxu0 %v1973
      %1975 = vmatprep.subr.mxu0 0.0
      %v1976 = vand.u32 %v511, 4294901760
      %v1977 = vsub.f32 %v511, %v1976
      %v1978 = vand.u32 %v1977, 4294901760
      %1979 = vmatpush1.msra.mxu0 %v1978
      %1980 = vmatprep.subr.mxu0 0.0
      %v1981 = vand.u32 %v512, 4294901760
      %v1982 = vsub.f32 %v512, %v1981
      %v1983 = vand.u32 %v1982, 4294901760
      %1984 = vmatpush1.msra.mxu0 %v1983
      %1985 = vmatprep.subr.mxu0 0.0
      %v1986 = vand.u32 %v513, 4294901760
      %v1987 = vsub.f32 %v513, %v1986
      %v1988 = vand.u32 %v1987, 4294901760
      %1989 = vmatpush1.msra.mxu0 %v1988
      %1990 = vmatprep.subr.mxu0 0.0
      %1991 = vmatpush1.msra.mxu0 0.0
      %1992 = vmatprep.subr.mxu0 0.0
      %1993 = vmatpush1.msra.mxu0 0.0
      %1994 = vmatprep.subr.mxu0 0.0
      %1995 = vmatpush1.msra.mxu0 0.0
      %1996 = vmatprep.subr.mxu0 0.0
      %1997 = vmatpush1.msra.mxu0 0.0
      %1998 = vmatprep.subr.mxu0 0.0
      %1999 = vmatpush1.msra.mxu0 0.0
      %2000 = vmatprep.subr.mxu0 0.0
      %2001 = vmatpush1.msra.mxu0 0.0
      %2002 = vmatprep.subr.mxu0 0.0
      %2003 = vmatpush1.msra.mxu0 0.0
      %2004 = vmatprep.subr.mxu0 0.0
      %2005 = vmatpush1.msra.mxu0 0.0
      %2006 = vmatprep.subr.mxu0 0.0
      %2007 = vmatpush1.msra.mxu0 0.0
      %2008 = vmatprep.subr.mxu0 0.0
      %2009 = vmatpush1.msra.mxu0 0.0
      %2010 = vmatprep.subr.mxu0 0.0
      %2011 = vmatpush1.msra.mxu0 0.0
      %2012 = vmatprep.subr.mxu0 0.0
      %2013 = vmatpush1.msra.mxu0 0.0
      %2014 = vmatprep.subr.mxu0 0.0
      %2015 = vmatpush1.msra.mxu0 0.0
      %2016 = vmatprep.subr.mxu0 0.0
      %2017 = vmatpush1.msra.mxu0 0.0
      %2018 = vmatprep.subr.mxu0 0.0
      %2019 = vmatpush1.msra.mxu0 0.0
      %2020 = vmatprep.subr.mxu0 0.0
      %2021 = vmatpush1.msra.mxu0 0.0
      %2022 = vmatprep.subr.mxu0 0.0
      %2023 = vmatpush1.msra.mxu0 0.0
      %2024 = vmatprep.subr.mxu0 0.0
      %2025 = vmatpush1.msra.mxu0 0.0
      %2026 = vmatprep.subr.mxu0 0.0
      %2027 = vmatpush1.msra.mxu0 0.0
      %2028 = vmatprep.subr.mxu0 0.0
      %2029 = vmatpush1.msra.mxu0 0.0
      %2030 = vmatprep.subr.mxu0 0.0
      %2031 = vmatpush1.msra.mxu0 0.0
      %2032 = vmatprep.subr.mxu0 0.0
      %2033 = vmatpush1.msra.mxu0 0.0
      %2034 = vmatprep.subr.mxu0 0.0
      %2035 = vmatpush1.msra.mxu0 0.0
      %2036 = vmatprep.subr.mxu0 0.0
      %2037 = vmatpush1.msra.mxu0 0.0
      %2038 = vmatprep.subr.mxu0 0.0
      %2039 = vmatpush1.msra.mxu0 0.0
      %2040 = vmatprep.subr.mxu0 0.0
      %2041 = vmatpush1.msra.mxu0 0.0
      %2042 = vmatprep.subr.mxu0 0.0
      %2043 = vmatpush1.msra.mxu0 0.0
      %2044 = vmatprep.subr.mxu0 0.0
      %2045 = vmatpush1.msra.mxu0 0.0
      %2046 = vmatprep.mubr.f32.mxu0 0.0
      %v2047 = vand.u32 %v1539, 4294901760
      %2048 = vmatmul.mubr.f32.gmra.mrb[0].mxu0 %v2047
      %v2049 = vpop.f32.mrb[0].mxu0
      %v2050 = vadd.f32 %v1943, %v2049
      %v2051 = vpop.f32.mrb[0].mxu0
      %2052 = vmatprep.mubr.f32.mxu0 0.0
      %v2053 = vand.u32 %v1542, 4294901760
      %2054 = vmatmul.mubr.f32.gmra.mrb[0].mxu0 %v2053
      %v2055 = vpop.f32.mrb[0].mxu0
      %v2056 = vadd.f32 %v1951, %v2055
      %v2057 = vpop.f32.mrb[0].mxu0
      %2058 = vmatprep.mubr.f32.mxu0 0.0
      %v2059 = vand.u32 %v1545, 4294901760
      %2060 = vmatmul.mubr.f32.gmra.mrb[0].mxu0 %v2059
      %v2061 = vpop.f32.mrb[0].mxu0
      %v2062 = vadd.f32 %v1959, %v2061
      %v2063 = vpop.f32.mrb[0].mxu0
      %2064 = vmatprep.mubr.f32.mxu0 0.0
      %v2065 = vand.u32 %v1548, 4294901760
      %2066 = vmatmul.mubr.f32.gmra.mrb[0].mxu0 %v2065
      %v2067 = vpop.f32.mrb[0].mxu0
      %v2068 = vadd.f32 %v1967, %v2067
      %v2069 = vpop.f32.mrb[0].mxu0
      %2070 = vdwg.mxu0
      %2071 = vmatprep.subr.mxu0 0.0
      %v2072 = vand.u32 %v510, 4294901760
      %2073 = vmatpush1.msra.mxu0 %v2072
      %2074 = vmatprep.subr.mxu0 0.0
      %v2075 = vand.u32 %v511, 4294901760
      %2076 = vmatpush1.msra.mxu0 %v2075
      %2077 = vmatprep.subr.mxu0 0.0
      %v2078 = vand.u32 %v512, 4294901760
      %2079 = vmatpush1.msra.mxu0 %v2078
      %2080 = vmatprep.subr.mxu0 0.0
      %v2081 = vand.u32 %v513, 4294901760
      %2082 = vmatpush1.msra.mxu0 %v2081
      %2083 = vmatprep.subr.mxu0 0.0
      %2084 = vmatpush1.msra.mxu0 0.0
      %2085 = vmatprep.subr.mxu0 0.0
      %2086 = vmatpush1.msra.mxu0 0.0
      %2087 = vmatprep.subr.mxu0 0.0
      %2088 = vmatpush1.msra.mxu0 0.0
      %2089 = vmatprep.subr.mxu0 0.0
      %2090 = vmatpush1.msra.mxu0 0.0
      %2091 = vmatprep.subr.mxu0 0.0
      %2092 = vmatpush1.msra.mxu0 0.0
      %2093 = vmatprep.subr.mxu0 0.0
      %2094 = vmatpush1.msra.mxu0 0.0
      %2095 = vmatprep.subr.mxu0 0.0
      %2096 = vmatpush1.msra.mxu0 0.0
      %2097 = vmatprep.subr.mxu0 0.0
      %2098 = vmatpush1.msra.mxu0 0.0
      %2099 = vmatprep.subr.mxu0 0.0
      %2100 = vmatpush1.msra.mxu0 0.0
      %2101 = vmatprep.subr.mxu0 0.0
      %2102 = vmatpush1.msra.mxu0 0.0
      %2103 = vmatprep.subr.mxu0 0.0
      %2104 = vmatpush1.msra.mxu0 0.0
      %2105 = vmatprep.subr.mxu0 0.0
      %2106 = vmatpush1.msra.mxu0 0.0
      %2107 = vmatprep.subr.mxu0 0.0
      %2108 = vmatpush1.msra.mxu0 0.0
      %2109 = vmatprep.subr.mxu0 0.0
      %2110 = vmatpush1.msra.mxu0 0.0
      %2111 = vmatprep.subr.mxu0 0.0
      %2112 = vmatpush1.msra.mxu0 0.0
      %2113 = vmatprep.subr.mxu0 0.0
      %2114 = vmatpush1.msra.mxu0 0.0
      %2115 = vmatprep.subr.mxu0 0.0
      %2116 = vmatpush1.msra.mxu0 0.0
      %2117 = vmatprep.subr.mxu0 0.0
      %2118 = vmatpush1.msra.mxu0 0.0
      %2119 = vmatprep.subr.mxu0 0.0
      %2120 = vmatpush1.msra.mxu0 0.0
      %2121 = vmatprep.subr.mxu0 0.0
      %2122 = vmatpush1.msra.mxu0 0.0
      %2123 = vmatprep.subr.mxu0 0.0
      %2124 = vmatpush1.msra.mxu0 0.0
      %2125 = vmatprep.subr.mxu0 0.0
      %2126 = vmatpush1.msra.mxu0 0.0
      %2127 = vmatprep.subr.mxu0 0.0
      %2128 = vmatpush1.msra.mxu0 0.0
      %2129 = vmatprep.subr.mxu0 0.0
      %2130 = vmatpush1.msra.mxu0 0.0
      %2131 = vmatprep.subr.mxu0 0.0
      %2132 = vmatpush1.msra.mxu0 0.0
      %2133 = vmatprep.subr.mxu0 0.0
      %2134 = vmatpush1.msra.mxu0 0.0
      %2135 = vmatprep.subr.mxu0 0.0
      %2136 = vmatpush1.msra.mxu0 0.0
      %2137 = vmatprep.subr.mxu0 0.0
      %2138 = vmatpush1.msra.mxu0 0.0
      %2139 = vmatprep.mubr.f32.mxu0 0.0
      %v2140 = vand.u32 %v1539, 4294901760
      %2141 = vmatmul.mubr.f32.gmra.mrb[0].mxu0 %v2140
      %v2142 = vpop.f32.mrb[0].mxu0
      %v2143 = vadd.f32 %v2050, %v2142
      %v2144 = vpop.f32.mrb[0].mxu0
      %2145 = vmatprep.mubr.f32.mxu0 0.0
      %v2146 = vand.u32 %v1542, 4294901760
      %2147 = vmatmul.mubr.f32.gmra.mrb[0].mxu0 %v2146
      %v2148 = vpop.f32.mrb[0].mxu0
      %v2149 = vadd.f32 %v2056, %v2148
      %v2150 = vpop.f32.mrb[0].mxu0
      %2151 = vmatprep.mubr.f32.mxu0 0.0
      %v2152 = vand.u32 %v1545, 4294901760
      %2153 = vmatmul.mubr.f32.gmra.mrb[0].mxu0 %v2152
      %v2154 = vpop.f32.mrb[0].mxu0
      %v2155 = vadd.f32 %v2062, %v2154
      %v2156 = vpop.f32.mrb[0].mxu0
      %2157 = vmatprep.mubr.f32.mxu0 0.0
      %v2158 = vand.u32 %v1548, 4294901760
      %2159 = vmatmul.mubr.f32.gmra.mrb[0].mxu0 %v2158
      %v2160 = vpop.f32.mrb[0].mxu0
      %v2161 = vadd.f32 %v2068, %v2160
      %v2162 = vpop.f32.mrb[0].mxu0
      %2163 = vdwg.mxu0
      %v2164 = vld [vmem:[%s5] sm:$0xff]
      %v2165 = vld [vmem:[%s5 + $0x8] sm:$0xff]
      %v2166 = vld [vmem:[%s5 + $0x10] sm:$0x7]
      %v2167 = vld [vmem:[%s6] sm:$0xff]
      %v2168 = vld [vmem:[%s6 + $0x8] sm:$0xff]
      %v2169 = vld [vmem:[%s6 + $0x10] sm:$0xff]
      %2176 = vrot.lane.b32.xlu0 %v496, 127
      %v2177 = vpop.permute.xlu0 %2176
      %2178 = vrot.lane.b32.xlu0 %v497, 127
      %v2179 = vpop.permute.xlu0 %2178
      %2180 = vrot.lane.b32.xlu0 %v498, 127
      %v2181 = vpop.permute.xlu0 %2180
      %2182 = vrot.lane.b32.xlu0 %v499, 127
      %v2183 = vpop.permute.xlu0 %2182
      %2184 = vrot.lane.b32.xlu0 %v500, 127
      %v2185 = vpop.permute.xlu0 %2184
      %2186 = vrot.lane.b32.xlu0 %v501, 127
      %v2187 = vpop.permute.xlu0 %2186
      %v2194 = vmax.f32 %v496, %v2177
      %v2195 = vmax.f32 %v497, %v2179
      %v2196 = vmax.f32 %v498, %v2181
      %v2197 = vmax.f32 %v499, %v2183
      %v2198 = vmax.f32 %v500, %v2185
      %v2199 = vmax.f32 %v501, %v2187
      %2200 = vrot.lane.b32.xlu0 %v496, 126
      %v2201 = vpop.permute.xlu0 %2200
      %2202 = vrot.lane.b32.xlu0 %v497, 126
      %v2203 = vpop.permute.xlu0 %2202
      %2204 = vrot.lane.b32.xlu0 %v498, 126
      %v2205 = vpop.permute.xlu0 %2204
      %2206 = vrot.lane.b32.xlu0 %v499, 126
      %v2207 = vpop.permute.xlu0 %2206
      %2208 = vrot.lane.b32.xlu0 %v500, 126
      %v2209 = vpop.permute.xlu0 %2208
      %2210 = vrot.lane.b32.xlu0 %v501, 126
      %v2211 = vpop.permute.xlu0 %2210
      %v2218 = vmax.f32 %v2194, %v2201
      %v2219 = vmax.f32 %v2195, %v2203
      %v2220 = vmax.f32 %v2196, %v2205
      %v2221 = vmax.f32 %v2197, %v2207
      %v2222 = vmax.f32 %v2198, %v2209
      %v2223 = vmax.f32 %v2199, %v2211
      %2224 = vrot.lane.b32.xlu0 %v496, 125
      %v2225 = vpop.permute.xlu0 %2224
      %2226 = vrot.lane.b32.xlu0 %v497, 125
      %v2227 = vpop.permute.xlu0 %2226
      %2228 = vrot.lane.b32.xlu0 %v498, 125
      %v2229 = vpop.permute.xlu0 %2228
      %2230 = vrot.lane.b32.xlu0 %v499, 125
      %v2231 = vpop.permute.xlu0 %2230
      %2232 = vrot.lane.b32.xlu0 %v500, 125
      %v2233 = vpop.permute.xlu0 %2232
      %2234 = vrot.lane.b32.xlu0 %v501, 125
      %v2235 = vpop.permute.xlu0 %2234
      %v2242 = vmax.f32 %v2218, %v2225
      %v2243 = vmax.f32 %v2219, %v2227
      %v2244 = vmax.f32 %v2220, %v2229
      %v2245 = vmax.f32 %v2221, %v2231
      %v2246 = vmax.f32 %v2222, %v2233
      %v2247 = vmax.f32 %v2223, %v2235
      %v2254 = vrot.slane %v2242, 1
      %v2255 = vrot.slane %v2243, 1
      %v2256 = vsel %vm594, %v2254, %v2255
      %v2257 = vrot.slane %v2244, 1
      %v2258 = vsel %vm594, %v2255, %v2257
      %v2259 = vrot.slane %v2245, 1
      %v2260 = vrot.slane %v2246, 1
      %v2261 = vsel %vm594, %v2259, %v2260
      %v2262 = vrot.slane %v2247, 1
      %v2263 = vsel %vm594, %v2260, %v2262
      %v2270 = vmax.f32 %v2242, %v2256
      %v2271 = vmax.f32 %v2243, %v2258
      %v2272 = vmax.f32 %v2244, %v2257
      %v2273 = vmax.f32 %v2245, %v2261
      %v2274 = vmax.f32 %v2246, %v2263
      %v2275 = vmax.f32 %v2247, %v2262
      %v2276 = vrot.slane %v2242, 2
      %v2277 = vrot.slane %v2243, 2
      %v2278 = vsel %vm625, %v2276, %v2277
      %v2279 = vrot.slane %v2244, 2
      %v2280 = vsel %vm625, %v2277, %v2279
      %v2281 = vrot.slane %v2245, 2
      %v2282 = vrot.slane %v2246, 2
      %v2283 = vsel %vm625, %v2281, %v2282
      %v2284 = vrot.slane %v2247, 2
      %v2285 = vsel %vm625, %v2282, %v2284
      %v2292 = vmax.f32 %v2270, %v2278
      %v2293 = vmax.f32 %v2271, %v2280
      %v2294 = vmax.f32 %v2272, %v2279
      %v2295 = vmax.f32 %v2273, %v2283
      %v2296 = vmax.f32 %v2274, %v2285
      %v2297 = vmax.f32 %v2275, %v2284
      %vm2298 = vcmask 1044480
      %v2299 = vrot.slane %v2242, 3
      %v2300 = vrot.slane %v2243, 3
      %v2301 = vsel %vm2298, %v2299, %v2300
      %v2302 = vrot.slane %v2244, 3
      %v2303 = vsel %vm2298, %v2300, %v2302
      %v2304 = vrot.slane %v2245, 3
      %v2305 = vrot.slane %v2246, 3
      %v2306 = vsel %vm2298, %v2304, %v2305
      %v2307 = vrot.slane %v2247, 3
      %v2308 = vsel %vm2298, %v2305, %v2307
      %v2315 = vmax.f32 %v2292, %v2301
      %v2316 = vmax.f32 %v2293, %v2303
      %v2317 = vmax.f32 %v2294, %v2302
      %v2318 = vmax.f32 %v2295, %v2306
      %v2319 = vmax.f32 %v2296, %v2308
      %v2320 = vmax.f32 %v2297, %v2307
      %vm2321 = vcmask 1042432
      %v2322 = vsel %vm2321, %v2317, 0.0
      %v2323 = vsel %vm2321, %v2320, 0.0
      %vm2324 = vcmask 154624
      %v2326 = vsel %vm2324, %v2315, 0
      %v2329 = vsel %vm2324, %v2316, 0
      %v2332 = vsel %vm2324, %v2322, 0
      %v2335 = vsel %vm2324, %v2318, 0
      %v2338 = vsel %vm2324, %v2319, 0
      %v2341 = vsel %vm2324, %v2323, 0
      %v2344 = vsel %vm2321, %v2166, 0
      %2346 = vmatprep.subr.mxu0 0.0
      %v2347 = vand.u32 %v2164, 4294901760
      %2348 = vmatpush1.msra.mxu0 %v2347
      %2349 = vmatprep.subr.mxu0 0.0
      %v2350 = vand.u32 %v2165, 4294901760
      %2351 = vmatpush1.msra.mxu0 %v2350
      %2352 = vmatprep.subr.mxu0 0.0
      %v2353 = vand.u32 %v2344, 4294901760
      %2354 = vmatpush1.msra.mxu0 %v2353
      %2355 = vmatprep.subr.mxu0 0.0
      %2356 = vmatpush1.msra.mxu0 0.0
      %2357 = vmatprep.subr.mxu0 0.0
      %2358 = vmatpush1.msra.mxu0 0.0
      %2359 = vmatprep.subr.mxu0 0.0
      %2360 = vmatpush1.msra.mxu0 0.0
      %2361 = vmatprep.subr.mxu0 0.0
      %2362 = vmatpush1.msra.mxu0 0.0
      %2363 = vmatprep.subr.mxu0 0.0
      %2364 = vmatpush1.msra.mxu0 0.0
      %2365 = vmatprep.subr.mxu0 0.0
      %2366 = vmatpush1.msra.mxu0 0.0
      %2367 = vmatprep.subr.mxu0 0.0
      %2368 = vmatpush1.msra.mxu0 0.0
      %2369 = vmatprep.subr.mxu0 0.0
      %2370 = vmatpush1.msra.mxu0 0.0
      %2371 = vmatprep.subr.mxu0 0.0
      %2372 = vmatpush1.msra.mxu0 0.0
      %2373 = vmatprep.subr.mxu0 0.0
      %2374 = vmatpush1.msra.mxu0 0.0
      %2375 = vmatprep.subr.mxu0 0.0
      %2376 = vmatpush1.msra.mxu0 0.0
      %2377 = vmatprep.subr.mxu0 0.0
      %2378 = vmatpush1.msra.mxu0 0.0
      %2379 = vmatprep.subr.mxu0 0.0
      %2380 = vmatpush1.msra.mxu0 0.0
      %2381 = vmatprep.subr.mxu0 0.0
      %2382 = vmatpush1.msra.mxu0 0.0
      %2383 = vmatprep.subr.mxu0 0.0
      %2384 = vmatpush1.msra.mxu0 0.0
      %2385 = vmatprep.subr.mxu0 0.0
      %2386 = vmatpush1.msra.mxu0 0.0
      %2387 = vmatprep.subr.mxu0 0.0
      %2388 = vmatpush1.msra.mxu0 0.0
      %2389 = vmatprep.subr.mxu0 0.0
      %2390 = vmatpush1.msra.mxu0 0.0
      %2391 = vmatprep.subr.mxu0 0.0
      %2392 = vmatpush1.msra.mxu0 0.0
      %2393 = vmatprep.subr.mxu0 0.0
      %2394 = vmatpush1.msra.mxu0 0.0
      %2395 = vmatprep.subr.mxu0 0.0
      %2396 = vmatpush1.msra.mxu0 0.0
      %2397 = vmatprep.subr.mxu0 0.0
      %2398 = vmatpush1.msra.mxu0 0.0
      %2399 = vmatprep.subr.mxu0 0.0
      %2400 = vmatpush1.msra.mxu0 0.0
      %2401 = vmatprep.subr.mxu0 0.0
      %2402 = vmatpush1.msra.mxu0 0.0
      %2403 = vmatprep.subr.mxu0 0.0
      %2404 = vmatpush1.msra.mxu0 0.0
      %2405 = vmatprep.subr.mxu0 0.0
      %2406 = vmatpush1.msra.mxu0 0.0
      %2407 = vmatprep.subr.mxu0 0.0
      %2408 = vmatpush1.msra.mxu0 0.0
      %2409 = vmatprep.subr.mxu0 0.0
      %2410 = vmatpush1.msra.mxu0 0.0
      %2411 = vmatprep.subr.mxu0 0.0
      %2412 = vmatpush1.msra.mxu0 0.0
      %2413 = vmatprep.mubr.f32.mxu0 0.0
      %v2414 = vand.u32 %v2326, 4294901760
      %v2415 = vsub.f32 %v2326, %v2414
      %v2416 = vand.u32 %v2415, 4294901760
      %v2417 = vsub.f32 %v2415, %v2416
      %v2418 = vand.u32 %v2417, 4294901760
      %2419 = vmatmul.mubr.f32.gmra.mrb[0].mxu0 %v2418
      %v2420 = vpop.f32.mrb[0].mxu0
      %v2421 = vadd.f32 0.0, %v2420
      %v2422 = vpop.f32.mrb[0].mxu0
      %2423 = vmatprep.mubr.f32.mxu0 0.0
      %v2424 = vand.u32 %v2329, 4294901760
      %v2425 = vsub.f32 %v2329, %v2424
      %v2426 = vand.u32 %v2425, 4294901760
      %v2427 = vsub.f32 %v2425, %v2426
      %v2428 = vand.u32 %v2427, 4294901760
      %2429 = vmatmul.mubr.f32.gmra.mrb[0].mxu0 %v2428
      %v2430 = vpop.f32.mrb[0].mxu0
      %v2431 = vadd.f32 0.0, %v2430
      %v2432 = vpop.f32.mrb[0].mxu0
      %2433 = vmatprep.mubr.f32.mxu0 0.0
      %v2434 = vand.u32 %v2332, 4294901760
      %v2435 = vsub.f32 %v2332, %v2434
      %v2436 = vand.u32 %v2435, 4294901760
      %v2437 = vsub.f32 %v2435, %v2436
      %v2438 = vand.u32 %v2437, 4294901760
      %2439 = vmatmul.mubr.f32.gmra.mrb[0].mxu0 %v2438
      %v2440 = vpop.f32.mrb[0].mxu0
      %v2441 = vadd.f32 0.0, %v2440
      %v2442 = vpop.f32.mrb[0].mxu0
      %2443 = vmatprep.mubr.f32.mxu0 0.0
      %v2444 = vand.u32 %v2335, 4294901760
      %v2445 = vsub.f32 %v2335, %v2444
      %v2446 = vand.u32 %v2445, 4294901760
      %v2447 = vsub.f32 %v2445, %v2446
      %v2448 = vand.u32 %v2447, 4294901760
      %2449 = vmatmul.mubr.f32.gmra.mrb[0].mxu0 %v2448
      %v2450 = vpop.f32.mrb[0].mxu0
      %v2451 = vadd.f32 0.0, %v2450
      %v2452 = vpop.f32.mrb[0].mxu0
      %2453 = vmatprep.mubr.f32.mxu0 0.0
      %v2454 = vand.u32 %v2338, 4294901760
      %v2455 = vsub.f32 %v2338, %v2454
      %v2456 = vand.u32 %v2455, 4294901760
      %v2457 = vsub.f32 %v2455, %v2456
      %v2458 = vand.u32 %v2457, 4294901760
      %2459 = vmatmul.mubr.f32.gmra.mrb[0].mxu0 %v2458
      %v2460 = vpop.f32.mrb[0].mxu0
      %v2461 = vadd.f32 0.0, %v2460
      %v2462 = vpop.f32.mrb[0].mxu0
      %2463 = vmatprep.mubr.f32.mxu0 0.0
      %v2464 = vand.u32 %v2341, 4294901760
      %v2465 = vsub.f32 %v2341, %v2464
      %v2466 = vand.u32 %v2465, 4294901760
      %v2467 = vsub.f32 %v2465, %v2466
      %v2468 = vand.u32 %v2467, 4294901760
      %2469 = vmatmul.mubr.f32.gmra.mrb[0].mxu0 %v2468
      %v2470 = vpop.f32.mrb[0].mxu0
      %v2471 = vadd.f32 0.0, %v2470
      %v2472 = vpop.f32.mrb[0].mxu0
      %2473 = vdwg.mxu0
      %2474 = vmatprep.subr.mxu0 0.0
      %v2475 = vand.u32 %v2164, 4294901760
      %v2476 = vsub.f32 %v2164, %v2475
      %v2477 = vand.u32 %v2476, 4294901760
      %v2478 = vsub.f32 %v2476, %v2477
      %v2479 = vand.u32 %v2478, 4294901760
      %2480 = vmatpush1.msra.mxu0 %v2479
      %2481 = vmatprep.subr.mxu0 0.0
      %v2482 = vand.u32 %v2165, 4294901760
      %v2483 = vsub.f32 %v2165, %v2482
      %v2484 = vand.u32 %v2483, 4294901760
      %v2485 = vsub.f32 %v2483, %v2484
      %v2486 = vand.u32 %v2485, 4294901760
      %2487 = vmatpush1.msra.mxu0 %v2486
      %2488 = vmatprep.subr.mxu0 0.0
      %v2489 = vand.u32 %v2344, 4294901760
      %v2490 = vsub.f32 %v2344, %v2489
      %v2491 = vand.u32 %v2490, 4294901760
      %v2492 = vsub.f32 %v2490, %v2491
      %v2493 = vand.u32 %v2492, 4294901760
      %2494 = vmatpush1.msra.mxu0 %v2493
      %2495 = vmatprep.subr.mxu0 0.0
      %2496 = vmatpush1.msra.mxu0 0.0
      %2497 = vmatprep.subr.mxu0 0.0
      %2498 = vmatpush1.msra.mxu0 0.0
      %2499 = vmatprep.subr.mxu0 0.0
      %2500 = vmatpush1.msra.mxu0 0.0
      %2501 = vmatprep.subr.mxu0 0.0
      %2502 = vmatpush1.msra.mxu0 0.0
      %2503 = vmatprep.subr.mxu0 0.0
      %2504 = vmatpush1.msra.mxu0 0.0
      %2505 = vmatprep.subr.mxu0 0.0
      %2506 = vmatpush1.msra.mxu0 0.0
      %2507 = vmatprep.subr.mxu0 0.0
      %2508 = vmatpush1.msra.mxu0 0.0
      %2509 = vmatprep.subr.mxu0 0.0
      %2510 = vmatpush1.msra.mxu0 0.0
      %2511 = vmatprep.subr.mxu0 0.0
      %2512 = vmatpush1.msra.mxu0 0.0
      %2513 = vmatprep.subr.mxu0 0.0
      %2514 = vmatpush1.msra.mxu0 0.0
      %2515 = vmatprep.subr.mxu0 0.0
      %2516 = vmatpush1.msra.mxu0 0.0
      %2517 = vmatprep.subr.mxu0 0.0
      %2518 = vmatpush1.msra.mxu0 0.0
      %2519 = vmatprep.subr.mxu0 0.0
      %2520 = vmatpush1.msra.mxu0 0.0
      %2521 = vmatprep.subr.mxu0 0.0
      %2522 = vmatpush1.msra.mxu0 0.0
      %2523 = vmatprep.subr.mxu0 0.0
      %2524 = vmatpush1.msra.mxu0 0.0
      %2525 = vmatprep.subr.mxu0 0.0
      %2526 = vmatpush1.msra.mxu0 0.0
      %2527 = vmatprep.subr.mxu0 0.0
      %2528 = vmatpush1.msra.mxu0 0.0
      %2529 = vmatprep.subr.mxu0 0.0
      %2530 = vmatpush1.msra.mxu0 0.0
      %2531 = vmatprep.subr.mxu0 0.0
      %2532 = vmatpush1.msra.mxu0 0.0
      %2533 = vmatprep.subr.mxu0 0.0
      %2534 = vmatpush1.msra.mxu0 0.0
      %2535 = vmatprep.subr.mxu0 0.0
      %2536 = vmatpush1.msra.mxu0 0.0
      %2537 = vmatprep.subr.mxu0 0.0
      %2538 = vmatpush1.msra.mxu0 0.0
      %2539 = vmatprep.subr.mxu0 0.0
      %2540 = vmatpush1.msra.mxu0 0.0
      %2541 = vmatprep.subr.mxu0 0.0
      %2542 = vmatpush1.msra.mxu0 0.0
      %2543 = vmatprep.subr.mxu0 0.0
      %2544 = vmatpush1.msra.mxu0 0.0
      %2545 = vmatprep.subr.mxu0 0.0
      %2546 = vmatpush1.msra.mxu0 0.0
      %2547 = vmatprep.subr.mxu0 0.0
      %2548 = vmatpush1.msra.mxu0 0.0
      %2549 = vmatprep.subr.mxu0 0.0
      %2550 = vmatpush1.msra.mxu0 0.0
      %2551 = vmatprep.subr.mxu0 0.0
      %2552 = vmatpush1.msra.mxu0 0.0
      %2553 = vmatprep.mubr.f32.mxu0 0.0
      %v2554 = vand.u32 %v2326, 4294901760
      %2555 = vmatmul.mubr.f32.gmra.mrb[0].mxu0 %v2554
      %v2556 = vpop.f32.mrb[0].mxu0
      %v2557 = vadd.f32 %v2421, %v2556
      %v2558 = vpop.f32.mrb[0].mxu0
      %2559 = vmatprep.mubr.f32.mxu0 0.0
      %v2560 = vand.u32 %v2329, 4294901760
      %2561 = vmatmul.mubr.f32.gmra.mrb[0].mxu0 %v2560
      %v2562 = vpop.f32.mrb[0].mxu0
      %v2563 = vadd.f32 %v2431, %v2562
      %v2564 = vpop.f32.mrb[0].mxu0
      %2565 = vmatprep.mubr.f32.mxu0 0.0
      %v2566 = vand.u32 %v2332, 4294901760
      %2567 = vmatmul.mubr.f32.gmra.mrb[0].mxu0 %v2566
      %v2568 = vpop.f32.mrb[0].mxu0
      %v2569 = vadd.f32 %v2441, %v2568
      %v2570 = vpop.f32.mrb[0].mxu0
      %2571 = vmatprep.mubr.f32.mxu0 0.0
      %v2572 = vand.u32 %v2335, 4294901760
      %2573 = vmatmul.mubr.f32.gmra.mrb[0].mxu0 %v2572
      %v2574 = vpop.f32.mrb[0].mxu0
      %v2575 = vadd.f32 %v2451, %v2574
      %v2576 = vpop.f32.mrb[0].mxu0
      %2577 = vmatprep.mubr.f32.mxu0 0.0
      %v2578 = vand.u32 %v2338, 4294901760
      %2579 = vmatmul.mubr.f32.gmra.mrb[0].mxu0 %v2578
      %v2580 = vpop.f32.mrb[0].mxu0
      %v2581 = vadd.f32 %v2461, %v2580
      %v2582 = vpop.f32.mrb[0].mxu0
      %2583 = vmatprep.mubr.f32.mxu0 0.0
      %v2584 = vand.u32 %v2341, 4294901760
      %2585 = vmatmul.mubr.f32.gmra.mrb[0].mxu0 %v2584
      %v2586 = vpop.f32.mrb[0].mxu0
      %v2587 = vadd.f32 %v2471, %v2586
      %v2588 = vpop.f32.mrb[0].mxu0
      %2589 = vdwg.mxu0
      %2590 = vmatprep.subr.mxu0 0.0
      %v2591 = vand.u32 %v2164, 4294901760
      %v2592 = vsub.f32 %v2164, %v2591
      %2593 = vmatpush1.msra.mxu0 %v2592
      %2594 = vmatprep.subr.mxu0 0.0
      %v2595 = vand.u32 %v2165, 4294901760
      %v2596 = vsub.f32 %v2165, %v2595
      %2597 = vmatpush1.msra.mxu0 %v2596
      %2598 = vmatprep.subr.mxu0 0.0
      %v2599 = vand.u32 %v2344, 4294901760
      %v2600 = vsub.f32 %v2344, %v2599
      %2601 = vmatpush1.msra.mxu0 %v2600
      %2602 = vmatprep.subr.mxu0 0.0
      %2603 = vmatpush1.msra.mxu0 0.0
      %2604 = vmatprep.subr.mxu0 0.0
      %2605 = vmatpush1.msra.mxu0 0.0
      %2606 = vmatprep.subr.mxu0 0.0
      %2607 = vmatpush1.msra.mxu0 0.0
      %2608 = vmatprep.subr.mxu0 0.0
      %2609 = vmatpush1.msra.mxu0 0.0
      %2610 = vmatprep.subr.mxu0 0.0
      %2611 = vmatpush1.msra.mxu0 0.0
      %2612 = vmatprep.subr.mxu0 0.0
      %2613 = vmatpush1.msra.mxu0 0.0
      %2614 = vmatprep.subr.mxu0 0.0
      %2615 = vmatpush1.msra.mxu0 0.0
      %2616 = vmatprep.subr.mxu0 0.0
      %2617 = vmatpush1.msra.mxu0 0.0
      %2618 = vmatprep.subr.mxu0 0.0
      %2619 = vmatpush1.msra.mxu0 0.0
      %2620 = vmatprep.subr.mxu0 0.0
      %2621 = vmatpush1.msra.mxu0 0.0
      %2622 = vmatprep.subr.mxu0 0.0
      %2623 = vmatpush1.msra.mxu0 0.0
      %2624 = vmatprep.subr.mxu0 0.0
      %2625 = vmatpush1.msra.mxu0 0.0
      %2626 = vmatprep.subr.mxu0 0.0
      %2627 = vmatpush1.msra.mxu0 0.0
      %2628 = vmatprep.subr.mxu0 0.0
      %2629 = vmatpush1.msra.mxu0 0.0
      %2630 = vmatprep.subr.mxu0 0.0
      %2631 = vmatpush1.msra.mxu0 0.0
      %2632 = vmatprep.subr.mxu0 0.0
      %2633 = vmatpush1.msra.mxu0 0.0
      %2634 = vmatprep.subr.mxu0 0.0
      %2635 = vmatpush1.msra.mxu0 0.0
      %2636 = vmatprep.subr.mxu0 0.0
      %2637 = vmatpush1.msra.mxu0 0.0
      %2638 = vmatprep.subr.mxu0 0.0
      %2639 = vmatpush1.msra.mxu0 0.0
      %2640 = vmatprep.subr.mxu0 0.0
      %2641 = vmatpush1.msra.mxu0 0.0
      %2642 = vmatprep.subr.mxu0 0.0
      %2643 = vmatpush1.msra.mxu0 0.0
      %2644 = vmatprep.subr.mxu0 0.0
      %2645 = vmatpush1.msra.mxu0 0.0
      %2646 = vmatprep.subr.mxu0 0.0
      %2647 = vmatpush1.msra.mxu0 0.0
      %2648 = vmatprep.subr.mxu0 0.0
      %2649 = vmatpush1.msra.mxu0 0.0
      %2650 = vmatprep.subr.mxu0 0.0
      %2651 = vmatpush1.msra.mxu0 0.0
      %2652 = vmatprep.subr.mxu0 0.0
      %2653 = vmatpush1.msra.mxu0 0.0
      %2654 = vmatprep.subr.mxu0 0.0
      %2655 = vmatpush1.msra.mxu0 0.0
      %2656 = vmatprep.subr.mxu0 0.0
      %2657 = vmatpush1.msra.mxu0 0.0
      %2658 = vmatprep.subr.mxu0 0.0
      %2659 = vmatpush1.msra.mxu0 0.0
      %2660 = vmatprep.mubr.f32.mxu0 0.0
      %v2661 = vand.u32 %v2326, 4294901760
      %v2662 = vsub.f32 %v2326, %v2661
      %2663 = vmatmul.mubr.f32.gmra.mrb[0].mxu0 %v2662
      %v2664 = vpop.f32.mrb[0].mxu0
      %v2665 = vadd.f32 %v2557, %v2664
      %v2666 = vpop.f32.mrb[0].mxu0
      %2667 = vmatprep.mubr.f32.mxu0 0.0
      %v2668 = vand.u32 %v2329, 4294901760
      %v2669 = vsub.f32 %v2329, %v2668
      %2670 = vmatmul.mubr.f32.gmra.mrb[0].mxu0 %v2669
      %v2671 = vpop.f32.mrb[0].mxu0
      %v2672 = vadd.f32 %v2563, %v2671
      %v2673 = vpop.f32.mrb[0].mxu0
      %2674 = vmatprep.mubr.f32.mxu0 0.0
      %v2675 = vand.u32 %v2332, 4294901760
      %v2676 = vsub.f32 %v2332, %v2675
      %2677 = vmatmul.mubr.f32.gmra.mrb[0].mxu0 %v2676
      %v2678 = vpop.f32.mrb[0].mxu0
      %v2679 = vadd.f32 %v2569, %v2678
      %v2680 = vpop.f32.mrb[0].mxu0
      %2681 = vmatprep.mubr.f32.mxu0 0.0
      %v2682 = vand.u32 %v2335, 4294901760
      %v2683 = vsub.f32 %v2335, %v2682
      %2684 = vmatmul.mubr.f32.gmra.mrb[0].mxu0 %v2683
      %v2685 = vpop.f32.mrb[0].mxu0
      %v2686 = vadd.f32 %v2575, %v2685
      %v2687 = vpop.f32.mrb[0].mxu0
      %2688 = vmatprep.mubr.f32.mxu0 0.0
      %v2689 = vand.u32 %v2338, 4294901760
      %v2690 = vsub.f32 %v2338, %v2689
      %2691 = vmatmul.mubr.f32.gmra.mrb[0].mxu0 %v2690
      %v2692 = vpop.f32.mrb[0].mxu0
      %v2693 = vadd.f32 %v2581, %v2692
      %v2694 = vpop.f32.mrb[0].mxu0
      %2695 = vmatprep.mubr.f32.mxu0 0.0
      %v2696 = vand.u32 %v2341, 4294901760
      %v2697 = vsub.f32 %v2341, %v2696
      %2698 = vmatmul.mubr.f32.gmra.mrb[0].mxu0 %v2697
      %v2699 = vpop.f32.mrb[0].mxu0
      %v2700 = vadd.f32 %v2587, %v2699
      %v2701 = vpop.f32.mrb[0].mxu0
      %2702 = vdwg.mxu0
      %2703 = vmatprep.subr.mxu0 0.0
      %v2704 = vand.u32 %v2164, 4294901760
      %2705 = vmatpush1.msra.mxu0 %v2704
      %2706 = vmatprep.subr.mxu0 0.0
      %v2707 = vand.u32 %v2165, 4294901760
      %2708 = vmatpush1.msra.mxu0 %v2707
      %2709 = vmatprep.subr.mxu0 0.0
      %v2710 = vand.u32 %v2344, 4294901760
      %2711 = vmatpush1.msra.mxu0 %v2710
      %2712 = vmatprep.subr.mxu0 0.0
      %2713 = vmatpush1.msra.mxu0 0.0
      %2714 = vmatprep.subr.mxu0 0.0
      %2715 = vmatpush1.msra.mxu0 0.0
      %2716 = vmatprep.subr.mxu0 0.0
      %2717 = vmatpush1.msra.mxu0 0.0
      %2718 = vmatprep.subr.mxu0 0.0
      %2719 = vmatpush1.msra.mxu0 0.0
      %2720 = vmatprep.subr.mxu0 0.0
      %2721 = vmatpush1.msra.mxu0 0.0
      %2722 = vmatprep.subr.mxu0 0.0
      %2723 = vmatpush1.msra.mxu0 0.0
      %2724 = vmatprep.subr.mxu0 0.0
      %2725 = vmatpush1.msra.mxu0 0.0
      %2726 = vmatprep.subr.mxu0 0.0
      %2727 = vmatpush1.msra.mxu0 0.0
      %2728 = vmatprep.subr.mxu0 0.0
      %2729 = vmatpush1.msra.mxu0 0.0
      %2730 = vmatprep.subr.mxu0 0.0
      %2731 = vmatpush1.msra.mxu0 0.0
      %2732 = vmatprep.subr.mxu0 0.0
      %2733 = vmatpush1.msra.mxu0 0.0
      %2734 = vmatprep.subr.mxu0 0.0
      %2735 = vmatpush1.msra.mxu0 0.0
      %2736 = vmatprep.subr.mxu0 0.0
      %2737 = vmatpush1.msra.mxu0 0.0
      %2738 = vmatprep.subr.mxu0 0.0
      %2739 = vmatpush1.msra.mxu0 0.0
      %2740 = vmatprep.subr.mxu0 0.0
      %2741 = vmatpush1.msra.mxu0 0.0
      %2742 = vmatprep.subr.mxu0 0.0
      %2743 = vmatpush1.msra.mxu0 0.0
      %2744 = vmatprep.subr.mxu0 0.0
      %2745 = vmatpush1.msra.mxu0 0.0
      %2746 = vmatprep.subr.mxu0 0.0
      %2747 = vmatpush1.msra.mxu0 0.0
      %2748 = vmatprep.subr.mxu0 0.0
      %2749 = vmatpush1.msra.mxu0 0.0
      %2750 = vmatprep.subr.mxu0 0.0
      %2751 = vmatpush1.msra.mxu0 0.0
      %2752 = vmatprep.subr.mxu0 0.0
      %2753 = vmatpush1.msra.mxu0 0.0
      %2754 = vmatprep.subr.mxu0 0.0
      %2755 = vmatpush1.msra.mxu0 0.0
      %2756 = vmatprep.subr.mxu0 0.0
      %2757 = vmatpush1.msra.mxu0 0.0
      %2758 = vmatprep.subr.mxu0 0.0
      %2759 = vmatpush1.msra.mxu0 0.0
      %2760 = vmatprep.subr.mxu0 0.0
      %2761 = vmatpush1.msra.mxu0 0.0
      %2762 = vmatprep.subr.mxu0 0.0
      %2763 = vmatpush1.msra.mxu0 0.0
      %2764 = vmatprep.subr.mxu0 0.0
      %2765 = vmatpush1.msra.mxu0 0.0
      %2766 = vmatprep.subr.mxu0 0.0
      %2767 = vmatpush1.msra.mxu0 0.0
      %2768 = vmatprep.subr.mxu0 0.0
      %2769 = vmatpush1.msra.mxu0 0.0
      %2770 = vmatprep.mubr.f32.mxu0 0.0
      %v2771 = vand.u32 %v2326, 4294901760
      %v2772 = vsub.f32 %v2326, %v2771
      %v2773 = vand.u32 %v2772, 4294901760
      %2774 = vmatmul.mubr.f32.gmra.mrb[0].mxu0 %v2773
      %v2775 = vpop.f32.mrb[0].mxu0
      %v2776 = vadd.f32 %v2665, %v2775
      %v2777 = vpop.f32.mrb[0].mxu0
      %2778 = vmatprep.mubr.f32.mxu0 0.0
      %v2779 = vand.u32 %v2329, 4294901760
      %v2780 = vsub.f32 %v2329, %v2779
      %v2781 = vand.u32 %v2780, 4294901760
      %2782 = vmatmul.mubr.f32.gmra.mrb[0].mxu0 %v2781
      %v2783 = vpop.f32.mrb[0].mxu0
      %v2784 = vadd.f32 %v2672, %v2783
      %v2785 = vpop.f32.mrb[0].mxu0
      %2786 = vmatprep.mubr.f32.mxu0 0.0
      %v2787 = vand.u32 %v2332, 4294901760
      %v2788 = vsub.f32 %v2332, %v2787
      %v2789 = vand.u32 %v2788, 4294901760
      %2790 = vmatmul.mubr.f32.gmra.mrb[0].mxu0 %v2789
      %v2791 = vpop.f32.mrb[0].mxu0
      %v2792 = vadd.f32 %v2679, %v2791
      %v2793 = vpop.f32.mrb[0].mxu0
      %2794 = vmatprep.mubr.f32.mxu0 0.0
      %v2795 = vand.u32 %v2335, 4294901760
      %v2796 = vsub.f32 %v2335, %v2795
      %v2797 = vand.u32 %v2796, 4294901760
      %2798 = vmatmul.mubr.f32.gmra.mrb[0].mxu0 %v2797
      %v2799 = vpop.f32.mrb[0].mxu0
      %v2800 = vadd.f32 %v2686, %v2799
      %v2801 = vpop.f32.mrb[0].mxu0
      %2802 = vmatprep.mubr.f32.mxu0 0.0
      %v2803 = vand.u32 %v2338, 4294901760
      %v2804 = vsub.f32 %v2338, %v2803
      %v2805 = vand.u32 %v2804, 4294901760
      %2806 = vmatmul.mubr.f32.gmra.mrb[0].mxu0 %v2805
      %v2807 = vpop.f32.mrb[0].mxu0
      %v2808 = vadd.f32 %v2693, %v2807
      %v2809 = vpop.f32.mrb[0].mxu0
      %2810 = vmatprep.mubr.f32.mxu0 0.0
      %v2811 = vand.u32 %v2341, 4294901760
      %v2812 = vsub.f32 %v2341, %v2811
      %v2813 = vand.u32 %v2812, 4294901760
      %2814 = vmatmul.mubr.f32.gmra.mrb[0].mxu0 %v2813
      %v2815 = vpop.f32.mrb[0].mxu0
      %v2816 = vadd.f32 %v2700, %v2815
      %v2817 = vpop.f32.mrb[0].mxu0
      %2818 = vdwg.mxu0
      %2819 = vmatprep.subr.mxu0 0.0
      %v2820 = vand.u32 %v2164, 4294901760
      %v2821 = vsub.f32 %v2164, %v2820
      %v2822 = vand.u32 %v2821, 4294901760
      %2823 = vmatpush1.msra.mxu0 %v2822
      %2824 = vmatprep.subr.mxu0 0.0
      %v2825 = vand.u32 %v2165, 4294901760
      %v2826 = vsub.f32 %v2165, %v2825
      %v2827 = vand.u32 %v2826, 4294901760
      %2828 = vmatpush1.msra.mxu0 %v2827
      %2829 = vmatprep.subr.mxu0 0.0
      %v2830 = vand.u32 %v2344, 4294901760
      %v2831 = vsub.f32 %v2344, %v2830
      %v2832 = vand.u32 %v2831, 4294901760
      %2833 = vmatpush1.msra.mxu0 %v2832
      %2834 = vmatprep.subr.mxu0 0.0
      %2835 = vmatpush1.msra.mxu0 0.0
      %2836 = vmatprep.subr.mxu0 0.0
      %2837 = vmatpush1.msra.mxu0 0.0
      %2838 = vmatprep.subr.mxu0 0.0
      %2839 = vmatpush1.msra.mxu0 0.0
      %2840 = vmatprep.subr.mxu0 0.0
      %2841 = vmatpush1.msra.mxu0 0.0
      %2842 = vmatprep.subr.mxu0 0.0
      %2843 = vmatpush1.msra.mxu0 0.0
      %2844 = vmatprep.subr.mxu0 0.0
      %2845 = vmatpush1.msra.mxu0 0.0
      %2846 = vmatprep.subr.mxu0 0.0
      %2847 = vmatpush1.msra.mxu0 0.0
      %2848 = vmatprep.subr.mxu0 0.0
      %2849 = vmatpush1.msra.mxu0 0.0
      %2850 = vmatprep.subr.mxu0 0.0
      %2851 = vmatpush1.msra.mxu0 0.0
      %2852 = vmatprep.subr.mxu0 0.0
      %2853 = vmatpush1.msra.mxu0 0.0
      %2854 = vmatprep.subr.mxu0 0.0
      %2855 = vmatpush1.msra.mxu0 0.0
      %2856 = vmatprep.subr.mxu0 0.0
      %2857 = vmatpush1.msra.mxu0 0.0
      %2858 = vmatprep.subr.mxu0 0.0
      %2859 = vmatpush1.msra.mxu0 0.0
      %2860 = vmatprep.subr.mxu0 0.0
      %2861 = vmatpush1.msra.mxu0 0.0
      %2862 = vmatprep.subr.mxu0 0.0
      %2863 = vmatpush1.msra.mxu0 0.0
      %2864 = vmatprep.subr.mxu0 0.0
      %2865 = vmatpush1.msra.mxu0 0.0
      %2866 = vmatprep.subr.mxu0 0.0
      %2867 = vmatpush1.msra.mxu0 0.0
      %2868 = vmatprep.subr.mxu0 0.0
      %2869 = vmatpush1.msra.mxu0 0.0
      %2870 = vmatprep.subr.mxu0 0.0
      %2871 = vmatpush1.msra.mxu0 0.0
      %2872 = vmatprep.subr.mxu0 0.0
      %2873 = vmatpush1.msra.mxu0 0.0
      %2874 = vmatprep.subr.mxu0 0.0
      %2875 = vmatpush1.msra.mxu0 0.0
      %2876 = vmatprep.subr.mxu0 0.0
      %2877 = vmatpush1.msra.mxu0 0.0
      %2878 = vmatprep.subr.mxu0 0.0
      %2879 = vmatpush1.msra.mxu0 0.0
      %2880 = vmatprep.subr.mxu0 0.0
      %2881 = vmatpush1.msra.mxu0 0.0
      %2882 = vmatprep.subr.mxu0 0.0
      %2883 = vmatpush1.msra.mxu0 0.0
      %2884 = vmatprep.subr.mxu0 0.0
      %2885 = vmatpush1.msra.mxu0 0.0
      %2886 = vmatprep.subr.mxu0 0.0
      %2887 = vmatpush1.msra.mxu0 0.0
      %2888 = vmatprep.subr.mxu0 0.0
      %2889 = vmatpush1.msra.mxu0 0.0
      %2890 = vmatprep.subr.mxu0 0.0
      %2891 = vmatpush1.msra.mxu0 0.0
      %2892 = vmatprep.mubr.f32.mxu0 0.0
      %v2893 = vand.u32 %v2326, 4294901760
      %2894 = vmatmul.mubr.f32.gmra.mrb[0].mxu0 %v2893
      %v2895 = vpop.f32.mrb[0].mxu0
      %v2896 = vadd.f32 %v2776, %v2895
      %v2897 = vpop.f32.mrb[0].mxu0
      %2898 = vmatprep.mubr.f32.mxu0 0.0
      %v2899 = vand.u32 %v2329, 4294901760
      %2900 = vmatmul.mubr.f32.gmra.mrb[0].mxu0 %v2899
      %v2901 = vpop.f32.mrb[0].mxu0
      %v2902 = vadd.f32 %v2784, %v2901
      %v2903 = vpop.f32.mrb[0].mxu0
      %2904 = vmatprep.mubr.f32.mxu0 0.0
      %v2905 = vand.u32 %v2332, 4294901760
      %2906 = vmatmul.mubr.f32.gmra.mrb[0].mxu0 %v2905
      %v2907 = vpop.f32.mrb[0].mxu0
      %v2908 = vadd.f32 %v2792, %v2907
      %v2909 = vpop.f32.mrb[0].mxu0
      %2910 = vmatprep.mubr.f32.mxu0 0.0
      %v2911 = vand.u32 %v2335, 4294901760
      %2912 = vmatmul.mubr.f32.gmra.mrb[0].mxu0 %v2911
      %v2913 = vpop.f32.mrb[0].mxu0
      %v2914 = vadd.f32 %v2800, %v2913
      %v2915 = vpop.f32.mrb[0].mxu0
      %2916 = vmatprep.mubr.f32.mxu0 0.0
      %v2917 = vand.u32 %v2338, 4294901760
      %2918 = vmatmul.mubr.f32.gmra.mrb[0].mxu0 %v2917
      %v2919 = vpop.f32.mrb[0].mxu0
      %v2920 = vadd.f32 %v2808, %v2919
      %v2921 = vpop.f32.mrb[0].mxu0
      %2922 = vmatprep.mubr.f32.mxu0 0.0
      %v2923 = vand.u32 %v2341, 4294901760
      %2924 = vmatmul.mubr.f32.gmra.mrb[0].mxu0 %v2923
      %v2925 = vpop.f32.mrb[0].mxu0
      %v2926 = vadd.f32 %v2816, %v2925
      %v2927 = vpop.f32.mrb[0].mxu0
      %2928 = vdwg.mxu0
      %2929 = vmatprep.subr.mxu0 0.0
      %v2930 = vand.u32 %v2164, 4294901760
      %2931 = vmatpush1.msra.mxu0 %v2930
      %2932 = vmatprep.subr.mxu0 0.0
      %v2933 = vand.u32 %v2165, 4294901760
      %2934 = vmatpush1.msra.mxu0 %v2933
      %2935 = vmatprep.subr.mxu0 0.0
      %v2936 = vand.u32 %v2344, 4294901760
      %2937 = vmatpush1.msra.mxu0 %v2936
      %2938 = vmatprep.subr.mxu0 0.0
      %2939 = vmatpush1.msra.mxu0 0.0
      %2940 = vmatprep.subr.mxu0 0.0
      %2941 = vmatpush1.msra.mxu0 0.0
      %2942 = vmatprep.subr.mxu0 0.0
      %2943 = vmatpush1.msra.mxu0 0.0
      %2944 = vmatprep.subr.mxu0 0.0
      %2945 = vmatpush1.msra.mxu0 0.0
      %2946 = vmatprep.subr.mxu0 0.0
      %2947 = vmatpush1.msra.mxu0 0.0
      %2948 = vmatprep.subr.mxu0 0.0
      %2949 = vmatpush1.msra.mxu0 0.0
      %2950 = vmatprep.subr.mxu0 0.0
      %2951 = vmatpush1.msra.mxu0 0.0
      %2952 = vmatprep.subr.mxu0 0.0
      %2953 = vmatpush1.msra.mxu0 0.0
      %2954 = vmatprep.subr.mxu0 0.0
      %2955 = vmatpush1.msra.mxu0 0.0
      %2956 = vmatprep.subr.mxu0 0.0
      %2957 = vmatpush1.msra.mxu0 0.0
      %2958 = vmatprep.subr.mxu0 0.0
      %2959 = vmatpush1.msra.mxu0 0.0
      %2960 = vmatprep.subr.mxu0 0.0
      %2961 = vmatpush1.msra.mxu0 0.0
      %2962 = vmatprep.subr.mxu0 0.0
      %2963 = vmatpush1.msra.mxu0 0.0
      %2964 = vmatprep.subr.mxu0 0.0
      %2965 = vmatpush1.msra.mxu0 0.0
      %2966 = vmatprep.subr.mxu0 0.0
      %2967 = vmatpush1.msra.mxu0 0.0
      %2968 = vmatprep.subr.mxu0 0.0
      %2969 = vmatpush1.msra.mxu0 0.0
      %2970 = vmatprep.subr.mxu0 0.0
      %2971 = vmatpush1.msra.mxu0 0.0
      %2972 = vmatprep.subr.mxu0 0.0
      %2973 = vmatpush1.msra.mxu0 0.0
      %2974 = vmatprep.subr.mxu0 0.0
      %2975 = vmatpush1.msra.mxu0 0.0
      %2976 = vmatprep.subr.mxu0 0.0
      %2977 = vmatpush1.msra.mxu0 0.0
      %2978 = vmatprep.subr.mxu0 0.0
      %2979 = vmatpush1.msra.mxu0 0.0
      %2980 = vmatprep.subr.mxu0 0.0
      %2981 = vmatpush1.msra.mxu0 0.0
      %2982 = vmatprep.subr.mxu0 0.0
      %2983 = vmatpush1.msra.mxu0 0.0
      %2984 = vmatprep.subr.mxu0 0.0
      %2985 = vmatpush1.msra.mxu0 0.0
      %2986 = vmatprep.subr.mxu0 0.0
      %2987 = vmatpush1.msra.mxu0 0.0
      %2988 = vmatprep.subr.mxu0 0.0
      %2989 = vmatpush1.msra.mxu0 0.0
      %2990 = vmatprep.subr.mxu0 0.0
      %2991 = vmatpush1.msra.mxu0 0.0
      %2992 = vmatprep.subr.mxu0 0.0
      %2993 = vmatpush1.msra.mxu0 0.0
      %2994 = vmatprep.subr.mxu0 0.0
      %2995 = vmatpush1.msra.mxu0 0.0
      %2996 = vmatprep.mubr.f32.mxu0 0.0
      %v2997 = vand.u32 %v2326, 4294901760
      %2998 = vmatmul.mubr.f32.gmra.mrb[0].mxu0 %v2997
      %v2999 = vpop.f32.mrb[0].mxu0
      %v3000 = vadd.f32 %v2896, %v2999
      %v3001 = vpop.f32.mrb[0].mxu0
      %3002 = vmatprep.mubr.f32.mxu0 0.0
      %v3003 = vand.u32 %v2329, 4294901760
      %3004 = vmatmul.mubr.f32.gmra.mrb[0].mxu0 %v3003
      %v3005 = vpop.f32.mrb[0].mxu0
      %v3006 = vadd.f32 %v2902, %v3005
      %v3007 = vpop.f32.mrb[0].mxu0
      %3008 = vmatprep.mubr.f32.mxu0 0.0
      %v3009 = vand.u32 %v2332, 4294901760
      %3010 = vmatmul.mubr.f32.gmra.mrb[0].mxu0 %v3009
      %v3011 = vpop.f32.mrb[0].mxu0
      %v3012 = vadd.f32 %v2908, %v3011
      %v3013 = vpop.f32.mrb[0].mxu0
      %3014 = vmatprep.mubr.f32.mxu0 0.0
      %v3015 = vand.u32 %v2335, 4294901760
      %3016 = vmatmul.mubr.f32.gmra.mrb[0].mxu0 %v3015
      %v3017 = vpop.f32.mrb[0].mxu0
      %v3018 = vadd.f32 %v2914, %v3017
      %v3019 = vpop.f32.mrb[0].mxu0
      %3020 = vmatprep.mubr.f32.mxu0 0.0
      %v3021 = vand.u32 %v2338, 4294901760
      %3022 = vmatmul.mubr.f32.gmra.mrb[0].mxu0 %v3021
      %v3023 = vpop.f32.mrb[0].mxu0
      %v3024 = vadd.f32 %v2920, %v3023
      %v3025 = vpop.f32.mrb[0].mxu0
      %3026 = vmatprep.mubr.f32.mxu0 0.0
      %v3027 = vand.u32 %v2341, 4294901760
      %3028 = vmatmul.mubr.f32.gmra.mrb[0].mxu0 %v3027
      %v3029 = vpop.f32.mrb[0].mxu0
      %v3030 = vadd.f32 %v2926, %v3029
      %v3031 = vpop.f32.mrb[0].mxu0
      %3032 = vdwg.mxu0
      %3033 = vxpose.xlu0.b32.start [1/16] %v3000, 128
      %3034 = vxpose.xlu0.b32.cont [2/16] %v3006, 128
      %3035 = vxpose.xlu0.b32.cont [3/16] %v3012, 128
      %3036 = vxpose.xlu0.b32.cont [4/16] 0.0, 128
      %3037 = vxpose.xlu0.b32.cont [5/16] 0.0, 128
      %3038 = vxpose.xlu0.b32.cont [6/16] 0.0, 128
      %3039 = vxpose.xlu0.b32.cont [7/16] 0.0, 128
      %3040 = vxpose.xlu0.b32.cont [8/16] 0.0, 128
      %3041 = vxpose.xlu0.b32.cont [9/16] 0.0, 128
      %3042 = vxpose.xlu0.b32.cont [10/16] 0.0, 128
      %3043 = vxpose.xlu0.b32.cont [11/16] 0.0, 128
      %3044 = vxpose.xlu0.b32.cont [12/16] 0.0, 128
      %3045 = vxpose.xlu0.b32.cont [13/16] 0.0, 128
      %3046 = vxpose.xlu0.b32.cont [14/16] 0.0, 128
      %3047 = vxpose.xlu0.b32.cont [15/16] 0.0, 128
      %3048 = vxpose.xlu0.b32.end [16/16] 0.0, 128
      %v3049 = vpop.trf.xlu0
      %v3050 = vpop.trf.xlu0
      %v3051 = vpop.trf.xlu0
      %v3052 = vpop.trf.xlu0
      %v3053 = vpop.trf.xlu0
      %v3054 = vpop.trf.xlu0
      %v3055 = vpop.trf.xlu0
      %v3056 = vpop.trf.xlu0
      %v3057 = vpop.trf.xlu0
      %v3058 = vpop.trf.xlu0
      %v3059 = vpop.trf.xlu0
      %v3060 = vpop.trf.xlu0
      %v3061 = vpop.trf.xlu0
      %v3062 = vpop.trf.xlu0
      %v3063 = vpop.trf.xlu0
      %v3064 = vpop.trf.xlu0
      %3065 = vxpose.xlu0.b32.start [1/16] %v3018, 128
      %3066 = vxpose.xlu0.b32.cont [2/16] %v3024, 128
      %3067 = vxpose.xlu0.b32.cont [3/16] %v3030, 128
      %3068 = vxpose.xlu0.b32.cont [4/16] 0.0, 128
      %3069 = vxpose.xlu0.b32.cont [5/16] 0.0, 128
      %3070 = vxpose.xlu0.b32.cont [6/16] 0.0, 128
      %3071 = vxpose.xlu0.b32.cont [7/16] 0.0, 128
      %3072 = vxpose.xlu0.b32.cont [8/16] 0.0, 128
      %3073 = vxpose.xlu0.b32.cont [9/16] 0.0, 128
      %3074 = vxpose.xlu0.b32.cont [10/16] 0.0, 128
      %3075 = vxpose.xlu0.b32.cont [11/16] 0.0, 128
      %3076 = vxpose.xlu0.b32.cont [12/16] 0.0, 128
      %3077 = vxpose.xlu0.b32.cont [13/16] 0.0, 128
      %3078 = vxpose.xlu0.b32.cont [14/16] 0.0, 128
      %3079 = vxpose.xlu0.b32.cont [15/16] 0.0, 128
      %3080 = vxpose.xlu0.b32.end [16/16] 0.0, 128
      %v3081 = vpop.trf.xlu0
      %v3082 = vpop.trf.xlu0
      %v3083 = vpop.trf.xlu0
      %v3084 = vpop.trf.xlu0
      %v3085 = vpop.trf.xlu0
      %v3086 = vpop.trf.xlu0
      %v3087 = vpop.trf.xlu0
      %v3088 = vpop.trf.xlu0
      %v3089 = vpop.trf.xlu0
      %v3090 = vpop.trf.xlu0
      %v3091 = vpop.trf.xlu0
      %v3092 = vpop.trf.xlu0
      %v3093 = vpop.trf.xlu0
      %v3094 = vpop.trf.xlu0
      %v3095 = vpop.trf.xlu0
      %v3096 = vpop.trf.xlu0
      %vm3097 = vcmask 195584
      %v3099 = vsel %vm3097, %v3049, 0
      %v3102 = vsel %vm3097, %v3050, 0
      %v3105 = vsel %vm3097, %v3081, 0
      %v3108 = vsel %vm3097, %v3082, 0
      %3110 = vmatprep.subr.mxu0 0.0
      %v3111 = vand.u32 %v2167, 4294901760
      %3112 = vmatpush1.msra.mxu0 %v3111
      %3113 = vmatprep.subr.mxu0 0.0
      %v3114 = vand.u32 %v2168, 4294901760
      %3115 = vmatpush1.msra.mxu0 %v3114
      %3116 = vmatprep.subr.mxu0 0.0
      %v3117 = vand.u32 %v2169, 4294901760
      %3118 = vmatpush1.msra.mxu0 %v3117
      %3119 = vmatprep.subr.mxu0 0.0
      %3120 = vmatpush1.msra.mxu0 0.0
      %3121 = vmatprep.subr.mxu0 0.0
      %3122 = vmatpush1.msra.mxu0 0.0
      %3123 = vmatprep.subr.mxu0 0.0
      %3124 = vmatpush1.msra.mxu0 0.0
      %3125 = vmatprep.subr.mxu0 0.0
      %3126 = vmatpush1.msra.mxu0 0.0
      %3127 = vmatprep.subr.mxu0 0.0
      %3128 = vmatpush1.msra.mxu0 0.0
      %3129 = vmatprep.subr.mxu0 0.0
      %3130 = vmatpush1.msra.mxu0 0.0
      %3131 = vmatprep.subr.mxu0 0.0
      %3132 = vmatpush1.msra.mxu0 0.0
      %3133 = vmatprep.subr.mxu0 0.0
      %3134 = vmatpush1.msra.mxu0 0.0
      %3135 = vmatprep.subr.mxu0 0.0
      %3136 = vmatpush1.msra.mxu0 0.0
      %3137 = vmatprep.subr.mxu0 0.0
      %3138 = vmatpush1.msra.mxu0 0.0
      %3139 = vmatprep.subr.mxu0 0.0
      %3140 = vmatpush1.msra.mxu0 0.0
      %3141 = vmatprep.subr.mxu0 0.0
      %3142 = vmatpush1.msra.mxu0 0.0
      %3143 = vmatprep.subr.mxu0 0.0
      %3144 = vmatpush1.msra.mxu0 0.0
      %3145 = vmatprep.subr.mxu0 0.0
      %3146 = vmatpush1.msra.mxu0 0.0
      %3147 = vmatprep.subr.mxu0 0.0
      %3148 = vmatpush1.msra.mxu0 0.0
      %3149 = vmatprep.subr.mxu0 0.0
      %3150 = vmatpush1.msra.mxu0 0.0
      %3151 = vmatprep.subr.mxu0 0.0
      %3152 = vmatpush1.msra.mxu0 0.0
      %3153 = vmatprep.subr.mxu0 0.0
      %3154 = vmatpush1.msra.mxu0 0.0
      %3155 = vmatprep.subr.mxu0 0.0
      %3156 = vmatpush1.msra.mxu0 0.0
      %3157 = vmatprep.subr.mxu0 0.0
      %3158 = vmatpush1.msra.mxu0 0.0
      %3159 = vmatprep.subr.mxu0 0.0
      %3160 = vmatpush1.msra.mxu0 0.0
      %3161 = vmatprep.subr.mxu0 0.0
      %3162 = vmatpush1.msra.mxu0 0.0
      %3163 = vmatprep.subr.mxu0 0.0
      %3164 = vmatpush1.msra.mxu0 0.0
      %3165 = vmatprep.subr.mxu0 0.0
      %3166 = vmatpush1.msra.mxu0 0.0
      %3167 = vmatprep.subr.mxu0 0.0
      %3168 = vmatpush1.msra.mxu0 0.0
      %3169 = vmatprep.subr.mxu0 0.0
      %3170 = vmatpush1.msra.mxu0 0.0
      %3171 = vmatprep.subr.mxu0 0.0
      %3172 = vmatpush1.msra.mxu0 0.0
      %3173 = vmatprep.subr.mxu0 0.0
      %3174 = vmatpush1.msra.mxu0 0.0
      %3175 = vmatprep.subr.mxu0 0.0
      %3176 = vmatpush1.msra.mxu0 0.0
      %3177 = vmatprep.mubr.f32.mxu0 0.0
      %v3178 = vand.u32 %v3099, 4294901760
      %v3179 = vsub.f32 %v3099, %v3178
      %v3180 = vand.u32 %v3179, 4294901760
      %v3181 = vsub.f32 %v3179, %v3180
      %v3182 = vand.u32 %v3181, 4294901760
      %3183 = vmatmul.mubr.f32.gmra.mrb[0].mxu0 %v3182
      %v3184 = vpop.f32.mrb[0].mxu0
      %v3185 = vadd.f32 0.0, %v3184
      %v3186 = vpop.f32.mrb[0].mxu0
      %3187 = vmatprep.mubr.f32.mxu0 0.0
      %v3188 = vand.u32 %v3102, 4294901760
      %v3189 = vsub.f32 %v3102, %v3188
      %v3190 = vand.u32 %v3189, 4294901760
      %v3191 = vsub.f32 %v3189, %v3190
      %v3192 = vand.u32 %v3191, 4294901760
      %3193 = vmatmul.mubr.f32.gmra.mrb[0].mxu0 %v3192
      %v3194 = vpop.f32.mrb[0].mxu0
      %v3195 = vadd.f32 0.0, %v3194
      %v3196 = vpop.f32.mrb[0].mxu0
      %3197 = vmatprep.mubr.f32.mxu0 0.0
      %v3198 = vand.u32 %v3105, 4294901760
      %v3199 = vsub.f32 %v3105, %v3198
      %v3200 = vand.u32 %v3199, 4294901760
      %v3201 = vsub.f32 %v3199, %v3200
      %v3202 = vand.u32 %v3201, 4294901760
      %3203 = vmatmul.mubr.f32.gmra.mrb[0].mxu0 %v3202
      %v3204 = vpop.f32.mrb[0].mxu0
      %v3205 = vadd.f32 0.0, %v3204
      %v3206 = vpop.f32.mrb[0].mxu0
      %3207 = vmatprep.mubr.f32.mxu0 0.0
      %v3208 = vand.u32 %v3108, 4294901760
      %v3209 = vsub.f32 %v3108, %v3208
      %v3210 = vand.u32 %v3209, 4294901760
      %v3211 = vsub.f32 %v3209, %v3210
      %v3212 = vand.u32 %v3211, 4294901760
      %3213 = vmatmul.mubr.f32.gmra.mrb[0].mxu0 %v3212
      %v3214 = vpop.f32.mrb[0].mxu0
      %v3215 = vadd.f32 0.0, %v3214
      %v3216 = vpop.f32.mrb[0].mxu0
      %3217 = vdwg.mxu0
      %3218 = vmatprep.subr.mxu0 0.0
      %v3219 = vand.u32 %v2167, 4294901760
      %v3220 = vsub.f32 %v2167, %v3219
      %v3221 = vand.u32 %v3220, 4294901760
      %v3222 = vsub.f32 %v3220, %v3221
      %v3223 = vand.u32 %v3222, 4294901760
      %3224 = vmatpush1.msra.mxu0 %v3223
      %3225 = vmatprep.subr.mxu0 0.0
      %v3226 = vand.u32 %v2168, 4294901760
      %v3227 = vsub.f32 %v2168, %v3226
      %v3228 = vand.u32 %v3227, 4294901760
      %v3229 = vsub.f32 %v3227, %v3228
      %v3230 = vand.u32 %v3229, 4294901760
      %3231 = vmatpush1.msra.mxu0 %v3230
      %3232 = vmatprep.subr.mxu0 0.0
      %v3233 = vand.u32 %v2169, 4294901760
      %v3234 = vsub.f32 %v2169, %v3233
      %v3235 = vand.u32 %v3234, 4294901760
      %v3236 = vsub.f32 %v3234, %v3235
      %v3237 = vand.u32 %v3236, 4294901760
      %3238 = vmatpush1.msra.mxu0 %v3237
      %3239 = vmatprep.subr.mxu0 0.0
      %3240 = vmatpush1.msra.mxu0 0.0
      %3241 = vmatprep.subr.mxu0 0.0
      %3242 = vmatpush1.msra.mxu0 0.0
      %3243 = vmatprep.subr.mxu0 0.0
      %3244 = vmatpush1.msra.mxu0 0.0
      %3245 = vmatprep.subr.mxu0 0.0
      %3246 = vmatpush1.msra.mxu0 0.0
      %3247 = vmatprep.subr.mxu0 0.0
      %3248 = vmatpush1.msra.mxu0 0.0
      %3249 = vmatprep.subr.mxu0 0.0
      %3250 = vmatpush1.msra.mxu0 0.0
      %3251 = vmatprep.subr.mxu0 0.0
      %3252 = vmatpush1.msra.mxu0 0.0
      %3253 = vmatprep.subr.mxu0 0.0
      %3254 = vmatpush1.msra.mxu0 0.0
      %3255 = vmatprep.subr.mxu0 0.0
      %3256 = vmatpush1.msra.mxu0 0.0
      %3257 = vmatprep.subr.mxu0 0.0
      %3258 = vmatpush1.msra.mxu0 0.0
      %3259 = vmatprep.subr.mxu0 0.0
      %3260 = vmatpush1.msra.mxu0 0.0
      %3261 = vmatprep.subr.mxu0 0.0
      %3262 = vmatpush1.msra.mxu0 0.0
      %3263 = vmatprep.subr.mxu0 0.0
      %3264 = vmatpush1.msra.mxu0 0.0
      %3265 = vmatprep.subr.mxu0 0.0
      %3266 = vmatpush1.msra.mxu0 0.0
      %3267 = vmatprep.subr.mxu0 0.0
      %3268 = vmatpush1.msra.mxu0 0.0
      %3269 = vmatprep.subr.mxu0 0.0
      %3270 = vmatpush1.msra.mxu0 0.0
      %3271 = vmatprep.subr.mxu0 0.0
      %3272 = vmatpush1.msra.mxu0 0.0
      %3273 = vmatprep.subr.mxu0 0.0
      %3274 = vmatpush1.msra.mxu0 0.0
      %3275 = vmatprep.subr.mxu0 0.0
      %3276 = vmatpush1.msra.mxu0 0.0
      %3277 = vmatprep.subr.mxu0 0.0
      %3278 = vmatpush1.msra.mxu0 0.0
      %3279 = vmatprep.subr.mxu0 0.0
      %3280 = vmatpush1.msra.mxu0 0.0
      %3281 = vmatprep.subr.mxu0 0.0
      %3282 = vmatpush1.msra.mxu0 0.0
      %3283 = vmatprep.subr.mxu0 0.0
      %3284 = vmatpush1.msra.mxu0 0.0
      %3285 = vmatprep.subr.mxu0 0.0
      %3286 = vmatpush1.msra.mxu0 0.0
      %3287 = vmatprep.subr.mxu0 0.0
      %3288 = vmatpush1.msra.mxu0 0.0
      %3289 = vmatprep.subr.mxu0 0.0
      %3290 = vmatpush1.msra.mxu0 0.0
      %3291 = vmatprep.subr.mxu0 0.0
      %3292 = vmatpush1.msra.mxu0 0.0
      %3293 = vmatprep.subr.mxu0 0.0
      %3294 = vmatpush1.msra.mxu0 0.0
      %3295 = vmatprep.subr.mxu0 0.0
      %3296 = vmatpush1.msra.mxu0 0.0
      %3297 = vmatprep.mubr.f32.mxu0 0.0
      %v3298 = vand.u32 %v3099, 4294901760
      %3299 = vmatmul.mubr.f32.gmra.mrb[0].mxu0 %v3298
      %v3300 = vpop.f32.mrb[0].mxu0
      %v3301 = vadd.f32 %v3185, %v3300
      %v3302 = vpop.f32.mrb[0].mxu0
      %3303 = vmatprep.mubr.f32.mxu0 0.0
      %v3304 = vand.u32 %v3102, 4294901760
      %3305 = vmatmul.mubr.f32.gmra.mrb[0].mxu0 %v3304
      %v3306 = vpop.f32.mrb[0].mxu0
      %v3307 = vadd.f32 %v3195, %v3306
      %v3308 = vpop.f32.mrb[0].mxu0
      %3309 = vmatprep.mubr.f32.mxu0 0.0
      %v3310 = vand.u32 %v3105, 4294901760
      %3311 = vmatmul.mubr.f32.gmra.mrb[0].mxu0 %v3310
      %v3312 = vpop.f32.mrb[0].mxu0
      %v3313 = vadd.f32 %v3205, %v3312
      %v3314 = vpop.f32.mrb[0].mxu0
      %3315 = vmatprep.mubr.f32.mxu0 0.0
      %v3316 = vand.u32 %v3108, 4294901760
      %3317 = vmatmul.mubr.f32.gmra.mrb[0].mxu0 %v3316
      %v3318 = vpop.f32.mrb[0].mxu0
      %v3319 = vadd.f32 %v3215, %v3318
      %v3320 = vpop.f32.mrb[0].mxu0
      %3321 = vdwg.mxu0
      %3322 = vmatprep.subr.mxu0 0.0
      %v3323 = vand.u32 %v2167, 4294901760
      %v3324 = vsub.f32 %v2167, %v3323
      %3325 = vmatpush1.msra.mxu0 %v3324
      %3326 = vmatprep.subr.mxu0 0.0
      %v3327 = vand.u32 %v2168, 4294901760
      %v3328 = vsub.f32 %v2168, %v3327
      %3329 = vmatpush1.msra.mxu0 %v3328
      %3330 = vmatprep.subr.mxu0 0.0
      %v3331 = vand.u32 %v2169, 4294901760
      %v3332 = vsub.f32 %v2169, %v3331
      %3333 = vmatpush1.msra.mxu0 %v3332
      %3334 = vmatprep.subr.mxu0 0.0
      %3335 = vmatpush1.msra.mxu0 0.0
      %3336 = vmatprep.subr.mxu0 0.0
      %3337 = vmatpush1.msra.mxu0 0.0
      %3338 = vmatprep.subr.mxu0 0.0
      %3339 = vmatpush1.msra.mxu0 0.0
      %3340 = vmatprep.subr.mxu0 0.0
      %3341 = vmatpush1.msra.mxu0 0.0
      %3342 = vmatprep.subr.mxu0 0.0
      %3343 = vmatpush1.msra.mxu0 0.0
      %3344 = vmatprep.subr.mxu0 0.0
      %3345 = vmatpush1.msra.mxu0 0.0
      %3346 = vmatprep.subr.mxu0 0.0
      %3347 = vmatpush1.msra.mxu0 0.0
      %3348 = vmatprep.subr.mxu0 0.0
      %3349 = vmatpush1.msra.mxu0 0.0
      %3350 = vmatprep.subr.mxu0 0.0
      %3351 = vmatpush1.msra.mxu0 0.0
      %3352 = vmatprep.subr.mxu0 0.0
      %3353 = vmatpush1.msra.mxu0 0.0
      %3354 = vmatprep.subr.mxu0 0.0
      %3355 = vmatpush1.msra.mxu0 0.0
      %3356 = vmatprep.subr.mxu0 0.0
      %3357 = vmatpush1.msra.mxu0 0.0
      %3358 = vmatprep.subr.mxu0 0.0
      %3359 = vmatpush1.msra.mxu0 0.0
      %3360 = vmatprep.subr.mxu0 0.0
      %3361 = vmatpush1.msra.mxu0 0.0
      %3362 = vmatprep.subr.mxu0 0.0
      %3363 = vmatpush1.msra.mxu0 0.0
      %3364 = vmatprep.subr.mxu0 0.0
      %3365 = vmatpush1.msra.mxu0 0.0
      %3366 = vmatprep.subr.mxu0 0.0
      %3367 = vmatpush1.msra.mxu0 0.0
      %3368 = vmatprep.subr.mxu0 0.0
      %3369 = vmatpush1.msra.mxu0 0.0
      %3370 = vmatprep.subr.mxu0 0.0
      %3371 = vmatpush1.msra.mxu0 0.0
      %3372 = vmatprep.subr.mxu0 0.0
      %3373 = vmatpush1.msra.mxu0 0.0
      %3374 = vmatprep.subr.mxu0 0.0
      %3375 = vmatpush1.msra.mxu0 0.0
      %3376 = vmatprep.subr.mxu0 0.0
      %3377 = vmatpush1.msra.mxu0 0.0
      %3378 = vmatprep.subr.mxu0 0.0
      %3379 = vmatpush1.msra.mxu0 0.0
      %3380 = vmatprep.subr.mxu0 0.0
      %3381 = vmatpush1.msra.mxu0 0.0
      %3382 = vmatprep.subr.mxu0 0.0
      %3383 = vmatpush1.msra.mxu0 0.0
      %3384 = vmatprep.subr.mxu0 0.0
      %3385 = vmatpush1.msra.mxu0 0.0
      %3386 = vmatprep.subr.mxu0 0.0
      %3387 = vmatpush1.msra.mxu0 0.0
      %3388 = vmatprep.subr.mxu0 0.0
      %3389 = vmatpush1.msra.mxu0 0.0
      %3390 = vmatprep.subr.mxu0 0.0
      %3391 = vmatpush1.msra.mxu0 0.0
      %3392 = vmatprep.mubr.f32.mxu0 0.0
      %v3393 = vand.u32 %v3099, 4294901760
      %v3394 = vsub.f32 %v3099, %v3393
      %3395 = vmatmul.mubr.f32.gmra.mrb[0].mxu0 %v3394
      %v3396 = vpop.f32.mrb[0].mxu0
      %v3397 = vadd.f32 %v3301, %v3396
      %v3398 = vpop.f32.mrb[0].mxu0
      %3399 = vmatprep.mubr.f32.mxu0 0.0
      %v3400 = vand.u32 %v3102, 4294901760
      %v3401 = vsub.f32 %v3102, %v3400
      %3402 = vmatmul.mubr.f32.gmra.mrb[0].mxu0 %v3401
      %v3403 = vpop.f32.mrb[0].mxu0
      %v3404 = vadd.f32 %v3307, %v3403
      %v3405 = vpop.f32.mrb[0].mxu0
      %3406 = vmatprep.mubr.f32.mxu0 0.0
      %v3407 = vand.u32 %v3105, 4294901760
      %v3408 = vsub.f32 %v3105, %v3407
      %3409 = vmatmul.mubr.f32.gmra.mrb[0].mxu0 %v3408
      %v3410 = vpop.f32.mrb[0].mxu0
      %v3411 = vadd.f32 %v3313, %v3410
      %v3412 = vpop.f32.mrb[0].mxu0
      %3413 = vmatprep.mubr.f32.mxu0 0.0
      %v3414 = vand.u32 %v3108, 4294901760
      %v3415 = vsub.f32 %v3108, %v3414
      %3416 = vmatmul.mubr.f32.gmra.mrb[0].mxu0 %v3415
      %v3417 = vpop.f32.mrb[0].mxu0
      %v3418 = vadd.f32 %v3319, %v3417
      %v3419 = vpop.f32.mrb[0].mxu0
      %3420 = vdwg.mxu0
      %3421 = vmatprep.subr.mxu0 0.0
      %v3422 = vand.u32 %v2167, 4294901760
      %3423 = vmatpush1.msra.mxu0 %v3422
      %3424 = vmatprep.subr.mxu0 0.0
      %v3425 = vand.u32 %v2168, 4294901760
      %3426 = vmatpush1.msra.mxu0 %v3425
      %3427 = vmatprep.subr.mxu0 0.0
      %v3428 = vand.u32 %v2169, 4294901760
      %3429 = vmatpush1.msra.mxu0 %v3428
      %3430 = vmatprep.subr.mxu0 0.0
      %3431 = vmatpush1.msra.mxu0 0.0
      %3432 = vmatprep.subr.mxu0 0.0
      %3433 = vmatpush1.msra.mxu0 0.0
      %3434 = vmatprep.subr.mxu0 0.0
      %3435 = vmatpush1.msra.mxu0 0.0
      %3436 = vmatprep.subr.mxu0 0.0
      %3437 = vmatpush1.msra.mxu0 0.0
      %3438 = vmatprep.subr.mxu0 0.0
      %3439 = vmatpush1.msra.mxu0 0.0
      %3440 = vmatprep.subr.mxu0 0.0
      %3441 = vmatpush1.msra.mxu0 0.0
      %3442 = vmatprep.subr.mxu0 0.0
      %3443 = vmatpush1.msra.mxu0 0.0
      %3444 = vmatprep.subr.mxu0 0.0
      %3445 = vmatpush1.msra.mxu0 0.0
      %3446 = vmatprep.subr.mxu0 0.0
      %3447 = vmatpush1.msra.mxu0 0.0
      %3448 = vmatprep.subr.mxu0 0.0
      %3449 = vmatpush1.msra.mxu0 0.0
      %3450 = vmatprep.subr.mxu0 0.0
      %3451 = vmatpush1.msra.mxu0 0.0
      %3452 = vmatprep.subr.mxu0 0.0
      %3453 = vmatpush1.msra.mxu0 0.0
      %3454 = vmatprep.subr.mxu0 0.0
      %3455 = vmatpush1.msra.mxu0 0.0
      %3456 = vmatprep.subr.mxu0 0.0
      %3457 = vmatpush1.msra.mxu0 0.0
      %3458 = vmatprep.subr.mxu0 0.0
      %3459 = vmatpush1.msra.mxu0 0.0
      %3460 = vmatprep.subr.mxu0 0.0
      %3461 = vmatpush1.msra.mxu0 0.0
      %3462 = vmatprep.subr.mxu0 0.0
      %3463 = vmatpush1.msra.mxu0 0.0
      %3464 = vmatprep.subr.mxu0 0.0
      %3465 = vmatpush1.msra.mxu0 0.0
      %3466 = vmatprep.subr.mxu0 0.0
      %3467 = vmatpush1.msra.mxu0 0.0
      %3468 = vmatprep.subr.mxu0 0.0
      %3469 = vmatpush1.msra.mxu0 0.0
      %3470 = vmatprep.subr.mxu0 0.0
      %3471 = vmatpush1.msra.mxu0 0.0
      %3472 = vmatprep.subr.mxu0 0.0
      %3473 = vmatpush1.msra.mxu0 0.0
      %3474 = vmatprep.subr.mxu0 0.0
      %3475 = vmatpush1.msra.mxu0 0.0
      %3476 = vmatprep.subr.mxu0 0.0
      %3477 = vmatpush1.msra.mxu0 0.0
      %3478 = vmatprep.subr.mxu0 0.0
      %3479 = vmatpush1.msra.mxu0 0.0
      %3480 = vmatprep.subr.mxu0 0.0
      %3481 = vmatpush1.msra.mxu0 0.0
      %3482 = vmatprep.subr.mxu0 0.0
      %3483 = vmatpush1.msra.mxu0 0.0
      %3484 = vmatprep.subr.mxu0 0.0
      %3485 = vmatpush1.msra.mxu0 0.0
      %3486 = vmatprep.subr.mxu0 0.0
      %3487 = vmatpush1.msra.mxu0 0.0
      %3488 = vmatprep.mubr.f32.mxu0 0.0
      %v3489 = vand.u32 %v3099, 4294901760
      %v3490 = vsub.f32 %v3099, %v3489
      %v3491 = vand.u32 %v3490, 4294901760
      %3492 = vmatmul.mubr.f32.gmra.mrb[0].mxu0 %v3491
      %v3493 = vpop.f32.mrb[0].mxu0
      %v3494 = vadd.f32 %v3397, %v3493
      %v3495 = vpop.f32.mrb[0].mxu0
      %3496 = vmatprep.mubr.f32.mxu0 0.0
      %v3497 = vand.u32 %v3102, 4294901760
      %v3498 = vsub.f32 %v3102, %v3497
      %v3499 = vand.u32 %v3498, 4294901760
      %3500 = vmatmul.mubr.f32.gmra.mrb[0].mxu0 %v3499
      %v3501 = vpop.f32.mrb[0].mxu0
      %v3502 = vadd.f32 %v3404, %v3501
      %v3503 = vpop.f32.mrb[0].mxu0
      %3504 = vmatprep.mubr.f32.mxu0 0.0
      %v3505 = vand.u32 %v3105, 4294901760
      %v3506 = vsub.f32 %v3105, %v3505
      %v3507 = vand.u32 %v3506, 4294901760
      %3508 = vmatmul.mubr.f32.gmra.mrb[0].mxu0 %v3507
      %v3509 = vpop.f32.mrb[0].mxu0
      %v3510 = vadd.f32 %v3411, %v3509
      %v3511 = vpop.f32.mrb[0].mxu0
      %3512 = vmatprep.mubr.f32.mxu0 0.0
      %v3513 = vand.u32 %v3108, 4294901760
      %v3514 = vsub.f32 %v3108, %v3513
      %v3515 = vand.u32 %v3514, 4294901760
      %3516 = vmatmul.mubr.f32.gmra.mrb[0].mxu0 %v3515
      %v3517 = vpop.f32.mrb[0].mxu0
      %v3518 = vadd.f32 %v3418, %v3517
      %v3519 = vpop.f32.mrb[0].mxu0
      %3520 = vdwg.mxu0
      %3521 = vmatprep.subr.mxu0 0.0
      %v3522 = vand.u32 %v2167, 4294901760
      %v3523 = vsub.f32 %v2167, %v3522
      %v3524 = vand.u32 %v3523, 4294901760
      %3525 = vmatpush1.msra.mxu0 %v3524
      %3526 = vmatprep.subr.mxu0 0.0
      %v3527 = vand.u32 %v2168, 4294901760
      %v3528 = vsub.f32 %v2168, %v3527
      %v3529 = vand.u32 %v3528, 4294901760
      %3530 = vmatpush1.msra.mxu0 %v3529
      %3531 = vmatprep.subr.mxu0 0.0
      %v3532 = vand.u32 %v2169, 4294901760
      %v3533 = vsub.f32 %v2169, %v3532
      %v3534 = vand.u32 %v3533, 4294901760
      %3535 = vmatpush1.msra.mxu0 %v3534
      %3536 = vmatprep.subr.mxu0 0.0
      %3537 = vmatpush1.msra.mxu0 0.0
      %3538 = vmatprep.subr.mxu0 0.0
      %3539 = vmatpush1.msra.mxu0 0.0
      %3540 = vmatprep.subr.mxu0 0.0
      %3541 = vmatpush1.msra.mxu0 0.0
      %3542 = vmatprep.subr.mxu0 0.0
      %3543 = vmatpush1.msra.mxu0 0.0
      %3544 = vmatprep.subr.mxu0 0.0
      %3545 = vmatpush1.msra.mxu0 0.0
      %3546 = vmatprep.subr.mxu0 0.0
      %3547 = vmatpush1.msra.mxu0 0.0
      %3548 = vmatprep.subr.mxu0 0.0
      %3549 = vmatpush1.msra.mxu0 0.0
      %3550 = vmatprep.subr.mxu0 0.0
      %3551 = vmatpush1.msra.mxu0 0.0
      %3552 = vmatprep.subr.mxu0 0.0
      %3553 = vmatpush1.msra.mxu0 0.0
      %3554 = vmatprep.subr.mxu0 0.0
      %3555 = vmatpush1.msra.mxu0 0.0
      %3556 = vmatprep.subr.mxu0 0.0
      %3557 = vmatpush1.msra.mxu0 0.0
      %3558 = vmatprep.subr.mxu0 0.0
      %3559 = vmatpush1.msra.mxu0 0.0
      %3560 = vmatprep.subr.mxu0 0.0
      %3561 = vmatpush1.msra.mxu0 0.0
      %3562 = vmatprep.subr.mxu0 0.0
      %3563 = vmatpush1.msra.mxu0 0.0
      %3564 = vmatprep.subr.mxu0 0.0
      %3565 = vmatpush1.msra.mxu0 0.0
      %3566 = vmatprep.subr.mxu0 0.0
      %3567 = vmatpush1.msra.mxu0 0.0
      %3568 = vmatprep.subr.mxu0 0.0
      %3569 = vmatpush1.msra.mxu0 0.0
      %3570 = vmatprep.subr.mxu0 0.0
      %3571 = vmatpush1.msra.mxu0 0.0
      %3572 = vmatprep.subr.mxu0 0.0
      %3573 = vmatpush1.msra.mxu0 0.0
      %3574 = vmatprep.subr.mxu0 0.0
      %3575 = vmatpush1.msra.mxu0 0.0
      %3576 = vmatprep.subr.mxu0 0.0
      %3577 = vmatpush1.msra.mxu0 0.0
      %3578 = vmatprep.subr.mxu0 0.0
      %3579 = vmatpush1.msra.mxu0 0.0
      %3580 = vmatprep.subr.mxu0 0.0
      %3581 = vmatpush1.msra.mxu0 0.0
      %3582 = vmatprep.subr.mxu0 0.0
      %3583 = vmatpush1.msra.mxu0 0.0
      %3584 = vmatprep.subr.mxu0 0.0
      %3585 = vmatpush1.msra.mxu0 0.0
      %3586 = vmatprep.subr.mxu0 0.0
      %3587 = vmatpush1.msra.mxu0 0.0
      %3588 = vmatprep.subr.mxu0 0.0
      %3589 = vmatpush1.msra.mxu0 0.0
      %3590 = vmatprep.subr.mxu0 0.0
      %3591 = vmatpush1.msra.mxu0 0.0
      %3592 = vmatprep.subr.mxu0 0.0
      %3593 = vmatpush1.msra.mxu0 0.0
      %3594 = vmatprep.mubr.f32.mxu0 0.0
      %v3595 = vand.u32 %v3099, 4294901760
      %3596 = vmatmul.mubr.f32.gmra.mrb[0].mxu0 %v3595
      %v3597 = vpop.f32.mrb[0].mxu0
      %v3598 = vadd.f32 %v3494, %v3597
      %v3599 = vpop.f32.mrb[0].mxu0
      %3600 = vmatprep.mubr.f32.mxu0 0.0
      %v3601 = vand.u32 %v3102, 4294901760
      %3602 = vmatmul.mubr.f32.gmra.mrb[0].mxu0 %v3601
      %v3603 = vpop.f32.mrb[0].mxu0
      %v3604 = vadd.f32 %v3502, %v3603
      %v3605 = vpop.f32.mrb[0].mxu0
      %3606 = vmatprep.mubr.f32.mxu0 0.0
      %v3607 = vand.u32 %v3105, 4294901760
      %3608 = vmatmul.mubr.f32.gmra.mrb[0].mxu0 %v3607
      %v3609 = vpop.f32.mrb[0].mxu0
      %v3610 = vadd.f32 %v3510, %v3609
      %v3611 = vpop.f32.mrb[0].mxu0
      %3612 = vmatprep.mubr.f32.mxu0 0.0
      %v3613 = vand.u32 %v3108, 4294901760
      %3614 = vmatmul.mubr.f32.gmra.mrb[0].mxu0 %v3613
      %v3615 = vpop.f32.mrb[0].mxu0
      %v3616 = vadd.f32 %v3518, %v3615
      %v3617 = vpop.f32.mrb[0].mxu0
      %3618 = vdwg.mxu0
      %3619 = vmatprep.subr.mxu0 0.0
      %v3620 = vand.u32 %v2167, 4294901760
      %3621 = vmatpush1.msra.mxu0 %v3620
      %3622 = vmatprep.subr.mxu0 0.0
      %v3623 = vand.u32 %v2168, 4294901760
      %3624 = vmatpush1.msra.mxu0 %v3623
      %3625 = vmatprep.subr.mxu0 0.0
      %v3626 = vand.u32 %v2169, 4294901760
      %3627 = vmatpush1.msra.mxu0 %v3626
      %3628 = vmatprep.subr.mxu0 0.0
      %3629 = vmatpush1.msra.mxu0 0.0
      %3630 = vmatprep.subr.mxu0 0.0
      %3631 = vmatpush1.msra.mxu0 0.0
      %3632 = vmatprep.subr.mxu0 0.0
      %3633 = vmatpush1.msra.mxu0 0.0
      %3634 = vmatprep.subr.mxu0 0.0
      %3635 = vmatpush1.msra.mxu0 0.0
      %3636 = vmatprep.subr.mxu0 0.0
      %3637 = vmatpush1.msra.mxu0 0.0
      %3638 = vmatprep.subr.mxu0 0.0
      %3639 = vmatpush1.msra.mxu0 0.0
      %3640 = vmatprep.subr.mxu0 0.0
      %3641 = vmatpush1.msra.mxu0 0.0
      %3642 = vmatprep.subr.mxu0 0.0
      %3643 = vmatpush1.msra.mxu0 0.0
      %3644 = vmatprep.subr.mxu0 0.0
      %3645 = vmatpush1.msra.mxu0 0.0
      %3646 = vmatprep.subr.mxu0 0.0
      %3647 = vmatpush1.msra.mxu0 0.0
      %3648 = vmatprep.subr.mxu0 0.0
      %3649 = vmatpush1.msra.mxu0 0.0
      %3650 = vmatprep.subr.mxu0 0.0
      %3651 = vmatpush1.msra.mxu0 0.0
      %3652 = vmatprep.subr.mxu0 0.0
      %3653 = vmatpush1.msra.mxu0 0.0
      %3654 = vmatprep.subr.mxu0 0.0
      %3655 = vmatpush1.msra.mxu0 0.0
      %3656 = vmatprep.subr.mxu0 0.0
      %3657 = vmatpush1.msra.mxu0 0.0
      %3658 = vmatprep.subr.mxu0 0.0
      %3659 = vmatpush1.msra.mxu0 0.0
      %3660 = vmatprep.subr.mxu0 0.0
      %3661 = vmatpush1.msra.mxu0 0.0
      %3662 = vmatprep.subr.mxu0 0.0
      %3663 = vmatpush1.msra.mxu0 0.0
      %3664 = vmatprep.subr.mxu0 0.0
      %3665 = vmatpush1.msra.mxu0 0.0
      %3666 = vmatprep.subr.mxu0 0.0
      %3667 = vmatpush1.msra.mxu0 0.0
      %3668 = vmatprep.subr.mxu0 0.0
      %3669 = vmatpush1.msra.mxu0 0.0
      %3670 = vmatprep.subr.mxu0 0.0
      %3671 = vmatpush1.msra.mxu0 0.0
      %3672 = vmatprep.subr.mxu0 0.0
      %3673 = vmatpush1.msra.mxu0 0.0
      %3674 = vmatprep.subr.mxu0 0.0
      %3675 = vmatpush1.msra.mxu0 0.0
      %3676 = vmatprep.subr.mxu0 0.0
      %3677 = vmatpush1.msra.mxu0 0.0
      %3678 = vmatprep.subr.mxu0 0.0
      %3679 = vmatpush1.msra.mxu0 0.0
      %3680 = vmatprep.subr.mxu0 0.0
      %3681 = vmatpush1.msra.mxu0 0.0
      %3682 = vmatprep.subr.mxu0 0.0
      %3683 = vmatpush1.msra.mxu0 0.0
      %3684 = vmatprep.subr.mxu0 0.0
      %3685 = vmatpush1.msra.mxu0 0.0
      %3686 = vmatprep.mubr.f32.mxu0 0.0
      %v3687 = vand.u32 %v3099, 4294901760
      %3688 = vmatmul.mubr.f32.gmra.mrb[0].mxu0 %v3687
      %v3689 = vpop.f32.mrb[0].mxu0
      %v3690 = vadd.f32 %v3598, %v3689
      %v3691 = vpop.f32.mrb[0].mxu0
      %3692 = vmatprep.mubr.f32.mxu0 0.0
      %v3693 = vand.u32 %v3102, 4294901760
      %3694 = vmatmul.mubr.f32.gmra.mrb[0].mxu0 %v3693
      %v3695 = vpop.f32.mrb[0].mxu0
      %v3696 = vadd.f32 %v3604, %v3695
      %v3697 = vpop.f32.mrb[0].mxu0
      %3698 = vmatprep.mubr.f32.mxu0 0.0
      %v3699 = vand.u32 %v3105, 4294901760
      %3700 = vmatmul.mubr.f32.gmra.mrb[0].mxu0 %v3699
      %v3701 = vpop.f32.mrb[0].mxu0
      %v3702 = vadd.f32 %v3610, %v3701
      %v3703 = vpop.f32.mrb[0].mxu0
      %3704 = vmatprep.mubr.f32.mxu0 0.0
      %v3705 = vand.u32 %v3108, 4294901760
      %3706 = vmatmul.mubr.f32.gmra.mrb[0].mxu0 %v3705
      %v3707 = vpop.f32.mrb[0].mxu0
      %v3708 = vadd.f32 %v3616, %v3707
      %v3709 = vpop.f32.mrb[0].mxu0
      %3710 = vdwg.mxu0
      %v3711 = vmax.f32 %v2143, %v3690
      %v3712 = vmax.f32 %v2149, %v3696
      %v3713 = vmax.f32 %v2155, %v3702
      %v3714 = vmax.f32 %v2161, %v3708
      %3715 = vxpose.xlu0.b32.start [1/16] %v3711, 128
      %3716 = vxpose.xlu0.b32.cont [2/16] %v3712, 128
      %3717 = vxpose.xlu0.b32.cont [3/16] 0.0, 128
      %3718 = vxpose.xlu0.b32.cont [4/16] 0.0, 128
      %3719 = vxpose.xlu0.b32.cont [5/16] 0.0, 128
      %3720 = vxpose.xlu0.b32.cont [6/16] 0.0, 128
      %3721 = vxpose.xlu0.b32.cont [7/16] 0.0, 128
      %3722 = vxpose.xlu0.b32.cont [8/16] 0.0, 128
      %3723 = vxpose.xlu0.b32.cont [9/16] 0.0, 128
      %3724 = vxpose.xlu0.b32.cont [10/16] 0.0, 128
      %3725 = vxpose.xlu0.b32.cont [11/16] 0.0, 128
      %3726 = vxpose.xlu0.b32.cont [12/16] 0.0, 128
      %3727 = vxpose.xlu0.b32.cont [13/16] 0.0, 128
      %3728 = vxpose.xlu0.b32.cont [14/16] 0.0, 128
      %3729 = vxpose.xlu0.b32.cont [15/16] 0.0, 128
      %3730 = vxpose.xlu0.b32.end [16/16] 0.0, 128
      %v3731 = vpop.trf.xlu0
      %v3732 = vpop.trf.xlu0
      %v3733 = vpop.trf.xlu0
      %v3734 = vpop.trf.xlu0
      %v3735 = vpop.trf.xlu0
      %v3736 = vpop.trf.xlu0
      %v3737 = vpop.trf.xlu0
      %v3738 = vpop.trf.xlu0
      %v3739 = vpop.trf.xlu0
      %v3740 = vpop.trf.xlu0
      %v3741 = vpop.trf.xlu0
      %v3742 = vpop.trf.xlu0
      %v3743 = vpop.trf.xlu0
      %v3744 = vpop.trf.xlu0
      %v3745 = vpop.trf.xlu0
      %v3746 = vpop.trf.xlu0
      %3747 = vxpose.xlu0.b32.start [1/16] %v3713, 128
      %3748 = vxpose.xlu0.b32.cont [2/16] %v3714, 128
      %3749 = vxpose.xlu0.b32.cont [3/16] 0.0, 128
      %3750 = vxpose.xlu0.b32.cont [4/16] 0.0, 128
      %3751 = vxpose.xlu0.b32.cont [5/16] 0.0, 128
      %3752 = vxpose.xlu0.b32.cont [6/16] 0.0, 128
      %3753 = vxpose.xlu0.b32.cont [7/16] 0.0, 128
      %3754 = vxpose.xlu0.b32.cont [8/16] 0.0, 128
      %3755 = vxpose.xlu0.b32.cont [9/16] 0.0, 128
      %3756 = vxpose.xlu0.b32.cont [10/16] 0.0, 128
      %3757 = vxpose.xlu0.b32.cont [11/16] 0.0, 128
      %3758 = vxpose.xlu0.b32.cont [12/16] 0.0, 128
      %3759 = vxpose.xlu0.b32.cont [13/16] 0.0, 128
      %3760 = vxpose.xlu0.b32.cont [14/16] 0.0, 128
      %3761 = vxpose.xlu0.b32.cont [15/16] 0.0, 128
      %3762 = vxpose.xlu0.b32.end [16/16] 0.0, 128
      %v3763 = vpop.trf.xlu0
      %v3764 = vpop.trf.xlu0
      %v3765 = vpop.trf.xlu0
      %v3766 = vpop.trf.xlu0
      %v3767 = vpop.trf.xlu0
      %v3768 = vpop.trf.xlu0
      %v3769 = vpop.trf.xlu0
      %v3770 = vpop.trf.xlu0
      %v3771 = vpop.trf.xlu0
      %v3772 = vpop.trf.xlu0
      %v3773 = vpop.trf.xlu0
      %v3774 = vpop.trf.xlu0
      %v3775 = vpop.trf.xlu0
      %v3776 = vpop.trf.xlu0
      %v3777 = vpop.trf.xlu0
      %v3778 = vpop.trf.xlu0
      %vm3779 = vcmask 130048
      %3780 = vst.msk [vmem:[%s479] sm:$0xff] %vm3779, %v3731
      %vm3781 = vcmask 128000
      %3782 = vst.msk [vmem:[%s479 + $0x8] sm:$0x3f] %vm3781, %v3732
      %3783 = vst.msk [vmem:[%s479 + $0x10] sm:$0xff] %vm3779, %v3763
      %3784 = vst.msk [vmem:[%s479 + $0x18] sm:$0x3f] %vm3781, %v3764
      %v3785 = vld [vmem:[%s7] sm:$0xff]
      %v3786 = vld [vmem:[%s7 + $0x8] sm:$0xff]
      %v3787 = vld [vmem:[%s7 + $0x10] sm:$0xf]
      %v3788 = vld [vmem:[%s8] sm:$0xff]
      %v3789 = vld [vmem:[%s8 + $0x8] sm:$0xff]
      %v3790 = vld [vmem:[%s8 + $0x10] sm:$0xff]
      %v3797 = vrot.slane %v2218, 1
      %v3798 = vrot.slane %v2219, 1
      %v3799 = vsel %vm594, %v3797, %v3798
      %v3800 = vrot.slane %v2220, 1
      %v3801 = vsel %vm594, %v3798, %v3800
      %v3802 = vrot.slane %v2221, 1
      %v3803 = vrot.slane %v2222, 1
      %v3804 = vsel %vm594, %v3802, %v3803
      %v3805 = vrot.slane %v2223, 1
      %v3806 = vsel %vm594, %v3803, %v3805
      %v3813 = vmax.f32 %v2218, %v3799
      %v3814 = vmax.f32 %v2219, %v3801
      %v3815 = vmax.f32 %v2220, %v3800
      %v3816 = vmax.f32 %v2221, %v3804
      %v3817 = vmax.f32 %v2222, %v3806
      %v3818 = vmax.f32 %v2223, %v3805
      %v3819 = vrot.slane %v2218, 2
      %v3820 = vrot.slane %v2219, 2
      %v3821 = vsel %vm625, %v3819, %v3820
      %v3822 = vrot.slane %v2220, 2
      %v3823 = vsel %vm625, %v3820, %v3822
      %v3824 = vrot.slane %v2221, 2
      %v3825 = vrot.slane %v2222, 2
      %v3826 = vsel %vm625, %v3824, %v3825
      %v3827 = vrot.slane %v2223, 2
      %v3828 = vsel %vm625, %v3825, %v3827
      %v3835 = vmax.f32 %v3813, %v3821
      %v3836 = vmax.f32 %v3814, %v3823
      %v3837 = vmax.f32 %v3815, %v3822
      %v3838 = vmax.f32 %v3816, %v3826
      %v3839 = vmax.f32 %v3817, %v3828
      %v3840 = vmax.f32 %v3818, %v3827
      %v3841 = vsel %vm656, %v3837, 0.0
      %v3842 = vsel %vm656, %v3840, 0.0
      %vm3843 = vcmask 162816
      %v3845 = vsel %vm3843, %v3835, 0
      %v3848 = vsel %vm3843, %v3836, 0
      %v3851 = vsel %vm3843, %v3841, 0
      %v3854 = vsel %vm3843, %v3838, 0
      %v3857 = vsel %vm3843, %v3839, 0
      %v3860 = vsel %vm3843, %v3842, 0
      %v3863 = vsel %vm656, %v3787, 0
      %3865 = vmatprep.subr.mxu0 0.0
      %v3866 = vand.u32 %v3785, 4294901760
      %3867 = vmatpush1.msra.mxu0 %v3866
      %3868 = vmatprep.subr.mxu0 0.0
      %v3869 = vand.u32 %v3786, 4294901760
      %3870 = vmatpush1.msra.mxu0 %v3869
      %3871 = vmatprep.subr.mxu0 0.0
      %v3872 = vand.u32 %v3863, 4294901760
      %3873 = vmatpush1.msra.mxu0 %v3872
      %3874 = vmatprep.subr.mxu0 0.0
      %3875 = vmatpush1.msra.mxu0 0.0
      %3876 = vmatprep.subr.mxu0 0.0
      %3877 = vmatpush1.msra.mxu0 0.0
      %3878 = vmatprep.subr.mxu0 0.0
      %3879 = vmatpush1.msra.mxu0 0.0
      %3880 = vmatprep.subr.mxu0 0.0
      %3881 = vmatpush1.msra.mxu0 0.0
      %3882 = vmatprep.subr.mxu0 0.0
      %3883 = vmatpush1.msra.mxu0 0.0
      %3884 = vmatprep.subr.mxu0 0.0
      %3885 = vmatpush1.msra.mxu0 0.0
      %3886 = vmatprep.subr.mxu0 0.0
      %3887 = vmatpush1.msra.mxu0 0.0
      %3888 = vmatprep.subr.mxu0 0.0
      %3889 = vmatpush1.msra.mxu0 0.0
      %3890 = vmatprep.subr.mxu0 0.0
      %3891 = vmatpush1.msra.mxu0 0.0
      %3892 = vmatprep.subr.mxu0 0.0
      %3893 = vmatpush1.msra.mxu0 0.0
      %3894 = vmatprep.subr.mxu0 0.0
      %3895 = vmatpush1.msra.mxu0 0.0
      %3896 = vmatprep.subr.mxu0 0.0
      %3897 = vmatpush1.msra.mxu0 0.0
      %3898 = vmatprep.subr.mxu0 0.0
      %3899 = vmatpush1.msra.mxu0 0.0
      %3900 = vmatprep.subr.mxu0 0.0
      %3901 = vmatpush1.msra.mxu0 0.0
      %3902 = vmatprep.subr.mxu0 0.0
      %3903 = vmatpush1.msra.mxu0 0.0
      %3904 = vmatprep.subr.mxu0 0.0
      %3905 = vmatpush1.msra.mxu0 0.0
      %3906 = vmatprep.subr.mxu0 0.0
      %3907 = vmatpush1.msra.mxu0 0.0
      %3908 = vmatprep.subr.mxu0 0.0
      %3909 = vmatpush1.msra.mxu0 0.0
      %3910 = vmatprep.subr.mxu0 0.0
      %3911 = vmatpush1.msra.mxu0 0.0
      %3912 = vmatprep.subr.mxu0 0.0
      %3913 = vmatpush1.msra.mxu0 0.0
      %3914 = vmatprep.subr.mxu0 0.0
      %3915 = vmatpush1.msra.mxu0 0.0
      %3916 = vmatprep.subr.mxu0 0.0
      %3917 = vmatpush1.msra.mxu0 0.0
      %3918 = vmatprep.subr.mxu0 0.0
      %3919 = vmatpush1.msra.mxu0 0.0
      %3920 = vmatprep.subr.mxu0 0.0
      %3921 = vmatpush1.msra.mxu0 0.0
      %3922 = vmatprep.subr.mxu0 0.0
      %3923 = vmatpush1.msra.mxu0 0.0
      %3924 = vmatprep.subr.mxu0 0.0
      %3925 = vmatpush1.msra.mxu0 0.0
      %3926 = vmatprep.subr.mxu0 0.0
      %3927 = vmatpush1.msra.mxu0 0.0
      %3928 = vmatprep.subr.mxu0 0.0
      %3929 = vmatpush1.msra.mxu0 0.0
      %3930 = vmatprep.subr.mxu0 0.0
      %3931 = vmatpush1.msra.mxu0 0.0
      %3932 = vmatprep.mubr.f32.mxu0 0.0
      %v3933 = vand.u32 %v3845, 4294901760
      %v3934 = vsub.f32 %v3845, %v3933
      %v3935 = vand.u32 %v3934, 4294901760
      %v3936 = vsub.f32 %v3934, %v3935
      %v3937 = vand.u32 %v3936, 4294901760
      %3938 = vmatmul.mubr.f32.gmra.mrb[0].mxu0 %v3937
      %v3939 = vpop.f32.mrb[0].mxu0
      %v3940 = vadd.f32 0.0, %v3939
      %v3941 = vpop.f32.mrb[0].mxu0
      %3942 = vmatprep.mubr.f32.mxu0 0.0
      %v3943 = vand.u32 %v3848, 4294901760
      %v3944 = vsub.f32 %v3848, %v3943
      %v3945 = vand.u32 %v3944, 4294901760
      %v3946 = vsub.f32 %v3944, %v3945
      %v3947 = vand.u32 %v3946, 4294901760
      %3948 = vmatmul.mubr.f32.gmra.mrb[0].mxu0 %v3947
      %v3949 = vpop.f32.mrb[0].mxu0
      %v3950 = vadd.f32 0.0, %v3949
      %v3951 = vpop.f32.mrb[0].mxu0
      %3952 = vmatprep.mubr.f32.mxu0 0.0
      %v3953 = vand.u32 %v3851, 4294901760
      %v3954 = vsub.f32 %v3851, %v3953
      %v3955 = vand.u32 %v3954, 4294901760
      %v3956 = vsub.f32 %v3954, %v3955
      %v3957 = vand.u32 %v3956, 4294901760
      %3958 = vmatmul.mubr.f32.gmra.mrb[0].mxu0 %v3957
      %v3959 = vpop.f32.mrb[0].mxu0
      %v3960 = vadd.f32 0.0, %v3959
      %v3961 = vpop.f32.mrb[0].mxu0
      %3962 = vmatprep.mubr.f32.mxu0 0.0
      %v3963 = vand.u32 %v3854, 4294901760
      %v3964 = vsub.f32 %v3854, %v3963
      %v3965 = vand.u32 %v3964, 4294901760
      %v3966 = vsub.f32 %v3964, %v3965
      %v3967 = vand.u32 %v3966, 4294901760
      %3968 = vmatmul.mubr.f32.gmra.mrb[0].mxu0 %v3967
      %v3969 = vpop.f32.mrb[0].mxu0
      %v3970 = vadd.f32 0.0, %v3969
      %v3971 = vpop.f32.mrb[0].mxu0
      %3972 = vmatprep.mubr.f32.mxu0 0.0
      %v3973 = vand.u32 %v3857, 4294901760
      %v3974 = vsub.f32 %v3857, %v3973
      %v3975 = vand.u32 %v3974, 4294901760
      %v3976 = vsub.f32 %v3974, %v3975
      %v3977 = vand.u32 %v3976, 4294901760
      %3978 = vmatmul.mubr.f32.gmra.mrb[0].mxu0 %v3977
      %v3979 = vpop.f32.mrb[0].mxu0
      %v3980 = vadd.f32 0.0, %v3979
      %v3981 = vpop.f32.mrb[0].mxu0
      %3982 = vmatprep.mubr.f32.mxu0 0.0
      %v3983 = vand.u32 %v3860, 4294901760
      %v3984 = vsub.f32 %v3860, %v3983
      %v3985 = vand.u32 %v3984, 4294901760
      %v3986 = vsub.f32 %v3984, %v3985
      %v3987 = vand.u32 %v3986, 4294901760
      %3988 = vmatmul.mubr.f32.gmra.mrb[0].mxu0 %v3987
      %v3989 = vpop.f32.mrb[0].mxu0
      %v3990 = vadd.f32 0.0, %v3989
      %v3991 = vpop.f32.mrb[0].mxu0
      %3992 = vdwg.mxu0
      %3993 = vmatprep.subr.mxu0 0.0
      %v3994 = vand.u32 %v3785, 4294901760
      %v3995 = vsub.f32 %v3785, %v3994
      %v3996 = vand.u32 %v3995, 4294901760
      %v3997 = vsub.f32 %v3995, %v3996
      %v3998 = vand.u32 %v3997, 4294901760
      %3999 = vmatpush1.msra.mxu0 %v3998
      %4000 = vmatprep.subr.mxu0 0.0
      %v4001 = vand.u32 %v3786, 4294901760
      %v4002 = vsub.f32 %v3786, %v4001
      %v4003 = vand.u32 %v4002, 4294901760
      %v4004 = vsub.f32 %v4002, %v4003
      %v4005 = vand.u32 %v4004, 4294901760
      %4006 = vmatpush1.msra.mxu0 %v4005
      %4007 = vmatprep.subr.mxu0 0.0
      %v4008 = vand.u32 %v3863, 4294901760
      %v4009 = vsub.f32 %v3863, %v4008
      %v4010 = vand.u32 %v4009, 4294901760
      %v4011 = vsub.f32 %v4009, %v4010
      %v4012 = vand.u32 %v4011, 4294901760
      %4013 = vmatpush1.msra.mxu0 %v4012
      %4014 = vmatprep.subr.mxu0 0.0
      %4015 = vmatpush1.msra.mxu0 0.0
      %4016 = vmatprep.subr.mxu0 0.0
      %4017 = vmatpush1.msra.mxu0 0.0
      %4018 = vmatprep.subr.mxu0 0.0
      %4019 = vmatpush1.msra.mxu0 0.0
      %4020 = vmatprep.subr.mxu0 0.0
      %4021 = vmatpush1.msra.mxu0 0.0
      %4022 = vmatprep.subr.mxu0 0.0
      %4023 = vmatpush1.msra.mxu0 0.0
      %4024 = vmatprep.subr.mxu0 0.0
      %4025 = vmatpush1.msra.mxu0 0.0
      %4026 = vmatprep.subr.mxu0 0.0
      %4027 = vmatpush1.msra.mxu0 0.0
      %4028 = vmatprep.subr.mxu0 0.0
      %4029 = vmatpush1.msra.mxu0 0.0
      %4030 = vmatprep.subr.mxu0 0.0
      %4031 = vmatpush1.msra.mxu0 0.0
      %4032 = vmatprep.subr.mxu0 0.0
      %4033 = vmatpush1.msra.mxu0 0.0
      %4034 = vmatprep.subr.mxu0 0.0
      %4035 = vmatpush1.msra.mxu0 0.0
      %4036 = vmatprep.subr.mxu0 0.0
      %4037 = vmatpush1.msra.mxu0 0.0
      %4038 = vmatprep.subr.mxu0 0.0
      %4039 = vmatpush1.msra.mxu0 0.0
      %4040 = vmatprep.subr.mxu0 0.0
      %4041 = vmatpush1.msra.mxu0 0.0
      %4042 = vmatprep.subr.mxu0 0.0
      %4043 = vmatpush1.msra.mxu0 0.0
      %4044 = vmatprep.subr.mxu0 0.0
      %4045 = vmatpush1.msra.mxu0 0.0
      %4046 = vmatprep.subr.mxu0 0.0
      %4047 = vmatpush1.msra.mxu0 0.0
      %4048 = vmatprep.subr.mxu0 0.0
      %4049 = vmatpush1.msra.mxu0 0.0
      %4050 = vmatprep.subr.mxu0 0.0
      %4051 = vmatpush1.msra.mxu0 0.0
      %4052 = vmatprep.subr.mxu0 0.0
      %4053 = vmatpush1.msra.mxu0 0.0
      %4054 = vmatprep.subr.mxu0 0.0
      %4055 = vmatpush1.msra.mxu0 0.0
      %4056 = vmatprep.subr.mxu0 0.0
      %4057 = vmatpush1.msra.mxu0 0.0
      %4058 = vmatprep.subr.mxu0 0.0
      %4059 = vmatpush1.msra.mxu0 0.0
      %4060 = vmatprep.subr.mxu0 0.0
      %4061 = vmatpush1.msra.mxu0 0.0
      %4062 = vmatprep.subr.mxu0 0.0
      %4063 = vmatpush1.msra.mxu0 0.0
      %4064 = vmatprep.subr.mxu0 0.0
      %4065 = vmatpush1.msra.mxu0 0.0
      %4066 = vmatprep.subr.mxu0 0.0
      %4067 = vmatpush1.msra.mxu0 0.0
      %4068 = vmatprep.subr.mxu0 0.0
      %4069 = vmatpush1.msra.mxu0 0.0
      %4070 = vmatprep.subr.mxu0 0.0
      %4071 = vmatpush1.msra.mxu0 0.0
      %4072 = vmatprep.mubr.f32.mxu0 0.0
      %v4073 = vand.u32 %v3845, 4294901760
      %4074 = vmatmul.mubr.f32.gmra.mrb[0].mxu0 %v4073
      %v4075 = vpop.f32.mrb[0].mxu0
      %v4076 = vadd.f32 %v3940, %v4075
      %v4077 = vpop.f32.mrb[0].mxu0
      %4078 = vmatprep.mubr.f32.mxu0 0.0
      %v4079 = vand.u32 %v3848, 4294901760
      %4080 = vmatmul.mubr.f32.gmra.mrb[0].mxu0 %v4079
      %v4081 = vpop.f32.mrb[0].mxu0
      %v4082 = vadd.f32 %v3950, %v4081
      %v4083 = vpop.f32.mrb[0].mxu0
      %4084 = vmatprep.mubr.f32.mxu0 0.0
      %v4085 = vand.u32 %v3851, 4294901760
      %4086 = vmatmul.mubr.f32.gmra.mrb[0].mxu0 %v4085
      %v4087 = vpop.f32.mrb[0].mxu0
      %v4088 = vadd.f32 %v3960, %v4087
      %v4089 = vpop.f32.mrb[0].mxu0
      %4090 = vmatprep.mubr.f32.mxu0 0.0
      %v4091 = vand.u32 %v3854, 4294901760
      %4092 = vmatmul.mubr.f32.gmra.mrb[0].mxu0 %v4091
      %v4093 = vpop.f32.mrb[0].mxu0
      %v4094 = vadd.f32 %v3970, %v4093
      %v4095 = vpop.f32.mrb[0].mxu0
      %4096 = vmatprep.mubr.f32.mxu0 0.0
      %v4097 = vand.u32 %v3857, 4294901760
      %4098 = vmatmul.mubr.f32.gmra.mrb[0].mxu0 %v4097
      %v4099 = vpop.f32.mrb[0].mxu0
      %v4100 = vadd.f32 %v3980, %v4099
      %v4101 = vpop.f32.mrb[0].mxu0
      %4102 = vmatprep.mubr.f32.mxu0 0.0
      %v4103 = vand.u32 %v3860, 4294901760
      %4104 = vmatmul.mubr.f32.gmra.mrb[0].mxu0 %v4103
      %v4105 = vpop.f32.mrb[0].mxu0
      %v4106 = vadd.f32 %v3990, %v4105
      %v4107 = vpop.f32.mrb[0].mxu0
      %4108 = vdwg.mxu0
      %4109 = vmatprep.subr.mxu0 0.0
      %v4110 = vand.u32 %v3785, 4294901760
      %v4111 = vsub.f32 %v3785, %v4110
      %4112 = vmatpush1.msra.mxu0 %v4111
      %4113 = vmatprep.subr.mxu0 0.0
      %v4114 = vand.u32 %v3786, 4294901760
      %v4115 = vsub.f32 %v3786, %v4114
      %4116 = vmatpush1.msra.mxu0 %v4115
      %4117 = vmatprep.subr.mxu0 0.0
      %v4118 = vand.u32 %v3863, 4294901760
      %v4119 = vsub.f32 %v3863, %v4118
      %4120 = vmatpush1.msra.mxu0 %v4119
      %4121 = vmatprep.subr.mxu0 0.0
      %4122 = vmatpush1.msra.mxu0 0.0
      %4123 = vmatprep.subr.mxu0 0.0
      %4124 = vmatpush1.msra.mxu0 0.0
      %4125 = vmatprep.subr.mxu0 0.0
      %4126 = vmatpush1.msra.mxu0 0.0
      %4127 = vmatprep.subr.mxu0 0.0
      %4128 = vmatpush1.msra.mxu0 0.0
      %4129 = vmatprep.subr.mxu0 0.0
      %4130 = vmatpush1.msra.mxu0 0.0
      %4131 = vmatprep.subr.mxu0 0.0
      %4132 = vmatpush1.msra.mxu0 0.0
      %4133 = vmatprep.subr.mxu0 0.0
      %4134 = vmatpush1.msra.mxu0 0.0
      %4135 = vmatprep.subr.mxu0 0.0
      %4136 = vmatpush1.msra.mxu0 0.0
      %4137 = vmatprep.subr.mxu0 0.0
      %4138 = vmatpush1.msra.mxu0 0.0
      %4139 = vmatprep.subr.mxu0 0.0
      %4140 = vmatpush1.msra.mxu0 0.0
      %4141 = vmatprep.subr.mxu0 0.0
      %4142 = vmatpush1.msra.mxu0 0.0
      %4143 = vmatprep.subr.mxu0 0.0
      %4144 = vmatpush1.msra.mxu0 0.0
      %4145 = vmatprep.subr.mxu0 0.0
      %4146 = vmatpush1.msra.mxu0 0.0
      %4147 = vmatprep.subr.mxu0 0.0
      %4148 = vmatpush1.msra.mxu0 0.0
      %4149 = vmatprep.subr.mxu0 0.0
      %4150 = vmatpush1.msra.mxu0 0.0
      %4151 = vmatprep.subr.mxu0 0.0
      %4152 = vmatpush1.msra.mxu0 0.0
      %4153 = vmatprep.subr.mxu0 0.0
      %4154 = vmatpush1.msra.mxu0 0.0
      %4155 = vmatprep.subr.mxu0 0.0
      %4156 = vmatpush1.msra.mxu0 0.0
      %4157 = vmatprep.subr.mxu0 0.0
      %4158 = vmatpush1.msra.mxu0 0.0
      %4159 = vmatprep.subr.mxu0 0.0
      %4160 = vmatpush1.msra.mxu0 0.0
      %4161 = vmatprep.subr.mxu0 0.0
      %4162 = vmatpush1.msra.mxu0 0.0
      %4163 = vmatprep.subr.mxu0 0.0
      %4164 = vmatpush1.msra.mxu0 0.0
      %4165 = vmatprep.subr.mxu0 0.0
      %4166 = vmatpush1.msra.mxu0 0.0
      %4167 = vmatprep.subr.mxu0 0.0
      %4168 = vmatpush1.msra.mxu0 0.0
      %4169 = vmatprep.subr.mxu0 0.0
      %4170 = vmatpush1.msra.mxu0 0.0
      %4171 = vmatprep.subr.mxu0 0.0
      %4172 = vmatpush1.msra.mxu0 0.0
      %4173 = vmatprep.subr.mxu0 0.0
      %4174 = vmatpush1.msra.mxu0 0.0
      %4175 = vmatprep.subr.mxu0 0.0
      %4176 = vmatpush1.msra.mxu0 0.0
      %4177 = vmatprep.subr.mxu0 0.0
      %4178 = vmatpush1.msra.mxu0 0.0
      %4179 = vmatprep.mubr.f32.mxu0 0.0
      %v4180 = vand.u32 %v3845, 4294901760
      %v4181 = vsub.f32 %v3845, %v4180
      %4182 = vmatmul.mubr.f32.gmra.mrb[0].mxu0 %v4181
      %v4183 = vpop.f32.mrb[0].mxu0
      %v4184 = vadd.f32 %v4076, %v4183
      %v4185 = vpop.f32.mrb[0].mxu0
      %4186 = vmatprep.mubr.f32.mxu0 0.0
      %v4187 = vand.u32 %v3848, 4294901760
      %v4188 = vsub.f32 %v3848, %v4187
      %4189 = vmatmul.mubr.f32.gmra.mrb[0].mxu0 %v4188
      %v4190 = vpop.f32.mrb[0].mxu0
      %v4191 = vadd.f32 %v4082, %v4190
      %v4192 = vpop.f32.mrb[0].mxu0
      %4193 = vmatprep.mubr.f32.mxu0 0.0
      %v4194 = vand.u32 %v3851, 4294901760
      %v4195 = vsub.f32 %v3851, %v4194
      %4196 = vmatmul.mubr.f32.gmra.mrb[0].mxu0 %v4195
      %v4197 = vpop.f32.mrb[0].mxu0
      %v4198 = vadd.f32 %v4088, %v4197
      %v4199 = vpop.f32.mrb[0].mxu0
      %4200 = vmatprep.mubr.f32.mxu0 0.0
      %v4201 = vand.u32 %v3854, 4294901760
      %v4202 = vsub.f32 %v3854, %v4201
      %4203 = vmatmul.mubr.f32.gmra.mrb[0].mxu0 %v4202
      %v4204 = vpop.f32.mrb[0].mxu0
      %v4205 = vadd.f32 %v4094, %v4204
      %v4206 = vpop.f32.mrb[0].mxu0
      %4207 = vmatprep.mubr.f32.mxu0 0.0
      %v4208 = vand.u32 %v3857, 4294901760
      %v4209 = vsub.f32 %v3857, %v4208
      %4210 = vmatmul.mubr.f32.gmra.mrb[0].mxu0 %v4209
      %v4211 = vpop.f32.mrb[0].mxu0
      %v4212 = vadd.f32 %v4100, %v4211
      %v4213 = vpop.f32.mrb[0].mxu0
      %4214 = vmatprep.mubr.f32.mxu0 0.0
      %v4215 = vand.u32 %v3860, 4294901760
      %v4216 = vsub.f32 %v3860, %v4215
      %4217 = vmatmul.mubr.f32.gmra.mrb[0].mxu0 %v4216
      %v4218 = vpop.f32.mrb[0].mxu0
      %v4219 = vadd.f32 %v4106, %v4218
      %v4220 = vpop.f32.mrb[0].mxu0
      %4221 = vdwg.mxu0
      %4222 = vmatprep.subr.mxu0 0.0
      %v4223 = vand.u32 %v3785, 4294901760
      %4224 = vmatpush1.msra.mxu0 %v4223
      %4225 = vmatprep.subr.mxu0 0.0
      %v4226 = vand.u32 %v3786, 4294901760
      %4227 = vmatpush1.msra.mxu0 %v4226
      %4228 = vmatprep.subr.mxu0 0.0
      %v4229 = vand.u32 %v3863, 4294901760
      %4230 = vmatpush1.msra.mxu0 %v4229
      %4231 = vmatprep.subr.mxu0 0.0
      %4232 = vmatpush1.msra.mxu0 0.0
      %4233 = vmatprep.subr.mxu0 0.0
      %4234 = vmatpush1.msra.mxu0 0.0
      %4235 = vmatprep.subr.mxu0 0.0
      %4236 = vmatpush1.msra.mxu0 0.0
      %4237 = vmatprep.subr.mxu0 0.0
      %4238 = vmatpush1.msra.mxu0 0.0
      %4239 = vmatprep.subr.mxu0 0.0
      %4240 = vmatpush1.msra.mxu0 0.0
      %4241 = vmatprep.subr.mxu0 0.0
      %4242 = vmatpush1.msra.mxu0 0.0
      %4243 = vmatprep.subr.mxu0 0.0
      %4244 = vmatpush1.msra.mxu0 0.0
      %4245 = vmatprep.subr.mxu0 0.0
      %4246 = vmatpush1.msra.mxu0 0.0
      %4247 = vmatprep.subr.mxu0 0.0
      %4248 = vmatpush1.msra.mxu0 0.0
      %4249 = vmatprep.subr.mxu0 0.0
      %4250 = vmatpush1.msra.mxu0 0.0
      %4251 = vmatprep.subr.mxu0 0.0
      %4252 = vmatpush1.msra.mxu0 0.0
      %4253 = vmatprep.subr.mxu0 0.0
      %4254 = vmatpush1.msra.mxu0 0.0
      %4255 = vmatprep.subr.mxu0 0.0
      %4256 = vmatpush1.msra.mxu0 0.0
      %4257 = vmatprep.subr.mxu0 0.0
      %4258 = vmatpush1.msra.mxu0 0.0
      %4259 = vmatprep.subr.mxu0 0.0
      %4260 = vmatpush1.msra.mxu0 0.0
      %4261 = vmatprep.subr.mxu0 0.0
      %4262 = vmatpush1.msra.mxu0 0.0
      %4263 = vmatprep.subr.mxu0 0.0
      %4264 = vmatpush1.msra.mxu0 0.0
      %4265 = vmatprep.subr.mxu0 0.0
      %4266 = vmatpush1.msra.mxu0 0.0
      %4267 = vmatprep.subr.mxu0 0.0
      %4268 = vmatpush1.msra.mxu0 0.0
      %4269 = vmatprep.subr.mxu0 0.0
      %4270 = vmatpush1.msra.mxu0 0.0
      %4271 = vmatprep.subr.mxu0 0.0
      %4272 = vmatpush1.msra.mxu0 0.0
      %4273 = vmatprep.subr.mxu0 0.0
      %4274 = vmatpush1.msra.mxu0 0.0
      %4275 = vmatprep.subr.mxu0 0.0
      %4276 = vmatpush1.msra.mxu0 0.0
      %4277 = vmatprep.subr.mxu0 0.0
      %4278 = vmatpush1.msra.mxu0 0.0
      %4279 = vmatprep.subr.mxu0 0.0
      %4280 = vmatpush1.msra.mxu0 0.0
      %4281 = vmatprep.subr.mxu0 0.0
      %4282 = vmatpush1.msra.mxu0 0.0
      %4283 = vmatprep.subr.mxu0 0.0
      %4284 = vmatpush1.msra.mxu0 0.0
      %4285 = vmatprep.subr.mxu0 0.0
      %4286 = vmatpush1.msra.mxu0 0.0
      %4287 = vmatprep.subr.mxu0 0.0
      %4288 = vmatpush1.msra.mxu0 0.0
      %4289 = vmatprep.mubr.f32.mxu0 0.0
      %v4290 = vand.u32 %v3845, 4294901760
      %v4291 = vsub.f32 %v3845, %v4290
      %v4292 = vand.u32 %v4291, 4294901760
      %4293 = vmatmul.mubr.f32.gmra.mrb[0].mxu0 %v4292
      %v4294 = vpop.f32.mrb[0].mxu0
      %v4295 = vadd.f32 %v4184, %v4294
      %v4296 = vpop.f32.mrb[0].mxu0
      %4297 = vmatprep.mubr.f32.mxu0 0.0
      %v4298 = vand.u32 %v3848, 4294901760
      %v4299 = vsub.f32 %v3848, %v4298
      %v4300 = vand.u32 %v4299, 4294901760
      %4301 = vmatmul.mubr.f32.gmra.mrb[0].mxu0 %v4300
      %v4302 = vpop.f32.mrb[0].mxu0
      %v4303 = vadd.f32 %v4191, %v4302
      %v4304 = vpop.f32.mrb[0].mxu0
      %4305 = vmatprep.mubr.f32.mxu0 0.0
      %v4306 = vand.u32 %v3851, 4294901760
      %v4307 = vsub.f32 %v3851, %v4306
      %v4308 = vand.u32 %v4307, 4294901760
      %4309 = vmatmul.mubr.f32.gmra.mrb[0].mxu0 %v4308
      %v4310 = vpop.f32.mrb[0].mxu0
      %v4311 = vadd.f32 %v4198, %v4310
      %v4312 = vpop.f32.mrb[0].mxu0
      %4313 = vmatprep.mubr.f32.mxu0 0.0
      %v4314 = vand.u32 %v3854, 4294901760
      %v4315 = vsub.f32 %v3854, %v4314
      %v4316 = vand.u32 %v4315, 4294901760
      %4317 = vmatmul.mubr.f32.gmra.mrb[0].mxu0 %v4316
      %v4318 = vpop.f32.mrb[0].mxu0
      %v4319 = vadd.f32 %v4205, %v4318
      %v4320 = vpop.f32.mrb[0].mxu0
      %4321 = vmatprep.mubr.f32.mxu0 0.0
      %v4322 = vand.u32 %v3857, 4294901760
      %v4323 = vsub.f32 %v3857, %v4322
      %v4324 = vand.u32 %v4323, 4294901760
      %4325 = vmatmul.mubr.f32.gmra.mrb[0].mxu0 %v4324
      %v4326 = vpop.f32.mrb[0].mxu0
      %v4327 = vadd.f32 %v4212, %v4326
      %v4328 = vpop.f32.mrb[0].mxu0
      %4329 = vmatprep.mubr.f32.mxu0 0.0
      %v4330 = vand.u32 %v3860, 4294901760
      %v4331 = vsub.f32 %v3860, %v4330
      %v4332 = vand.u32 %v4331, 4294901760
      %4333 = vmatmul.mubr.f32.gmra.mrb[0].mxu0 %v4332
      %v4334 = vpop.f32.mrb[0].mxu0
      %v4335 = vadd.f32 %v4219, %v4334
      %v4336 = vpop.f32.mrb[0].mxu0
      %4337 = vdwg.mxu0
      %4338 = vmatprep.subr.mxu0 0.0
      %v4339 = vand.u32 %v3785, 4294901760
      %v4340 = vsub.f32 %v3785, %v4339
      %v4341 = vand.u32 %v4340, 4294901760
      %4342 = vmatpush1.msra.mxu0 %v4341
      %4343 = vmatprep.subr.mxu0 0.0
      %v4344 = vand.u32 %v3786, 4294901760
      %v4345 = vsub.f32 %v3786, %v4344
      %v4346 = vand.u32 %v4345, 4294901760
      %4347 = vmatpush1.msra.mxu0 %v4346
      %4348 = vmatprep.subr.mxu0 0.0
      %v4349 = vand.u32 %v3863, 4294901760
      %v4350 = vsub.f32 %v3863, %v4349
      %v4351 = vand.u32 %v4350, 4294901760
      %4352 = vmatpush1.msra.mxu0 %v4351
      %4353 = vmatprep.subr.mxu0 0.0
      %4354 = vmatpush1.msra.mxu0 0.0
      %4355 = vmatprep.subr.mxu0 0.0
      %4356 = vmatpush1.msra.mxu0 0.0
      %4357 = vmatprep.subr.mxu0 0.0
      %4358 = vmatpush1.msra.mxu0 0.0
      %4359 = vmatprep.subr.mxu0 0.0
      %4360 = vmatpush1.msra.mxu0 0.0
      %4361 = vmatprep.subr.mxu0 0.0
      %4362 = vmatpush1.msra.mxu0 0.0
      %4363 = vmatprep.subr.mxu0 0.0
      %4364 = vmatpush1.msra.mxu0 0.0
      %4365 = vmatprep.subr.mxu0 0.0
      %4366 = vmatpush1.msra.mxu0 0.0
      %4367 = vmatprep.subr.mxu0 0.0
      %4368 = vmatpush1.msra.mxu0 0.0
      %4369 = vmatprep.subr.mxu0 0.0
      %4370 = vmatpush1.msra.mxu0 0.0
      %4371 = vmatprep.subr.mxu0 0.0
      %4372 = vmatpush1.msra.mxu0 0.0
      %4373 = vmatprep.subr.mxu0 0.0
      %4374 = vmatpush1.msra.mxu0 0.0
      %4375 = vmatprep.subr.mxu0 0.0
      %4376 = vmatpush1.msra.mxu0 0.0
      %4377 = vmatprep.subr.mxu0 0.0
      %4378 = vmatpush1.msra.mxu0 0.0
      %4379 = vmatprep.subr.mxu0 0.0
      %4380 = vmatpush1.msra.mxu0 0.0
      %4381 = vmatprep.subr.mxu0 0.0
      %4382 = vmatpush1.msra.mxu0 0.0
      %4383 = vmatprep.subr.mxu0 0.0
      %4384 = vmatpush1.msra.mxu0 0.0
      %4385 = vmatprep.subr.mxu0 0.0
      %4386 = vmatpush1.msra.mxu0 0.0
      %4387 = vmatprep.subr.mxu0 0.0
      %4388 = vmatpush1.msra.mxu0 0.0
      %4389 = vmatprep.subr.mxu0 0.0
      %4390 = vmatpush1.msra.mxu0 0.0
      %4391 = vmatprep.subr.mxu0 0.0
      %4392 = vmatpush1.msra.mxu0 0.0
      %4393 = vmatprep.subr.mxu0 0.0
      %4394 = vmatpush1.msra.mxu0 0.0
      %4395 = vmatprep.subr.mxu0 0.0
      %4396 = vmatpush1.msra.mxu0 0.0
      %4397 = vmatprep.subr.mxu0 0.0
      %4398 = vmatpush1.msra.mxu0 0.0
      %4399 = vmatprep.subr.mxu0 0.0
      %4400 = vmatpush1.msra.mxu0 0.0
      %4401 = vmatprep.subr.mxu0 0.0
      %4402 = vmatpush1.msra.mxu0 0.0
      %4403 = vmatprep.subr.mxu0 0.0
      %4404 = vmatpush1.msra.mxu0 0.0
      %4405 = vmatprep.subr.mxu0 0.0
      %4406 = vmatpush1.msra.mxu0 0.0
      %4407 = vmatprep.subr.mxu0 0.0
      %4408 = vmatpush1.msra.mxu0 0.0
      %4409 = vmatprep.subr.mxu0 0.0
      %4410 = vmatpush1.msra.mxu0 0.0
      %4411 = vmatprep.mubr.f32.mxu0 0.0
      %v4412 = vand.u32 %v3845, 4294901760
      %4413 = vmatmul.mubr.f32.gmra.mrb[0].mxu0 %v4412
      %v4414 = vpop.f32.mrb[0].mxu0
      %v4415 = vadd.f32 %v4295, %v4414
      %v4416 = vpop.f32.mrb[0].mxu0
      %4417 = vmatprep.mubr.f32.mxu0 0.0
      %v4418 = vand.u32 %v3848, 4294901760
      %4419 = vmatmul.mubr.f32.gmra.mrb[0].mxu0 %v4418
      %v4420 = vpop.f32.mrb[0].mxu0
      %v4421 = vadd.f32 %v4303, %v4420
      %v4422 = vpop.f32.mrb[0].mxu0
      %4423 = vmatprep.mubr.f32.mxu0 0.0
      %v4424 = vand.u32 %v3851, 4294901760
      %4425 = vmatmul.mubr.f32.gmra.mrb[0].mxu0 %v4424
      %v4426 = vpop.f32.mrb[0].mxu0
      %v4427 = vadd.f32 %v4311, %v4426
      %v4428 = vpop.f32.mrb[0].mxu0
      %4429 = vmatprep.mubr.f32.mxu0 0.0
      %v4430 = vand.u32 %v3854, 4294901760
      %4431 = vmatmul.mubr.f32.gmra.mrb[0].mxu0 %v4430
      %v4432 = vpop.f32.mrb[0].mxu0
      %v4433 = vadd.f32 %v4319, %v4432
      %v4434 = vpop.f32.mrb[0].mxu0
      %4435 = vmatprep.mubr.f32.mxu0 0.0
      %v4436 = vand.u32 %v3857, 4294901760
      %4437 = vmatmul.mubr.f32.gmra.mrb[0].mxu0 %v4436
      %v4438 = vpop.f32.mrb[0].mxu0
      %v4439 = vadd.f32 %v4327, %v4438
      %v4440 = vpop.f32.mrb[0].mxu0
      %4441 = vmatprep.mubr.f32.mxu0 0.0
      %v4442 = vand.u32 %v3860, 4294901760
      %4443 = vmatmul.mubr.f32.gmra.mrb[0].mxu0 %v4442
      %v4444 = vpop.f32.mrb[0].mxu0
      %v4445 = vadd.f32 %v4335, %v4444
      %v4446 = vpop.f32.mrb[0].mxu0
      %4447 = vdwg.mxu0
      %4448 = vmatprep.subr.mxu0 0.0
      %v4449 = vand.u32 %v3785, 4294901760
      %4450 = vmatpush1.msra.mxu0 %v4449
      %4451 = vmatprep.subr.mxu0 0.0
      %v4452 = vand.u32 %v3786, 4294901760
      %4453 = vmatpush1.msra.mxu0 %v4452
      %4454 = vmatprep.subr.mxu0 0.0
      %v4455 = vand.u32 %v3863, 4294901760
      %4456 = vmatpush1.msra.mxu0 %v4455
      %4457 = vmatprep.subr.mxu0 0.0
      %4458 = vmatpush1.msra.mxu0 0.0
      %4459 = vmatprep.subr.mxu0 0.0
      %4460 = vmatpush1.msra.mxu0 0.0
      %4461 = vmatprep.subr.mxu0 0.0
      %4462 = vmatpush1.msra.mxu0 0.0
      %4463 = vmatprep.subr.mxu0 0.0
      %4464 = vmatpush1.msra.mxu0 0.0
      %4465 = vmatprep.subr.mxu0 0.0
      %4466 = vmatpush1.msra.mxu0 0.0
      %4467 = vmatprep.subr.mxu0 0.0
      %4468 = vmatpush1.msra.mxu0 0.0
      %4469 = vmatprep.subr.mxu0 0.0
      %4470 = vmatpush1.msra.mxu0 0.0
      %4471 = vmatprep.subr.mxu0 0.0
      %4472 = vmatpush1.msra.mxu0 0.0
      %4473 = vmatprep.subr.mxu0 0.0
      %4474 = vmatpush1.msra.mxu0 0.0
      %4475 = vmatprep.subr.mxu0 0.0
      %4476 = vmatpush1.msra.mxu0 0.0
      %4477 = vmatprep.subr.mxu0 0.0
      %4478 = vmatpush1.msra.mxu0 0.0
      %4479 = vmatprep.subr.mxu0 0.0
      %4480 = vmatpush1.msra.mxu0 0.0
      %4481 = vmatprep.subr.mxu0 0.0
      %4482 = vmatpush1.msra.mxu0 0.0
      %4483 = vmatprep.subr.mxu0 0.0
      %4484 = vmatpush1.msra.mxu0 0.0
      %4485 = vmatprep.subr.mxu0 0.0
      %4486 = vmatpush1.msra.mxu0 0.0
      %4487 = vmatprep.subr.mxu0 0.0
      %4488 = vmatpush1.msra.mxu0 0.0
      %4489 = vmatprep.subr.mxu0 0.0
      %4490 = vmatpush1.msra.mxu0 0.0
      %4491 = vmatprep.subr.mxu0 0.0
      %4492 = vmatpush1.msra.mxu0 0.0
      %4493 = vmatprep.subr.mxu0 0.0
      %4494 = vmatpush1.msra.mxu0 0.0
      %4495 = vmatprep.subr.mxu0 0.0
      %4496 = vmatpush1.msra.mxu0 0.0
      %4497 = vmatprep.subr.mxu0 0.0
      %4498 = vmatpush1.msra.mxu0 0.0
      %4499 = vmatprep.subr.mxu0 0.0
      %4500 = vmatpush1.msra.mxu0 0.0
      %4501 = vmatprep.subr.mxu0 0.0
      %4502 = vmatpush1.msra.mxu0 0.0
      %4503 = vmatprep.subr.mxu0 0.0
      %4504 = vmatpush1.msra.mxu0 0.0
      %4505 = vmatprep.subr.mxu0 0.0
      %4506 = vmatpush1.msra.mxu0 0.0
      %4507 = vmatprep.subr.mxu0 0.0
      %4508 = vmatpush1.msra.mxu0 0.0
      %4509 = vmatprep.subr.mxu0 0.0
      %4510 = vmatpush1.msra.mxu0 0.0
      %4511 = vmatprep.subr.mxu0 0.0
      %4512 = vmatpush1.msra.mxu0 0.0
      %4513 = vmatprep.subr.mxu0 0.0
      %4514 = vmatpush1.msra.mxu0 0.0
      %4515 = vmatprep.mubr.f32.mxu0 0.0
      %v4516 = vand.u32 %v3845, 4294901760
      %4517 = vmatmul.mubr.f32.gmra.mrb[0].mxu0 %v4516
      %v4518 = vpop.f32.mrb[0].mxu0
      %v4519 = vadd.f32 %v4415, %v4518
      %v4520 = vpop.f32.mrb[0].mxu0
      %4521 = vmatprep.mubr.f32.mxu0 0.0
      %v4522 = vand.u32 %v3848, 4294901760
      %4523 = vmatmul.mubr.f32.gmra.mrb[0].mxu0 %v4522
      %v4524 = vpop.f32.mrb[0].mxu0
      %v4525 = vadd.f32 %v4421, %v4524
      %v4526 = vpop.f32.mrb[0].mxu0
      %4527 = vmatprep.mubr.f32.mxu0 0.0
      %v4528 = vand.u32 %v3851, 4294901760
      %4529 = vmatmul.mubr.f32.gmra.mrb[0].mxu0 %v4528
      %v4530 = vpop.f32.mrb[0].mxu0
      %v4531 = vadd.f32 %v4427, %v4530
      %v4532 = vpop.f32.mrb[0].mxu0
      %4533 = vmatprep.mubr.f32.mxu0 0.0
      %v4534 = vand.u32 %v3854, 4294901760
      %4535 = vmatmul.mubr.f32.gmra.mrb[0].mxu0 %v4534
      %v4536 = vpop.f32.mrb[0].mxu0
      %v4537 = vadd.f32 %v4433, %v4536
      %v4538 = vpop.f32.mrb[0].mxu0
      %4539 = vmatprep.mubr.f32.mxu0 0.0
      %v4540 = vand.u32 %v3857, 4294901760
      %4541 = vmatmul.mubr.f32.gmra.mrb[0].mxu0 %v4540
      %v4542 = vpop.f32.mrb[0].mxu0
      %v4543 = vadd.f32 %v4439, %v4542
      %v4544 = vpop.f32.mrb[0].mxu0
      %4545 = vmatprep.mubr.f32.mxu0 0.0
      %v4546 = vand.u32 %v3860, 4294901760
      %4547 = vmatmul.mubr.f32.gmra.mrb[0].mxu0 %v4546
      %v4548 = vpop.f32.mrb[0].mxu0
      %v4549 = vadd.f32 %v4445, %v4548
      %v4550 = vpop.f32.mrb[0].mxu0
      %4551 = vdwg.mxu0
      %4552 = vxpose.xlu0.b32.start [1/16] %v4519, 128
      %4553 = vxpose.xlu0.b32.cont [2/16] %v4525, 128
      %4554 = vxpose.xlu0.b32.cont [3/16] %v4531, 128
      %4555 = vxpose.xlu0.b32.cont [4/16] 0.0, 128
      %4556 = vxpose.xlu0.b32.cont [5/16] 0.0, 128
      %4557 = vxpose.xlu0.b32.cont [6/16] 0.0, 128
      %4558 = vxpose.xlu0.b32.cont [7/16] 0.0, 128
      %4559 = vxpose.xlu0.b32.cont [8/16] 0.0, 128
      %4560 = vxpose.xlu0.b32.cont [9/16] 0.0, 128
      %4561 = vxpose.xlu0.b32.cont [10/16] 0.0, 128
      %4562 = vxpose.xlu0.b32.cont [11/16] 0.0, 128
      %4563 = vxpose.xlu0.b32.cont [12/16] 0.0, 128
      %4564 = vxpose.xlu0.b32.cont [13/16] 0.0, 128
      %4565 = vxpose.xlu0.b32.cont [14/16] 0.0, 128
      %4566 = vxpose.xlu0.b32.cont [15/16] 0.0, 128
      %4567 = vxpose.xlu0.b32.end [16/16] 0.0, 128
      %v4568 = vpop.trf.xlu0
      %v4569 = vpop.trf.xlu0
      %v4570 = vpop.trf.xlu0
      %v4571 = vpop.trf.xlu0
      %v4572 = vpop.trf.xlu0
      %v4573 = vpop.trf.xlu0
      %v4574 = vpop.trf.xlu0
      %v4575 = vpop.trf.xlu0
      %v4576 = vpop.trf.xlu0
      %v4577 = vpop.trf.xlu0
      %v4578 = vpop.trf.xlu0
      %v4579 = vpop.trf.xlu0
      %v4580 = vpop.trf.xlu0
      %v4581 = vpop.trf.xlu0
      %v4582 = vpop.trf.xlu0
      %v4583 = vpop.trf.xlu0
      %4584 = vxpose.xlu0.b32.start [1/16] %v4537, 128
      %4585 = vxpose.xlu0.b32.cont [2/16] %v4543, 128
      %4586 = vxpose.xlu0.b32.cont [3/16] %v4549, 128
      %4587 = vxpose.xlu0.b32.cont [4/16] 0.0, 128
      %4588 = vxpose.xlu0.b32.cont [5/16] 0.0, 128
      %4589 = vxpose.xlu0.b32.cont [6/16] 0.0, 128
      %4590 = vxpose.xlu0.b32.cont [7/16] 0.0, 128
      %4591 = vxpose.xlu0.b32.cont [8/16] 0.0, 128
      %4592 = vxpose.xlu0.b32.cont [9/16] 0.0, 128
      %4593 = vxpose.xlu0.b32.cont [10/16] 0.0, 128
      %4594 = vxpose.xlu0.b32.cont [11/16] 0.0, 128
      %4595 = vxpose.xlu0.b32.cont [12/16] 0.0, 128
      %4596 = vxpose.xlu0.b32.cont [13/16] 0.0, 128
      %4597 = vxpose.xlu0.b32.cont [14/16] 0.0, 128
      %4598 = vxpose.xlu0.b32.cont [15/16] 0.0, 128
      %4599 = vxpose.xlu0.b32.end [16/16] 0.0, 128
      %v4600 = vpop.trf.xlu0
      %v4601 = vpop.trf.xlu0
      %v4602 = vpop.trf.xlu0
      %v4603 = vpop.trf.xlu0
      %v4604 = vpop.trf.xlu0
      %v4605 = vpop.trf.xlu0
      %v4606 = vpop.trf.xlu0
      %v4607 = vpop.trf.xlu0
      %v4608 = vpop.trf.xlu0
      %v4609 = vpop.trf.xlu0
      %v4610 = vpop.trf.xlu0
      %v4611 = vpop.trf.xlu0
      %v4612 = vpop.trf.xlu0
      %v4613 = vpop.trf.xlu0
      %v4614 = vpop.trf.xlu0
      %v4615 = vpop.trf.xlu0
      %v4617 = vsel %vm3097, %v4568, 0
      %v4620 = vsel %vm3097, %v4569, 0
      %v4623 = vsel %vm3097, %v4600, 0
      %v4626 = vsel %vm3097, %v4601, 0
      %4628 = vmatprep.subr.mxu0 0.0
      %v4629 = vand.u32 %v3788, 4294901760
      %4630 = vmatpush1.msra.mxu0 %v4629
      %4631 = vmatprep.subr.mxu0 0.0
      %v4632 = vand.u32 %v3789, 4294901760
      %4633 = vmatpush1.msra.mxu0 %v4632
      %4634 = vmatprep.subr.mxu0 0.0
      %v4635 = vand.u32 %v3790, 4294901760
      %4636 = vmatpush1.msra.mxu0 %v4635
      %4637 = vmatprep.subr.mxu0 0.0
      %4638 = vmatpush1.msra.mxu0 0.0
      %4639 = vmatprep.subr.mxu0 0.0
      %4640 = vmatpush1.msra.mxu0 0.0
      %4641 = vmatprep.subr.mxu0 0.0
      %4642 = vmatpush1.msra.mxu0 0.0
      %4643 = vmatprep.subr.mxu0 0.0
      %4644 = vmatpush1.msra.mxu0 0.0
      %4645 = vmatprep.subr.mxu0 0.0
      %4646 = vmatpush1.msra.mxu0 0.0
      %4647 = vmatprep.subr.mxu0 0.0
      %4648 = vmatpush1.msra.mxu0 0.0
      %4649 = vmatprep.subr.mxu0 0.0
      %4650 = vmatpush1.msra.mxu0 0.0
      %4651 = vmatprep.subr.mxu0 0.0
      %4652 = vmatpush1.msra.mxu0 0.0
      %4653 = vmatprep.subr.mxu0 0.0
      %4654 = vmatpush1.msra.mxu0 0.0
      %4655 = vmatprep.subr.mxu0 0.0
      %4656 = vmatpush1.msra.mxu0 0.0
      %4657 = vmatprep.subr.mxu0 0.0
      %4658 = vmatpush1.msra.mxu0 0.0
      %4659 = vmatprep.subr.mxu0 0.0
      %4660 = vmatpush1.msra.mxu0 0.0
      %4661 = vmatprep.subr.mxu0 0.0
      %4662 = vmatpush1.msra.mxu0 0.0
      %4663 = vmatprep.subr.mxu0 0.0
      %4664 = vmatpush1.msra.mxu0 0.0
      %4665 = vmatprep.subr.mxu0 0.0
      %4666 = vmatpush1.msra.mxu0 0.0
      %4667 = vmatprep.subr.mxu0 0.0
      %4668 = vmatpush1.msra.mxu0 0.0
      %4669 = vmatprep.subr.mxu0 0.0
      %4670 = vmatpush1.msra.mxu0 0.0
      %4671 = vmatprep.subr.mxu0 0.0
      %4672 = vmatpush1.msra.mxu0 0.0
      %4673 = vmatprep.subr.mxu0 0.0
      %4674 = vmatpush1.msra.mxu0 0.0
      %4675 = vmatprep.subr.mxu0 0.0
      %4676 = vmatpush1.msra.mxu0 0.0
      %4677 = vmatprep.subr.mxu0 0.0
      %4678 = vmatpush1.msra.mxu0 0.0
      %4679 = vmatprep.subr.mxu0 0.0
      %4680 = vmatpush1.msra.mxu0 0.0
      %4681 = vmatprep.subr.mxu0 0.0
      %4682 = vmatpush1.msra.mxu0 0.0
      %4683 = vmatprep.subr.mxu0 0.0
      %4684 = vmatpush1.msra.mxu0 0.0
      %4685 = vmatprep.subr.mxu0 0.0
      %4686 = vmatpush1.msra.mxu0 0.0
      %4687 = vmatprep.subr.mxu0 0.0
      %4688 = vmatpush1.msra.mxu0 0.0
      %4689 = vmatprep.subr.mxu0 0.0
      %4690 = vmatpush1.msra.mxu0 0.0
      %4691 = vmatprep.subr.mxu0 0.0
      %4692 = vmatpush1.msra.mxu0 0.0
      %4693 = vmatprep.subr.mxu0 0.0
      %4694 = vmatpush1.msra.mxu0 0.0
      %4695 = vmatprep.mubr.f32.mxu0 0.0
      %v4696 = vand.u32 %v4617, 4294901760
      %v4697 = vsub.f32 %v4617, %v4696
      %v4698 = vand.u32 %v4697, 4294901760
      %v4699 = vsub.f32 %v4697, %v4698
      %v4700 = vand.u32 %v4699, 4294901760
      %4701 = vmatmul.mubr.f32.gmra.mrb[0].mxu0 %v4700
      %v4702 = vpop.f32.mrb[0].mxu0
      %v4703 = vadd.f32 0.0, %v4702
      %v4704 = vpop.f32.mrb[0].mxu0
      %4705 = vmatprep.mubr.f32.mxu0 0.0
      %v4706 = vand.u32 %v4620, 4294901760
      %v4707 = vsub.f32 %v4620, %v4706
      %v4708 = vand.u32 %v4707, 4294901760
      %v4709 = vsub.f32 %v4707, %v4708
      %v4710 = vand.u32 %v4709, 4294901760
      %4711 = vmatmul.mubr.f32.gmra.mrb[0].mxu0 %v4710
      %v4712 = vpop.f32.mrb[0].mxu0
      %v4713 = vadd.f32 0.0, %v4712
      %v4714 = vpop.f32.mrb[0].mxu0
      %4715 = vmatprep.mubr.f32.mxu0 0.0
      %v4716 = vand.u32 %v4623, 4294901760
      %v4717 = vsub.f32 %v4623, %v4716
      %v4718 = vand.u32 %v4717, 4294901760
      %v4719 = vsub.f32 %v4717, %v4718
      %v4720 = vand.u32 %v4719, 4294901760
      %4721 = vmatmul.mubr.f32.gmra.mrb[0].mxu0 %v4720
      %v4722 = vpop.f32.mrb[0].mxu0
      %v4723 = vadd.f32 0.0, %v4722
      %v4724 = vpop.f32.mrb[0].mxu0
      %4725 = vmatprep.mubr.f32.mxu0 0.0
      %v4726 = vand.u32 %v4626, 4294901760
      %v4727 = vsub.f32 %v4626, %v4726
      %v4728 = vand.u32 %v4727, 4294901760
      %v4729 = vsub.f32 %v4727, %v4728
      %v4730 = vand.u32 %v4729, 4294901760
      %4731 = vmatmul.mubr.f32.gmra.mrb[0].mxu0 %v4730
      %v4732 = vpop.f32.mrb[0].mxu0
      %v4733 = vadd.f32 0.0, %v4732
      %v4734 = vpop.f32.mrb[0].mxu0
      %4735 = vdwg.mxu0
      %4736 = vmatprep.subr.mxu0 0.0
      %v4737 = vand.u32 %v3788, 4294901760
      %v4738 = vsub.f32 %v3788, %v4737
      %v4739 = vand.u32 %v4738, 4294901760
      %v4740 = vsub.f32 %v4738, %v4739
      %v4741 = vand.u32 %v4740, 4294901760
      %4742 = vmatpush1.msra.mxu0 %v4741
      %4743 = vmatprep.subr.mxu0 0.0
      %v4744 = vand.u32 %v3789, 4294901760
      %v4745 = vsub.f32 %v3789, %v4744
      %v4746 = vand.u32 %v4745, 4294901760
      %v4747 = vsub.f32 %v4745, %v4746
      %v4748 = vand.u32 %v4747, 4294901760
      %4749 = vmatpush1.msra.mxu0 %v4748
      %4750 = vmatprep.subr.mxu0 0.0
      %v4751 = vand.u32 %v3790, 4294901760
      %v4752 = vsub.f32 %v3790, %v4751
      %v4753 = vand.u32 %v4752, 4294901760
      %v4754 = vsub.f32 %v4752, %v4753
      %v4755 = vand.u32 %v4754, 4294901760
      %4756 = vmatpush1.msra.mxu0 %v4755
      %4757 = vmatprep.subr.mxu0 0.0
      %4758 = vmatpush1.msra.mxu0 0.0
      %4759 = vmatprep.subr.mxu0 0.0
      %4760 = vmatpush1.msra.mxu0 0.0
      %4761 = vmatprep.subr.mxu0 0.0
      %4762 = vmatpush1.msra.mxu0 0.0
      %4763 = vmatprep.subr.mxu0 0.0
      %4764 = vmatpush1.msra.mxu0 0.0
      %4765 = vmatprep.subr.mxu0 0.0
      %4766 = vmatpush1.msra.mxu0 0.0
      %4767 = vmatprep.subr.mxu0 0.0
      %4768 = vmatpush1.msra.mxu0 0.0
      %4769 = vmatprep.subr.mxu0 0.0
      %4770 = vmatpush1.msra.mxu0 0.0
      %4771 = vmatprep.subr.mxu0 0.0
      %4772 = vmatpush1.msra.mxu0 0.0
      %4773 = vmatprep.subr.mxu0 0.0
      %4774 = vmatpush1.msra.mxu0 0.0
      %4775 = vmatprep.subr.mxu0 0.0
      %4776 = vmatpush1.msra.mxu0 0.0
      %4777 = vmatprep.subr.mxu0 0.0
      %4778 = vmatpush1.msra.mxu0 0.0
      %4779 = vmatprep.subr.mxu0 0.0
      %4780 = vmatpush1.msra.mxu0 0.0
      %4781 = vmatprep.subr.mxu0 0.0
      %4782 = vmatpush1.msra.mxu0 0.0
      %4783 = vmatprep.subr.mxu0 0.0
      %4784 = vmatpush1.msra.mxu0 0.0
      %4785 = vmatprep.subr.mxu0 0.0
      %4786 = vmatpush1.msra.mxu0 0.0
      %4787 = vmatprep.subr.mxu0 0.0
      %4788 = vmatpush1.msra.mxu0 0.0
      %4789 = vmatprep.subr.mxu0 0.0
      %4790 = vmatpush1.msra.mxu0 0.0
      %4791 = vmatprep.subr.mxu0 0.0
      %4792 = vmatpush1.msra.mxu0 0.0
      %4793 = vmatprep.subr.mxu0 0.0
      %4794 = vmatpush1.msra.mxu0 0.0
      %4795 = vmatprep.subr.mxu0 0.0
      %4796 = vmatpush1.msra.mxu0 0.0
      %4797 = vmatprep.subr.mxu0 0.0
      %4798 = vmatpush1.msra.mxu0 0.0
      %4799 = vmatprep.subr.mxu0 0.0
      %4800 = vmatpush1.msra.mxu0 0.0
      %4801 = vmatprep.subr.mxu0 0.0
      %4802 = vmatpush1.msra.mxu0 0.0
      %4803 = vmatprep.subr.mxu0 0.0
      %4804 = vmatpush1.msra.mxu0 0.0
      %4805 = vmatprep.subr.mxu0 0.0
      %4806 = vmatpush1.msra.mxu0 0.0
      %4807 = vmatprep.subr.mxu0 0.0
      %4808 = vmatpush1.msra.mxu0 0.0
      %4809 = vmatprep.subr.mxu0 0.0
      %4810 = vmatpush1.msra.mxu0 0.0
      %4811 = vmatprep.subr.mxu0 0.0
      %4812 = vmatpush1.msra.mxu0 0.0
      %4813 = vmatprep.subr.mxu0 0.0
      %4814 = vmatpush1.msra.mxu0 0.0
      %4815 = vmatprep.mubr.f32.mxu0 0.0
      %v4816 = vand.u32 %v4617, 4294901760
      %4817 = vmatmul.mubr.f32.gmra.mrb[0].mxu0 %v4816
      %v4818 = vpop.f32.mrb[0].mxu0
      %v4819 = vadd.f32 %v4703, %v4818
      %v4820 = vpop.f32.mrb[0].mxu0
      %4821 = vmatprep.mubr.f32.mxu0 0.0
      %v4822 = vand.u32 %v4620, 4294901760
      %4823 = vmatmul.mubr.f32.gmra.mrb[0].mxu0 %v4822
      %v4824 = vpop.f32.mrb[0].mxu0
      %v4825 = vadd.f32 %v4713, %v4824
      %v4826 = vpop.f32.mrb[0].mxu0
      %4827 = vmatprep.mubr.f32.mxu0 0.0
      %v4828 = vand.u32 %v4623, 4294901760
      %4829 = vmatmul.mubr.f32.gmra.mrb[0].mxu0 %v4828
      %v4830 = vpop.f32.mrb[0].mxu0
      %v4831 = vadd.f32 %v4723, %v4830
      %v4832 = vpop.f32.mrb[0].mxu0
      %4833 = vmatprep.mubr.f32.mxu0 0.0
      %v4834 = vand.u32 %v4626, 4294901760
      %4835 = vmatmul.mubr.f32.gmra.mrb[0].mxu0 %v4834
      %v4836 = vpop.f32.mrb[0].mxu0
      %v4837 = vadd.f32 %v4733, %v4836
      %v4838 = vpop.f32.mrb[0].mxu0
      %4839 = vdwg.mxu0
      %4840 = vmatprep.subr.mxu0 0.0
      %v4841 = vand.u32 %v3788, 4294901760
      %v4842 = vsub.f32 %v3788, %v4841
      %4843 = vmatpush1.msra.mxu0 %v4842
      %4844 = vmatprep.subr.mxu0 0.0
      %v4845 = vand.u32 %v3789, 4294901760
      %v4846 = vsub.f32 %v3789, %v4845
      %4847 = vmatpush1.msra.mxu0 %v4846
      %4848 = vmatprep.subr.mxu0 0.0
      %v4849 = vand.u32 %v3790, 4294901760
      %v4850 = vsub.f32 %v3790, %v4849
      %4851 = vmatpush1.msra.mxu0 %v4850
      %4852 = vmatprep.subr.mxu0 0.0
      %4853 = vmatpush1.msra.mxu0 0.0
      %4854 = vmatprep.subr.mxu0 0.0
      %4855 = vmatpush1.msra.mxu0 0.0
      %4856 = vmatprep.subr.mxu0 0.0
      %4857 = vmatpush1.msra.mxu0 0.0
      %4858 = vmatprep.subr.mxu0 0.0
      %4859 = vmatpush1.msra.mxu0 0.0
      %4860 = vmatprep.subr.mxu0 0.0
      %4861 = vmatpush1.msra.mxu0 0.0
      %4862 = vmatprep.subr.mxu0 0.0
      %4863 = vmatpush1.msra.mxu0 0.0
      %4864 = vmatprep.subr.mxu0 0.0
      %4865 = vmatpush1.msra.mxu0 0.0
      %4866 = vmatprep.subr.mxu0 0.0
      %4867 = vmatpush1.msra.mxu0 0.0
      %4868 = vmatprep.subr.mxu0 0.0
      %4869 = vmatpush1.msra.mxu0 0.0
      %4870 = vmatprep.subr.mxu0 0.0
      %4871 = vmatpush1.msra.mxu0 0.0
      %4872 = vmatprep.subr.mxu0 0.0
      %4873 = vmatpush1.msra.mxu0 0.0
      %4874 = vmatprep.subr.mxu0 0.0
      %4875 = vmatpush1.msra.mxu0 0.0
      %4876 = vmatprep.subr.mxu0 0.0
      %4877 = vmatpush1.msra.mxu0 0.0
      %4878 = vmatprep.subr.mxu0 0.0
      %4879 = vmatpush1.msra.mxu0 0.0
      %4880 = vmatprep.subr.mxu0 0.0
      %4881 = vmatpush1.msra.mxu0 0.0
      %4882 = vmatprep.subr.mxu0 0.0
      %4883 = vmatpush1.msra.mxu0 0.0
      %4884 = vmatprep.subr.mxu0 0.0
      %4885 = vmatpush1.msra.mxu0 0.0
      %4886 = vmatprep.subr.mxu0 0.0
      %4887 = vmatpush1.msra.mxu0 0.0
      %4888 = vmatprep.subr.mxu0 0.0
      %4889 = vmatpush1.msra.mxu0 0.0
      %4890 = vmatprep.subr.mxu0 0.0
      %4891 = vmatpush1.msra.mxu0 0.0
      %4892 = vmatprep.subr.mxu0 0.0
      %4893 = vmatpush1.msra.mxu0 0.0
      %4894 = vmatprep.subr.mxu0 0.0
      %4895 = vmatpush1.msra.mxu0 0.0
      %4896 = vmatprep.subr.mxu0 0.0
      %4897 = vmatpush1.msra.mxu0 0.0
      %4898 = vmatprep.subr.mxu0 0.0
      %4899 = vmatpush1.msra.mxu0 0.0
      %4900 = vmatprep.subr.mxu0 0.0
      %4901 = vmatpush1.msra.mxu0 0.0
      %4902 = vmatprep.subr.mxu0 0.0
      %4903 = vmatpush1.msra.mxu0 0.0
      %4904 = vmatprep.subr.mxu0 0.0
      %4905 = vmatpush1.msra.mxu0 0.0
      %4906 = vmatprep.subr.mxu0 0.0
      %4907 = vmatpush1.msra.mxu0 0.0
      %4908 = vmatprep.subr.mxu0 0.0
      %4909 = vmatpush1.msra.mxu0 0.0
      %4910 = vmatprep.mubr.f32.mxu0 0.0
      %v4911 = vand.u32 %v4617, 4294901760
      %v4912 = vsub.f32 %v4617, %v4911
      %4913 = vmatmul.mubr.f32.gmra.mrb[0].mxu0 %v4912
      %v4914 = vpop.f32.mrb[0].mxu0
      %v4915 = vadd.f32 %v4819, %v4914
      %v4916 = vpop.f32.mrb[0].mxu0
      %4917 = vmatprep.mubr.f32.mxu0 0.0
      %v4918 = vand.u32 %v4620, 4294901760
      %v4919 = vsub.f32 %v4620, %v4918
      %4920 = vmatmul.mubr.f32.gmra.mrb[0].mxu0 %v4919
      %v4921 = vpop.f32.mrb[0].mxu0
      %v4922 = vadd.f32 %v4825, %v4921
      %v4923 = vpop.f32.mrb[0].mxu0
      %4924 = vmatprep.mubr.f32.mxu0 0.0
      %v4925 = vand.u32 %v4623, 4294901760
      %v4926 = vsub.f32 %v4623, %v4925
      %4927 = vmatmul.mubr.f32.gmra.mrb[0].mxu0 %v4926
      %v4928 = vpop.f32.mrb[0].mxu0
      %v4929 = vadd.f32 %v4831, %v4928
      %v4930 = vpop.f32.mrb[0].mxu0
      %4931 = vmatprep.mubr.f32.mxu0 0.0
      %v4932 = vand.u32 %v4626, 4294901760
      %v4933 = vsub.f32 %v4626, %v4932
      %4934 = vmatmul.mubr.f32.gmra.mrb[0].mxu0 %v4933
      %v4935 = vpop.f32.mrb[0].mxu0
      %v4936 = vadd.f32 %v4837, %v4935
      %v4937 = vpop.f32.mrb[0].mxu0
      %4938 = vdwg.mxu0
      %4939 = vmatprep.subr.mxu0 0.0
      %v4940 = vand.u32 %v3788, 4294901760
      %4941 = vmatpush1.msra.mxu0 %v4940
      %4942 = vmatprep.subr.mxu0 0.0
      %v4943 = vand.u32 %v3789, 4294901760
      %4944 = vmatpush1.msra.mxu0 %v4943
      %4945 = vmatprep.subr.mxu0 0.0
      %v4946 = vand.u32 %v3790, 4294901760
      %4947 = vmatpush1.msra.mxu0 %v4946
      %4948 = vmatprep.subr.mxu0 0.0
      %4949 = vmatpush1.msra.mxu0 0.0
      %4950 = vmatprep.subr.mxu0 0.0
      %4951 = vmatpush1.msra.mxu0 0.0
      %4952 = vmatprep.subr.mxu0 0.0
      %4953 = vmatpush1.msra.mxu0 0.0
      %4954 = vmatprep.subr.mxu0 0.0
      %4955 = vmatpush1.msra.mxu0 0.0
      %4956 = vmatprep.subr.mxu0 0.0
      %4957 = vmatpush1.msra.mxu0 0.0
      %4958 = vmatprep.subr.mxu0 0.0
      %4959 = vmatpush1.msra.mxu0 0.0
      %4960 = vmatprep.subr.mxu0 0.0
      %4961 = vmatpush1.msra.mxu0 0.0
      %4962 = vmatprep.subr.mxu0 0.0
      %4963 = vmatpush1.msra.mxu0 0.0
      %4964 = vmatprep.subr.mxu0 0.0
      %4965 = vmatpush1.msra.mxu0 0.0
      %4966 = vmatprep.subr.mxu0 0.0
      %4967 = vmatpush1.msra.mxu0 0.0
      %4968 = vmatprep.subr.mxu0 0.0
      %4969 = vmatpush1.msra.mxu0 0.0
      %4970 = vmatprep.subr.mxu0 0.0
      %4971 = vmatpush1.msra.mxu0 0.0
      %4972 = vmatprep.subr.mxu0 0.0
      %4973 = vmatpush1.msra.mxu0 0.0
      %4974 = vmatprep.subr.mxu0 0.0
      %4975 = vmatpush1.msra.mxu0 0.0
      %4976 = vmatprep.subr.mxu0 0.0
      %4977 = vmatpush1.msra.mxu0 0.0
      %4978 = vmatprep.subr.mxu0 0.0
      %4979 = vmatpush1.msra.mxu0 0.0
      %4980 = vmatprep.subr.mxu0 0.0
      %4981 = vmatpush1.msra.mxu0 0.0
      %4982 = vmatprep.subr.mxu0 0.0
      %4983 = vmatpush1.msra.mxu0 0.0
      %4984 = vmatprep.subr.mxu0 0.0
      %4985 = vmatpush1.msra.mxu0 0.0
      %4986 = vmatprep.subr.mxu0 0.0
      %4987 = vmatpush1.msra.mxu0 0.0
      %4988 = vmatprep.subr.mxu0 0.0
      %4989 = vmatpush1.msra.mxu0 0.0
      %4990 = vmatprep.subr.mxu0 0.0
      %4991 = vmatpush1.msra.mxu0 0.0
      %4992 = vmatprep.subr.mxu0 0.0
      %4993 = vmatpush1.msra.mxu0 0.0
      %4994 = vmatprep.subr.mxu0 0.0
      %4995 = vmatpush1.msra.mxu0 0.0
      %4996 = vmatprep.subr.mxu0 0.0
      %4997 = vmatpush1.msra.mxu0 0.0
      %4998 = vmatprep.subr.mxu0 0.0
      %4999 = vmatpush1.msra.mxu0 0.0
      %5000 = vmatprep.subr.mxu0 0.0
      %5001 = vmatpush1.msra.mxu0 0.0
      %5002 = vmatprep.subr.mxu0 0.0
      %5003 = vmatpush1.msra.mxu0 0.0
      %5004 = vmatprep.subr.mxu0 0.0
      %5005 = vmatpush1.msra.mxu0 0.0
      %5006 = vmatprep.mubr.f32.mxu0 0.0
      %v5007 = vand.u32 %v4617, 4294901760
      %v5008 = vsub.f32 %v4617, %v5007
      %v5009 = vand.u32 %v5008, 4294901760
      %5010 = vmatmul.mubr.f32.gmra.mrb[0].mxu0 %v5009
      %v5011 = vpop.f32.mrb[0].mxu0
      %v5012 = vadd.f32 %v4915, %v5011
      %v5013 = vpop.f32.mrb[0].mxu0
      %5014 = vmatprep.mubr.f32.mxu0 0.0
      %v5015 = vand.u32 %v4620, 4294901760
      %v5016 = vsub.f32 %v4620, %v5015
      %v5017 = vand.u32 %v5016, 4294901760
      %5018 = vmatmul.mubr.f32.gmra.mrb[0].mxu0 %v5017
      %v5019 = vpop.f32.mrb[0].mxu0
      %v5020 = vadd.f32 %v4922, %v5019
      %v5021 = vpop.f32.mrb[0].mxu0
      %5022 = vmatprep.mubr.f32.mxu0 0.0
      %v5023 = vand.u32 %v4623, 4294901760
      %v5024 = vsub.f32 %v4623, %v5023
      %v5025 = vand.u32 %v5024, 4294901760
      %5026 = vmatmul.mubr.f32.gmra.mrb[0].mxu0 %v5025
      %v5027 = vpop.f32.mrb[0].mxu0
      %v5028 = vadd.f32 %v4929, %v5027
      %v5029 = vpop.f32.mrb[0].mxu0
      %5030 = vmatprep.mubr.f32.mxu0 0.0
      %v5031 = vand.u32 %v4626, 4294901760
      %v5032 = vsub.f32 %v4626, %v5031
      %v5033 = vand.u32 %v5032, 4294901760
      %5034 = vmatmul.mubr.f32.gmra.mrb[0].mxu0 %v5033
      %v5035 = vpop.f32.mrb[0].mxu0
      %v5036 = vadd.f32 %v4936, %v5035
      %v5037 = vpop.f32.mrb[0].mxu0
      %5038 = vdwg.mxu0
      %5039 = vmatprep.subr.mxu0 0.0
      %v5040 = vand.u32 %v3788, 4294901760
      %v5041 = vsub.f32 %v3788, %v5040
      %v5042 = vand.u32 %v5041, 4294901760
      %5043 = vmatpush1.msra.mxu0 %v5042
      %5044 = vmatprep.subr.mxu0 0.0
      %v5045 = vand.u32 %v3789, 4294901760
      %v5046 = vsub.f32 %v3789, %v5045
      %v5047 = vand.u32 %v5046, 4294901760
      %5048 = vmatpush1.msra.mxu0 %v5047
      %5049 = vmatprep.subr.mxu0 0.0
      %v5050 = vand.u32 %v3790, 4294901760
      %v5051 = vsub.f32 %v3790, %v5050
      %v5052 = vand.u32 %v5051, 4294901760
      %5053 = vmatpush1.msra.mxu0 %v5052
      %5054 = vmatprep.subr.mxu0 0.0
      %5055 = vmatpush1.msra.mxu0 0.0
      %5056 = vmatprep.subr.mxu0 0.0
      %5057 = vmatpush1.msra.mxu0 0.0
      %5058 = vmatprep.subr.mxu0 0.0
      %5059 = vmatpush1.msra.mxu0 0.0
      %5060 = vmatprep.subr.mxu0 0.0
      %5061 = vmatpush1.msra.mxu0 0.0
      %5062 = vmatprep.subr.mxu0 0.0
      %5063 = vmatpush1.msra.mxu0 0.0
      %5064 = vmatprep.subr.mxu0 0.0
      %5065 = vmatpush1.msra.mxu0 0.0
      %5066 = vmatprep.subr.mxu0 0.0
      %5067 = vmatpush1.msra.mxu0 0.0
      %5068 = vmatprep.subr.mxu0 0.0
      %5069 = vmatpush1.msra.mxu0 0.0
      %5070 = vmatprep.subr.mxu0 0.0
      %5071 = vmatpush1.msra.mxu0 0.0
      %5072 = vmatprep.subr.mxu0 0.0
      %5073 = vmatpush1.msra.mxu0 0.0
      %5074 = vmatprep.subr.mxu0 0.0
      %5075 = vmatpush1.msra.mxu0 0.0
      %5076 = vmatprep.subr.mxu0 0.0
      %5077 = vmatpush1.msra.mxu0 0.0
      %5078 = vmatprep.subr.mxu0 0.0
      %5079 = vmatpush1.msra.mxu0 0.0
      %5080 = vmatprep.subr.mxu0 0.0
      %5081 = vmatpush1.msra.mxu0 0.0
      %5082 = vmatprep.subr.mxu0 0.0
      %5083 = vmatpush1.msra.mxu0 0.0
      %5084 = vmatprep.subr.mxu0 0.0
      %5085 = vmatpush1.msra.mxu0 0.0
      %5086 = vmatprep.subr.mxu0 0.0
      %5087 = vmatpush1.msra.mxu0 0.0
      %5088 = vmatprep.subr.mxu0 0.0
      %5089 = vmatpush1.msra.mxu0 0.0
      %5090 = vmatprep.subr.mxu0 0.0
      %5091 = vmatpush1.msra.mxu0 0.0
      %5092 = vmatprep.subr.mxu0 0.0
      %5093 = vmatpush1.msra.mxu0 0.0
      %5094 = vmatprep.subr.mxu0 0.0
      %5095 = vmatpush1.msra.mxu0 0.0
      %5096 = vmatprep.subr.mxu0 0.0
      %5097 = vmatpush1.msra.mxu0 0.0
      %5098 = vmatprep.subr.mxu0 0.0
      %5099 = vmatpush1.msra.mxu0 0.0
      %5100 = vmatprep.subr.mxu0 0.0
      %5101 = vmatpush1.msra.mxu0 0.0
      %5102 = vmatprep.subr.mxu0 0.0
      %5103 = vmatpush1.msra.mxu0 0.0
      %5104 = vmatprep.subr.mxu0 0.0
      %5105 = vmatpush1.msra.mxu0 0.0
      %5106 = vmatprep.subr.mxu0 0.0
      %5107 = vmatpush1.msra.mxu0 0.0
      %5108 = vmatprep.subr.mxu0 0.0
      %5109 = vmatpush1.msra.mxu0 0.0
      %5110 = vmatprep.subr.mxu0 0.0
      %5111 = vmatpush1.msra.mxu0 0.0
      %5112 = vmatprep.mubr.f32.mxu0 0.0
      %v5113 = vand.u32 %v4617, 4294901760
      %5114 = vmatmul.mubr.f32.gmra.mrb[0].mxu0 %v5113
      %v5115 = vpop.f32.mrb[0].mxu0
      %v5116 = vadd.f32 %v5012, %v5115
      %v5117 = vpop.f32.mrb[0].mxu0
      %5118 = vmatprep.mubr.f32.mxu0 0.0
      %v5119 = vand.u32 %v4620, 4294901760
      %5120 = vmatmul.mubr.f32.gmra.mrb[0].mxu0 %v5119
      %v5121 = vpop.f32.mrb[0].mxu0
      %v5122 = vadd.f32 %v5020, %v5121
      %v5123 = vpop.f32.mrb[0].mxu0
      %5124 = vmatprep.mubr.f32.mxu0 0.0
      %v5125 = vand.u32 %v4623, 4294901760
      %5126 = vmatmul.mubr.f32.gmra.mrb[0].mxu0 %v5125
      %v5127 = vpop.f32.mrb[0].mxu0
      %v5128 = vadd.f32 %v5028, %v5127
      %v5129 = vpop.f32.mrb[0].mxu0
      %5130 = vmatprep.mubr.f32.mxu0 0.0
      %v5131 = vand.u32 %v4626, 4294901760
      %5132 = vmatmul.mubr.f32.gmra.mrb[0].mxu0 %v5131
      %v5133 = vpop.f32.mrb[0].mxu0
      %v5134 = vadd.f32 %v5036, %v5133
      %v5135 = vpop.f32.mrb[0].mxu0
      %5136 = vdwg.mxu0
      %5137 = vmatprep.subr.mxu0 0.0
      %v5138 = vand.u32 %v3788, 4294901760
      %5139 = vmatpush1.msra.mxu0 %v5138
      %5140 = vmatprep.subr.mxu0 0.0
      %v5141 = vand.u32 %v3789, 4294901760
      %5142 = vmatpush1.msra.mxu0 %v5141
      %5143 = vmatprep.subr.mxu0 0.0
      %v5144 = vand.u32 %v3790, 4294901760
      %5145 = vmatpush1.msra.mxu0 %v5144
      %5146 = vmatprep.subr.mxu0 0.0
      %5147 = vmatpush1.msra.mxu0 0.0
      %5148 = vmatprep.subr.mxu0 0.0
      %5149 = vmatpush1.msra.mxu0 0.0
      %5150 = vmatprep.subr.mxu0 0.0
      %5151 = vmatpush1.msra.mxu0 0.0
      %5152 = vmatprep.subr.mxu0 0.0
      %5153 = vmatpush1.msra.mxu0 0.0
      %5154 = vmatprep.subr.mxu0 0.0
      %5155 = vmatpush1.msra.mxu0 0.0
      %5156 = vmatprep.subr.mxu0 0.0
      %5157 = vmatpush1.msra.mxu0 0.0
      %5158 = vmatprep.subr.mxu0 0.0
      %5159 = vmatpush1.msra.mxu0 0.0
      %5160 = vmatprep.subr.mxu0 0.0
      %5161 = vmatpush1.msra.mxu0 0.0
      %5162 = vmatprep.subr.mxu0 0.0
      %5163 = vmatpush1.msra.mxu0 0.0
      %5164 = vmatprep.subr.mxu0 0.0
      %5165 = vmatpush1.msra.mxu0 0.0
      %5166 = vmatprep.subr.mxu0 0.0
      %5167 = vmatpush1.msra.mxu0 0.0
      %5168 = vmatprep.subr.mxu0 0.0
      %5169 = vmatpush1.msra.mxu0 0.0
      %5170 = vmatprep.subr.mxu0 0.0
      %5171 = vmatpush1.msra.mxu0 0.0
      %5172 = vmatprep.subr.mxu0 0.0
      %5173 = vmatpush1.msra.mxu0 0.0
      %5174 = vmatprep.subr.mxu0 0.0
      %5175 = vmatpush1.msra.mxu0 0.0
      %5176 = vmatprep.subr.mxu0 0.0
      %5177 = vmatpush1.msra.mxu0 0.0
      %5178 = vmatprep.subr.mxu0 0.0
      %5179 = vmatpush1.msra.mxu0 0.0
      %5180 = vmatprep.subr.mxu0 0.0
      %5181 = vmatpush1.msra.mxu0 0.0
      %5182 = vmatprep.subr.mxu0 0.0
      %5183 = vmatpush1.msra.mxu0 0.0
      %5184 = vmatprep.subr.mxu0 0.0
      %5185 = vmatpush1.msra.mxu0 0.0
      %5186 = vmatprep.subr.mxu0 0.0
      %5187 = vmatpush1.msra.mxu0 0.0
      %5188 = vmatprep.subr.mxu0 0.0
      %5189 = vmatpush1.msra.mxu0 0.0
      %5190 = vmatprep.subr.mxu0 0.0
      %5191 = vmatpush1.msra.mxu0 0.0
      %5192 = vmatprep.subr.mxu0 0.0
      %5193 = vmatpush1.msra.mxu0 0.0
      %5194 = vmatprep.subr.mxu0 0.0
      %5195 = vmatpush1.msra.mxu0 0.0
      %5196 = vmatprep.subr.mxu0 0.0
      %5197 = vmatpush1.msra.mxu0 0.0
      %5198 = vmatprep.subr.mxu0 0.0
      %5199 = vmatpush1.msra.mxu0 0.0
      %5200 = vmatprep.subr.mxu0 0.0
      %5201 = vmatpush1.msra.mxu0 0.0
      %5202 = vmatprep.subr.mxu0 0.0
      %5203 = vmatpush1.msra.mxu0 0.0
      %5204 = vmatprep.mubr.f32.mxu0 0.0
      %v5205 = vand.u32 %v4617, 4294901760
      %5206 = vmatmul.mubr.f32.gmra.mrb[0].mxu0 %v5205
      %v5207 = vpop.f32.mrb[0].mxu0
      %v5208 = vadd.f32 %v5116, %v5207
      %v5209 = vpop.f32.mrb[0].mxu0
      %5210 = vmatprep.mubr.f32.mxu0 0.0
      %v5211 = vand.u32 %v4620, 4294901760
      %5212 = vmatmul.mubr.f32.gmra.mrb[0].mxu0 %v5211
      %v5213 = vpop.f32.mrb[0].mxu0
      %v5214 = vadd.f32 %v5122, %v5213
      %v5215 = vpop.f32.mrb[0].mxu0
      %5216 = vmatprep.mubr.f32.mxu0 0.0
      %v5217 = vand.u32 %v4623, 4294901760
      %5218 = vmatmul.mubr.f32.gmra.mrb[0].mxu0 %v5217
      %v5219 = vpop.f32.mrb[0].mxu0
      %v5220 = vadd.f32 %v5128, %v5219
      %v5221 = vpop.f32.mrb[0].mxu0
      %5222 = vmatprep.mubr.f32.mxu0 0.0
      %v5223 = vand.u32 %v4626, 4294901760
      %5224 = vmatmul.mubr.f32.gmra.mrb[0].mxu0 %v5223
      %v5225 = vpop.f32.mrb[0].mxu0
      %v5226 = vadd.f32 %v5134, %v5225
      %v5227 = vpop.f32.mrb[0].mxu0
      %5228 = vdwg.mxu0
      %v5229 = vld [vmem:[%s9] sm:$0xff]
      %v5230 = vld [vmem:[%s9 + $0x8] sm:$0x1f]
      %v5231 = vld [vmem:[%s10] sm:$0xff]
      %v5232 = vld [vmem:[%s10 + $0x8] sm:$0xff]
      %5237 = vrot.lane.b32.xlu0 %v502, 127
      %v5238 = vpop.permute.xlu0 %5237
      %5239 = vrot.lane.b32.xlu0 %v503, 127
      %v5240 = vpop.permute.xlu0 %5239
      %5241 = vrot.lane.b32.xlu0 %v504, 127
      %v5242 = vpop.permute.xlu0 %5241
      %5243 = vrot.lane.b32.xlu0 %v505, 127
      %v5244 = vpop.permute.xlu0 %5243
      %v5249 = vmax.f32 %v502, %v5238
      %v5250 = vmax.f32 %v503, %v5240
      %v5251 = vmax.f32 %v504, %v5242
      %v5252 = vmax.f32 %v505, %v5244
      %5253 = vrot.lane.b32.xlu0 %v502, 126
      %v5254 = vpop.permute.xlu0 %5253
      %5255 = vrot.lane.b32.xlu0 %v503, 126
      %v5256 = vpop.permute.xlu0 %5255
      %5257 = vrot.lane.b32.xlu0 %v504, 126
      %v5258 = vpop.permute.xlu0 %5257
      %5259 = vrot.lane.b32.xlu0 %v505, 126
      %v5260 = vpop.permute.xlu0 %5259
      %v5265 = vmax.f32 %v5249, %v5254
      %v5266 = vmax.f32 %v5250, %v5256
      %v5267 = vmax.f32 %v5251, %v5258
      %v5268 = vmax.f32 %v5252, %v5260
      %5269 = vrot.lane.b32.xlu0 %v502, 125
      %v5270 = vpop.permute.xlu0 %5269
      %5271 = vrot.lane.b32.xlu0 %v503, 125
      %v5272 = vpop.permute.xlu0 %5271
      %5273 = vrot.lane.b32.xlu0 %v504, 125
      %v5274 = vpop.permute.xlu0 %5273
      %5275 = vrot.lane.b32.xlu0 %v505, 125
      %v5276 = vpop.permute.xlu0 %5275
      %v5281 = vmax.f32 %v5265, %v5270
      %v5282 = vmax.f32 %v5266, %v5272
      %v5283 = vmax.f32 %v5267, %v5274
      %v5284 = vmax.f32 %v5268, %v5276
      %v5289 = vrot.slane %v5281, 1
      %v5290 = vrot.slane %v5282, 1
      %v5291 = vsel %vm594, %v5289, %v5290
      %v5292 = vrot.slane %v5283, 1
      %v5293 = vrot.slane %v5284, 1
      %v5294 = vsel %vm594, %v5292, %v5293
      %v5299 = vmax.f32 %v5281, %v5291
      %v5300 = vmax.f32 %v5282, %v5290
      %v5301 = vmax.f32 %v5283, %v5294
      %v5302 = vmax.f32 %v5284, %v5293
      %v5303 = vrot.slane %v5281, 2
      %v5304 = vrot.slane %v5282, 2
      %v5305 = vsel %vm625, %v5303, %v5304
      %v5306 = vrot.slane %v5283, 2
      %v5307 = vrot.slane %v5284, 2
      %v5308 = vsel %vm625, %v5306, %v5307
      %v5313 = vmax.f32 %v5299, %v5305
      %v5314 = vmax.f32 %v5300, %v5304
      %v5315 = vmax.f32 %v5301, %v5308
      %v5316 = vmax.f32 %v5302, %v5307
      %v5317 = vrot.slane %v5281, 3
      %v5318 = vrot.slane %v5282, 3
      %v5319 = vsel %vm2298, %v5317, %v5318
      %v5320 = vrot.slane %v5283, 3
      %v5321 = vrot.slane %v5284, 3
      %v5322 = vsel %vm2298, %v5320, %v5321
      %v5327 = vmax.f32 %v5313, %v5319
      %v5328 = vmax.f32 %v5314, %v5318
      %v5329 = vmax.f32 %v5315, %v5322
      %v5330 = vmax.f32 %v5316, %v5321
      %v5331 = vsel %vm2298, %v5328, 0.0
      %v5332 = vsel %vm2298, %v5330, 0.0
      %vm5333 = vcmask 105472
      %v5335 = vsel %vm5333, %v5327, 0
      %v5338 = vsel %vm5333, %v5331, 0
      %v5341 = vsel %vm5333, %v5329, 0
      %v5344 = vsel %vm5333, %v5332, 0
      %v5347 = vsel %vm2298, %v5230, 0
      %5349 = vmatprep.subr.mxu0 0.0
      %v5350 = vand.u32 %v5229, 4294901760
      %5351 = vmatpush1.msra.mxu0 %v5350
      %5352 = vmatprep.subr.mxu0 0.0
      %v5353 = vand.u32 %v5347, 4294901760
      %5354 = vmatpush1.msra.mxu0 %v5353
      %5355 = vmatprep.subr.mxu0 0.0
      %5356 = vmatpush1.msra.mxu0 0.0
      %5357 = vmatprep.subr.mxu0 0.0
      %5358 = vmatpush1.msra.mxu0 0.0
      %5359 = vmatprep.subr.mxu0 0.0
      %5360 = vmatpush1.msra.mxu0 0.0
      %5361 = vmatprep.subr.mxu0 0.0
      %5362 = vmatpush1.msra.mxu0 0.0
      %5363 = vmatprep.subr.mxu0 0.0
      %5364 = vmatpush1.msra.mxu0 0.0
      %5365 = vmatprep.subr.mxu0 0.0
      %5366 = vmatpush1.msra.mxu0 0.0
      %5367 = vmatprep.subr.mxu0 0.0
      %5368 = vmatpush1.msra.mxu0 0.0
      %5369 = vmatprep.subr.mxu0 0.0
      %5370 = vmatpush1.msra.mxu0 0.0
      %5371 = vmatprep.subr.mxu0 0.0
      %5372 = vmatpush1.msra.mxu0 0.0
      %5373 = vmatprep.subr.mxu0 0.0
      %5374 = vmatpush1.msra.mxu0 0.0
      %5375 = vmatprep.subr.mxu0 0.0
      %5376 = vmatpush1.msra.mxu0 0.0
      %5377 = vmatprep.subr.mxu0 0.0
      %5378 = vmatpush1.msra.mxu0 0.0
      %5379 = vmatprep.subr.mxu0 0.0
      %5380 = vmatpush1.msra.mxu0 0.0
      %5381 = vmatprep.subr.mxu0 0.0
      %5382 = vmatpush1.msra.mxu0 0.0
      %5383 = vmatprep.subr.mxu0 0.0
      %5384 = vmatpush1.msra.mxu0 0.0
      %5385 = vmatprep.subr.mxu0 0.0
      %5386 = vmatpush1.msra.mxu0 0.0
      %5387 = vmatprep.subr.mxu0 0.0
      %5388 = vmatpush1.msra.mxu0 0.0
      %5389 = vmatprep.subr.mxu0 0.0
      %5390 = vmatpush1.msra.mxu0 0.0
      %5391 = vmatprep.subr.mxu0 0.0
      %5392 = vmatpush1.msra.mxu0 0.0
      %5393 = vmatprep.subr.mxu0 0.0
      %5394 = vmatpush1.msra.mxu0 0.0
      %5395 = vmatprep.subr.mxu0 0.0
      %5396 = vmatpush1.msra.mxu0 0.0
      %5397 = vmatprep.subr.mxu0 0.0
      %5398 = vmatpush1.msra.mxu0 0.0
      %5399 = vmatprep.subr.mxu0 0.0
      %5400 = vmatpush1.msra.mxu0 0.0
      %5401 = vmatprep.subr.mxu0 0.0
      %5402 = vmatpush1.msra.mxu0 0.0
      %5403 = vmatprep.subr.mxu0 0.0
      %5404 = vmatpush1.msra.mxu0 0.0
      %5405 = vmatprep.subr.mxu0 0.0
      %5406 = vmatpush1.msra.mxu0 0.0
      %5407 = vmatprep.subr.mxu0 0.0
      %5408 = vmatpush1.msra.mxu0 0.0
      %5409 = vmatprep.subr.mxu0 0.0
      %5410 = vmatpush1.msra.mxu0 0.0
      %5411 = vmatprep.subr.mxu0 0.0
      %5412 = vmatpush1.msra.mxu0 0.0
      %5413 = vmatprep.subr.mxu0 0.0
      %5414 = vmatpush1.msra.mxu0 0.0
      %5415 = vmatprep.mubr.f32.mxu0 0.0
      %v5416 = vand.u32 %v5335, 4294901760
      %v5417 = vsub.f32 %v5335, %v5416
      %v5418 = vand.u32 %v5417, 4294901760
      %v5419 = vsub.f32 %v5417, %v5418
      %v5420 = vand.u32 %v5419, 4294901760
      %5421 = vmatmul.mubr.f32.gmra.mrb[0].mxu0 %v5420
      %v5422 = vpop.f32.mrb[0].mxu0
      %v5423 = vadd.f32 0.0, %v5422
      %v5424 = vpop.f32.mrb[0].mxu0
      %5425 = vmatprep.mubr.f32.mxu0 0.0
      %v5426 = vand.u32 %v5338, 4294901760
      %v5427 = vsub.f32 %v5338, %v5426
      %v5428 = vand.u32 %v5427, 4294901760
      %v5429 = vsub.f32 %v5427, %v5428
      %v5430 = vand.u32 %v5429, 4294901760
      %5431 = vmatmul.mubr.f32.gmra.mrb[0].mxu0 %v5430
      %v5432 = vpop.f32.mrb[0].mxu0
      %v5433 = vadd.f32 0.0, %v5432
      %v5434 = vpop.f32.mrb[0].mxu0
      %5435 = vmatprep.mubr.f32.mxu0 0.0
      %v5436 = vand.u32 %v5341, 4294901760
      %v5437 = vsub.f32 %v5341, %v5436
      %v5438 = vand.u32 %v5437, 4294901760
      %v5439 = vsub.f32 %v5437, %v5438
      %v5440 = vand.u32 %v5439, 4294901760
      %5441 = vmatmul.mubr.f32.gmra.mrb[0].mxu0 %v5440
      %v5442 = vpop.f32.mrb[0].mxu0
      %v5443 = vadd.f32 0.0, %v5442
      %v5444 = vpop.f32.mrb[0].mxu0
      %5445 = vmatprep.mubr.f32.mxu0 0.0
      %v5446 = vand.u32 %v5344, 4294901760
      %v5447 = vsub.f32 %v5344, %v5446
      %v5448 = vand.u32 %v5447, 4294901760
      %v5449 = vsub.f32 %v5447, %v5448
      %v5450 = vand.u32 %v5449, 4294901760
      %5451 = vmatmul.mubr.f32.gmra.mrb[0].mxu0 %v5450
      %v5452 = vpop.f32.mrb[0].mxu0
      %v5453 = vadd.f32 0.0, %v5452
      %v5454 = vpop.f32.mrb[0].mxu0
      %5455 = vdwg.mxu0
      %5456 = vmatprep.subr.mxu0 0.0
      %v5457 = vand.u32 %v5229, 4294901760
      %v5458 = vsub.f32 %v5229, %v5457
      %v5459 = vand.u32 %v5458, 4294901760
      %v5460 = vsub.f32 %v5458, %v5459
      %v5461 = vand.u32 %v5460, 4294901760
      %5462 = vmatpush1.msra.mxu0 %v5461
      %5463 = vmatprep.subr.mxu0 0.0
      %v5464 = vand.u32 %v5347, 4294901760
      %v5465 = vsub.f32 %v5347, %v5464
      %v5466 = vand.u32 %v5465, 4294901760
      %v5467 = vsub.f32 %v5465, %v5466
      %v5468 = vand.u32 %v5467, 4294901760
      %5469 = vmatpush1.msra.mxu0 %v5468
      %5470 = vmatprep.subr.mxu0 0.0
      %5471 = vmatpush1.msra.mxu0 0.0
      %5472 = vmatprep.subr.mxu0 0.0
      %5473 = vmatpush1.msra.mxu0 0.0
      %5474 = vmatprep.subr.mxu0 0.0
      %5475 = vmatpush1.msra.mxu0 0.0
      %5476 = vmatprep.subr.mxu0 0.0
      %5477 = vmatpush1.msra.mxu0 0.0
      %5478 = vmatprep.subr.mxu0 0.0
      %5479 = vmatpush1.msra.mxu0 0.0
      %5480 = vmatprep.subr.mxu0 0.0
      %5481 = vmatpush1.msra.mxu0 0.0
      %5482 = vmatprep.subr.mxu0 0.0
      %5483 = vmatpush1.msra.mxu0 0.0
      %5484 = vmatprep.subr.mxu0 0.0
      %5485 = vmatpush1.msra.mxu0 0.0
      %5486 = vmatprep.subr.mxu0 0.0
      %5487 = vmatpush1.msra.mxu0 0.0
      %5488 = vmatprep.subr.mxu0 0.0
      %5489 = vmatpush1.msra.mxu0 0.0
      %5490 = vmatprep.subr.mxu0 0.0
      %5491 = vmatpush1.msra.mxu0 0.0
      %5492 = vmatprep.subr.mxu0 0.0
      %5493 = vmatpush1.msra.mxu0 0.0
      %5494 = vmatprep.subr.mxu0 0.0
      %5495 = vmatpush1.msra.mxu0 0.0
      %5496 = vmatprep.subr.mxu0 0.0
      %5497 = vmatpush1.msra.mxu0 0.0
      %5498 = vmatprep.subr.mxu0 0.0
      %5499 = vmatpush1.msra.mxu0 0.0
      %5500 = vmatprep.subr.mxu0 0.0
      %5501 = vmatpush1.msra.mxu0 0.0
      %5502 = vmatprep.subr.mxu0 0.0
      %5503 = vmatpush1.msra.mxu0 0.0
      %5504 = vmatprep.subr.mxu0 0.0
      %5505 = vmatpush1.msra.mxu0 0.0
      %5506 = vmatprep.subr.mxu0 0.0
      %5507 = vmatpush1.msra.mxu0 0.0
      %5508 = vmatprep.subr.mxu0 0.0
      %5509 = vmatpush1.msra.mxu0 0.0
      %5510 = vmatprep.subr.mxu0 0.0
      %5511 = vmatpush1.msra.mxu0 0.0
      %5512 = vmatprep.subr.mxu0 0.0
      %5513 = vmatpush1.msra.mxu0 0.0
      %5514 = vmatprep.subr.mxu0 0.0
      %5515 = vmatpush1.msra.mxu0 0.0
      %5516 = vmatprep.subr.mxu0 0.0
      %5517 = vmatpush1.msra.mxu0 0.0
      %5518 = vmatprep.subr.mxu0 0.0
      %5519 = vmatpush1.msra.mxu0 0.0
      %5520 = vmatprep.subr.mxu0 0.0
      %5521 = vmatpush1.msra.mxu0 0.0
      %5522 = vmatprep.subr.mxu0 0.0
      %5523 = vmatpush1.msra.mxu0 0.0
      %5524 = vmatprep.subr.mxu0 0.0
      %5525 = vmatpush1.msra.mxu0 0.0
      %5526 = vmatprep.subr.mxu0 0.0
      %5527 = vmatpush1.msra.mxu0 0.0
      %5528 = vmatprep.subr.mxu0 0.0
      %5529 = vmatpush1.msra.mxu0 0.0
      %5530 = vmatprep.mubr.f32.mxu0 0.0
      %v5531 = vand.u32 %v5335, 4294901760
      %5532 = vmatmul.mubr.f32.gmra.mrb[0].mxu0 %v5531
      %v5533 = vpop.f32.mrb[0].mxu0
      %v5534 = vadd.f32 %v5423, %v5533
      %v5535 = vpop.f32.mrb[0].mxu0
      %5536 = vmatprep.mubr.f32.mxu0 0.0
      %v5537 = vand.u32 %v5338, 4294901760
      %5538 = vmatmul.mubr.f32.gmra.mrb[0].mxu0 %v5537
      %v5539 = vpop.f32.mrb[0].mxu0
      %v5540 = vadd.f32 %v5433, %v5539
      %v5541 = vpop.f32.mrb[0].mxu0
      %5542 = vmatprep.mubr.f32.mxu0 0.0
      %v5543 = vand.u32 %v5341, 4294901760
      %5544 = vmatmul.mubr.f32.gmra.mrb[0].mxu0 %v5543
      %v5545 = vpop.f32.mrb[0].mxu0
      %v5546 = vadd.f32 %v5443, %v5545
      %v5547 = vpop.f32.mrb[0].mxu0
      %5548 = vmatprep.mubr.f32.mxu0 0.0
      %v5549 = vand.u32 %v5344, 4294901760
      %5550 = vmatmul.mubr.f32.gmra.mrb[0].mxu0 %v5549
      %v5551 = vpop.f32.mrb[0].mxu0
      %v5552 = vadd.f32 %v5453, %v5551
      %v5553 = vpop.f32.mrb[0].mxu0
      %5554 = vdwg.mxu0
      %5555 = vmatprep.subr.mxu0 0.0
      %v5556 = vand.u32 %v5229, 4294901760
      %v5557 = vsub.f32 %v5229, %v5556
      %5558 = vmatpush1.msra.mxu0 %v5557
      %5559 = vmatprep.subr.mxu0 0.0
      %v5560 = vand.u32 %v5347, 4294901760
      %v5561 = vsub.f32 %v5347, %v5560
      %5562 = vmatpush1.msra.mxu0 %v5561
      %5563 = vmatprep.subr.mxu0 0.0
      %5564 = vmatpush1.msra.mxu0 0.0
      %5565 = vmatprep.subr.mxu0 0.0
      %5566 = vmatpush1.msra.mxu0 0.0
      %5567 = vmatprep.subr.mxu0 0.0
      %5568 = vmatpush1.msra.mxu0 0.0
      %5569 = vmatprep.subr.mxu0 0.0
      %5570 = vmatpush1.msra.mxu0 0.0
      %5571 = vmatprep.subr.mxu0 0.0
      %5572 = vmatpush1.msra.mxu0 0.0
      %5573 = vmatprep.subr.mxu0 0.0
      %5574 = vmatpush1.msra.mxu0 0.0
      %5575 = vmatprep.subr.mxu0 0.0
      %5576 = vmatpush1.msra.mxu0 0.0
      %5577 = vmatprep.subr.mxu0 0.0
      %5578 = vmatpush1.msra.mxu0 0.0
      %5579 = vmatprep.subr.mxu0 0.0
      %5580 = vmatpush1.msra.mxu0 0.0
      %5581 = vmatprep.subr.mxu0 0.0
      %5582 = vmatpush1.msra.mxu0 0.0
      %5583 = vmatprep.subr.mxu0 0.0
      %5584 = vmatpush1.msra.mxu0 0.0
      %5585 = vmatprep.subr.mxu0 0.0
      %5586 = vmatpush1.msra.mxu0 0.0
      %5587 = vmatprep.subr.mxu0 0.0
      %5588 = vmatpush1.msra.mxu0 0.0
      %5589 = vmatprep.subr.mxu0 0.0
      %5590 = vmatpush1.msra.mxu0 0.0
      %5591 = vmatprep.subr.mxu0 0.0
      %5592 = vmatpush1.msra.mxu0 0.0
      %5593 = vmatprep.subr.mxu0 0.0
      %5594 = vmatpush1.msra.mxu0 0.0
      %5595 = vmatprep.subr.mxu0 0.0
      %5596 = vmatpush1.msra.mxu0 0.0
      %5597 = vmatprep.subr.mxu0 0.0
      %5598 = vmatpush1.msra.mxu0 0.0
      %5599 = vmatprep.subr.mxu0 0.0
      %5600 = vmatpush1.msra.mxu0 0.0
      %5601 = vmatprep.subr.mxu0 0.0
      %5602 = vmatpush1.msra.mxu0 0.0
      %5603 = vmatprep.subr.mxu0 0.0
      %5604 = vmatpush1.msra.mxu0 0.0
      %5605 = vmatprep.subr.mxu0 0.0
      %5606 = vmatpush1.msra.mxu0 0.0
      %5607 = vmatprep.subr.mxu0 0.0
      %5608 = vmatpush1.msra.mxu0 0.0
      %5609 = vmatprep.subr.mxu0 0.0
      %5610 = vmatpush1.msra.mxu0 0.0
      %5611 = vmatprep.subr.mxu0 0.0
      %5612 = vmatpush1.msra.mxu0 0.0
      %5613 = vmatprep.subr.mxu0 0.0
      %5614 = vmatpush1.msra.mxu0 0.0
      %5615 = vmatprep.subr.mxu0 0.0
      %5616 = vmatpush1.msra.mxu0 0.0
      %5617 = vmatprep.subr.mxu0 0.0
      %5618 = vmatpush1.msra.mxu0 0.0
      %5619 = vmatprep.subr.mxu0 0.0
      %5620 = vmatpush1.msra.mxu0 0.0
      %5621 = vmatprep.subr.mxu0 0.0
      %5622 = vmatpush1.msra.mxu0 0.0
      %5623 = vmatprep.mubr.f32.mxu0 0.0
      %v5624 = vand.u32 %v5335, 4294901760
      %v5625 = vsub.f32 %v5335, %v5624
      %5626 = vmatmul.mubr.f32.gmra.mrb[0].mxu0 %v5625
      %v5627 = vpop.f32.mrb[0].mxu0
      %v5628 = vadd.f32 %v5534, %v5627
      %v5629 = vpop.f32.mrb[0].mxu0
      %5630 = vmatprep.mubr.f32.mxu0 0.0
      %v5631 = vand.u32 %v5338, 4294901760
      %v5632 = vsub.f32 %v5338, %v5631
      %5633 = vmatmul.mubr.f32.gmra.mrb[0].mxu0 %v5632
      %v5634 = vpop.f32.mrb[0].mxu0
      %v5635 = vadd.f32 %v5540, %v5634
      %v5636 = vpop.f32.mrb[0].mxu0
      %5637 = vmatprep.mubr.f32.mxu0 0.0
      %v5638 = vand.u32 %v5341, 4294901760
      %v5639 = vsub.f32 %v5341, %v5638
      %5640 = vmatmul.mubr.f32.gmra.mrb[0].mxu0 %v5639
      %v5641 = vpop.f32.mrb[0].mxu0
      %v5642 = vadd.f32 %v5546, %v5641
      %v5643 = vpop.f32.mrb[0].mxu0
      %5644 = vmatprep.mubr.f32.mxu0 0.0
      %v5645 = vand.u32 %v5344, 4294901760
      %v5646 = vsub.f32 %v5344, %v5645
      %5647 = vmatmul.mubr.f32.gmra.mrb[0].mxu0 %v5646
      %v5648 = vpop.f32.mrb[0].mxu0
      %v5649 = vadd.f32 %v5552, %v5648
      %v5650 = vpop.f32.mrb[0].mxu0
      %5651 = vdwg.mxu0
      %5652 = vmatprep.subr.mxu0 0.0
      %v5653 = vand.u32 %v5229, 4294901760
      %5654 = vmatpush1.msra.mxu0 %v5653
      %5655 = vmatprep.subr.mxu0 0.0
      %v5656 = vand.u32 %v5347, 4294901760
      %5657 = vmatpush1.msra.mxu0 %v5656
      %5658 = vmatprep.subr.mxu0 0.0
      %5659 = vmatpush1.msra.mxu0 0.0
      %5660 = vmatprep.subr.mxu0 0.0
      %5661 = vmatpush1.msra.mxu0 0.0
      %5662 = vmatprep.subr.mxu0 0.0
      %5663 = vmatpush1.msra.mxu0 0.0
      %5664 = vmatprep.subr.mxu0 0.0
      %5665 = vmatpush1.msra.mxu0 0.0
      %5666 = vmatprep.subr.mxu0 0.0
      %5667 = vmatpush1.msra.mxu0 0.0
      %5668 = vmatprep.subr.mxu0 0.0
      %5669 = vmatpush1.msra.mxu0 0.0
      %5670 = vmatprep.subr.mxu0 0.0
      %5671 = vmatpush1.msra.mxu0 0.0
      %5672 = vmatprep.subr.mxu0 0.0
      %5673 = vmatpush1.msra.mxu0 0.0
      %5674 = vmatprep.subr.mxu0 0.0
      %5675 = vmatpush1.msra.mxu0 0.0
      %5676 = vmatprep.subr.mxu0 0.0
      %5677 = vmatpush1.msra.mxu0 0.0
      %5678 = vmatprep.subr.mxu0 0.0
      %5679 = vmatpush1.msra.mxu0 0.0
      %5680 = vmatprep.subr.mxu0 0.0
      %5681 = vmatpush1.msra.mxu0 0.0
      %5682 = vmatprep.subr.mxu0 0.0
      %5683 = vmatpush1.msra.mxu0 0.0
      %5684 = vmatprep.subr.mxu0 0.0
      %5685 = vmatpush1.msra.mxu0 0.0
      %5686 = vmatprep.subr.mxu0 0.0
      %5687 = vmatpush1.msra.mxu0 0.0
      %5688 = vmatprep.subr.mxu0 0.0
      %5689 = vmatpush1.msra.mxu0 0.0
      %5690 = vmatprep.subr.mxu0 0.0
      %5691 = vmatpush1.msra.mxu0 0.0
      %5692 = vmatprep.subr.mxu0 0.0
      %5693 = vmatpush1.msra.mxu0 0.0
      %5694 = vmatprep.subr.mxu0 0.0
      %5695 = vmatpush1.msra.mxu0 0.0
      %5696 = vmatprep.subr.mxu0 0.0
      %5697 = vmatpush1.msra.mxu0 0.0
      %5698 = vmatprep.subr.mxu0 0.0
      %5699 = vmatpush1.msra.mxu0 0.0
      %5700 = vmatprep.subr.mxu0 0.0
      %5701 = vmatpush1.msra.mxu0 0.0
      %5702 = vmatprep.subr.mxu0 0.0
      %5703 = vmatpush1.msra.mxu0 0.0
      %5704 = vmatprep.subr.mxu0 0.0
      %5705 = vmatpush1.msra.mxu0 0.0
      %5706 = vmatprep.subr.mxu0 0.0
      %5707 = vmatpush1.msra.mxu0 0.0
      %5708 = vmatprep.subr.mxu0 0.0
      %5709 = vmatpush1.msra.mxu0 0.0
      %5710 = vmatprep.subr.mxu0 0.0
      %5711 = vmatpush1.msra.mxu0 0.0
      %5712 = vmatprep.subr.mxu0 0.0
      %5713 = vmatpush1.msra.mxu0 0.0
      %5714 = vmatprep.subr.mxu0 0.0
      %5715 = vmatpush1.msra.mxu0 0.0
      %5716 = vmatprep.subr.mxu0 0.0
      %5717 = vmatpush1.msra.mxu0 0.0
      %5718 = vmatprep.mubr.f32.mxu0 0.0
      %v5719 = vand.u32 %v5335, 4294901760
      %v5720 = vsub.f32 %v5335, %v5719
      %v5721 = vand.u32 %v5720, 4294901760
      %5722 = vmatmul.mubr.f32.gmra.mrb[0].mxu0 %v5721
      %v5723 = vpop.f32.mrb[0].mxu0
      %v5724 = vadd.f32 %v5628, %v5723
      %v5725 = vpop.f32.mrb[0].mxu0
      %5726 = vmatprep.mubr.f32.mxu0 0.0
      %v5727 = vand.u32 %v5338, 4294901760
      %v5728 = vsub.f32 %v5338, %v5727
      %v5729 = vand.u32 %v5728, 4294901760
      %5730 = vmatmul.mubr.f32.gmra.mrb[0].mxu0 %v5729
      %v5731 = vpop.f32.mrb[0].mxu0
      %v5732 = vadd.f32 %v5635, %v5731
      %v5733 = vpop.f32.mrb[0].mxu0
      %5734 = vmatprep.mubr.f32.mxu0 0.0
      %v5735 = vand.u32 %v5341, 4294901760
      %v5736 = vsub.f32 %v5341, %v5735
      %v5737 = vand.u32 %v5736, 4294901760
      %5738 = vmatmul.mubr.f32.gmra.mrb[0].mxu0 %v5737
      %v5739 = vpop.f32.mrb[0].mxu0
      %v5740 = vadd.f32 %v5642, %v5739
      %v5741 = vpop.f32.mrb[0].mxu0
      %5742 = vmatprep.mubr.f32.mxu0 0.0
      %v5743 = vand.u32 %v5344, 4294901760
      %v5744 = vsub.f32 %v5344, %v5743
      %v5745 = vand.u32 %v5744, 4294901760
      %5746 = vmatmul.mubr.f32.gmra.mrb[0].mxu0 %v5745
      %v5747 = vpop.f32.mrb[0].mxu0
      %v5748 = vadd.f32 %v5649, %v5747
      %v5749 = vpop.f32.mrb[0].mxu0
      %5750 = vdwg.mxu0
      %5751 = vmatprep.subr.mxu0 0.0
      %v5752 = vand.u32 %v5229, 4294901760
      %v5753 = vsub.f32 %v5229, %v5752
      %v5754 = vand.u32 %v5753, 4294901760
      %5755 = vmatpush1.msra.mxu0 %v5754
      %5756 = vmatprep.subr.mxu0 0.0
      %v5757 = vand.u32 %v5347, 4294901760
      %v5758 = vsub.f32 %v5347, %v5757
      %v5759 = vand.u32 %v5758, 4294901760
      %5760 = vmatpush1.msra.mxu0 %v5759
      %5761 = vmatprep.subr.mxu0 0.0
      %5762 = vmatpush1.msra.mxu0 0.0
      %5763 = vmatprep.subr.mxu0 0.0
      %5764 = vmatpush1.msra.mxu0 0.0
      %5765 = vmatprep.subr.mxu0 0.0
      %5766 = vmatpush1.msra.mxu0 0.0
      %5767 = vmatprep.subr.mxu0 0.0
      %5768 = vmatpush1.msra.mxu0 0.0
      %5769 = vmatprep.subr.mxu0 0.0
      %5770 = vmatpush1.msra.mxu0 0.0
      %5771 = vmatprep.subr.mxu0 0.0
      %5772 = vmatpush1.msra.mxu0 0.0
      %5773 = vmatprep.subr.mxu0 0.0
      %5774 = vmatpush1.msra.mxu0 0.0
      %5775 = vmatprep.subr.mxu0 0.0
      %5776 = vmatpush1.msra.mxu0 0.0
      %5777 = vmatprep.subr.mxu0 0.0
      %5778 = vmatpush1.msra.mxu0 0.0
      %5779 = vmatprep.subr.mxu0 0.0
      %5780 = vmatpush1.msra.mxu0 0.0
      %5781 = vmatprep.subr.mxu0 0.0
      %5782 = vmatpush1.msra.mxu0 0.0
      %5783 = vmatprep.subr.mxu0 0.0
      %5784 = vmatpush1.msra.mxu0 0.0
      %5785 = vmatprep.subr.mxu0 0.0
      %5786 = vmatpush1.msra.mxu0 0.0
      %5787 = vmatprep.subr.mxu0 0.0
      %5788 = vmatpush1.msra.mxu0 0.0
      %5789 = vmatprep.subr.mxu0 0.0
      %5790 = vmatpush1.msra.mxu0 0.0
      %5791 = vmatprep.subr.mxu0 0.0
      %5792 = vmatpush1.msra.mxu0 0.0
      %5793 = vmatprep.subr.mxu0 0.0
      %5794 = vmatpush1.msra.mxu0 0.0
      %5795 = vmatprep.subr.mxu0 0.0
      %5796 = vmatpush1.msra.mxu0 0.0
      %5797 = vmatprep.subr.mxu0 0.0
      %5798 = vmatpush1.msra.mxu0 0.0
      %5799 = vmatprep.subr.mxu0 0.0
      %5800 = vmatpush1.msra.mxu0 0.0
      %5801 = vmatprep.subr.mxu0 0.0
      %5802 = vmatpush1.msra.mxu0 0.0
      %5803 = vmatprep.subr.mxu0 0.0
      %5804 = vmatpush1.msra.mxu0 0.0
      %5805 = vmatprep.subr.mxu0 0.0
      %5806 = vmatpush1.msra.mxu0 0.0
      %5807 = vmatprep.subr.mxu0 0.0
      %5808 = vmatpush1.msra.mxu0 0.0
      %5809 = vmatprep.subr.mxu0 0.0
      %5810 = vmatpush1.msra.mxu0 0.0
      %5811 = vmatprep.subr.mxu0 0.0
      %5812 = vmatpush1.msra.mxu0 0.0
      %5813 = vmatprep.subr.mxu0 0.0
      %5814 = vmatpush1.msra.mxu0 0.0
      %5815 = vmatprep.subr.mxu0 0.0
      %5816 = vmatpush1.msra.mxu0 0.0
      %5817 = vmatprep.subr.mxu0 0.0
      %5818 = vmatpush1.msra.mxu0 0.0
      %5819 = vmatprep.subr.mxu0 0.0
      %5820 = vmatpush1.msra.mxu0 0.0
      %5821 = vmatprep.mubr.f32.mxu0 0.0
      %v5822 = vand.u32 %v5335, 4294901760
      %5823 = vmatmul.mubr.f32.gmra.mrb[0].mxu0 %v5822
      %v5824 = vpop.f32.mrb[0].mxu0
      %v5825 = vadd.f32 %v5724, %v5824
      %v5826 = vpop.f32.mrb[0].mxu0
      %5827 = vmatprep.mubr.f32.mxu0 0.0
      %v5828 = vand.u32 %v5338, 4294901760
      %5829 = vmatmul.mubr.f32.gmra.mrb[0].mxu0 %v5828
      %v5830 = vpop.f32.mrb[0].mxu0
      %v5831 = vadd.f32 %v5732, %v5830
      %v5832 = vpop.f32.mrb[0].mxu0
      %5833 = vmatprep.mubr.f32.mxu0 0.0
      %v5834 = vand.u32 %v5341, 4294901760
      %5835 = vmatmul.mubr.f32.gmra.mrb[0].mxu0 %v5834
      %v5836 = vpop.f32.mrb[0].mxu0
      %v5837 = vadd.f32 %v5740, %v5836
      %v5838 = vpop.f32.mrb[0].mxu0
      %5839 = vmatprep.mubr.f32.mxu0 0.0
      %v5840 = vand.u32 %v5344, 4294901760
      %5841 = vmatmul.mubr.f32.gmra.mrb[0].mxu0 %v5840
      %v5842 = vpop.f32.mrb[0].mxu0
      %v5843 = vadd.f32 %v5748, %v5842
      %v5844 = vpop.f32.mrb[0].mxu0
      %5845 = vdwg.mxu0
      %5846 = vmatprep.subr.mxu0 0.0
      %v5847 = vand.u32 %v5229, 4294901760
      %5848 = vmatpush1.msra.mxu0 %v5847
      %5849 = vmatprep.subr.mxu0 0.0
      %v5850 = vand.u32 %v5347, 4294901760
      %5851 = vmatpush1.msra.mxu0 %v5850
      %5852 = vmatprep.subr.mxu0 0.0
      %5853 = vmatpush1.msra.mxu0 0.0
      %5854 = vmatprep.subr.mxu0 0.0
      %5855 = vmatpush1.msra.mxu0 0.0
      %5856 = vmatprep.subr.mxu0 0.0
      %5857 = vmatpush1.msra.mxu0 0.0
      %5858 = vmatprep.subr.mxu0 0.0
      %5859 = vmatpush1.msra.mxu0 0.0
      %5860 = vmatprep.subr.mxu0 0.0
      %5861 = vmatpush1.msra.mxu0 0.0
      %5862 = vmatprep.subr.mxu0 0.0
      %5863 = vmatpush1.msra.mxu0 0.0
      %5864 = vmatprep.subr.mxu0 0.0
      %5865 = vmatpush1.msra.mxu0 0.0
      %5866 = vmatprep.subr.mxu0 0.0
      %5867 = vmatpush1.msra.mxu0 0.0
      %5868 = vmatprep.subr.mxu0 0.0
      %5869 = vmatpush1.msra.mxu0 0.0
      %5870 = vmatprep.subr.mxu0 0.0
      %5871 = vmatpush1.msra.mxu0 0.0
      %5872 = vmatprep.subr.mxu0 0.0
      %5873 = vmatpush1.msra.mxu0 0.0
      %5874 = vmatprep.subr.mxu0 0.0
      %5875 = vmatpush1.msra.mxu0 0.0
      %5876 = vmatprep.subr.mxu0 0.0
      %5877 = vmatpush1.msra.mxu0 0.0
      %5878 = vmatprep.subr.mxu0 0.0
      %5879 = vmatpush1.msra.mxu0 0.0
      %5880 = vmatprep.subr.mxu0 0.0
      %5881 = vmatpush1.msra.mxu0 0.0
      %5882 = vmatprep.subr.mxu0 0.0
      %5883 = vmatpush1.msra.mxu0 0.0
      %5884 = vmatprep.subr.mxu0 0.0
      %5885 = vmatpush1.msra.mxu0 0.0
      %5886 = vmatprep.subr.mxu0 0.0
      %5887 = vmatpush1.msra.mxu0 0.0
      %5888 = vmatprep.subr.mxu0 0.0
      %5889 = vmatpush1.msra.mxu0 0.0
      %5890 = vmatprep.subr.mxu0 0.0
      %5891 = vmatpush1.msra.mxu0 0.0
      %5892 = vmatprep.subr.mxu0 0.0
      %5893 = vmatpush1.msra.mxu0 0.0
      %5894 = vmatprep.subr.mxu0 0.0
      %5895 = vmatpush1.msra.mxu0 0.0
      %5896 = vmatprep.subr.mxu0 0.0
      %5897 = vmatpush1.msra.mxu0 0.0
      %5898 = vmatprep.subr.mxu0 0.0
      %5899 = vmatpush1.msra.mxu0 0.0
      %5900 = vmatprep.subr.mxu0 0.0
      %5901 = vmatpush1.msra.mxu0 0.0
      %5902 = vmatprep.subr.mxu0 0.0
      %5903 = vmatpush1.msra.mxu0 0.0
      %5904 = vmatprep.subr.mxu0 0.0
      %5905 = vmatpush1.msra.mxu0 0.0
      %5906 = vmatprep.subr.mxu0 0.0
      %5907 = vmatpush1.msra.mxu0 0.0
      %5908 = vmatprep.subr.mxu0 0.0
      %5909 = vmatpush1.msra.mxu0 0.0
      %5910 = vmatprep.subr.mxu0 0.0
      %5911 = vmatpush1.msra.mxu0 0.0
      %5912 = vmatprep.mubr.f32.mxu0 0.0
      %v5913 = vand.u32 %v5335, 4294901760
      %5914 = vmatmul.mubr.f32.gmra.mrb[0].mxu0 %v5913
      %v5915 = vpop.f32.mrb[0].mxu0
      %v5916 = vadd.f32 %v5825, %v5915
      %v5917 = vpop.f32.mrb[0].mxu0
      %5918 = vmatprep.mubr.f32.mxu0 0.0
      %v5919 = vand.u32 %v5338, 4294901760
      %5920 = vmatmul.mubr.f32.gmra.mrb[0].mxu0 %v5919
      %v5921 = vpop.f32.mrb[0].mxu0
      %v5922 = vadd.f32 %v5831, %v5921
      %v5923 = vpop.f32.mrb[0].mxu0
      %5924 = vmatprep.mubr.f32.mxu0 0.0
      %v5925 = vand.u32 %v5341, 4294901760
      %5926 = vmatmul.mubr.f32.gmra.mrb[0].mxu0 %v5925
      %v5927 = vpop.f32.mrb[0].mxu0
      %v5928 = vadd.f32 %v5837, %v5927
      %v5929 = vpop.f32.mrb[0].mxu0
      %5930 = vmatprep.mubr.f32.mxu0 0.0
      %v5931 = vand.u32 %v5344, 4294901760
      %5932 = vmatmul.mubr.f32.gmra.mrb[0].mxu0 %v5931
      %v5933 = vpop.f32.mrb[0].mxu0
      %v5934 = vadd.f32 %v5843, %v5933
      %v5935 = vpop.f32.mrb[0].mxu0
      %5936 = vdwg.mxu0
      %5937 = vxpose.xlu0.b32.start [1/16] %v5916, 128
      %5938 = vxpose.xlu0.b32.cont [2/16] %v5922, 128
      %5939 = vxpose.xlu0.b32.cont [3/16] 0.0, 128
      %5940 = vxpose.xlu0.b32.cont [4/16] 0.0, 128
      %5941 = vxpose.xlu0.b32.cont [5/16] 0.0, 128
      %5942 = vxpose.xlu0.b32.cont [6/16] 0.0, 128
      %5943 = vxpose.xlu0.b32.cont [7/16] 0.0, 128
      %5944 = vxpose.xlu0.b32.cont [8/16] 0.0, 128
      %5945 = vxpose.xlu0.b32.cont [9/16] 0.0, 128
      %5946 = vxpose.xlu0.b32.cont [10/16] 0.0, 128
      %5947 = vxpose.xlu0.b32.cont [11/16] 0.0, 128
      %5948 = vxpose.xlu0.b32.cont [12/16] 0.0, 128
      %5949 = vxpose.xlu0.b32.cont [13/16] 0.0, 128
      %5950 = vxpose.xlu0.b32.cont [14/16] 0.0, 128
      %5951 = vxpose.xlu0.b32.cont [15/16] 0.0, 128
      %5952 = vxpose.xlu0.b32.end [16/16] 0.0, 128
      %v5953 = vpop.trf.xlu0
      %v5954 = vpop.trf.xlu0
      %v5955 = vpop.trf.xlu0
      %v5956 = vpop.trf.xlu0
      %v5957 = vpop.trf.xlu0
      %v5958 = vpop.trf.xlu0
      %v5959 = vpop.trf.xlu0
      %v5960 = vpop.trf.xlu0
      %v5961 = vpop.trf.xlu0
      %v5962 = vpop.trf.xlu0
      %v5963 = vpop.trf.xlu0
      %v5964 = vpop.trf.xlu0
      %v5965 = vpop.trf.xlu0
      %v5966 = vpop.trf.xlu0
      %v5967 = vpop.trf.xlu0
      %v5968 = vpop.trf.xlu0
      %5969 = vxpose.xlu0.b32.start [1/16] %v5928, 128
      %5970 = vxpose.xlu0.b32.cont [2/16] %v5934, 128
      %5971 = vxpose.xlu0.b32.cont [3/16] 0.0, 128
      %5972 = vxpose.xlu0.b32.cont [4/16] 0.0, 128
      %5973 = vxpose.xlu0.b32.cont [5/16] 0.0, 128
      %5974 = vxpose.xlu0.b32.cont [6/16] 0.0, 128
      %5975 = vxpose.xlu0.b32.cont [7/16] 0.0, 128
      %5976 = vxpose.xlu0.b32.cont [8/16] 0.0, 128
      %5977 = vxpose.xlu0.b32.cont [9/16] 0.0, 128
      %5978 = vxpose.xlu0.b32.cont [10/16] 0.0, 128
      %5979 = vxpose.xlu0.b32.cont [11/16] 0.0, 128
      %5980 = vxpose.xlu0.b32.cont [12/16] 0.0, 128
      %5981 = vxpose.xlu0.b32.cont [13/16] 0.0, 128
      %5982 = vxpose.xlu0.b32.cont [14/16] 0.0, 128
      %5983 = vxpose.xlu0.b32.cont [15/16] 0.0, 128
      %5984 = vxpose.xlu0.b32.end [16/16] 0.0, 128
      %v5985 = vpop.trf.xlu0
      %v5986 = vpop.trf.xlu0
      %v5987 = vpop.trf.xlu0
      %v5988 = vpop.trf.xlu0
      %v5989 = vpop.trf.xlu0
      %v5990 = vpop.trf.xlu0
      %v5991 = vpop.trf.xlu0
      %v5992 = vpop.trf.xlu0
      %v5993 = vpop.trf.xlu0
      %v5994 = vpop.trf.xlu0
      %v5995 = vpop.trf.xlu0
      %v5996 = vpop.trf.xlu0
      %v5997 = vpop.trf.xlu0
      %v5998 = vpop.trf.xlu0
      %v5999 = vpop.trf.xlu0
      %v6000 = vpop.trf.xlu0
      %v6002 = vsel %vm3779, %v5953, 0
      %v6005 = vsel %vm3779, %v5954, 0
      %v6008 = vsel %vm3779, %v5985, 0
      %v6011 = vsel %vm3779, %v5986, 0
      %6013 = vmatprep.subr.mxu0 0.0
      %v6014 = vand.u32 %v5231, 4294901760
      %6015 = vmatpush1.msra.mxu0 %v6014
      %6016 = vmatprep.subr.mxu0 0.0
      %v6017 = vand.u32 %v5232, 4294901760
      %6018 = vmatpush1.msra.mxu0 %v6017
      %6019 = vmatprep.subr.mxu0 0.0
      %6020 = vmatpush1.msra.mxu0 0.0
      %6021 = vmatprep.subr.mxu0 0.0
      %6022 = vmatpush1.msra.mxu0 0.0
      %6023 = vmatprep.subr.mxu0 0.0
      %6024 = vmatpush1.msra.mxu0 0.0
      %6025 = vmatprep.subr.mxu0 0.0
      %6026 = vmatpush1.msra.mxu0 0.0
      %6027 = vmatprep.subr.mxu0 0.0
      %6028 = vmatpush1.msra.mxu0 0.0
      %6029 = vmatprep.subr.mxu0 0.0
      %6030 = vmatpush1.msra.mxu0 0.0
      %6031 = vmatprep.subr.mxu0 0.0
      %6032 = vmatpush1.msra.mxu0 0.0
      %6033 = vmatprep.subr.mxu0 0.0
      %6034 = vmatpush1.msra.mxu0 0.0
      %6035 = vmatprep.subr.mxu0 0.0
      %6036 = vmatpush1.msra.mxu0 0.0
      %6037 = vmatprep.subr.mxu0 0.0
      %6038 = vmatpush1.msra.mxu0 0.0
      %6039 = vmatprep.subr.mxu0 0.0
      %6040 = vmatpush1.msra.mxu0 0.0
      %6041 = vmatprep.subr.mxu0 0.0
      %6042 = vmatpush1.msra.mxu0 0.0
      %6043 = vmatprep.subr.mxu0 0.0
      %6044 = vmatpush1.msra.mxu0 0.0
      %6045 = vmatprep.subr.mxu0 0.0
      %6046 = vmatpush1.msra.mxu0 0.0
      %6047 = vmatprep.subr.mxu0 0.0
      %6048 = vmatpush1.msra.mxu0 0.0
      %6049 = vmatprep.subr.mxu0 0.0
      %6050 = vmatpush1.msra.mxu0 0.0
      %6051 = vmatprep.subr.mxu0 0.0
      %6052 = vmatpush1.msra.mxu0 0.0
      %6053 = vmatprep.subr.mxu0 0.0
      %6054 = vmatpush1.msra.mxu0 0.0
      %6055 = vmatprep.subr.mxu0 0.0
      %6056 = vmatpush1.msra.mxu0 0.0
      %6057 = vmatprep.subr.mxu0 0.0
      %6058 = vmatpush1.msra.mxu0 0.0
      %6059 = vmatprep.subr.mxu0 0.0
      %6060 = vmatpush1.msra.mxu0 0.0
      %6061 = vmatprep.subr.mxu0 0.0
      %6062 = vmatpush1.msra.mxu0 0.0
      %6063 = vmatprep.subr.mxu0 0.0
      %6064 = vmatpush1.msra.mxu0 0.0
      %6065 = vmatprep.subr.mxu0 0.0
      %6066 = vmatpush1.msra.mxu0 0.0
      %6067 = vmatprep.subr.mxu0 0.0
      %6068 = vmatpush1.msra.mxu0 0.0
      %6069 = vmatprep.subr.mxu0 0.0
      %6070 = vmatpush1.msra.mxu0 0.0
      %6071 = vmatprep.subr.mxu0 0.0
      %6072 = vmatpush1.msra.mxu0 0.0
      %6073 = vmatprep.subr.mxu0 0.0
      %6074 = vmatpush1.msra.mxu0 0.0
      %6075 = vmatprep.subr.mxu0 0.0
      %6076 = vmatpush1.msra.mxu0 0.0
      %6077 = vmatprep.subr.mxu0 0.0
      %6078 = vmatpush1.msra.mxu0 0.0
      %6079 = vmatprep.mubr.f32.mxu0 0.0
      %v6080 = vand.u32 %v6002, 4294901760
      %v6081 = vsub.f32 %v6002, %v6080
      %v6082 = vand.u32 %v6081, 4294901760
      %v6083 = vsub.f32 %v6081, %v6082
      %v6084 = vand.u32 %v6083, 4294901760
      %6085 = vmatmul.mubr.f32.gmra.mrb[0].mxu0 %v6084
      %v6086 = vpop.f32.mrb[0].mxu0
      %v6087 = vadd.f32 0.0, %v6086
      %v6088 = vpop.f32.mrb[0].mxu0
      %6089 = vmatprep.mubr.f32.mxu0 0.0
      %v6090 = vand.u32 %v6005, 4294901760
      %v6091 = vsub.f32 %v6005, %v6090
      %v6092 = vand.u32 %v6091, 4294901760
      %v6093 = vsub.f32 %v6091, %v6092
      %v6094 = vand.u32 %v6093, 4294901760
      %6095 = vmatmul.mubr.f32.gmra.mrb[0].mxu0 %v6094
      %v6096 = vpop.f32.mrb[0].mxu0
      %v6097 = vadd.f32 0.0, %v6096
      %v6098 = vpop.f32.mrb[0].mxu0
      %6099 = vmatprep.mubr.f32.mxu0 0.0
      %v6100 = vand.u32 %v6008, 4294901760
      %v6101 = vsub.f32 %v6008, %v6100
      %v6102 = vand.u32 %v6101, 4294901760
      %v6103 = vsub.f32 %v6101, %v6102
      %v6104 = vand.u32 %v6103, 4294901760
      %6105 = vmatmul.mubr.f32.gmra.mrb[0].mxu0 %v6104
      %v6106 = vpop.f32.mrb[0].mxu0
      %v6107 = vadd.f32 0.0, %v6106
      %v6108 = vpop.f32.mrb[0].mxu0
      %6109 = vmatprep.mubr.f32.mxu0 0.0
      %v6110 = vand.u32 %v6011, 4294901760
      %v6111 = vsub.f32 %v6011, %v6110
      %v6112 = vand.u32 %v6111, 4294901760
      %v6113 = vsub.f32 %v6111, %v6112
      %v6114 = vand.u32 %v6113, 4294901760
      %6115 = vmatmul.mubr.f32.gmra.mrb[0].mxu0 %v6114
      %v6116 = vpop.f32.mrb[0].mxu0
      %v6117 = vadd.f32 0.0, %v6116
      %v6118 = vpop.f32.mrb[0].mxu0
      %6119 = vdwg.mxu0
      %6120 = vmatprep.subr.mxu0 0.0
      %v6121 = vand.u32 %v5231, 4294901760
      %v6122 = vsub.f32 %v5231, %v6121
      %v6123 = vand.u32 %v6122, 4294901760
      %v6124 = vsub.f32 %v6122, %v6123
      %v6125 = vand.u32 %v6124, 4294901760
      %6126 = vmatpush1.msra.mxu0 %v6125
      %6127 = vmatprep.subr.mxu0 0.0
      %v6128 = vand.u32 %v5232, 4294901760
      %v6129 = vsub.f32 %v5232, %v6128
      %v6130 = vand.u32 %v6129, 4294901760
      %v6131 = vsub.f32 %v6129, %v6130
      %v6132 = vand.u32 %v6131, 4294901760
      %6133 = vmatpush1.msra.mxu0 %v6132
      %6134 = vmatprep.subr.mxu0 0.0
      %6135 = vmatpush1.msra.mxu0 0.0
      %6136 = vmatprep.subr.mxu0 0.0
      %6137 = vmatpush1.msra.mxu0 0.0
      %6138 = vmatprep.subr.mxu0 0.0
      %6139 = vmatpush1.msra.mxu0 0.0
      %6140 = vmatprep.subr.mxu0 0.0
      %6141 = vmatpush1.msra.mxu0 0.0
      %6142 = vmatprep.subr.mxu0 0.0
      %6143 = vmatpush1.msra.mxu0 0.0
      %6144 = vmatprep.subr.mxu0 0.0
      %6145 = vmatpush1.msra.mxu0 0.0
      %6146 = vmatprep.subr.mxu0 0.0
      %6147 = vmatpush1.msra.mxu0 0.0
      %6148 = vmatprep.subr.mxu0 0.0
      %6149 = vmatpush1.msra.mxu0 0.0
      %6150 = vmatprep.subr.mxu0 0.0
      %6151 = vmatpush1.msra.mxu0 0.0
      %6152 = vmatprep.subr.mxu0 0.0
      %6153 = vmatpush1.msra.mxu0 0.0
      %6154 = vmatprep.subr.mxu0 0.0
      %6155 = vmatpush1.msra.mxu0 0.0
      %6156 = vmatprep.subr.mxu0 0.0
      %6157 = vmatpush1.msra.mxu0 0.0
      %6158 = vmatprep.subr.mxu0 0.0
      %6159 = vmatpush1.msra.mxu0 0.0
      %6160 = vmatprep.subr.mxu0 0.0
      %6161 = vmatpush1.msra.mxu0 0.0
      %6162 = vmatprep.subr.mxu0 0.0
      %6163 = vmatpush1.msra.mxu0 0.0
      %6164 = vmatprep.subr.mxu0 0.0
      %6165 = vmatpush1.msra.mxu0 0.0
      %6166 = vmatprep.subr.mxu0 0.0
      %6167 = vmatpush1.msra.mxu0 0.0
      %6168 = vmatprep.subr.mxu0 0.0
      %6169 = vmatpush1.msra.mxu0 0.0
      %6170 = vmatprep.subr.mxu0 0.0
      %6171 = vmatpush1.msra.mxu0 0.0
      %6172 = vmatprep.subr.mxu0 0.0
      %6173 = vmatpush1.msra.mxu0 0.0
      %6174 = vmatprep.subr.mxu0 0.0
      %6175 = vmatpush1.msra.mxu0 0.0
      %6176 = vmatprep.subr.mxu0 0.0
      %6177 = vmatpush1.msra.mxu0 0.0
      %6178 = vmatprep.subr.mxu0 0.0
      %6179 = vmatpush1.msra.mxu0 0.0
      %6180 = vmatprep.subr.mxu0 0.0
      %6181 = vmatpush1.msra.mxu0 0.0
      %6182 = vmatprep.subr.mxu0 0.0
      %6183 = vmatpush1.msra.mxu0 0.0
      %6184 = vmatprep.subr.mxu0 0.0
      %6185 = vmatpush1.msra.mxu0 0.0
      %6186 = vmatprep.subr.mxu0 0.0
      %6187 = vmatpush1.msra.mxu0 0.0
      %6188 = vmatprep.subr.mxu0 0.0
      %6189 = vmatpush1.msra.mxu0 0.0
      %6190 = vmatprep.subr.mxu0 0.0
      %6191 = vmatpush1.msra.mxu0 0.0
      %6192 = vmatprep.subr.mxu0 0.0
      %6193 = vmatpush1.msra.mxu0 0.0
      %6194 = vmatprep.mubr.f32.mxu0 0.0
      %v6195 = vand.u32 %v6002, 4294901760
      %6196 = vmatmul.mubr.f32.gmra.mrb[0].mxu0 %v6195
      %v6197 = vpop.f32.mrb[0].mxu0
      %v6198 = vadd.f32 %v6087, %v6197
      %v6199 = vpop.f32.mrb[0].mxu0
      %6200 = vmatprep.mubr.f32.mxu0 0.0
      %v6201 = vand.u32 %v6005, 4294901760
      %6202 = vmatmul.mubr.f32.gmra.mrb[0].mxu0 %v6201
      %v6203 = vpop.f32.mrb[0].mxu0
      %v6204 = vadd.f32 %v6097, %v6203
      %v6205 = vpop.f32.mrb[0].mxu0
      %6206 = vmatprep.mubr.f32.mxu0 0.0
      %v6207 = vand.u32 %v6008, 4294901760
      %6208 = vmatmul.mubr.f32.gmra.mrb[0].mxu0 %v6207
      %v6209 = vpop.f32.mrb[0].mxu0
      %v6210 = vadd.f32 %v6107, %v6209
      %v6211 = vpop.f32.mrb[0].mxu0
      %6212 = vmatprep.mubr.f32.mxu0 0.0
      %v6213 = vand.u32 %v6011, 4294901760
      %6214 = vmatmul.mubr.f32.gmra.mrb[0].mxu0 %v6213
      %v6215 = vpop.f32.mrb[0].mxu0
      %v6216 = vadd.f32 %v6117, %v6215
      %v6217 = vpop.f32.mrb[0].mxu0
      %6218 = vdwg.mxu0
      %6219 = vmatprep.subr.mxu0 0.0
      %v6220 = vand.u32 %v5231, 4294901760
      %v6221 = vsub.f32 %v5231, %v6220
      %6222 = vmatpush1.msra.mxu0 %v6221
      %6223 = vmatprep.subr.mxu0 0.0
      %v6224 = vand.u32 %v5232, 4294901760
      %v6225 = vsub.f32 %v5232, %v6224
      %6226 = vmatpush1.msra.mxu0 %v6225
      %6227 = vmatprep.subr.mxu0 0.0
      %6228 = vmatpush1.msra.mxu0 0.0
      %6229 = vmatprep.subr.mxu0 0.0
      %6230 = vmatpush1.msra.mxu0 0.0
      %6231 = vmatprep.subr.mxu0 0.0
      %6232 = vmatpush1.msra.mxu0 0.0
      %6233 = vmatprep.subr.mxu0 0.0
      %6234 = vmatpush1.msra.mxu0 0.0
      %6235 = vmatprep.subr.mxu0 0.0
      %6236 = vmatpush1.msra.mxu0 0.0
      %6237 = vmatprep.subr.mxu0 0.0
      %6238 = vmatpush1.msra.mxu0 0.0
      %6239 = vmatprep.subr.mxu0 0.0
      %6240 = vmatpush1.msra.mxu0 0.0
      %6241 = vmatprep.subr.mxu0 0.0
      %6242 = vmatpush1.msra.mxu0 0.0
      %6243 = vmatprep.subr.mxu0 0.0
      %6244 = vmatpush1.msra.mxu0 0.0
      %6245 = vmatprep.subr.mxu0 0.0
      %6246 = vmatpush1.msra.mxu0 0.0
      %6247 = vmatprep.subr.mxu0 0.0
      %6248 = vmatpush1.msra.mxu0 0.0
      %6249 = vmatprep.subr.mxu0 0.0
      %6250 = vmatpush1.msra.mxu0 0.0
      %6251 = vmatprep.subr.mxu0 0.0
      %6252 = vmatpush1.msra.mxu0 0.0
      %6253 = vmatprep.subr.mxu0 0.0
      %6254 = vmatpush1.msra.mxu0 0.0
      %6255 = vmatprep.subr.mxu0 0.0
      %6256 = vmatpush1.msra.mxu0 0.0
      %6257 = vmatprep.subr.mxu0 0.0
      %6258 = vmatpush1.msra.mxu0 0.0
      %6259 = vmatprep.subr.mxu0 0.0
      %6260 = vmatpush1.msra.mxu0 0.0
      %6261 = vmatprep.subr.mxu0 0.0
      %6262 = vmatpush1.msra.mxu0 0.0
      %6263 = vmatprep.subr.mxu0 0.0
      %6264 = vmatpush1.msra.mxu0 0.0
      %6265 = vmatprep.subr.mxu0 0.0
      %6266 = vmatpush1.msra.mxu0 0.0
      %6267 = vmatprep.subr.mxu0 0.0
      %6268 = vmatpush1.msra.mxu0 0.0
      %6269 = vmatprep.subr.mxu0 0.0
      %6270 = vmatpush1.msra.mxu0 0.0
      %6271 = vmatprep.subr.mxu0 0.0
      %6272 = vmatpush1.msra.mxu0 0.0
      %6273 = vmatprep.subr.mxu0 0.0
      %6274 = vmatpush1.msra.mxu0 0.0
      %6275 = vmatprep.subr.mxu0 0.0
      %6276 = vmatpush1.msra.mxu0 0.0
      %6277 = vmatprep.subr.mxu0 0.0
      %6278 = vmatpush1.msra.mxu0 0.0
      %6279 = vmatprep.subr.mxu0 0.0
      %6280 = vmatpush1.msra.mxu0 0.0
      %6281 = vmatprep.subr.mxu0 0.0
      %6282 = vmatpush1.msra.mxu0 0.0
      %6283 = vmatprep.subr.mxu0 0.0
      %6284 = vmatpush1.msra.mxu0 0.0
      %6285 = vmatprep.subr.mxu0 0.0
      %6286 = vmatpush1.msra.mxu0 0.0
      %6287 = vmatprep.mubr.f32.mxu0 0.0
      %v6288 = vand.u32 %v6002, 4294901760
      %v6289 = vsub.f32 %v6002, %v6288
      %6290 = vmatmul.mubr.f32.gmra.mrb[0].mxu0 %v6289
      %v6291 = vpop.f32.mrb[0].mxu0
      %v6292 = vadd.f32 %v6198, %v6291
      %v6293 = vpop.f32.mrb[0].mxu0
      %6294 = vmatprep.mubr.f32.mxu0 0.0
      %v6295 = vand.u32 %v6005, 4294901760
      %v6296 = vsub.f32 %v6005, %v6295
      %6297 = vmatmul.mubr.f32.gmra.mrb[0].mxu0 %v6296
      %v6298 = vpop.f32.mrb[0].mxu0
      %v6299 = vadd.f32 %v6204, %v6298
      %v6300 = vpop.f32.mrb[0].mxu0
      %6301 = vmatprep.mubr.f32.mxu0 0.0
      %v6302 = vand.u32 %v6008, 4294901760
      %v6303 = vsub.f32 %v6008, %v6302
      %6304 = vmatmul.mubr.f32.gmra.mrb[0].mxu0 %v6303
      %v6305 = vpop.f32.mrb[0].mxu0
      %v6306 = vadd.f32 %v6210, %v6305
      %v6307 = vpop.f32.mrb[0].mxu0
      %6308 = vmatprep.mubr.f32.mxu0 0.0
      %v6309 = vand.u32 %v6011, 4294901760
      %v6310 = vsub.f32 %v6011, %v6309
      %6311 = vmatmul.mubr.f32.gmra.mrb[0].mxu0 %v6310
      %v6312 = vpop.f32.mrb[0].mxu0
      %v6313 = vadd.f32 %v6216, %v6312
      %v6314 = vpop.f32.mrb[0].mxu0
      %6315 = vdwg.mxu0
      %6316 = vmatprep.subr.mxu0 0.0
      %v6317 = vand.u32 %v5231, 4294901760
      %6318 = vmatpush1.msra.mxu0 %v6317
      %6319 = vmatprep.subr.mxu0 0.0
      %v6320 = vand.u32 %v5232, 4294901760
      %6321 = vmatpush1.msra.mxu0 %v6320
      %6322 = vmatprep.subr.mxu0 0.0
      %6323 = vmatpush1.msra.mxu0 0.0
      %6324 = vmatprep.subr.mxu0 0.0
      %6325 = vmatpush1.msra.mxu0 0.0
      %6326 = vmatprep.subr.mxu0 0.0
      %6327 = vmatpush1.msra.mxu0 0.0
      %6328 = vmatprep.subr.mxu0 0.0
      %6329 = vmatpush1.msra.mxu0 0.0
      %6330 = vmatprep.subr.mxu0 0.0
      %6331 = vmatpush1.msra.mxu0 0.0
      %6332 = vmatprep.subr.mxu0 0.0
      %6333 = vmatpush1.msra.mxu0 0.0
      %6334 = vmatprep.subr.mxu0 0.0
      %6335 = vmatpush1.msra.mxu0 0.0
      %6336 = vmatprep.subr.mxu0 0.0
      %6337 = vmatpush1.msra.mxu0 0.0
      %6338 = vmatprep.subr.mxu0 0.0
      %6339 = vmatpush1.msra.mxu0 0.0
      %6340 = vmatprep.subr.mxu0 0.0
      %6341 = vmatpush1.msra.mxu0 0.0
      %6342 = vmatprep.subr.mxu0 0.0
      %6343 = vmatpush1.msra.mxu0 0.0
      %6344 = vmatprep.subr.mxu0 0.0
      %6345 = vmatpush1.msra.mxu0 0.0
      %6346 = vmatprep.subr.mxu0 0.0
      %6347 = vmatpush1.msra.mxu0 0.0
      %6348 = vmatprep.subr.mxu0 0.0
      %6349 = vmatpush1.msra.mxu0 0.0
      %6350 = vmatprep.subr.mxu0 0.0
      %6351 = vmatpush1.msra.mxu0 0.0
      %6352 = vmatprep.subr.mxu0 0.0
      %6353 = vmatpush1.msra.mxu0 0.0
      %6354 = vmatprep.subr.mxu0 0.0
      %6355 = vmatpush1.msra.mxu0 0.0
      %6356 = vmatprep.subr.mxu0 0.0
      %6357 = vmatpush1.msra.mxu0 0.0
      %6358 = vmatprep.subr.mxu0 0.0
      %6359 = vmatpush1.msra.mxu0 0.0
      %6360 = vmatprep.subr.mxu0 0.0
      %6361 = vmatpush1.msra.mxu0 0.0
      %6362 = vmatprep.subr.mxu0 0.0
      %6363 = vmatpush1.msra.mxu0 0.0
      %6364 = vmatprep.subr.mxu0 0.0
      %6365 = vmatpush1.msra.mxu0 0.0
      %6366 = vmatprep.subr.mxu0 0.0
      %6367 = vmatpush1.msra.mxu0 0.0
      %6368 = vmatprep.subr.mxu0 0.0
      %6369 = vmatpush1.msra.mxu0 0.0
      %6370 = vmatprep.subr.mxu0 0.0
      %6371 = vmatpush1.msra.mxu0 0.0
      %6372 = vmatprep.subr.mxu0 0.0
      %6373 = vmatpush1.msra.mxu0 0.0
      %6374 = vmatprep.subr.mxu0 0.0
      %6375 = vmatpush1.msra.mxu0 0.0
      %6376 = vmatprep.subr.mxu0 0.0
      %6377 = vmatpush1.msra.mxu0 0.0
      %6378 = vmatprep.subr.mxu0 0.0
      %6379 = vmatpush1.msra.mxu0 0.0
      %6380 = vmatprep.subr.mxu0 0.0
      %6381 = vmatpush1.msra.mxu0 0.0
      %6382 = vmatprep.mubr.f32.mxu0 0.0
      %v6383 = vand.u32 %v6002, 4294901760
      %v6384 = vsub.f32 %v6002, %v6383
      %v6385 = vand.u32 %v6384, 4294901760
      %6386 = vmatmul.mubr.f32.gmra.mrb[0].mxu0 %v6385
      %v6387 = vpop.f32.mrb[0].mxu0
      %v6388 = vadd.f32 %v6292, %v6387
      %v6389 = vpop.f32.mrb[0].mxu0
      %6390 = vmatprep.mubr.f32.mxu0 0.0
      %v6391 = vand.u32 %v6005, 4294901760
      %v6392 = vsub.f32 %v6005, %v6391
      %v6393 = vand.u32 %v6392, 4294901760
      %6394 = vmatmul.mubr.f32.gmra.mrb[0].mxu0 %v6393
      %v6395 = vpop.f32.mrb[0].mxu0
      %v6396 = vadd.f32 %v6299, %v6395
      %v6397 = vpop.f32.mrb[0].mxu0
      %6398 = vmatprep.mubr.f32.mxu0 0.0
      %v6399 = vand.u32 %v6008, 4294901760
      %v6400 = vsub.f32 %v6008, %v6399
      %v6401 = vand.u32 %v6400, 4294901760
      %6402 = vmatmul.mubr.f32.gmra.mrb[0].mxu0 %v6401
      %v6403 = vpop.f32.mrb[0].mxu0
      %v6404 = vadd.f32 %v6306, %v6403
      %v6405 = vpop.f32.mrb[0].mxu0
      %6406 = vmatprep.mubr.f32.mxu0 0.0
      %v6407 = vand.u32 %v6011, 4294901760
      %v6408 = vsub.f32 %v6011, %v6407
      %v6409 = vand.u32 %v6408, 4294901760
      %6410 = vmatmul.mubr.f32.gmra.mrb[0].mxu0 %v6409
      %v6411 = vpop.f32.mrb[0].mxu0
      %v6412 = vadd.f32 %v6313, %v6411
      %v6413 = vpop.f32.mrb[0].mxu0
      %6414 = vdwg.mxu0
      %6415 = vmatprep.subr.mxu0 0.0
      %v6416 = vand.u32 %v5231, 4294901760
      %v6417 = vsub.f32 %v5231, %v6416
      %v6418 = vand.u32 %v6417, 4294901760
      %6419 = vmatpush1.msra.mxu0 %v6418
      %6420 = vmatprep.subr.mxu0 0.0
      %v6421 = vand.u32 %v5232, 4294901760
      %v6422 = vsub.f32 %v5232, %v6421
      %v6423 = vand.u32 %v6422, 4294901760
      %6424 = vmatpush1.msra.mxu0 %v6423
      %6425 = vmatprep.subr.mxu0 0.0
      %6426 = vmatpush1.msra.mxu0 0.0
      %6427 = vmatprep.subr.mxu0 0.0
      %6428 = vmatpush1.msra.mxu0 0.0
      %6429 = vmatprep.subr.mxu0 0.0
      %6430 = vmatpush1.msra.mxu0 0.0
      %6431 = vmatprep.subr.mxu0 0.0
      %6432 = vmatpush1.msra.mxu0 0.0
      %6433 = vmatprep.subr.mxu0 0.0
      %6434 = vmatpush1.msra.mxu0 0.0
      %6435 = vmatprep.subr.mxu0 0.0
      %6436 = vmatpush1.msra.mxu0 0.0
      %6437 = vmatprep.subr.mxu0 0.0
      %6438 = vmatpush1.msra.mxu0 0.0
      %6439 = vmatprep.subr.mxu0 0.0
      %6440 = vmatpush1.msra.mxu0 0.0
      %6441 = vmatprep.subr.mxu0 0.0
      %6442 = vmatpush1.msra.mxu0 0.0
      %6443 = vmatprep.subr.mxu0 0.0
      %6444 = vmatpush1.msra.mxu0 0.0
      %6445 = vmatprep.subr.mxu0 0.0
      %6446 = vmatpush1.msra.mxu0 0.0
      %6447 = vmatprep.subr.mxu0 0.0
      %6448 = vmatpush1.msra.mxu0 0.0
      %6449 = vmatprep.subr.mxu0 0.0
      %6450 = vmatpush1.msra.mxu0 0.0
      %6451 = vmatprep.subr.mxu0 0.0
      %6452 = vmatpush1.msra.mxu0 0.0
      %6453 = vmatprep.subr.mxu0 0.0
      %6454 = vmatpush1.msra.mxu0 0.0
      %6455 = vmatprep.subr.mxu0 0.0
      %6456 = vmatpush1.msra.mxu0 0.0
      %6457 = vmatprep.subr.mxu0 0.0
      %6458 = vmatpush1.msra.mxu0 0.0
      %6459 = vmatprep.subr.mxu0 0.0
      %6460 = vmatpush1.msra.mxu0 0.0
      %6461 = vmatprep.subr.mxu0 0.0
      %6462 = vmatpush1.msra.mxu0 0.0
      %6463 = vmatprep.subr.mxu0 0.0
      %6464 = vmatpush1.msra.mxu0 0.0
      %6465 = vmatprep.subr.mxu0 0.0
      %6466 = vmatpush1.msra.mxu0 0.0
      %6467 = vmatprep.subr.mxu0 0.0
      %6468 = vmatpush1.msra.mxu0 0.0
      %6469 = vmatprep.subr.mxu0 0.0
      %6470 = vmatpush1.msra.mxu0 0.0
      %6471 = vmatprep.subr.mxu0 0.0
      %6472 = vmatpush1.msra.mxu0 0.0
      %6473 = vmatprep.subr.mxu0 0.0
      %6474 = vmatpush1.msra.mxu0 0.0
      %6475 = vmatprep.subr.mxu0 0.0
      %6476 = vmatpush1.msra.mxu0 0.0
      %6477 = vmatprep.subr.mxu0 0.0
      %6478 = vmatpush1.msra.mxu0 0.0
      %6479 = vmatprep.subr.mxu0 0.0
      %6480 = vmatpush1.msra.mxu0 0.0
      %6481 = vmatprep.subr.mxu0 0.0
      %6482 = vmatpush1.msra.mxu0 0.0
      %6483 = vmatprep.subr.mxu0 0.0
      %6484 = vmatpush1.msra.mxu0 0.0
      %6485 = vmatprep.mubr.f32.mxu0 0.0
      %v6486 = vand.u32 %v6002, 4294901760
      %6487 = vmatmul.mubr.f32.gmra.mrb[0].mxu0 %v6486
      %v6488 = vpop.f32.mrb[0].mxu0
      %v6489 = vadd.f32 %v6388, %v6488
      %v6490 = vpop.f32.mrb[0].mxu0
      %6491 = vmatprep.mubr.f32.mxu0 0.0
      %v6492 = vand.u32 %v6005, 4294901760
      %6493 = vmatmul.mubr.f32.gmra.mrb[0].mxu0 %v6492
      %v6494 = vpop.f32.mrb[0].mxu0
      %v6495 = vadd.f32 %v6396, %v6494
      %v6496 = vpop.f32.mrb[0].mxu0
      %6497 = vmatprep.mubr.f32.mxu0 0.0
      %v6498 = vand.u32 %v6008, 4294901760
      %6499 = vmatmul.mubr.f32.gmra.mrb[0].mxu0 %v6498
      %v6500 = vpop.f32.mrb[0].mxu0
      %v6501 = vadd.f32 %v6404, %v6500
      %v6502 = vpop.f32.mrb[0].mxu0
      %6503 = vmatprep.mubr.f32.mxu0 0.0
      %v6504 = vand.u32 %v6011, 4294901760
      %6505 = vmatmul.mubr.f32.gmra.mrb[0].mxu0 %v6504
      %v6506 = vpop.f32.mrb[0].mxu0
      %v6507 = vadd.f32 %v6412, %v6506
      %v6508 = vpop.f32.mrb[0].mxu0
      %6509 = vdwg.mxu0
      %6510 = vmatprep.subr.mxu0 0.0
      %v6511 = vand.u32 %v5231, 4294901760
      %6512 = vmatpush1.msra.mxu0 %v6511
      %6513 = vmatprep.subr.mxu0 0.0
      %v6514 = vand.u32 %v5232, 4294901760
      %6515 = vmatpush1.msra.mxu0 %v6514
      %6516 = vmatprep.subr.mxu0 0.0
      %6517 = vmatpush1.msra.mxu0 0.0
      %6518 = vmatprep.subr.mxu0 0.0
      %6519 = vmatpush1.msra.mxu0 0.0
      %6520 = vmatprep.subr.mxu0 0.0
      %6521 = vmatpush1.msra.mxu0 0.0
      %6522 = vmatprep.subr.mxu0 0.0
      %6523 = vmatpush1.msra.mxu0 0.0
      %6524 = vmatprep.subr.mxu0 0.0
      %6525 = vmatpush1.msra.mxu0 0.0
      %6526 = vmatprep.subr.mxu0 0.0
      %6527 = vmatpush1.msra.mxu0 0.0
      %6528 = vmatprep.subr.mxu0 0.0
      %6529 = vmatpush1.msra.mxu0 0.0
      %6530 = vmatprep.subr.mxu0 0.0
      %6531 = vmatpush1.msra.mxu0 0.0
      %6532 = vmatprep.subr.mxu0 0.0
      %6533 = vmatpush1.msra.mxu0 0.0
      %6534 = vmatprep.subr.mxu0 0.0
      %6535 = vmatpush1.msra.mxu0 0.0
      %6536 = vmatprep.subr.mxu0 0.0
      %6537 = vmatpush1.msra.mxu0 0.0
      %6538 = vmatprep.subr.mxu0 0.0
      %6539 = vmatpush1.msra.mxu0 0.0
      %6540 = vmatprep.subr.mxu0 0.0
      %6541 = vmatpush1.msra.mxu0 0.0
      %6542 = vmatprep.subr.mxu0 0.0
      %6543 = vmatpush1.msra.mxu0 0.0
      %6544 = vmatprep.subr.mxu0 0.0
      %6545 = vmatpush1.msra.mxu0 0.0
      %6546 = vmatprep.subr.mxu0 0.0
      %6547 = vmatpush1.msra.mxu0 0.0
      %6548 = vmatprep.subr.mxu0 0.0
      %6549 = vmatpush1.msra.mxu0 0.0
      %6550 = vmatprep.subr.mxu0 0.0
      %6551 = vmatpush1.msra.mxu0 0.0
      %6552 = vmatprep.subr.mxu0 0.0
      %6553 = vmatpush1.msra.mxu0 0.0
      %6554 = vmatprep.subr.mxu0 0.0
      %6555 = vmatpush1.msra.mxu0 0.0
      %6556 = vmatprep.subr.mxu0 0.0
      %6557 = vmatpush1.msra.mxu0 0.0
      %6558 = vmatprep.subr.mxu0 0.0
      %6559 = vmatpush1.msra.mxu0 0.0
      %6560 = vmatprep.subr.mxu0 0.0
      %6561 = vmatpush1.msra.mxu0 0.0
      %6562 = vmatprep.subr.mxu0 0.0
      %6563 = vmatpush1.msra.mxu0 0.0
      %6564 = vmatprep.subr.mxu0 0.0
      %6565 = vmatpush1.msra.mxu0 0.0
      %6566 = vmatprep.subr.mxu0 0.0
      %6567 = vmatpush1.msra.mxu0 0.0
      %6568 = vmatprep.subr.mxu0 0.0
      %6569 = vmatpush1.msra.mxu0 0.0
      %6570 = vmatprep.subr.mxu0 0.0
      %6571 = vmatpush1.msra.mxu0 0.0
      %6572 = vmatprep.subr.mxu0 0.0
      %6573 = vmatpush1.msra.mxu0 0.0
      %6574 = vmatprep.subr.mxu0 0.0
      %6575 = vmatpush1.msra.mxu0 0.0
      %6576 = vmatprep.mubr.f32.mxu0 0.0
      %v6577 = vand.u32 %v6002, 4294901760
      %6578 = vmatmul.mubr.f32.gmra.mrb[0].mxu0 %v6577
      %v6579 = vpop.f32.mrb[0].mxu0
      %v6580 = vadd.f32 %v6489, %v6579
      %v6581 = vpop.f32.mrb[0].mxu0
      %6582 = vmatprep.mubr.f32.mxu0 0.0
      %v6583 = vand.u32 %v6005, 4294901760
      %6584 = vmatmul.mubr.f32.gmra.mrb[0].mxu0 %v6583
      %v6585 = vpop.f32.mrb[0].mxu0
      %v6586 = vadd.f32 %v6495, %v6585
      %v6587 = vpop.f32.mrb[0].mxu0
      %6588 = vmatprep.mubr.f32.mxu0 0.0
      %v6589 = vand.u32 %v6008, 4294901760
      %6590 = vmatmul.mubr.f32.gmra.mrb[0].mxu0 %v6589
      %v6591 = vpop.f32.mrb[0].mxu0
      %v6592 = vadd.f32 %v6501, %v6591
      %v6593 = vpop.f32.mrb[0].mxu0
      %6594 = vmatprep.mubr.f32.mxu0 0.0
      %v6595 = vand.u32 %v6011, 4294901760
      %6596 = vmatmul.mubr.f32.gmra.mrb[0].mxu0 %v6595
      %v6597 = vpop.f32.mrb[0].mxu0
      %v6598 = vadd.f32 %v6507, %v6597
      %v6599 = vpop.f32.mrb[0].mxu0
      %6600 = vdwg.mxu0
      %v6601 = vmax.f32 %v5208, %v6580
      %v6602 = vmax.f32 %v5214, %v6586
      %v6603 = vmax.f32 %v5220, %v6592
      %v6604 = vmax.f32 %v5226, %v6598
      %6605 = vxpose.xlu0.b32.start [1/16] %v6601, 128
      %6606 = vxpose.xlu0.b32.cont [2/16] %v6602, 128
      %6607 = vxpose.xlu0.b32.cont [3/16] 0.0, 128
      %6608 = vxpose.xlu0.b32.cont [4/16] 0.0, 128
      %6609 = vxpose.xlu0.b32.cont [5/16] 0.0, 128
      %6610 = vxpose.xlu0.b32.cont [6/16] 0.0, 128
      %6611 = vxpose.xlu0.b32.cont [7/16] 0.0, 128
      %6612 = vxpose.xlu0.b32.cont [8/16] 0.0, 128
      %6613 = vxpose.xlu0.b32.cont [9/16] 0.0, 128
      %6614 = vxpose.xlu0.b32.cont [10/16] 0.0, 128
      %6615 = vxpose.xlu0.b32.cont [11/16] 0.0, 128
      %6616 = vxpose.xlu0.b32.cont [12/16] 0.0, 128
      %6617 = vxpose.xlu0.b32.cont [13/16] 0.0, 128
      %6618 = vxpose.xlu0.b32.cont [14/16] 0.0, 128
      %6619 = vxpose.xlu0.b32.cont [15/16] 0.0, 128
      %6620 = vxpose.xlu0.b32.end [16/16] 0.0, 128
      %v6621 = vpop.trf.xlu0
      %v6622 = vpop.trf.xlu0
      %v6623 = vpop.trf.xlu0
      %v6624 = vpop.trf.xlu0
      %v6625 = vpop.trf.xlu0
      %v6626 = vpop.trf.xlu0
      %v6627 = vpop.trf.xlu0
      %v6628 = vpop.trf.xlu0
      %v6629 = vpop.trf.xlu0
      %v6630 = vpop.trf.xlu0
      %v6631 = vpop.trf.xlu0
      %v6632 = vpop.trf.xlu0
      %v6633 = vpop.trf.xlu0
      %v6634 = vpop.trf.xlu0
      %v6635 = vpop.trf.xlu0
      %v6636 = vpop.trf.xlu0
      %6637 = vxpose.xlu0.b32.start [1/16] %v6603, 128
      %6638 = vxpose.xlu0.b32.cont [2/16] %v6604, 128
      %6639 = vxpose.xlu0.b32.cont [3/16] 0.0, 128
      %6640 = vxpose.xlu0.b32.cont [4/16] 0.0, 128
      %6641 = vxpose.xlu0.b32.cont [5/16] 0.0, 128
      %6642 = vxpose.xlu0.b32.cont [6/16] 0.0, 128
      %6643 = vxpose.xlu0.b32.cont [7/16] 0.0, 128
      %6644 = vxpose.xlu0.b32.cont [8/16] 0.0, 128
      %6645 = vxpose.xlu0.b32.cont [9/16] 0.0, 128
      %6646 = vxpose.xlu0.b32.cont [10/16] 0.0, 128
      %6647 = vxpose.xlu0.b32.cont [11/16] 0.0, 128
      %6648 = vxpose.xlu0.b32.cont [12/16] 0.0, 128
      %6649 = vxpose.xlu0.b32.cont [13/16] 0.0, 128
      %6650 = vxpose.xlu0.b32.cont [14/16] 0.0, 128
      %6651 = vxpose.xlu0.b32.cont [15/16] 0.0, 128
      %6652 = vxpose.xlu0.b32.end [16/16] 0.0, 128
      %v6653 = vpop.trf.xlu0
      %v6654 = vpop.trf.xlu0
      %v6655 = vpop.trf.xlu0
      %v6656 = vpop.trf.xlu0
      %v6657 = vpop.trf.xlu0
      %v6658 = vpop.trf.xlu0
      %v6659 = vpop.trf.xlu0
      %v6660 = vpop.trf.xlu0
      %v6661 = vpop.trf.xlu0
      %v6662 = vpop.trf.xlu0
      %v6663 = vpop.trf.xlu0
      %v6664 = vpop.trf.xlu0
      %v6665 = vpop.trf.xlu0
      %v6666 = vpop.trf.xlu0
      %v6667 = vpop.trf.xlu0
      %v6668 = vpop.trf.xlu0
      %6669 = vst.msk [vmem:[%s486] sm:$0xff] %vm3779, %v6621
      %vm6670 = vcmask 123904
      %6671 = vst.msk [vmem:[%s486 + $0x8] sm:$0x3] %vm6670, %v6622
      %6672 = vst.msk [vmem:[%s486 + $0x10] sm:$0xff] %vm3779, %v6653
      %6673 = vst.msk [vmem:[%s486 + $0x18] sm:$0x3] %vm6670, %v6654
      %s6674 = smul.u32 2, %s24
      %p6675 = scmp.lt.s32.totalorder %s6674, 15
      %s6676 = scalar_select %p6675, %s6674, 15
      %s6677 = smul.addr %s6676, 2
      %s6678 = smul.addr %s6677, 8
      %s6679 = scalar_lea.vmem %s11, %s6678
      %s6680 = smul.u32 2, %s24
      %p6681 = scmp.lt.s32.totalorder %s6680, 15
      %s6682 = scalar_select %p6681, %s6680, 15
      %s6683 = smul.addr %s6682, 2
      %s6684 = smul.addr %s6683, 8
      %s6685 = scalar_lea.vmem %s12, %s6684
      // Predicated region
      $region65: #{tpu_custom_call.1} parent=63 // pred_check
        %p6686 = pneg %p288
      $region66: #{tpu_custom_call.1} parent=63 // pred_check_branch
        %6688 = sbr.rel (%p6686) target = $region68
      $region67: #{tpu_custom_call.1} parent=63 // pred_region
        %s6689 = smul.u32 2, %s24
      $region68: #{tpu_custom_call.1} parent=63 // pred_fallthru
        _
      // Predicated region
      $region69: #{tpu_custom_call.1} parent=63 // pred_check
        %p6690 = pneg %p314
      $region70: #{tpu_custom_call.1} parent=63 // pred_check_branch
        %6692 = sbr.rel (%p6690) target = $region72
      $region71: #{tpu_custom_call.1} parent=63 // pred_region
        %s6693 = smul.u32 2, %s24
      $region72: #{tpu_custom_call.1} parent=63 // pred_fallthru
        _
    $region64: #{tpu_custom_call.1} parent=5 // pred_fallthru
      _
    %p6694 = scmp.le.s32.totalorder 2, %s19
    // Predicated region
    $region73: #{tpu_custom_call.1} parent=5 // pred_check
      %p6695 = pneg %p6694
    $region74: #{tpu_custom_call.1} parent=5 // pred_check_branch
      %6697 = sbr.rel (%p6695) target = $region76
    $region75: #{tpu_custom_call.1} parent=5 // pred_region
      %s6698 = ssub.s32 %s19, 2
      // Predicated region
      $region77: #{tpu_custom_call.1} parent=75 // pred_check
        %p6699 = pneg %p294
      $region78: #{tpu_custom_call.1} parent=75 // pred_check_branch
        %6701 = sbr.rel (%p6699) target = $region80
      $region79: #{tpu_custom_call.1} parent=75 // pred_region
        %s6702 = smul.u32 2, %s25
        %p6703 = scmp.lt.s32.totalorder %s6702, 15
        %s6704 = scalar_select %p6703, %s6702, 15
        %s6705 = smul.addr %s6704, 2
        %s6706 = smul.addr %s6705, 8
        %s6707 = scalar_lea.vmem %s11, %s6706
      $region80: #{tpu_custom_call.1} parent=75 // pred_fallthru
        _
      // Predicated region
      $region81: #{tpu_custom_call.1} parent=75 // pred_check
        %p6708 = pneg %p320
      $region82: #{tpu_custom_call.1} parent=75 // pred_check_branch
        %6710 = sbr.rel (%p6708) target = $region84
      $region83: #{tpu_custom_call.1} parent=75 // pred_region
        %s6711 = smul.u32 2, %s25
        %p6712 = scmp.lt.s32.totalorder %s6711, 15
        %s6713 = scalar_select %p6712, %s6711, 15
        %s6714 = smul.addr %s6713, 2
        %s6715 = smul.addr %s6714, 8
        %s6716 = scalar_lea.vmem %s12, %s6715
      $region84: #{tpu_custom_call.1} parent=75 // pred_fallthru
        _
    $region76: #{tpu_custom_call.1} parent=5 // pred_fallthru
      _
  $region6: #{tpu_custom_call.1} parent=0 // loop_footer
    %s23 = sadd.s32 1, %s19
  $region7: #{tpu_custom_call.1} parent=0 // loop_footer_branch
    %18 = sbr.rel target = $region3
  $region8: #{tpu_custom_call.1} parent=0 // loop_exit
    _

</llo_original>
